<compile_context>
chip_gen: v7x
topology: tpu7x:2x2x1
jax: 0.10.0
libtpu: 0.0.40
codegen_flags: <defaults>
</compile_context>

<pallas_src>
import functools
import math

import jax
import jax.numpy as jnp
import numpy as np
from jax.experimental import pallas as pl
from jax.experimental.pallas import tpu as pltpu

VMEM_SPEC = pl.BlockSpec(memory_space=pltpu.MemorySpace.VMEM)
ALPHAS = tuple(2.0 ** k for k in range(-3, 2))       # GaussianKernel alphas 2^-3 .. 2^1
BN_EPS = 1e-5
BN_MOMENTUM = 0.1
LOGIT_PAD = 128                                       # lane-dense padded logits width
LAYER_NAMES = ("layer1", "layer2", "layer3", "layer4", "layer5")

# MXU inputs run in bf16 (~2x MXU throughput on v5e/v6e/v7x, half the weight DMA bytes);
# accumulation stays f32 via preferred_element_type.  Everything else stays f32.
MXU_DTYPE = jnp.bfloat16


def _mxu_dot(a, b):
    return jnp.dot(a.astype(MXU_DTYPE), b.astype(MXU_DTYPE),
                   preferred_element_type=jnp.float32)


def _pad_lanes(v, width):
    c = v.shape[-1]
    if c == width:
        return v
    return jnp.concatenate([v, jnp.zeros((v.shape[0], width - c), v.dtype)], axis=-1)


def _layer_cfg(in_channel):
    # (kernel_size, Cin, Cout, pool) per conv block
    return ((7, in_channel, 32, "max2"),
            (3, 32, 64, None),
            (3, 64, 128, None),
            (3, 128, 256, None),
            (3, 256, 512, "adaptive4"))


# --------------------------------------------------------------------------- kernel A
def feature_kernel(*refs, layer_cfg, training):
    """Fused Conv1d+BN+ReLU(+pool) x5 for one group (source OR target) of B samples."""
    n_layers = len(layer_cfg)
    x_ref = refs[0]
    layer_refs = [refs[1 + 6 * i: 1 + 6 * (i + 1)] for i in range(n_layers)]
    feat_ref = refs[1 + 6 * n_layers]
    stats_ref = refs[2 + 6 * n_layers] if training else None

    B, L, Cin0 = x_ref.shape
    # Free row-major merge of the leading dims -- no per-sample concat copies.
    act = x_ref[...].reshape(B * L, Cin0)
    stat_rows = []

    for li, (K, Cin, Cout, pool) in enumerate(layer_cfg):
        w_ref, b_ref, g_ref, be_ref, rm_ref, rv_ref = layer_refs[li]
        Lout = L - K + 1
        R = B * Lout

        # ---- Conv1d as ONE matmul (im2col along lanes, contraction K*Cin).
        # Shifted full-slab views: wrapped / cross-sample rows only land in positions
        # l >= Lout, which are discarded by the compaction below.
        shifted = [act if k == 0 else jnp.roll(act, -k, axis=0) for k in range(K)]
        x_cat = shifted[0] if K == 1 else jnp.concatenate(shifted, axis=1)   # (B*L, K*Cin)
        y_full = _mxu_dot(x_cat, w_ref[...]) + b_ref[...]                    # (B*L, Cout) f32

        # ---- Compact to the valid rows once per layer (B slices, not B*K).
        if B == 1:
            y = y_full[:Lout]
        else:
            y = jnp.concatenate([y_full[n * L: n * L + Lout] for n in range(B)], axis=0)

        # ---- BatchNorm1d: biased batch stats (training) / running stats (eval), f32.
        if training:
            inv_cnt = 1.0 / float(R)
            mean = jnp.sum(y, axis=0, keepdims=True) * inv_cnt               # (1, Cout)
            var = jnp.sum((y - mean) ** 2, axis=0, keepdims=True) * inv_cnt
            stat_rows.append(_pad_lanes(mean, stats_ref.shape[-1]))
            stat_rows.append(_pad_lanes(var, stats_ref.shape[-1]))
        else:
            mean = rm_ref[...]
            var = rv_ref[...]
        y = (y - mean) * jax.lax.rsqrt(var + BN_EPS) * g_ref[...] + be_ref[...]
        y = jnp.maximum(y, 0.0)                                              # ReLU

        # ---- Pooling: cheap sublane max, no O(R^2) selection masks.
        if pool == "max2":                                                   # MaxPool1d(2, 2)
            assert Lout % 2 == 0
            act, L = y.reshape(R // 2, 2, Cout).max(axis=1), Lout // 2
        elif pool == "adaptive4":                                            # AdaptiveMaxPool1d(4)
            # TODO(synk): general AdaptiveMaxPool1d bin boundaries when Lout % 4 != 0.
            assert Lout % 4 == 0
            act, L = y.reshape(B * 4, Lout // 4, Cout).max(axis=1), 4
        else:
            act, L = y, Lout

    feat_ref[...] = act                                                      # (B*4, 512)
    if training:
        stats_ref[0] = jnp.concatenate(stat_rows, axis=0)                    # one lane-dense store


def _feature_cost(cfg, B, L0, G):
    flops = 0
    weight_bytes = 0
    L = L0
    for (K, Cin, Cout, pool) in cfg:
        Lout = L - K + 1
        flops += 2 * G * (B * L) * (K * Cin) * Cout       # conv matmul on full slab rows
        flops += 10 * G * (B * Lout) * Cout               # BN/ReLU/pool elementwise, rough
        weight_bytes += (K * Cin * Cout) * 2 + 5 * Cout * 4
        if pool == "max2":
            L = Lout // 2
        elif pool == "adaptive4":
            L = 4
        else:
            L = Lout
    bytes_accessed = (G * B * L0 * cfg[0][1] * 4
                      + G * weight_bytes
                      + G * B * 4 * 512 * 4
                      + G * 2 * len(cfg) * 512 * 4)
    return pl.CostEstimate(flops=int(flops),
                           transcendentals=int(G * len(cfg) * 512),
                           bytes_accessed=int(bytes_accessed))


def feature_extractor(params, x_nlc, cfg, *, training):
    """x_nlc: (G*B, L, Cin) float32, source samples first then target (training)."""
    N, L0, Cin0 = x_nlc.shape
    G = 2 if training else 1
    B = N // G
    assert B * G == N
    assert G == 1 or (B * 4) % 8 == 0      # sublane-aligned per-group feature blocks

    flat = []
    for name in LAYER_NAMES:
        lp = params[name]
        flat += [lp["wf"], lp["b"], lp["gamma"], lp["beta"], lp["rmean"], lp["rvar"]]

    in_specs = [pl.BlockSpec((B, L0, Cin0), lambda g: (g, 0, 0))]
    in_specs += [pl.BlockSpec(a.shape, lambda g, nd=a.ndim: (0,) * nd) for a in flat]

    n_stats = 2 * len(cfg)
    feat_shape = jax.ShapeDtypeStruct((N * 4, 512), jnp.float32)
    feat_spec = pl.BlockSpec((B * 4, 512), lambda g: (g, 0))
    if training:
        out_shape = (feat_shape, jax.ShapeDtypeStruct((G, n_stats, 512), jnp.float32))
        out_specs = (feat_spec, pl.BlockSpec((1, n_stats, 512), lambda g: (g, 0, 0)))
    else:
        out_shape = feat_shape
        out_specs = feat_spec

    kern = functools.partial(feature_kernel, layer_cfg=cfg, training=training)
    return pl.pallas_call(
        kern,
        grid=(G,),
        out_shape=out_shape,
        in_specs=in_specs,
        out_specs=out_specs,
        compiler_params=pltpu.CompilerParams(dimension_semantics=("parallel",)),
        cost_estimate=_feature_cost(cfg, B, L0, G),
    )(x_nlc, *flat)


# --------------------------------------------------------------------------- kernel B
def _mkmmd(feats, idx, eye, batch_size):
    """Multi-kernel MMD (tllib formulation) of stacked [source; target] features (f32)."""
    n = 2 * batch_size
    gram = jax.lax.dot_general(feats, feats, (((1,), (1,)), ((), ())),
                               preferred_element_type=jnp.float32)           # (n, n) f32
    sq_col = jnp.sum(feats * feats, axis=1, keepdims=True)                   # (n, 1)
    sq_row = jnp.sum(gram * eye, axis=0, keepdims=True)                      # (1, n)
    l2 = jnp.maximum(sq_col + sq_row - 2.0 * gram, 0.0)
    # sigma^2 tracking: mean over all n*n entries (zero diagonal included), clamped so
    # collapsed features (all-zero activations) don't produce exp(-x/0) NaNs.
    mean_l2 = jnp.maximum(jnp.sum(l2) * (1.0 / float(n * n)), 1e-12)
    inv = 1.0 / mean_l2
    km = None
    for a in ALPHAS:
        k = jnp.exp(l2 * (inv * (-0.5 / a)))     # scalar coef, no per-alpha matrix divide
        km = k if km is None else km + k
    return jnp.sum(km * idx) + 2.0 / float(batch_size - 1)


def head_kernel(*refs, batch_size, with_mmd):
    if with_mmd:
        f_ref, w1, b1, w2, b2, w3, b3, idx_ref, logits_ref, mmd_ref = refs
    else:
        f_ref, w1, b1, w2, b2, w3, b3, logits_ref = refs

    h1 = jnp.maximum(_mxu_dot(f_ref[...], w1[...]) + b1[...], 0.0)        # (N, 256)
    h2 = jnp.maximum(_mxu_dot(h1, w2[...]) + b2[...], 0.0)                # (N, 64)
    logits = _mxu_dot(h2, w3[...]) + b3[...]                              # (N, 128); cols>=C are 0
    logits_ref[...] = logits

    if with_mmd:
        n = 2 * batch_size
        idx = idx_ref[...]
        eye = (jax.lax.broadcasted_iota(jnp.int32, (n, n), 0) ==
               jax.lax.broadcasted_iota(jnp.int32, (n, n), 1)).astype(jnp.float32)
        total = (_mkmmd(h1, idx, eye, batch_size)
                 + _mkmmd(h2, idx, eye, batch_size)
                 + _mkmmd(logits, idx, eye, batch_size))   # zero-padded cols don't affect MMD
        mmd_ref[...] = jnp.zeros(mmd_ref.shape, jnp.float32) + total


def _head_cost(N, with_mmd):
    fc = 2 * N * (4 * 512 * 256 + 256 * 64 + 64 * LOGIT_PAD)
    flops = fc
    trans = 0
    bytes_accessed = (N * 4 * 512 * 4
                      + (4 * 512 * 256 + 256 * 64 + 64 * LOGIT_PAD) * 2
                      + N * LOGIT_PAD * 4)
    if with_mmd:
        flops += 2 * N * N * (256 + 64 + LOGIT_PAD) + 40 * N * N
        trans = 3 * len(ALPHAS) * N * N
        bytes_accessed += N * N * 4 + 128 * 4
    return pl.CostEstimate(flops=int(flops), transcendentals=int(trans),
                           bytes_accessed=int(bytes_accessed))


def classifier_head(params, feats, index_matrix=None):
    N = feats.shape[0]
    w1, b1 = params["fc1"]["w"], params["fc1"]["b"]
    w2, b2 = params["fc2"]["w"], params["fc2"]["b"]
    w3, b3 = params["fc3"]["wpad"], params["fc3"]["bpad"]
    args = [feats, w1, b1, w2, b2, w3, b3]
    logits_shape = jax.ShapeDtypeStruct((N, LOGIT_PAD), jnp.float32)

    if index_matrix is not None:
        args.append(index_matrix)
        kern = functools.partial(head_kernel, batch_size=N // 2, with_mmd=True)
        logits_pad, mmd = pl.pallas_call(
            kern,
            out_shape=(logits_shape, jax.ShapeDtypeStruct((1, 128), jnp.float32)),
            in_specs=[VMEM_SPEC] * len(args),
            out_specs=(VMEM_SPEC, VMEM_SPEC),
            cost_estimate=_head_cost(N, True),
        )(*args)
        return logits_pad, mmd[0, 0]

    kern = functools.partial(head_kernel, batch_size=N, with_mmd=False)
    logits_pad = pl.pallas_call(
        kern,
        out_shape=logits_shape,
        in_specs=[VMEM_SPEC] * len(args),
        out_specs=VMEM_SPEC,
        cost_estimate=_head_cost(N, False),
    )(*args)
    return logits_pad


# --------------------------------------------------------------------------- glue / model
@functools.lru_cache(maxsize=None)
def _index_matrix(batch_size, linear_flag=False):
    m = np.zeros((2 * batch_size, 2 * batch_size), dtype=np.float32)
    if linear_flag:
        for i in range(batch_size):
            s1, s2 = i, (i + 1) % batch_size
            t1, t2 = s1 + batch_size, s2 + batch_size
            m[s1, s2] = 1.0 / batch_size
            m[t1, t2] = 1.0 / batch_size
            m[s1, t2] = -1.0 / batch_size
            m[s2, t1] = -1.0 / batch_size
    else:
        for i in range(batch_size):
            for j in range(batch_size):
                if i != j:
                    m[i, j] = 1.0 / (batch_size * (batch_size - 1))
                    m[i + batch_size, j + batch_size] = 1.0 / (batch_size * (batch_size - 1))
        for i in range(batch_size):
            for j in range(batch_size):
                m[i, j + batch_size] = -1.0 / (batch_size * batch_size)
                m[i + batch_size, j] = -1.0 / (batch_size * batch_size)
    return jnp.asarray(m)


def cross_entropy(logits, labels):
    lse = jax.nn.logsumexp(logits, axis=1)
    picked = jnp.take_along_axis(logits, labels[:, None], axis=1)[:, 0]
    return jnp.mean(lse - picked)


def apply_bn_momentum(params, stats, cfg, *, batch_size, input_length, momentum=BN_MOMENTUM):
    """PyTorch BatchNorm1d running-stat momentum updates for the two sequential fs()
    passes (source first, then target), with the unbiased-variance correction."""
    new = dict(params)
    L = input_length
    for li, name in enumerate(LAYER_NAMES):
        K, _, cout, pool = cfg[li]
        Lout = L - K + 1
        cnt = float(batch_size * Lout)
        corr = cnt / max(cnt - 1.0, 1.0)
        lp = dict(params[name])
        rm, rv = lp["rmean"], lp["rvar"]
        for g in range(stats.shape[0]):                 # 0 = source pass, 1 = target pass
            mean = stats[g, 2 * li, :cout][None, :]
            var_u = stats[g, 2 * li + 1, :cout][None, :] * corr
            rm = (1.0 - momentum) * rm + momentum * mean
            rv = (1.0 - momentum) * rv + momentum * var_u
        lp["rmean"], lp["rvar"] = rm, rv
        new[name] = lp
        if pool == "max2":
            L = Lout // 2
        elif pool == "adaptive4":
            L = 4
        else:
            L = Lout
    return new


def dan_forward(params, target_data, source_data=None, source_label=None, *, training=True):
    """Functional DAN forward.  Training returns (pred, ce_loss, mmd_loss, new_params) where
    new_params carries the BatchNorm running-stat updates PyTorch performs as a module side
    effect; eval returns pred."""
    in_channel = target_data.shape[1]
    cfg = _layer_cfg(in_channel)
    num_classes = params["fc3"]["w"].shape[1]

    if training:
        B = target_data.shape[0]
        assert B >= 2, "MK-MMD needs batch_size >= 2 (divides by batch_size - 1)"
        # one fused pass over [source ++ target]  (NCL -> NLC for the kernel)
        x = jnp.concatenate([source_data, target_data], axis=0)
        x = jnp.transpose(x, (0, 2, 1)).astype(jnp.float32)
        feats_raw, stats = feature_extractor(params, x, cfg, training=True)
        feats = feats_raw.reshape(2 * B, 4 * 512)            # free row-major reshape
        idx = _index_matrix(B, False)
        logits_pad, loss_mmd = classifier_head(params, feats, idx)
        logits_s = logits_pad[:B, :num_classes]
        pred = logits_pad[B:, :num_classes]
        loss = cross_entropy(logits_s, source_label)
        new_params = apply_bn_momentum(params, stats, cfg,
                                       batch_size=B, input_length=target_data.shape[2])
        return pred, loss, loss_mmd, new_params

    x = jnp.transpose(target_data, (0, 2, 1)).astype(jnp.float32)
    feats_raw = feature_extractor(params, x, cfg, training=False)
    feats = feats_raw.reshape(target_data.shape[0], 4 * 512)
    logits_pad = classifier_head(params, feats)
    return logits_pad[:, :num_classes]


# --------------------------------------------------------------------------- init
def init_params(key, in_channel=2, num_classes=3):
    keys = jax.random.split(key, 8)

    def conv_p(k, cin, cout, ksz):
        kw, kb = jax.random.split(k)
        bound = 1.0 / math.sqrt(cin * ksz)
        w = jax.random.uniform(kw, (cout, cin, ksz), jnp.float32, -bound, bound)
        b = jax.random.uniform(kb, (cout,), jnp.float32, -bound, bound)
        wf = jnp.transpose(w, (2, 1, 0)).reshape(ksz * cin, cout)     # (K*Cin, Cout), k-major
        return dict(wf=wf.astype(jnp.bfloat16),                       # MXU weights in bf16
                    b=b.reshape(1, cout),
                    gamma=jnp.ones((1, cout), jnp.float32),
                    beta=jnp.zeros((1, cout), jnp.float32),
                    rmean=jnp.zeros((1, cout), jnp.float32),
                    rvar=jnp.ones((1, cout), jnp.float32))

    def lin_p(k, din, dout):
        kw, kb = jax.random.split(k)
        bound = 1.0 / math.sqrt(din)
        w = jax.random.uniform(kw, (dout, din), jnp.float32, -bound, bound)
        b = jax.random.uniform(kb, (dout,), jnp.float32, -bound, bound)
        return jnp.transpose(w), b.reshape(1, dout)

    w1, b1 = lin_p(keys[5], 512 * 4, 256)
    # Absorb PyTorch nn.Flatten order (feature index = c*4 + l) into fc1 so the feature
    # kernel can emit its lane-dense bin-major (index = l*512 + c) layout directly.
    w1p = jnp.transpose(w1.reshape(512, 4, 256), (1, 0, 2)).reshape(4 * 512, 256)
    w2, b2 = lin_p(keys[6], 256, 64)
    w3, b3 = lin_p(keys[7], 64, num_classes)
    w3p = jnp.zeros((64, LOGIT_PAD), jnp.float32).at[:, :num_classes].set(w3)
    b3p = jnp.zeros((1, LOGIT_PAD), jnp.float32).at[:, :num_classes].set(b3)

    return {
        "layer1": conv_p(keys[0], in_channel, 32, 7),
        "layer2": conv_p(keys[1], 32, 64, 3),
        "layer3": conv_p(keys[2], 64, 128, 3),
        "layer4": conv_p(keys[3], 128, 256, 3),
        "layer5": conv_p(keys[4], 256, 512, 3),
        "fc1": dict(w=w1p.astype(jnp.bfloat16), b=b1),
        "fc2": dict(w=w2.astype(jnp.bfloat16), b=b2),
        "fc3": dict(w=w3, b=b3,
                    wpad=w3p.astype(jnp.bfloat16), bpad=b3p),
    }


if __name__ == "__main__":
    key = jax.random.PRNGKey(0)
    pkey, k1, k2 = jax.random.split(key, 3)
    params = init_params(pkey, in_channel=2, num_classes=3)

    # L=54 -> conv7:48 -> pool:24 -> 22 -> 20 -> 18 -> conv3:16 -> adaptive pool:4
    target_data = jax.random.normal(k1, (2, 2, 54), jnp.float32)
    source_data = jax.random.normal(k2, (2, 2, 54), jnp.float32)
    source_label = jnp.array([0, 2], dtype=jnp.int32)

    train_step = jax.jit(functools.partial(dan_forward, training=True))
    predict = jax.jit(functools.partial(dan_forward, training=False))

    pred, ce_loss, mmd_loss, new_params = train_step(params, target_data, source_data,
                                                     source_label)
    pred_eval = predict(new_params, target_data)
    jax.block_until_ready((pred, ce_loss, mmd_loss, pred_eval))
    print("KERNEL_OK")
</pallas_src>

<mosaic_0001>
module attributes {stable_mosaic.version = 11 : i64} {
  func.func @feature_kernel(%arg0: i32, %arg1: memref<2x54x2xf32, #tpu.memory_space<vmem>>, %arg2: memref<14x32xbf16, #tpu.memory_space<vmem>>, %arg3: memref<1x32xf32, #tpu.memory_space<vmem>>, %arg4: memref<1x32xf32, #tpu.memory_space<vmem>>, %arg5: memref<1x32xf32, #tpu.memory_space<vmem>>, %arg6: memref<1x32xf32, #tpu.memory_space<vmem>>, %arg7: memref<1x32xf32, #tpu.memory_space<vmem>>, %arg8: memref<96x64xbf16, #tpu.memory_space<vmem>>, %arg9: memref<1x64xf32, #tpu.memory_space<vmem>>, %arg10: memref<1x64xf32, #tpu.memory_space<vmem>>, %arg11: memref<1x64xf32, #tpu.memory_space<vmem>>, %arg12: memref<1x64xf32, #tpu.memory_space<vmem>>, %arg13: memref<1x64xf32, #tpu.memory_space<vmem>>, %arg14: memref<192x128xbf16, #tpu.memory_space<vmem>>, %arg15: memref<1x128xf32, #tpu.memory_space<vmem>>, %arg16: memref<1x128xf32, #tpu.memory_space<vmem>>, %arg17: memref<1x128xf32, #tpu.memory_space<vmem>>, %arg18: memref<1x128xf32, #tpu.memory_space<vmem>>, %arg19: memref<1x128xf32, #tpu.memory_space<vmem>>, %arg20: memref<384x256xbf16, #tpu.memory_space<vmem>>, %arg21: memref<1x256xf32, #tpu.memory_space<vmem>>, %arg22: memref<1x256xf32, #tpu.memory_space<vmem>>, %arg23: memref<1x256xf32, #tpu.memory_space<vmem>>, %arg24: memref<1x256xf32, #tpu.memory_space<vmem>>, %arg25: memref<1x256xf32, #tpu.memory_space<vmem>>, %arg26: memref<768x512xbf16, #tpu.memory_space<vmem>>, %arg27: memref<1x512xf32, #tpu.memory_space<vmem>>, %arg28: memref<1x512xf32, #tpu.memory_space<vmem>>, %arg29: memref<1x512xf32, #tpu.memory_space<vmem>>, %arg30: memref<1x512xf32, #tpu.memory_space<vmem>>, %arg31: memref<1x512xf32, #tpu.memory_space<vmem>>, %arg32: memref<8x512xf32, #tpu.memory_space<vmem>>, %arg33: memref<1x10x512xf32, #tpu.memory_space<vmem>>) attributes {dimension_semantics = [#tpu.dimension_semantics<parallel>], iteration_bounds = array<i64: 2>, scalar_prefetch = 0 : i64, scratch_operands = 0 : i64, tpu.core_type = #tpu.core_type<tc>, window_params = [{transform_indices = @transform_0, window_bounds = array<i64: 2, 54, 2>}, {pipeline_mode = #tpu.pipeline_mode<synchronous>, transform_indices = @transform_1, window_bounds = array<i64: 14, 32>}, {pipeline_mode = #tpu.pipeline_mode<synchronous>, transform_indices = @transform_2, window_bounds = array<i64: 1, 32>}, {pipeline_mode = #tpu.pipeline_mode<synchronous>, transform_indices = @transform_3, window_bounds = array<i64: 1, 32>}, {pipeline_mode = #tpu.pipeline_mode<synchronous>, transform_indices = @transform_4, window_bounds = array<i64: 1, 32>}, {pipeline_mode = #tpu.pipeline_mode<synchronous>, transform_indices = @transform_5, window_bounds = array<i64: 1, 32>}, {pipeline_mode = #tpu.pipeline_mode<synchronous>, transform_indices = @transform_6, window_bounds = array<i64: 1, 32>}, {pipeline_mode = #tpu.pipeline_mode<synchronous>, transform_indices = @transform_7, window_bounds = array<i64: 96, 64>}, {pipeline_mode = #tpu.pipeline_mode<synchronous>, transform_indices = @transform_8, window_bounds = array<i64: 1, 64>}, {pipeline_mode = #tpu.pipeline_mode<synchronous>, transform_indices = @transform_9, window_bounds = array<i64: 1, 64>}, {pipeline_mode = #tpu.pipeline_mode<synchronous>, transform_indices = @transform_10, window_bounds = array<i64: 1, 64>}, {pipeline_mode = #tpu.pipeline_mode<synchronous>, transform_indices = @transform_11, window_bounds = array<i64: 1, 64>}, {pipeline_mode = #tpu.pipeline_mode<synchronous>, transform_indices = @transform_12, window_bounds = array<i64: 1, 64>}, {pipeline_mode = #tpu.pipeline_mode<synchronous>, transform_indices = @transform_13, window_bounds = array<i64: 192, 128>}, {pipeline_mode = #tpu.pipeline_mode<synchronous>, transform_indices = @transform_14, window_bounds = array<i64: 1, 128>}, {pipeline_mode = #tpu.pipeline_mode<synchronous>, transform_indices = @transform_15, window_bounds = array<i64: 1, 128>}, {pipeline_mode = #tpu.pipeline_mode<synchronous>, transform_indices = @transform_16, window_bounds = array<i64: 1, 128>}, {pipeline_mode = #tpu.pipeline_mode<synchronous>, transform_indices = @transform_17, window_bounds = array<i64: 1, 128>}, {pipeline_mode = #tpu.pipeline_mode<synchronous>, transform_indices = @transform_18, window_bounds = array<i64: 1, 128>}, {pipeline_mode = #tpu.pipeline_mode<synchronous>, transform_indices = @transform_19, window_bounds = array<i64: 384, 256>}, {pipeline_mode = #tpu.pipeline_mode<synchronous>, transform_indices = @transform_20, window_bounds = array<i64: 1, 256>}, {pipeline_mode = #tpu.pipeline_mode<synchronous>, transform_indices = @transform_21, window_bounds = array<i64: 1, 256>}, {pipeline_mode = #tpu.pipeline_mode<synchronous>, transform_indices = @transform_22, window_bounds = array<i64: 1, 256>}, {pipeline_mode = #tpu.pipeline_mode<synchronous>, transform_indices = @transform_23, window_bounds = array<i64: 1, 256>}, {pipeline_mode = #tpu.pipeline_mode<synchronous>, transform_indices = @transform_24, window_bounds = array<i64: 1, 256>}, {pipeline_mode = #tpu.pipeline_mode<synchronous>, transform_indices = @transform_25, window_bounds = array<i64: 768, 512>}, {pipeline_mode = #tpu.pipeline_mode<synchronous>, transform_indices = @transform_26, window_bounds = array<i64: 1, 512>}, {pipeline_mode = #tpu.pipeline_mode<synchronous>, transform_indices = @transform_27, window_bounds = array<i64: 1, 512>}, {pipeline_mode = #tpu.pipeline_mode<synchronous>, transform_indices = @transform_28, window_bounds = array<i64: 1, 512>}, {pipeline_mode = #tpu.pipeline_mode<synchronous>, transform_indices = @transform_29, window_bounds = array<i64: 1, 512>}, {pipeline_mode = #tpu.pipeline_mode<synchronous>, transform_indices = @transform_30, window_bounds = array<i64: 1, 512>}, {transform_indices = @transform_31, window_bounds = array<i64: 8, 512>}, {transform_indices = @transform_32, window_bounds = array<i64: 1, 10, 512>}]} {
    %c0 = arith.constant 0 : index
    %c0_0 = arith.constant 0 : index
    %c0_1 = arith.constant 0 : index
    %0 = vector.load %arg1[%c0, %c0_0, %c0_1] : memref<2x54x2xf32, #tpu.memory_space<vmem>>, vector<2x54x2xf32>
    %1 = vector.shape_cast %0 : vector<2x54x2xf32> to vector<108x2xf32>
    %2 = vector.extract_strided_slice %1 {offsets = [1, 0], sizes = [107, 2], strides = [1, 1]} : vector<108x2xf32> to vector<107x2xf32>
    %3 = vector.extract_strided_slice %1 {offsets = [0, 0], sizes = [1, 2], strides = [1, 1]} : vector<108x2xf32> to vector<1x2xf32>
    %4 = tpu.concatenate %2, %3 in 0 : vector<107x2xf32>, vector<1x2xf32> -> vector<108x2xf32>
    %5 = vector.extract_strided_slice %1 {offsets = [2, 0], sizes = [106, 2], strides = [1, 1]} : vector<108x2xf32> to vector<106x2xf32>
    %6 = vector.extract_strided_slice %1 {offsets = [0, 0], sizes = [2, 2], strides = [1, 1]} : vector<108x2xf32> to vector<2x2xf32>
    %7 = tpu.concatenate %5, %6 in 0 : vector<106x2xf32>, vector<2x2xf32> -> vector<108x2xf32>
    %8 = vector.extract_strided_slice %1 {offsets = [3, 0], sizes = [105, 2], strides = [1, 1]} : vector<108x2xf32> to vector<105x2xf32>
    %9 = vector.extract_strided_slice %1 {offsets = [0, 0], sizes = [3, 2], strides = [1, 1]} : vector<108x2xf32> to vector<3x2xf32>
    %10 = tpu.concatenate %8, %9 in 0 : vector<105x2xf32>, vector<3x2xf32> -> vector<108x2xf32>
    %11 = vector.extract_strided_slice %1 {offsets = [4, 0], sizes = [104, 2], strides = [1, 1]} : vector<108x2xf32> to vector<104x2xf32>
    %12 = vector.extract_strided_slice %1 {offsets = [0, 0], sizes = [4, 2], strides = [1, 1]} : vector<108x2xf32> to vector<4x2xf32>
    %13 = tpu.concatenate %11, %12 in 0 : vector<104x2xf32>, vector<4x2xf32> -> vector<108x2xf32>
    %14 = vector.extract_strided_slice %1 {offsets = [5, 0], sizes = [103, 2], strides = [1, 1]} : vector<108x2xf32> to vector<103x2xf32>
    %15 = vector.extract_strided_slice %1 {offsets = [0, 0], sizes = [5, 2], strides = [1, 1]} : vector<108x2xf32> to vector<5x2xf32>
    %16 = tpu.concatenate %14, %15 in 0 : vector<103x2xf32>, vector<5x2xf32> -> vector<108x2xf32>
    %17 = vector.extract_strided_slice %1 {offsets = [6, 0], sizes = [102, 2], strides = [1, 1]} : vector<108x2xf32> to vector<102x2xf32>
    %18 = vector.extract_strided_slice %1 {offsets = [0, 0], sizes = [6, 2], strides = [1, 1]} : vector<108x2xf32> to vector<6x2xf32>
    %19 = tpu.concatenate %17, %18 in 0 : vector<102x2xf32>, vector<6x2xf32> -> vector<108x2xf32>
    %20 = tpu.concatenate %1, %4, %7, %10, %13, %16, %19 in 1 : vector<108x2xf32>, vector<108x2xf32>, vector<108x2xf32>, vector<108x2xf32>, vector<108x2xf32>, vector<108x2xf32>, vector<108x2xf32> -> vector<108x14xf32>
    %c0_2 = arith.constant 0 : index
    %c0_3 = arith.constant 0 : index
    %21 = vector.load %arg2[%c0_2, %c0_3] : memref<14x32xbf16, #tpu.memory_space<vmem>>, vector<14x32xbf16>
    %22 = arith.truncf %20 : vector<108x14xf32> to vector<108x14xbf16>
    %cst = arith.constant dense<0.000000e+00> : vector<108x32xf32>
    %23 = tpu.matmul %22, %21, %cst {dimension_numbers = #tpu.dot_dimension_numbers<[1], [0], [0], [1], [0, 0, 1, 1], [], []>} : vector<108x14xbf16>, vector<14x32xbf16>, vector<108x32xf32> -> vector<108x32xf32>
    %c0_4 = arith.constant 0 : index
    %c0_5 = arith.constant 0 : index
    %24 = vector.load %arg3[%c0_4, %c0_5] : memref<1x32xf32, #tpu.memory_space<vmem>>, vector<1x32xf32>
    %25 = vector.broadcast %24 : vector<1x32xf32> to vector<108x32xf32>
    %26 = arith.addf %23, %25 : vector<108x32xf32>
    %27 = vector.extract_strided_slice %26 {offsets = [0, 0], sizes = [48, 32], strides = [1, 1]} : vector<108x32xf32> to vector<48x32xf32>
    %28 = vector.extract_strided_slice %26 {offsets = [54, 0], sizes = [48, 32], strides = [1, 1]} : vector<108x32xf32> to vector<48x32xf32>
    %29 = tpu.concatenate %27, %28 in 0 : vector<48x32xf32>, vector<48x32xf32> -> vector<96x32xf32>
    %cst_6 = arith.constant dense<0.000000e+00> : vector<32xf32>
    %30 = vector.multi_reduction <add>, %29, %cst_6 [0] : vector<96x32xf32> to vector<32xf32>
    %31 = vector.shape_cast %30 : vector<32xf32> to vector<1x32xf32>
    %cst_7 = arith.constant 0.010416667 : f32
    %32 = vector.broadcast %cst_7 : f32 to vector<1x32xf32>
    %33 = arith.mulf %31, %32 : vector<1x32xf32>
    %34 = vector.broadcast %33 : vector<1x32xf32> to vector<96x32xf32>
    %35 = arith.subf %29, %34 : vector<96x32xf32>
    %36 = arith.mulf %35, %35 : vector<96x32xf32>
    %cst_8 = arith.constant dense<0.000000e+00> : vector<32xf32>
    %37 = vector.multi_reduction <add>, %36, %cst_8 [0] : vector<96x32xf32> to vector<32xf32>
    %38 = vector.shape_cast %37 : vector<32xf32> to vector<1x32xf32>
    %cst_9 = arith.constant 0.010416667 : f32
    %39 = vector.broadcast %cst_9 : f32 to vector<1x32xf32>
    %40 = arith.mulf %38, %39 : vector<1x32xf32>
    %cst_10 = arith.constant 0.000000e+00 : f32
    %41 = vector.broadcast %cst_10 : f32 to vector<1x480xf32>
    %42 = tpu.concatenate %33, %41 in 1 : vector<1x32xf32>, vector<1x480xf32> -> vector<1x512xf32>
    %cst_11 = arith.constant 0.000000e+00 : f32
    %43 = vector.broadcast %cst_11 : f32 to vector<1x480xf32>
    %44 = tpu.concatenate %40, %43 in 1 : vector<1x32xf32>, vector<1x480xf32> -> vector<1x512xf32>
    %45 = vector.broadcast %33 : vector<1x32xf32> to vector<96x32xf32>
    %46 = arith.subf %29, %45 : vector<96x32xf32>
    %cst_12 = arith.constant 9.99999974E-6 : f32
    %47 = vector.broadcast %cst_12 : f32 to vector<1x32xf32>
    %48 = arith.addf %40, %47 : vector<1x32xf32>
    %49 = math.rsqrt %48 : vector<1x32xf32>
    %50 = vector.broadcast %49 : vector<1x32xf32> to vector<96x32xf32>
    %51 = arith.mulf %46, %50 : vector<96x32xf32>
    %c0_13 = arith.constant 0 : index
    %c0_14 = arith.constant 0 : index
    %52 = vector.load %arg4[%c0_13, %c0_14] : memref<1x32xf32, #tpu.memory_space<vmem>>, vector<1x32xf32>
    %53 = vector.broadcast %52 : vector<1x32xf32> to vector<96x32xf32>
    %54 = arith.mulf %51, %53 : vector<96x32xf32>
    %c0_15 = arith.constant 0 : index
    %c0_16 = arith.constant 0 : index
    %55 = vector.load %arg5[%c0_15, %c0_16] : memref<1x32xf32, #tpu.memory_space<vmem>>, vector<1x32xf32>
    %56 = vector.broadcast %55 : vector<1x32xf32> to vector<96x32xf32>
    %57 = arith.addf %54, %56 : vector<96x32xf32>
    %cst_17 = arith.constant 0.000000e+00 : f32
    %58 = vector.broadcast %cst_17 : f32 to vector<96x32xf32>
    %59 = arith.maximumf %57, %58 : vector<96x32xf32>
    %60 = vector.shape_cast %59 : vector<96x32xf32> to vector<48x2x32xf32>
    %cst_18 = arith.constant dense<0xFF800000> : vector<48x32xf32>
    %61 = vector.multi_reduction <maximumf>, %60, %cst_18 [1] : vector<48x2x32xf32> to vector<48x32xf32>
    %62 = vector.extract_strided_slice %61 {offsets = [1, 0], sizes = [47, 32], strides = [1, 1]} : vector<48x32xf32> to vector<47x32xf32>
    %63 = vector.extract_strided_slice %61 {offsets = [0, 0], sizes = [1, 32], strides = [1, 1]} : vector<48x32xf32> to vector<1x32xf32>
    %64 = tpu.concatenate %62, %63 in 0 : vector<47x32xf32>, vector<1x32xf32> -> vector<48x32xf32>
    %65 = vector.extract_strided_slice %61 {offsets = [2, 0], sizes = [46, 32], strides = [1, 1]} : vector<48x32xf32> to vector<46x32xf32>
    %66 = vector.extract_strided_slice %61 {offsets = [0, 0], sizes = [2, 32], strides = [1, 1]} : vector<48x32xf32> to vector<2x32xf32>
    %67 = tpu.concatenate %65, %66 in 0 : vector<46x32xf32>, vector<2x32xf32> -> vector<48x32xf32>
    %68 = tpu.concatenate %61, %64, %67 in 1 : vector<48x32xf32>, vector<48x32xf32>, vector<48x32xf32> -> vector<48x96xf32>
    %c0_19 = arith.constant 0 : index
    %c0_20 = arith.constant 0 : index
    %69 = vector.load %arg8[%c0_19, %c0_20] : memref<96x64xbf16, #tpu.memory_space<vmem>>, vector<96x64xbf16>
    %70 = arith.truncf %68 : vector<48x96xf32> to vector<48x96xbf16>
    %cst_21 = arith.constant dense<0.000000e+00> : vector<48x64xf32>
    %71 = tpu.matmul %70, %69, %cst_21 {dimension_numbers = #tpu.dot_dimension_numbers<[1], [0], [0], [1], [0, 0, 1, 1], [], []>} : vector<48x96xbf16>, vector<96x64xbf16>, vector<48x64xf32> -> vector<48x64xf32>
    %c0_22 = arith.constant 0 : index
    %c0_23 = arith.constant 0 : index
    %72 = vector.load %arg9[%c0_22, %c0_23] : memref<1x64xf32, #tpu.memory_space<vmem>>, vector<1x64xf32>
    %73 = vector.broadcast %72 : vector<1x64xf32> to vector<48x64xf32>
    %74 = arith.addf %71, %73 : vector<48x64xf32>
    %75 = vector.extract_strided_slice %74 {offsets = [0, 0], sizes = [22, 64], strides = [1, 1]} : vector<48x64xf32> to vector<22x64xf32>
    %76 = vector.extract_strided_slice %74 {offsets = [24, 0], sizes = [22, 64], strides = [1, 1]} : vector<48x64xf32> to vector<22x64xf32>
    %77 = tpu.concatenate %75, %76 in 0 : vector<22x64xf32>, vector<22x64xf32> -> vector<44x64xf32>
    %cst_24 = arith.constant dense<0.000000e+00> : vector<64xf32>
    %78 = vector.multi_reduction <add>, %77, %cst_24 [0] : vector<44x64xf32> to vector<64xf32>
    %79 = vector.shape_cast %78 : vector<64xf32> to vector<1x64xf32>
    %cst_25 = arith.constant 0.0227272734 : f32
    %80 = vector.broadcast %cst_25 : f32 to vector<1x64xf32>
    %81 = arith.mulf %79, %80 : vector<1x64xf32>
    %82 = vector.broadcast %81 : vector<1x64xf32> to vector<44x64xf32>
    %83 = arith.subf %77, %82 : vector<44x64xf32>
    %84 = arith.mulf %83, %83 : vector<44x64xf32>
    %cst_26 = arith.constant dense<0.000000e+00> : vector<64xf32>
    %85 = vector.multi_reduction <add>, %84, %cst_26 [0] : vector<44x64xf32> to vector<64xf32>
    %86 = vector.shape_cast %85 : vector<64xf32> to vector<1x64xf32>
    %cst_27 = arith.constant 0.0227272734 : f32
    %87 = vector.broadcast %cst_27 : f32 to vector<1x64xf32>
    %88 = arith.mulf %86, %87 : vector<1x64xf32>
    %cst_28 = arith.constant 0.000000e+00 : f32
    %89 = vector.broadcast %cst_28 : f32 to vector<1x448xf32>
    %90 = tpu.concatenate %81, %89 in 1 : vector<1x64xf32>, vector<1x448xf32> -> vector<1x512xf32>
    %cst_29 = arith.constant 0.000000e+00 : f32
    %91 = vector.broadcast %cst_29 : f32 to vector<1x448xf32>
    %92 = tpu.concatenate %88, %91 in 1 : vector<1x64xf32>, vector<1x448xf32> -> vector<1x512xf32>
    %93 = vector.broadcast %81 : vector<1x64xf32> to vector<44x64xf32>
    %94 = arith.subf %77, %93 : vector<44x64xf32>
    %cst_30 = arith.constant 9.99999974E-6 : f32
    %95 = vector.broadcast %cst_30 : f32 to vector<1x64xf32>
    %96 = arith.addf %88, %95 : vector<1x64xf32>
    %97 = math.rsqrt %96 : vector<1x64xf32>
    %98 = vector.broadcast %97 : vector<1x64xf32> to vector<44x64xf32>
    %99 = arith.mulf %94, %98 : vector<44x64xf32>
    %c0_31 = arith.constant 0 : index
    %c0_32 = arith.constant 0 : index
    %100 = vector.load %arg10[%c0_31, %c0_32] : memref<1x64xf32, #tpu.memory_space<vmem>>, vector<1x64xf32>
    %101 = vector.broadcast %100 : vector<1x64xf32> to vector<44x64xf32>
    %102 = arith.mulf %99, %101 : vector<44x64xf32>
    %c0_33 = arith.constant 0 : index
    %c0_34 = arith.constant 0 : index
    %103 = vector.load %arg11[%c0_33, %c0_34] : memref<1x64xf32, #tpu.memory_space<vmem>>, vector<1x64xf32>
    %104 = vector.broadcast %103 : vector<1x64xf32> to vector<44x64xf32>
    %105 = arith.addf %102, %104 : vector<44x64xf32>
    %cst_35 = arith.constant 0.000000e+00 : f32
    %106 = vector.broadcast %cst_35 : f32 to vector<44x64xf32>
    %107 = arith.maximumf %105, %106 : vector<44x64xf32>
    %108 = vector.extract_strided_slice %107 {offsets = [1, 0], sizes = [43, 64], strides = [1, 1]} : vector<44x64xf32> to vector<43x64xf32>
    %109 = vector.extract_strided_slice %107 {offsets = [0, 0], sizes = [1, 64], strides = [1, 1]} : vector<44x64xf32> to vector<1x64xf32>
    %110 = tpu.concatenate %108, %109 in 0 : vector<43x64xf32>, vector<1x64xf32> -> vector<44x64xf32>
    %111 = vector.extract_strided_slice %107 {offsets = [2, 0], sizes = [42, 64], strides = [1, 1]} : vector<44x64xf32> to vector<42x64xf32>
    %112 = vector.extract_strided_slice %107 {offsets = [0, 0], sizes = [2, 64], strides = [1, 1]} : vector<44x64xf32> to vector<2x64xf32>
    %113 = tpu.concatenate %111, %112 in 0 : vector<42x64xf32>, vector<2x64xf32> -> vector<44x64xf32>
    %114 = tpu.concatenate %107, %110, %113 in 1 : vector<44x64xf32>, vector<44x64xf32>, vector<44x64xf32> -> vector<44x192xf32>
    %c0_36 = arith.constant 0 : index
    %c0_37 = arith.constant 0 : index
    %115 = vector.load %arg14[%c0_36, %c0_37] : memref<192x128xbf16, #tpu.memory_space<vmem>>, vector<192x128xbf16>
    %116 = arith.truncf %114 : vector<44x192xf32> to vector<44x192xbf16>
    %cst_38 = arith.constant dense<0.000000e+00> : vector<44x128xf32>
    %117 = tpu.matmul %116, %115, %cst_38 {dimension_numbers = #tpu.dot_dimension_numbers<[1], [0], [0], [1], [0, 0, 1, 1], [], []>} : vector<44x192xbf16>, vector<192x128xbf16>, vector<44x128xf32> -> vector<44x128xf32>
    %c0_39 = arith.constant 0 : index
    %c0_40 = arith.constant 0 : index
    %118 = vector.load %arg15[%c0_39, %c0_40] : memref<1x128xf32, #tpu.memory_space<vmem>>, vector<1x128xf32>
    %119 = vector.broadcast %118 : vector<1x128xf32> to vector<44x128xf32>
    %120 = arith.addf %117, %119 : vector<44x128xf32>
    %121 = vector.extract_strided_slice %120 {offsets = [0, 0], sizes = [20, 128], strides = [1, 1]} : vector<44x128xf32> to vector<20x128xf32>
    %122 = vector.extract_strided_slice %120 {offsets = [22, 0], sizes = [20, 128], strides = [1, 1]} : vector<44x128xf32> to vector<20x128xf32>
    %123 = tpu.concatenate %121, %122 in 0 : vector<20x128xf32>, vector<20x128xf32> -> vector<40x128xf32>
    %cst_41 = arith.constant dense<0.000000e+00> : vector<128xf32>
    %124 = vector.multi_reduction <add>, %123, %cst_41 [0] : vector<40x128xf32> to vector<128xf32>
    %125 = vector.shape_cast %124 : vector<128xf32> to vector<1x128xf32>
    %cst_42 = arith.constant 2.500000e-02 : f32
    %126 = vector.broadcast %cst_42 : f32 to vector<1x128xf32>
    %127 = arith.mulf %125, %126 : vector<1x128xf32>
    %128 = vector.broadcast %127 : vector<1x128xf32> to vector<40x128xf32>
    %129 = arith.subf %123, %128 : vector<40x128xf32>
    %130 = arith.mulf %129, %129 : vector<40x128xf32>
    %cst_43 = arith.constant dense<0.000000e+00> : vector<128xf32>
    %131 = vector.multi_reduction <add>, %130, %cst_43 [0] : vector<40x128xf32> to vector<128xf32>
    %132 = vector.shape_cast %131 : vector<128xf32> to vector<1x128xf32>
    %cst_44 = arith.constant 2.500000e-02 : f32
    %133 = vector.broadcast %cst_44 : f32 to vector<1x128xf32>
    %134 = arith.mulf %132, %133 : vector<1x128xf32>
    %cst_45 = arith.constant 0.000000e+00 : f32
    %135 = vector.broadcast %cst_45 : f32 to vector<1x384xf32>
    %136 = tpu.concatenate %127, %135 in 1 : vector<1x128xf32>, vector<1x384xf32> -> vector<1x512xf32>
    %cst_46 = arith.constant 0.000000e+00 : f32
    %137 = vector.broadcast %cst_46 : f32 to vector<1x384xf32>
    %138 = tpu.concatenate %134, %137 in 1 : vector<1x128xf32>, vector<1x384xf32> -> vector<1x512xf32>
    %139 = vector.broadcast %127 : vector<1x128xf32> to vector<40x128xf32>
    %140 = arith.subf %123, %139 : vector<40x128xf32>
    %cst_47 = arith.constant 9.99999974E-6 : f32
    %141 = vector.broadcast %cst_47 : f32 to vector<1x128xf32>
    %142 = arith.addf %134, %141 : vector<1x128xf32>
    %143 = math.rsqrt %142 : vector<1x128xf32>
    %144 = vector.broadcast %143 : vector<1x128xf32> to vector<40x128xf32>
    %145 = arith.mulf %140, %144 : vector<40x128xf32>
    %c0_48 = arith.constant 0 : index
    %c0_49 = arith.constant 0 : index
    %146 = vector.load %arg16[%c0_48, %c0_49] : memref<1x128xf32, #tpu.memory_space<vmem>>, vector<1x128xf32>
    %147 = vector.broadcast %146 : vector<1x128xf32> to vector<40x128xf32>
    %148 = arith.mulf %145, %147 : vector<40x128xf32>
    %c0_50 = arith.constant 0 : index
    %c0_51 = arith.constant 0 : index
    %149 = vector.load %arg17[%c0_50, %c0_51] : memref<1x128xf32, #tpu.memory_space<vmem>>, vector<1x128xf32>
    %150 = vector.broadcast %149 : vector<1x128xf32> to vector<40x128xf32>
    %151 = arith.addf %148, %150 : vector<40x128xf32>
    %cst_52 = arith.constant 0.000000e+00 : f32
    %152 = vector.broadcast %cst_52 : f32 to vector<40x128xf32>
    %153 = arith.maximumf %151, %152 : vector<40x128xf32>
    %154 = vector.extract_strided_slice %153 {offsets = [1, 0], sizes = [39, 128], strides = [1, 1]} : vector<40x128xf32> to vector<39x128xf32>
    %155 = vector.extract_strided_slice %153 {offsets = [0, 0], sizes = [1, 128], strides = [1, 1]} : vector<40x128xf32> to vector<1x128xf32>
    %156 = tpu.concatenate %154, %155 in 0 : vector<39x128xf32>, vector<1x128xf32> -> vector<40x128xf32>
    %157 = vector.extract_strided_slice %153 {offsets = [2, 0], sizes = [38, 128], strides = [1, 1]} : vector<40x128xf32> to vector<38x128xf32>
    %158 = vector.extract_strided_slice %153 {offsets = [0, 0], sizes = [2, 128], strides = [1, 1]} : vector<40x128xf32> to vector<2x128xf32>
    %159 = tpu.concatenate %157, %158 in 0 : vector<38x128xf32>, vector<2x128xf32> -> vector<40x128xf32>
    %160 = tpu.concatenate %153, %156, %159 in 1 : vector<40x128xf32>, vector<40x128xf32>, vector<40x128xf32> -> vector<40x384xf32>
    %c0_53 = arith.constant 0 : index
    %c0_54 = arith.constant 0 : index
    %161 = vector.load %arg20[%c0_53, %c0_54] : memref<384x256xbf16, #tpu.memory_space<vmem>>, vector<384x256xbf16>
    %162 = arith.truncf %160 : vector<40x384xf32> to vector<40x384xbf16>
    %cst_55 = arith.constant dense<0.000000e+00> : vector<40x256xf32>
    %163 = tpu.matmul %162, %161, %cst_55 {dimension_numbers = #tpu.dot_dimension_numbers<[1], [0], [0], [1], [0, 0, 1, 1], [], []>} : vector<40x384xbf16>, vector<384x256xbf16>, vector<40x256xf32> -> vector<40x256xf32>
    %c0_56 = arith.constant 0 : index
    %c0_57 = arith.constant 0 : index
    %164 = vector.load %arg21[%c0_56, %c0_57] : memref<1x256xf32, #tpu.memory_space<vmem>>, vector<1x256xf32>
    %165 = vector.broadcast %164 : vector<1x256xf32> to vector<40x256xf32>
    %166 = arith.addf %163, %165 : vector<40x256xf32>
    %167 = vector.extract_strided_slice %166 {offsets = [0, 0], sizes = [18, 256], strides = [1, 1]} : vector<40x256xf32> to vector<18x256xf32>
    %168 = vector.extract_strided_slice %166 {offsets = [20, 0], sizes = [18, 256], strides = [1, 1]} : vector<40x256xf32> to vector<18x256xf32>
    %169 = tpu.concatenate %167, %168 in 0 : vector<18x256xf32>, vector<18x256xf32> -> vector<36x256xf32>
    %cst_58 = arith.constant dense<0.000000e+00> : vector<256xf32>
    %170 = vector.multi_reduction <add>, %169, %cst_58 [0] : vector<36x256xf32> to vector<256xf32>
    %171 = vector.shape_cast %170 : vector<256xf32> to vector<1x256xf32>
    %cst_59 = arith.constant 0.027777778 : f32
    %172 = vector.broadcast %cst_59 : f32 to vector<1x256xf32>
    %173 = arith.mulf %171, %172 : vector<1x256xf32>
    %174 = vector.broadcast %173 : vector<1x256xf32> to vector<36x256xf32>
    %175 = arith.subf %169, %174 : vector<36x256xf32>
    %176 = arith.mulf %175, %175 : vector<36x256xf32>
    %cst_60 = arith.constant dense<0.000000e+00> : vector<256xf32>
    %177 = vector.multi_reduction <add>, %176, %cst_60 [0] : vector<36x256xf32> to vector<256xf32>
    %178 = vector.shape_cast %177 : vector<256xf32> to vector<1x256xf32>
    %cst_61 = arith.constant 0.027777778 : f32
    %179 = vector.broadcast %cst_61 : f32 to vector<1x256xf32>
    %180 = arith.mulf %178, %179 : vector<1x256xf32>
    %cst_62 = arith.constant 0.000000e+00 : f32
    %181 = vector.broadcast %cst_62 : f32 to vector<1x256xf32>
    %182 = tpu.concatenate %173, %181 in 1 : vector<1x256xf32>, vector<1x256xf32> -> vector<1x512xf32>
    %cst_63 = arith.constant 0.000000e+00 : f32
    %183 = vector.broadcast %cst_63 : f32 to vector<1x256xf32>
    %184 = tpu.concatenate %180, %183 in 1 : vector<1x256xf32>, vector<1x256xf32> -> vector<1x512xf32>
    %185 = vector.broadcast %173 : vector<1x256xf32> to vector<36x256xf32>
    %186 = arith.subf %169, %185 : vector<36x256xf32>
    %cst_64 = arith.constant 9.99999974E-6 : f32
    %187 = vector.broadcast %cst_64 : f32 to vector<1x256xf32>
    %188 = arith.addf %180, %187 : vector<1x256xf32>
    %189 = math.rsqrt %188 : vector<1x256xf32>
    %190 = vector.broadcast %189 : vector<1x256xf32> to vector<36x256xf32>
    %191 = arith.mulf %186, %190 : vector<36x256xf32>
    %c0_65 = arith.constant 0 : index
    %c0_66 = arith.constant 0 : index
    %192 = vector.load %arg22[%c0_65, %c0_66] : memref<1x256xf32, #tpu.memory_space<vmem>>, vector<1x256xf32>
    %193 = vector.broadcast %192 : vector<1x256xf32> to vector<36x256xf32>
    %194 = arith.mulf %191, %193 : vector<36x256xf32>
    %c0_67 = arith.constant 0 : index
    %c0_68 = arith.constant 0 : index
    %195 = vector.load %arg23[%c0_67, %c0_68] : memref<1x256xf32, #tpu.memory_space<vmem>>, vector<1x256xf32>
    %196 = vector.broadcast %195 : vector<1x256xf32> to vector<36x256xf32>
    %197 = arith.addf %194, %196 : vector<36x256xf32>
    %cst_69 = arith.constant 0.000000e+00 : f32
    %198 = vector.broadcast %cst_69 : f32 to vector<36x256xf32>
    %199 = arith.maximumf %197, %198 : vector<36x256xf32>
    %200 = vector.extract_strided_slice %199 {offsets = [1, 0], sizes = [35, 256], strides = [1, 1]} : vector<36x256xf32> to vector<35x256xf32>
    %201 = vector.extract_strided_slice %199 {offsets = [0, 0], sizes = [1, 256], strides = [1, 1]} : vector<36x256xf32> to vector<1x256xf32>
    %202 = tpu.concatenate %200, %201 in 0 : vector<35x256xf32>, vector<1x256xf32> -> vector<36x256xf32>
    %203 = vector.extract_strided_slice %199 {offsets = [2, 0], sizes = [34, 256], strides = [1, 1]} : vector<36x256xf32> to vector<34x256xf32>
    %204 = vector.extract_strided_slice %199 {offsets = [0, 0], sizes = [2, 256], strides = [1, 1]} : vector<36x256xf32> to vector<2x256xf32>
    %205 = tpu.concatenate %203, %204 in 0 : vector<34x256xf32>, vector<2x256xf32> -> vector<36x256xf32>
    %206 = tpu.concatenate %199, %202, %205 in 1 : vector<36x256xf32>, vector<36x256xf32>, vector<36x256xf32> -> vector<36x768xf32>
    %c0_70 = arith.constant 0 : index
    %c0_71 = arith.constant 0 : index
    %207 = vector.load %arg26[%c0_70, %c0_71] : memref<768x512xbf16, #tpu.memory_space<vmem>>, vector<768x512xbf16>
    %208 = arith.truncf %206 : vector<36x768xf32> to vector<36x768xbf16>
    %cst_72 = arith.constant dense<0.000000e+00> : vector<36x512xf32>
    %209 = tpu.matmul %208, %207, %cst_72 {dimension_numbers = #tpu.dot_dimension_numbers<[1], [0], [0], [1], [0, 0, 1, 1], [], []>} : vector<36x768xbf16>, vector<768x512xbf16>, vector<36x512xf32> -> vector<36x512xf32>
    %c0_73 = arith.constant 0 : index
    %c0_74 = arith.constant 0 : index
    %210 = vector.load %arg27[%c0_73, %c0_74] : memref<1x512xf32, #tpu.memory_space<vmem>>, vector<1x512xf32>
    %211 = vector.broadcast %210 : vector<1x512xf32> to vector<36x512xf32>
    %212 = arith.addf %209, %211 : vector<36x512xf32>
    %213 = vector.extract_strided_slice %212 {offsets = [0, 0], sizes = [16, 512], strides = [1, 1]} : vector<36x512xf32> to vector<16x512xf32>
    %214 = vector.extract_strided_slice %212 {offsets = [18, 0], sizes = [16, 512], strides = [1, 1]} : vector<36x512xf32> to vector<16x512xf32>
    %215 = tpu.concatenate %213, %214 in 0 : vector<16x512xf32>, vector<16x512xf32> -> vector<32x512xf32>
    %cst_75 = arith.constant dense<0.000000e+00> : vector<512xf32>
    %216 = vector.multi_reduction <add>, %215, %cst_75 [0] : vector<32x512xf32> to vector<512xf32>
    %217 = vector.shape_cast %216 : vector<512xf32> to vector<1x512xf32>
    %cst_76 = arith.constant 3.125000e-02 : f32
    %218 = vector.broadcast %cst_76 : f32 to vector<1x512xf32>
    %219 = arith.mulf %217, %218 : vector<1x512xf32>
    %220 = vector.broadcast %219 : vector<1x512xf32> to vector<32x512xf32>
    %221 = arith.subf %215, %220 : vector<32x512xf32>
    %222 = arith.mulf %221, %221 : vector<32x512xf32>
    %cst_77 = arith.constant dense<0.000000e+00> : vector<512xf32>
    %223 = vector.multi_reduction <add>, %222, %cst_77 [0] : vector<32x512xf32> to vector<512xf32>
    %224 = vector.shape_cast %223 : vector<512xf32> to vector<1x512xf32>
    %cst_78 = arith.constant 3.125000e-02 : f32
    %225 = vector.broadcast %cst_78 : f32 to vector<1x512xf32>
    %226 = arith.mulf %224, %225 : vector<1x512xf32>
    %227 = vector.broadcast %219 : vector<1x512xf32> to vector<32x512xf32>
    %228 = arith.subf %215, %227 : vector<32x512xf32>
    %cst_79 = arith.constant 9.99999974E-6 : f32
    %229 = vector.broadcast %cst_79 : f32 to vector<1x512xf32>
    %230 = arith.addf %226, %229 : vector<1x512xf32>
    %231 = math.rsqrt %230 : vector<1x512xf32>
    %232 = vector.broadcast %231 : vector<1x512xf32> to vector<32x512xf32>
    %233 = arith.mulf %228, %232 : vector<32x512xf32>
    %c0_80 = arith.constant 0 : index
    %c0_81 = arith.constant 0 : index
    %234 = vector.load %arg28[%c0_80, %c0_81] : memref<1x512xf32, #tpu.memory_space<vmem>>, vector<1x512xf32>
    %235 = vector.broadcast %234 : vector<1x512xf32> to vector<32x512xf32>
    %236 = arith.mulf %233, %235 : vector<32x512xf32>
    %c0_82 = arith.constant 0 : index
    %c0_83 = arith.constant 0 : index
    %237 = vector.load %arg29[%c0_82, %c0_83] : memref<1x512xf32, #tpu.memory_space<vmem>>, vector<1x512xf32>
    %238 = vector.broadcast %237 : vector<1x512xf32> to vector<32x512xf32>
    %239 = arith.addf %236, %238 : vector<32x512xf32>
    %cst_84 = arith.constant 0.000000e+00 : f32
    %240 = vector.broadcast %cst_84 : f32 to vector<32x512xf32>
    %241 = arith.maximumf %239, %240 : vector<32x512xf32>
    %242 = vector.shape_cast %241 : vector<32x512xf32> to vector<8x4x512xf32>
    %cst_85 = arith.constant dense<0xFF800000> : vector<8x512xf32>
    %243 = vector.multi_reduction <maximumf>, %242, %cst_85 [1] : vector<8x4x512xf32> to vector<8x512xf32>
    %c0_86 = arith.constant 0 : index
    %c0_87 = arith.constant 0 : index
    %244 = vector.load %arg32[%c0_86, %c0_87] : memref<8x512xf32, #tpu.memory_space<vmem>>, vector<8x512xf32>
    tpu.vector_store %arg32[%c0_86, %c0_87], %243 {strides = array<i32>} : memref<8x512xf32, #tpu.memory_space<vmem>>, vector<8x512xf32>,
    %245 = tpu.concatenate %42, %44, %90, %92, %136, %138, %182, %184, %219, %226 in 0 : vector<1x512xf32>, vector<1x512xf32>, vector<1x512xf32>, vector<1x512xf32>, vector<1x512xf32>, vector<1x512xf32>, vector<1x512xf32>, vector<1x512xf32>, vector<1x512xf32>, vector<1x512xf32> -> vector<10x512xf32>
    %c0_88 = arith.constant 0 : index
    %c0_89 = arith.constant 0 : index
    %c0_90 = arith.constant 0 : index
    %246 = vector.load %arg33[%c0_88, %c0_89, %c0_90] : memref<1x10x512xf32, #tpu.memory_space<vmem>>, vector<1x10x512xf32>
    %247 = vector.shape_cast %246 : vector<1x10x512xf32> to vector<10x512xf32>
    %248 = vector.shape_cast %245 : vector<10x512xf32> to vector<1x10x512xf32>
    tpu.vector_store %arg33[%c0_88, %c0_89, %c0_90], %248 {strides = array<i32>} : memref<1x10x512xf32, #tpu.memory_space<vmem>>, vector<1x10x512xf32>,
    return
  }
  func.func @transform_0(%arg0: i32) -> (i32, i32, i32) {
    %c0_i32 = arith.constant 0 : i32
    %c0_i32_0 = arith.constant 0 : i32
    %c0_i32_1 = arith.constant 0 : i32
    return %arg0, %c0_i32, %c0_i32_0 : i32, i32, i32
  }
  func.func @transform_1(%arg0: i32) -> (i32, i32) {
    %c0_i32 = arith.constant 0 : i32
    %c0_i32_0 = arith.constant 0 : i32
    %c0_i32_1 = arith.constant 0 : i32
    return %c0_i32, %c0_i32_0 : i32, i32
  }
  func.func @transform_2(%arg0: i32) -> (i32, i32) {
    %c0_i32 = arith.constant 0 : i32
    %c0_i32_0 = arith.constant 0 : i32
    %c0_i32_1 = arith.constant 0 : i32
    return %c0_i32, %c0_i32_0 : i32, i32
  }
  func.func @transform_3(%arg0: i32) -> (i32, i32) {
    %c0_i32 = arith.constant 0 : i32
    %c0_i32_0 = arith.constant 0 : i32
    %c0_i32_1 = arith.constant 0 : i32
    return %c0_i32, %c0_i32_0 : i32, i32
  }
  func.func @transform_4(%arg0: i32) -> (i32, i32) {
    %c0_i32 = arith.constant 0 : i32
    %c0_i32_0 = arith.constant 0 : i32
    %c0_i32_1 = arith.constant 0 : i32
    return %c0_i32, %c0_i32_0 : i32, i32
  }
  func.func @transform_5(%arg0: i32) -> (i32, i32) {
    %c0_i32 = arith.constant 0 : i32
    %c0_i32_0 = arith.constant 0 : i32
    %c0_i32_1 = arith.constant 0 : i32
    return %c0_i32, %c0_i32_0 : i32, i32
  }
  func.func @transform_6(%arg0: i32) -> (i32, i32) {
    %c0_i32 = arith.constant 0 : i32
    %c0_i32_0 = arith.constant 0 : i32
    %c0_i32_1 = arith.constant 0 : i32
    return %c0_i32, %c0_i32_0 : i32, i32
  }
  func.func @transform_7(%arg0: i32) -> (i32, i32) {
    %c0_i32 = arith.constant 0 : i32
    %c0_i32_0 = arith.constant 0 : i32
    %c0_i32_1 = arith.constant 0 : i32
    return %c0_i32, %c0_i32_0 : i32, i32
  }
  func.func @transform_8(%arg0: i32) -> (i32, i32) {
    %c0_i32 = arith.constant 0 : i32
    %c0_i32_0 = arith.constant 0 : i32
    %c0_i32_1 = arith.constant 0 : i32
    return %c0_i32, %c0_i32_0 : i32, i32
  }
  func.func @transform_9(%arg0: i32) -> (i32, i32) {
    %c0_i32 = arith.constant 0 : i32
    %c0_i32_0 = arith.constant 0 : i32
    %c0_i32_1 = arith.constant 0 : i32
    return %c0_i32, %c0_i32_0 : i32, i32
  }
  func.func @transform_10(%arg0: i32) -> (i32, i32) {
    %c0_i32 = arith.constant 0 : i32
    %c0_i32_0 = arith.constant 0 : i32
    %c0_i32_1 = arith.constant 0 : i32
    return %c0_i32, %c0_i32_0 : i32, i32
  }
  func.func @transform_11(%arg0: i32) -> (i32, i32) {
    %c0_i32 = arith.constant 0 : i32
    %c0_i32_0 = arith.constant 0 : i32
    %c0_i32_1 = arith.constant 0 : i32
    return %c0_i32, %c0_i32_0 : i32, i32
  }
  func.func @transform_12(%arg0: i32) -> (i32, i32) {
    %c0_i32 = arith.constant 0 : i32
    %c0_i32_0 = arith.constant 0 : i32
    %c0_i32_1 = arith.constant 0 : i32
    return %c0_i32, %c0_i32_0 : i32, i32
  }
  func.func @transform_13(%arg0: i32) -> (i32, i32) {
    %c0_i32 = arith.constant 0 : i32
    %c0_i32_0 = arith.constant 0 : i32
    %c0_i32_1 = arith.constant 0 : i32
    return %c0_i32, %c0_i32_0 : i32, i32
  }
  func.func @transform_14(%arg0: i32) -> (i32, i32) {
    %c0_i32 = arith.constant 0 : i32
    %c0_i32_0 = arith.constant 0 : i32
    %c0_i32_1 = arith.constant 0 : i32
    return %c0_i32, %c0_i32_0 : i32, i32
  }
  func.func @transform_15(%arg0: i32) -> (i32, i32) {
    %c0_i32 = arith.constant 0 : i32
    %c0_i32_0 = arith.constant 0 : i32
    %c0_i32_1 = arith.constant 0 : i32
    return %c0_i32, %c0_i32_0 : i32, i32
  }
  func.func @transform_16(%arg0: i32) -> (i32, i32) {
    %c0_i32 = arith.constant 0 : i32
    %c0_i32_0 = arith.constant 0 : i32
    %c0_i32_1 = arith.constant 0 : i32
    return %c0_i32, %c0_i32_0 : i32, i32
  }
  func.func @transform_17(%arg0: i32) -> (i32, i32) {
    %c0_i32 = arith.constant 0 : i32
    %c0_i32_0 = arith.constant 0 : i32
    %c0_i32_1 = arith.constant 0 : i32
    return %c0_i32, %c0_i32_0 : i32, i32
  }
  func.func @transform_18(%arg0: i32) -> (i32, i32) {
    %c0_i32 = arith.constant 0 : i32
    %c0_i32_0 = arith.constant 0 : i32
    %c0_i32_1 = arith.constant 0 : i32
    return %c0_i32, %c0_i32_0 : i32, i32
  }
  func.func @transform_19(%arg0: i32) -> (i32, i32) {
    %c0_i32 = arith.constant 0 : i32
    %c0_i32_0 = arith.constant 0 : i32
    %c0_i32_1 = arith.constant 0 : i32
    return %c0_i32, %c0_i32_0 : i32, i32
  }
  func.func @transform_20(%arg0: i32) -> (i32, i32) {
    %c0_i32 = arith.constant 0 : i32
    %c0_i32_0 = arith.constant 0 : i32
    %c0_i32_1 = arith.constant 0 : i32
    return %c0_i32, %c0_i32_0 : i32, i32
  }
  func.func @transform_21(%arg0: i32) -> (i32, i32) {
    %c0_i32 = arith.constant 0 : i32
    %c0_i32_0 = arith.constant 0 : i32
    %c0_i32_1 = arith.constant 0 : i32
    return %c0_i32, %c0_i32_0 : i32, i32
  }
  func.func @transform_22(%arg0: i32) -> (i32, i32) {
    %c0_i32 = arith.constant 0 : i32
    %c0_i32_0 = arith.constant 0 : i32
    %c0_i32_1 = arith.constant 0 : i32
    return %c0_i32, %c0_i32_0 : i32, i32
  }
  func.func @transform_23(%arg0: i32) -> (i32, i32) {
    %c0_i32 = arith.constant 0 : i32
    %c0_i32_0 = arith.constant 0 : i32
    %c0_i32_1 = arith.constant 0 : i32
    return %c0_i32, %c0_i32_0 : i32, i32
  }
  func.func @transform_24(%arg0: i32) -> (i32, i32) {
    %c0_i32 = arith.constant 0 : i32
    %c0_i32_0 = arith.constant 0 : i32
    %c0_i32_1 = arith.constant 0 : i32
    return %c0_i32, %c0_i32_0 : i32, i32
  }
  func.func @transform_25(%arg0: i32) -> (i32, i32) {
    %c0_i32 = arith.constant 0 : i32
    %c0_i32_0 = arith.constant 0 : i32
    %c0_i32_1 = arith.constant 0 : i32
    return %c0_i32, %c0_i32_0 : i32, i32
  }
  func.func @transform_26(%arg0: i32) -> (i32, i32) {
    %c0_i32 = arith.constant 0 : i32
    %c0_i32_0 = arith.constant 0 : i32
    %c0_i32_1 = arith.constant 0 : i32
    return %c0_i32, %c0_i32_0 : i32, i32
  }
  func.func @transform_27(%arg0: i32) -> (i32, i32) {
    %c0_i32 = arith.constant 0 : i32
    %c0_i32_0 = arith.constant 0 : i32
    %c0_i32_1 = arith.constant 0 : i32
    return %c0_i32, %c0_i32_0 : i32, i32
  }
  func.func @transform_28(%arg0: i32) -> (i32, i32) {
    %c0_i32 = arith.constant 0 : i32
    %c0_i32_0 = arith.constant 0 : i32
    %c0_i32_1 = arith.constant 0 : i32
    return %c0_i32, %c0_i32_0 : i32, i32
  }
  func.func @transform_29(%arg0: i32) -> (i32, i32) {
    %c0_i32 = arith.constant 0 : i32
    %c0_i32_0 = arith.constant 0 : i32
    %c0_i32_1 = arith.constant 0 : i32
    return %c0_i32, %c0_i32_0 : i32, i32
  }
  func.func @transform_30(%arg0: i32) -> (i32, i32) {
    %c0_i32 = arith.constant 0 : i32
    %c0_i32_0 = arith.constant 0 : i32
    %c0_i32_1 = arith.constant 0 : i32
    return %c0_i32, %c0_i32_0 : i32, i32
  }
  func.func @transform_31(%arg0: i32) -> (i32, i32) {
    %c0_i32 = arith.constant 0 : i32
    %c0_i32_0 = arith.constant 0 : i32
    return %arg0, %c0_i32 : i32, i32
  }
  func.func @transform_32(%arg0: i32) -> (i32, i32, i32) {
    %c0_i32 = arith.constant 0 : i32
    %c0_i32_0 = arith.constant 0 : i32
    %c0_i32_1 = arith.constant 0 : i32
    return %arg0, %c0_i32, %c0_i32_0 : i32, i32, i32
  }
}

module attributes {stable_mosaic.version = 11 : i64} {
  func.func @head_kernel(%arg0: memref<4x2048xf32, #tpu.memory_space<vmem>>, %arg1: memref<2048x256xbf16, #tpu.memory_space<vmem>>, %arg2: memref<1x256xf32, #tpu.memory_space<vmem>>, %arg3: memref<256x64xbf16, #tpu.memory_space<vmem>>, %arg4: memref<1x64xf32, #tpu.memory_space<vmem>>, %arg5: memref<64x128xbf16, #tpu.memory_space<vmem>>, %arg6: memref<1x128xf32, #tpu.memory_space<vmem>>, %arg7: memref<4x4xf32, #tpu.memory_space<vmem>>, %arg8: memref<4x128xf32, #tpu.memory_space<vmem>>, %arg9: memref<1x128xf32, #tpu.memory_space<vmem>>) attributes {dimension_semantics = [], scalar_prefetch = 0 : i64, scratch_operands = 0 : i64, tpu.core_type = #tpu.core_type<tc>} {
    %c0 = arith.constant 0 : index
    %c0_0 = arith.constant 0 : index
    %0 = vector.load %arg0[%c0, %c0_0] : memref<4x2048xf32, #tpu.memory_space<vmem>>, vector<4x2048xf32>
    %c0_1 = arith.constant 0 : index
    %c0_2 = arith.constant 0 : index
    %1 = vector.load %arg1[%c0_1, %c0_2] : memref<2048x256xbf16, #tpu.memory_space<vmem>>, vector<2048x256xbf16>
    %2 = arith.truncf %0 : vector<4x2048xf32> to vector<4x2048xbf16>
    %cst = arith.constant dense<0.000000e+00> : vector<4x256xf32>
    %3 = tpu.matmul %2, %1, %cst {dimension_numbers = #tpu.dot_dimension_numbers<[1], [0], [0], [1], [0, 0, 1, 1], [], []>} : vector<4x2048xbf16>, vector<2048x256xbf16>, vector<4x256xf32> -> vector<4x256xf32>
    %c0_3 = arith.constant 0 : index
    %c0_4 = arith.constant 0 : index
    %4 = vector.load %arg2[%c0_3, %c0_4] : memref<1x256xf32, #tpu.memory_space<vmem>>, vector<1x256xf32>
    %5 = vector.broadcast %4 : vector<1x256xf32> to vector<4x256xf32>
    %6 = arith.addf %3, %5 : vector<4x256xf32>
    %cst_5 = arith.constant 0.000000e+00 : f32
    %7 = vector.broadcast %cst_5 : f32 to vector<4x256xf32>
    %8 = arith.maximumf %6, %7 : vector<4x256xf32>
    %c0_6 = arith.constant 0 : index
    %c0_7 = arith.constant 0 : index
    %9 = vector.load %arg3[%c0_6, %c0_7] : memref<256x64xbf16, #tpu.memory_space<vmem>>, vector<256x64xbf16>
    %10 = arith.truncf %8 : vector<4x256xf32> to vector<4x256xbf16>
    %cst_8 = arith.constant dense<0.000000e+00> : vector<4x64xf32>
    %11 = tpu.matmul %10, %9, %cst_8 {dimension_numbers = #tpu.dot_dimension_numbers<[1], [0], [0], [1], [0, 0, 1, 1], [], []>} : vector<4x256xbf16>, vector<256x64xbf16>, vector<4x64xf32> -> vector<4x64xf32>
    %c0_9 = arith.constant 0 : index
    %c0_10 = arith.constant 0 : index
    %12 = vector.load %arg4[%c0_9, %c0_10] : memref<1x64xf32, #tpu.memory_space<vmem>>, vector<1x64xf32>
    %13 = vector.broadcast %12 : vector<1x64xf32> to vector<4x64xf32>
    %14 = arith.addf %11, %13 : vector<4x64xf32>
    %cst_11 = arith.constant 0.000000e+00 : f32
    %15 = vector.broadcast %cst_11 : f32 to vector<4x64xf32>
    %16 = arith.maximumf %14, %15 : vector<4x64xf32>
    %c0_12 = arith.constant 0 : index
    %c0_13 = arith.constant 0 : index
    %17 = vector.load %arg5[%c0_12, %c0_13] : memref<64x128xbf16, #tpu.memory_space<vmem>>, vector<64x128xbf16>
    %18 = arith.truncf %16 : vector<4x64xf32> to vector<4x64xbf16>
    %cst_14 = arith.constant dense<0.000000e+00> : vector<4x128xf32>
    %19 = tpu.matmul %18, %17, %cst_14 {dimension_numbers = #tpu.dot_dimension_numbers<[1], [0], [0], [1], [0, 0, 1, 1], [], []>} : vector<4x64xbf16>, vector<64x128xbf16>, vector<4x128xf32> -> vector<4x128xf32>
    %c0_15 = arith.constant 0 : index
    %c0_16 = arith.constant 0 : index
    %20 = vector.load %arg6[%c0_15, %c0_16] : memref<1x128xf32, #tpu.memory_space<vmem>>, vector<1x128xf32>
    %21 = vector.broadcast %20 : vector<1x128xf32> to vector<4x128xf32>
    %22 = arith.addf %19, %21 : vector<4x128xf32>
    %c0_17 = arith.constant 0 : index
    %c0_18 = arith.constant 0 : index
    %23 = vector.load %arg8[%c0_17, %c0_18] : memref<4x128xf32, #tpu.memory_space<vmem>>, vector<4x128xf32>
    tpu.vector_store %arg8[%c0_17, %c0_18], %22 {strides = array<i32>} : memref<4x128xf32, #tpu.memory_space<vmem>>, vector<4x128xf32>,
    %c0_19 = arith.constant 0 : index
    %c0_20 = arith.constant 0 : index
    %24 = vector.load %arg7[%c0_19, %c0_20] : memref<4x4xf32, #tpu.memory_space<vmem>>, vector<4x4xf32>
    %25 = tpu.iota {dimensions = array<i32: 0>} : vector<4x4xi32>
    %26 = tpu.iota {dimensions = array<i32: 1>} : vector<4x4xi32>
    %27 = arith.cmpi eq, %25, %26 : vector<4x4xi32>
    %28 = arith.extui %27 : vector<4x4xi1> to vector<4x4xi32>
    %29 = arith.sitofp %28 : vector<4x4xi32> to vector<4x4xf32>
    %cst_21 = arith.constant dense<0.000000e+00> : vector<4x4xf32>
    %30 = tpu.matmul %8, %8, %cst_21 {dimension_numbers = #tpu.dot_dimension_numbers<[1], [1], [0], [0], [0, 0, 1, 0], [], []>} : vector<4x256xf32>, vector<4x256xf32>, vector<4x4xf32> -> vector<4x4xf32>
    %31 = arith.mulf %8, %8 : vector<4x256xf32>
    %cst_22 = arith.constant dense<0.000000e+00> : vector<4xf32>
    %32 = vector.multi_reduction <add>, %31, %cst_22 [1] : vector<4x256xf32> to vector<4xf32>
    %33 = vector.shape_cast %32 : vector<4xf32> to vector<4x1xf32>
    %34 = arith.mulf %30, %29 : vector<4x4xf32>
    %cst_23 = arith.constant dense<0.000000e+00> : vector<4xf32>
    %35 = vector.multi_reduction <add>, %34, %cst_23 [0] : vector<4x4xf32> to vector<4xf32>
    %36 = vector.shape_cast %35 : vector<4xf32> to vector<1x4xf32>
    %37 = vector.broadcast %33 : vector<4x1xf32> to vector<4x4xf32>
    %38 = vector.broadcast %36 : vector<1x4xf32> to vector<4x4xf32>
    %39 = arith.addf %37, %38 : vector<4x4xf32>
    %cst_24 = arith.constant 2.000000e+00 : f32
    %40 = vector.broadcast %cst_24 : f32 to vector<4x4xf32>
    %41 = arith.mulf %40, %30 : vector<4x4xf32>
    %42 = arith.subf %39, %41 : vector<4x4xf32>
    %cst_25 = arith.constant 0.000000e+00 : f32
    %43 = vector.broadcast %cst_25 : f32 to vector<4x4xf32>
    %44 = arith.maximumf %42, %43 : vector<4x4xf32>
    %45 = vector.shape_cast %44 : vector<4x4xf32> to vector<1x4x4xf32>
    %cst_26 = arith.constant dense<0.000000e+00> : vector<1xf32>
    %46 = vector.multi_reduction <add>, %45, %cst_26 [1, 2] : vector<1x4x4xf32> to vector<1xf32>
    %47 = vector.shape_cast %46 : vector<1xf32> to vector<1x1x1xf32>
    %48 = vector.extract %47[0, 0, 0] : f32 from vector<1x1x1xf32>
    %cst_27 = arith.constant 6.250000e-02 : f32
    %49 = arith.mulf %48, %cst_27 : f32
    %cst_28 = arith.constant 9.99999996E-13 : f32
    %50 = arith.maximumf %49, %cst_28 : f32
    %cst_29 = arith.constant 1.000000e+00 : f32
    %51 = arith.divf %cst_29, %50 : f32
    %cst_30 = arith.constant -4.000000e+00 : f32
    %52 = arith.mulf %51, %cst_30 : f32
    %53 = vector.broadcast %52 : f32 to vector<4x4xf32>
    %54 = arith.mulf %44, %53 : vector<4x4xf32>
    %55 = math.exp %54 : vector<4x4xf32>
    %cst_31 = arith.constant -2.000000e+00 : f32
    %56 = arith.mulf %51, %cst_31 : f32
    %57 = vector.broadcast %56 : f32 to vector<4x4xf32>
    %58 = arith.mulf %44, %57 : vector<4x4xf32>
    %59 = math.exp %58 : vector<4x4xf32>
    %60 = arith.addf %55, %59 : vector<4x4xf32>
    %cst_32 = arith.constant -1.000000e+00 : f32
    %61 = arith.mulf %51, %cst_32 : f32
    %62 = vector.broadcast %61 : f32 to vector<4x4xf32>
    %63 = arith.mulf %44, %62 : vector<4x4xf32>
    %64 = math.exp %63 : vector<4x4xf32>
    %65 = arith.addf %60, %64 : vector<4x4xf32>
    %cst_33 = arith.constant -5.000000e-01 : f32
    %66 = arith.mulf %51, %cst_33 : f32
    %67 = vector.broadcast %66 : f32 to vector<4x4xf32>
    %68 = arith.mulf %44, %67 : vector<4x4xf32>
    %69 = math.exp %68 : vector<4x4xf32>
    %70 = arith.addf %65, %69 : vector<4x4xf32>
    %cst_34 = arith.constant -2.500000e-01 : f32
    %71 = arith.mulf %51, %cst_34 : f32
    %72 = vector.broadcast %71 : f32 to vector<4x4xf32>
    %73 = arith.mulf %44, %72 : vector<4x4xf32>
    %74 = math.exp %73 : vector<4x4xf32>
    %75 = arith.addf %70, %74 : vector<4x4xf32>
    %76 = arith.mulf %75, %24 : vector<4x4xf32>
    %77 = vector.shape_cast %76 : vector<4x4xf32> to vector<1x4x4xf32>
    %cst_35 = arith.constant dense<0.000000e+00> : vector<1xf32>
    %78 = vector.multi_reduction <add>, %77, %cst_35 [1, 2] : vector<1x4x4xf32> to vector<1xf32>
    %79 = vector.shape_cast %78 : vector<1xf32> to vector<1x1x1xf32>
    %80 = vector.extract %79[0, 0, 0] : f32 from vector<1x1x1xf32>
    %cst_36 = arith.constant 2.000000e+00 : f32
    %81 = arith.addf %80, %cst_36 : f32
    %cst_37 = arith.constant dense<0.000000e+00> : vector<4x4xf32>
    %82 = tpu.matmul %16, %16, %cst_37 {dimension_numbers = #tpu.dot_dimension_numbers<[1], [1], [0], [0], [0, 0, 1, 0], [], []>} : vector<4x64xf32>, vector<4x64xf32>, vector<4x4xf32> -> vector<4x4xf32>
    %83 = arith.mulf %16, %16 : vector<4x64xf32>
    %cst_38 = arith.constant dense<0.000000e+00> : vector<4xf32>
    %84 = vector.multi_reduction <add>, %83, %cst_38 [1] : vector<4x64xf32> to vector<4xf32>
    %85 = vector.shape_cast %84 : vector<4xf32> to vector<4x1xf32>
    %86 = arith.mulf %82, %29 : vector<4x4xf32>
    %cst_39 = arith.constant dense<0.000000e+00> : vector<4xf32>
    %87 = vector.multi_reduction <add>, %86, %cst_39 [0] : vector<4x4xf32> to vector<4xf32>
    %88 = vector.shape_cast %87 : vector<4xf32> to vector<1x4xf32>
    %89 = vector.broadcast %85 : vector<4x1xf32> to vector<4x4xf32>
    %90 = vector.broadcast %88 : vector<1x4xf32> to vector<4x4xf32>
    %91 = arith.addf %89, %90 : vector<4x4xf32>
    %cst_40 = arith.constant 2.000000e+00 : f32
    %92 = vector.broadcast %cst_40 : f32 to vector<4x4xf32>
    %93 = arith.mulf %92, %82 : vector<4x4xf32>
    %94 = arith.subf %91, %93 : vector<4x4xf32>
    %cst_41 = arith.constant 0.000000e+00 : f32
    %95 = vector.broadcast %cst_41 : f32 to vector<4x4xf32>
    %96 = arith.maximumf %94, %95 : vector<4x4xf32>
    %97 = vector.shape_cast %96 : vector<4x4xf32> to vector<1x4x4xf32>
    %cst_42 = arith.constant dense<0.000000e+00> : vector<1xf32>
    %98 = vector.multi_reduction <add>, %97, %cst_42 [1, 2] : vector<1x4x4xf32> to vector<1xf32>
    %99 = vector.shape_cast %98 : vector<1xf32> to vector<1x1x1xf32>
    %100 = vector.extract %99[0, 0, 0] : f32 from vector<1x1x1xf32>
    %cst_43 = arith.constant 6.250000e-02 : f32
    %101 = arith.mulf %100, %cst_43 : f32
    %cst_44 = arith.constant 9.99999996E-13 : f32
    %102 = arith.maximumf %101, %cst_44 : f32
    %cst_45 = arith.constant 1.000000e+00 : f32
    %103 = arith.divf %cst_45, %102 : f32
    %cst_46 = arith.constant -4.000000e+00 : f32
    %104 = arith.mulf %103, %cst_46 : f32
    %105 = vector.broadcast %104 : f32 to vector<4x4xf32>
    %106 = arith.mulf %96, %105 : vector<4x4xf32>
    %107 = math.exp %106 : vector<4x4xf32>
    %cst_47 = arith.constant -2.000000e+00 : f32
    %108 = arith.mulf %103, %cst_47 : f32
    %109 = vector.broadcast %108 : f32 to vector<4x4xf32>
    %110 = arith.mulf %96, %109 : vector<4x4xf32>
    %111 = math.exp %110 : vector<4x4xf32>
    %112 = arith.addf %107, %111 : vector<4x4xf32>
    %cst_48 = arith.constant -1.000000e+00 : f32
    %113 = arith.mulf %103, %cst_48 : f32
    %114 = vector.broadcast %113 : f32 to vector<4x4xf32>
    %115 = arith.mulf %96, %114 : vector<4x4xf32>
    %116 = math.exp %115 : vector<4x4xf32>
    %117 = arith.addf %112, %116 : vector<4x4xf32>
    %cst_49 = arith.constant -5.000000e-01 : f32
    %118 = arith.mulf %103, %cst_49 : f32
    %119 = vector.broadcast %118 : f32 to vector<4x4xf32>
    %120 = arith.mulf %96, %119 : vector<4x4xf32>
    %121 = math.exp %120 : vector<4x4xf32>
    %122 = arith.addf %117, %121 : vector<4x4xf32>
    %cst_50 = arith.constant -2.500000e-01 : f32
    %123 = arith.mulf %103, %cst_50 : f32
    %124 = vector.broadcast %123 : f32 to vector<4x4xf32>
    %125 = arith.mulf %96, %124 : vector<4x4xf32>
    %126 = math.exp %125 : vector<4x4xf32>
    %127 = arith.addf %122, %126 : vector<4x4xf32>
    %128 = arith.mulf %127, %24 : vector<4x4xf32>
    %129 = vector.shape_cast %128 : vector<4x4xf32> to vector<1x4x4xf32>
    %cst_51 = arith.constant dense<0.000000e+00> : vector<1xf32>
    %130 = vector.multi_reduction <add>, %129, %cst_51 [1, 2] : vector<1x4x4xf32> to vector<1xf32>
    %131 = vector.shape_cast %130 : vector<1xf32> to vector<1x1x1xf32>
    %132 = vector.extract %131[0, 0, 0] : f32 from vector<1x1x1xf32>
    %cst_52 = arith.constant 2.000000e+00 : f32
    %133 = arith.addf %132, %cst_52 : f32
    %134 = arith.addf %81, %133 : f32
    %cst_53 = arith.constant dense<0.000000e+00> : vector<4x4xf32>
    %135 = tpu.matmul %22, %22, %cst_53 {dimension_numbers = #tpu.dot_dimension_numbers<[1], [1], [0], [0], [0, 0, 1, 0], [], []>} : vector<4x128xf32>, vector<4x128xf32>, vector<4x4xf32> -> vector<4x4xf32>
    %136 = arith.mulf %22, %22 : vector<4x128xf32>
    %cst_54 = arith.constant dense<0.000000e+00> : vector<4xf32>
    %137 = vector.multi_reduction <add>, %136, %cst_54 [1] : vector<4x128xf32> to vector<4xf32>
    %138 = vector.shape_cast %137 : vector<4xf32> to vector<4x1xf32>
    %139 = arith.mulf %135, %29 : vector<4x4xf32>
    %cst_55 = arith.constant dense<0.000000e+00> : vector<4xf32>
    %140 = vector.multi_reduction <add>, %139, %cst_55 [0] : vector<4x4xf32> to vector<4xf32>
    %141 = vector.shape_cast %140 : vector<4xf32> to vector<1x4xf32>
    %142 = vector.broadcast %138 : vector<4x1xf32> to vector<4x4xf32>
    %143 = vector.broadcast %141 : vector<1x4xf32> to vector<4x4xf32>
    %144 = arith.addf %142, %143 : vector<4x4xf32>
    %cst_56 = arith.constant 2.000000e+00 : f32
    %145 = vector.broadcast %cst_56 : f32 to vector<4x4xf32>
    %146 = arith.mulf %145, %135 : vector<4x4xf32>
    %147 = arith.subf %144, %146 : vector<4x4xf32>
    %cst_57 = arith.constant 0.000000e+00 : f32
    %148 = vector.broadcast %cst_57 : f32 to vector<4x4xf32>
    %149 = arith.maximumf %147, %148 : vector<4x4xf32>
    %150 = vector.shape_cast %149 : vector<4x4xf32> to vector<1x4x4xf32>
    %cst_58 = arith.constant dense<0.000000e+00> : vector<1xf32>
    %151 = vector.multi_reduction <add>, %150, %cst_58 [1, 2] : vector<1x4x4xf32> to vector<1xf32>
    %152 = vector.shape_cast %151 : vector<1xf32> to vector<1x1x1xf32>
    %153 = vector.extract %152[0, 0, 0] : f32 from vector<1x1x1xf32>
    %cst_59 = arith.constant 6.250000e-02 : f32
    %154 = arith.mulf %153, %cst_59 : f32
    %cst_60 = arith.constant 9.99999996E-13 : f32
    %155 = arith.maximumf %154, %cst_60 : f32
    %cst_61 = arith.constant 1.000000e+00 : f32
    %156 = arith.divf %cst_61, %155 : f32
    %cst_62 = arith.constant -4.000000e+00 : f32
    %157 = arith.mulf %156, %cst_62 : f32
    %158 = vector.broadcast %157 : f32 to vector<4x4xf32>
    %159 = arith.mulf %149, %158 : vector<4x4xf32>
    %160 = math.exp %159 : vector<4x4xf32>
    %cst_63 = arith.constant -2.000000e+00 : f32
    %161 = arith.mulf %156, %cst_63 : f32
    %162 = vector.broadcast %161 : f32 to vector<4x4xf32>
    %163 = arith.mulf %149, %162 : vector<4x4xf32>
    %164 = math.exp %163 : vector<4x4xf32>
    %165 = arith.addf %160, %164 : vector<4x4xf32>
    %cst_64 = arith.constant -1.000000e+00 : f32
    %166 = arith.mulf %156, %cst_64 : f32
    %167 = vector.broadcast %166 : f32 to vector<4x4xf32>
    %168 = arith.mulf %149, %167 : vector<4x4xf32>
    %169 = math.exp %168 : vector<4x4xf32>
    %170 = arith.addf %165, %169 : vector<4x4xf32>
    %cst_65 = arith.constant -5.000000e-01 : f32
    %171 = arith.mulf %156, %cst_65 : f32
    %172 = vector.broadcast %171 : f32 to vector<4x4xf32>
    %173 = arith.mulf %149, %172 : vector<4x4xf32>
    %174 = math.exp %173 : vector<4x4xf32>
    %175 = arith.addf %170, %174 : vector<4x4xf32>
    %cst_66 = arith.constant -2.500000e-01 : f32
    %176 = arith.mulf %156, %cst_66 : f32
    %177 = vector.broadcast %176 : f32 to vector<4x4xf32>
    %178 = arith.mulf %149, %177 : vector<4x4xf32>
    %179 = math.exp %178 : vector<4x4xf32>
    %180 = arith.addf %175, %179 : vector<4x4xf32>
    %181 = arith.mulf %180, %24 : vector<4x4xf32>
    %182 = vector.shape_cast %181 : vector<4x4xf32> to vector<1x4x4xf32>
    %cst_67 = arith.constant dense<0.000000e+00> : vector<1xf32>
    %183 = vector.multi_reduction <add>, %182, %cst_67 [1, 2] : vector<1x4x4xf32> to vector<1xf32>
    %184 = vector.shape_cast %183 : vector<1xf32> to vector<1x1x1xf32>
    %185 = vector.extract %184[0, 0, 0] : f32 from vector<1x1x1xf32>
    %cst_68 = arith.constant 2.000000e+00 : f32
    %186 = arith.addf %185, %cst_68 : f32
    %187 = arith.addf %134, %186 : f32
    %cst_69 = arith.constant 0.000000e+00 : f32
    %188 = vector.broadcast %cst_69 : f32 to vector<1x128xf32>
    %189 = vector.broadcast %187 : f32 to vector<1x128xf32>
    %190 = arith.addf %188, %189 : vector<1x128xf32>
    %c0_70 = arith.constant 0 : index
    %c0_71 = arith.constant 0 : index
    %191 = vector.load %arg9[%c0_70, %c0_71] : memref<1x128xf32, #tpu.memory_space<vmem>>, vector<1x128xf32>
    tpu.vector_store %arg9[%c0_70, %c0_71], %190 {strides = array<i32>} : memref<1x128xf32, #tpu.memory_space<vmem>>, vector<1x128xf32>,
    return
  }
}

</mosaic_0001>

<llo_original>
// kernel: dan_forward.3
$region0: #{dan_forward.3}
  #allocation0 [shape = 'u32[]', space=smem, size = 0x4, offset = 0x4, fixed_abs, tag = 'smem constant byte address 0x4 - core index']
  #allocation1 [shape = 'u32[144,128]{1,0:T(1,128)}', space=vmem, size = 0x12000, scoped, tag = 'internal scratch']
  %s0 = inlined_call_operand.vmem [shape: f32[4,2048], index: 0, kind: input, shape index: {}]
  %s1 = inlined_call_operand.vmem [shape: bf16[2048,256], index: 1, kind: input, shape index: {}]
  %s2 = inlined_call_operand.vmem [shape: f32[1,256], index: 2, kind: input, shape index: {}]
  %s3 = inlined_call_operand.vmem [shape: bf16[256,64], index: 3, kind: input, shape index: {}]
  %s4 = inlined_call_operand.vmem [shape: f32[1,64], index: 4, kind: input, shape index: {}]
  %s5 = inlined_call_operand.vmem [shape: bf16[64,128], index: 5, kind: input, shape index: {}]
  %s6 = inlined_call_operand.vmem [shape: f32[1,128], index: 6, kind: input, shape index: {}]
  %s7 = inlined_call_operand.vmem [shape: f32[4,4], index: 7, kind: input, shape index: {}]
  %s8 = inlined_call_operand.vmem [shape: f32[4,128], index: 8, kind: output, shape index: {0}]
  %s9 = inlined_call_operand.hbm [shape: f32[1,128], index: 9, kind: output, shape index: {1}]
  %10 = xla_tuple %s8, %s9
  %s11 = sld [smem:[#allocation0]]
  $region50: #{dan_forward.3} parent=0
    _
  %s13 = ssub.s32 1, %s11
  %s14 = scalar_select 0, %s13, %s11
  $region1: #{dan_forward.3} parent=0
    #allocation2 [shape = 'u8[512]{0}', space=vmem, size = 0x400, scoped, tag = 'output window, operand 1, single buffered']
    #allocation3 [shape = 's32[1]{0}', space=sflag, size = 0x4, scoped, tag = 'scoped memory for dan_forward.3']
    %15 = vsyncpa [#allocation3], 0
    // Predicated region
    $region2: #{dan_forward.3} parent=1 // pred_check
      _
    $region3: #{dan_forward.3} parent=1 // pred_check_branch
      %17 = sbr.rel (0) target = $region5
    $region4: #{dan_forward.3} parent=1 // pred_region
      _
    $region5: #{dan_forward.3} parent=1 // pred_fallthru
      _
    // Predicated region
    $region6: #{dan_forward.3} parent=1 // pred_check
      _
    $region7: #{dan_forward.3} parent=1 // pred_check_branch
      %19 = sbr.rel (0) target = $region9
    $region8: #{dan_forward.3} parent=1 // pred_region
      _
    $region9: #{dan_forward.3} parent=1 // pred_fallthru
      _
    // Predicated region
    $region10: #{dan_forward.3} parent=1 // pred_check
      _
    $region11: #{dan_forward.3} parent=1 // pred_check_branch
      %21 = sbr.rel (0) target = $region13
    $region12: #{dan_forward.3} parent=1 // pred_region
      _
    $region13: #{dan_forward.3} parent=1 // pred_fallthru
      _
    // Predicated region
    $region14: #{dan_forward.3} parent=1 // pred_check
      _
    $region15: #{dan_forward.3} parent=1 // pred_check_branch
      %23 = sbr.rel (0) target = $region17
    $region16: #{dan_forward.3} parent=1 // pred_region
      _
    $region17: #{dan_forward.3} parent=1 // pred_fallthru
      _
    // Predicated region
    $region18: #{dan_forward.3} parent=1 // pred_check
      _
    $region19: #{dan_forward.3} parent=1 // pred_check_branch
      %25 = sbr.rel (0) target = $region21
    $region20: #{dan_forward.3} parent=1 // pred_region
      _
    $region21: #{dan_forward.3} parent=1 // pred_fallthru
      _
    // Predicated region
    $region22: #{dan_forward.3} parent=1 // pred_check
      _
    $region23: #{dan_forward.3} parent=1 // pred_check_branch
      %27 = sbr.rel (0) target = $region25
    $region24: #{dan_forward.3} parent=1 // pred_region
      _
    $region25: #{dan_forward.3} parent=1 // pred_fallthru
      _
    // Predicated region
    $region26: #{dan_forward.3} parent=1 // pred_check
      _
    $region27: #{dan_forward.3} parent=1 // pred_check_branch
      %29 = sbr.rel (0) target = $region29
    $region28: #{dan_forward.3} parent=1 // pred_region
      _
    $region29: #{dan_forward.3} parent=1 // pred_fallthru
      _
    // Predicated region
    $region30: #{dan_forward.3} parent=1 // pred_check
      _
    $region31: #{dan_forward.3} parent=1 // pred_check_branch
      %31 = sbr.rel (0) target = $region33
    $region32: #{dan_forward.3} parent=1 // pred_region
      _
    $region33: #{dan_forward.3} parent=1 // pred_fallthru
      _
    %v33 = vld [vmem:[%s0] sm:$0xff]
    %v34 = vld [vmem:[%s0 + $0x8] sm:$0xff]
    %v35 = vld [vmem:[%s0 + $0x10] sm:$0xff]
    %v36 = vld [vmem:[%s0 + $0x18] sm:$0xff]
    %v37 = vld [vmem:[%s0 + $0x20] sm:$0xff]
    %v38 = vld [vmem:[%s0 + $0x28] sm:$0xff]
    %v39 = vld [vmem:[%s0 + $0x30] sm:$0xff]
    %v40 = vld [vmem:[%s0 + $0x38] sm:$0xff]
    %v41 = vld [vmem:[%s1] sm:$0xff]
    %v42 = vld [vmem:[%s1 + $0x8] sm:$0xff]
    %v43 = vld [vmem:[%s1 + $0x10] sm:$0xff]
    %v44 = vld [vmem:[%s1 + $0x18] sm:$0xff]
    %v45 = vld [vmem:[%s1 + $0x20] sm:$0xff]
    %v46 = vld [vmem:[%s1 + $0x28] sm:$0xff]
    %v47 = vld [vmem:[%s1 + $0x30] sm:$0xff]
    %v48 = vld [vmem:[%s1 + $0x38] sm:$0xff]
    %v49 = vld [vmem:[%s1 + $0x40] sm:$0xff]
    %v50 = vld [vmem:[%s1 + $0x48] sm:$0xff]
    %v51 = vld [vmem:[%s1 + $0x50] sm:$0xff]
    %v52 = vld [vmem:[%s1 + $0x58] sm:$0xff]
    %v53 = vld [vmem:[%s1 + $0x60] sm:$0xff]
    %v54 = vld [vmem:[%s1 + $0x68] sm:$0xff]
    %v55 = vld [vmem:[%s1 + $0x70] sm:$0xff]
    %v56 = vld [vmem:[%s1 + $0x78] sm:$0xff]
    %v57 = vld [vmem:[%s1 + $0x80] sm:$0xff]
    %v58 = vld [vmem:[%s1 + $0x88] sm:$0xff]
    %v59 = vld [vmem:[%s1 + $0x90] sm:$0xff]
    %v60 = vld [vmem:[%s1 + $0x98] sm:$0xff]
    %v61 = vld [vmem:[%s1 + $0xa0] sm:$0xff]
    %v62 = vld [vmem:[%s1 + $0xa8] sm:$0xff]
    %v63 = vld [vmem:[%s1 + $0xb0] sm:$0xff]
    %v64 = vld [vmem:[%s1 + $0xb8] sm:$0xff]
    %v65 = vld [vmem:[%s1 + $0xc0] sm:$0xff]
    %v66 = vld [vmem:[%s1 + $0xc8] sm:$0xff]
    %v67 = vld [vmem:[%s1 + $0xd0] sm:$0xff]
    %v68 = vld [vmem:[%s1 + $0xd8] sm:$0xff]
    %v69 = vld [vmem:[%s1 + $0xe0] sm:$0xff]
    %v70 = vld [vmem:[%s1 + $0xe8] sm:$0xff]
    %v71 = vld [vmem:[%s1 + $0xf0] sm:$0xff]
    %v72 = vld [vmem:[%s1 + $0xf8] sm:$0xff]
    %v73 = vld [vmem:[%s1 + $0x100] sm:$0xff]
    %v74 = vld [vmem:[%s1 + $0x108] sm:$0xff]
    %v75 = vld [vmem:[%s1 + $0x110] sm:$0xff]
    %v76 = vld [vmem:[%s1 + $0x118] sm:$0xff]
    %v77 = vld [vmem:[%s1 + $0x120] sm:$0xff]
    %v78 = vld [vmem:[%s1 + $0x128] sm:$0xff]
    %v79 = vld [vmem:[%s1 + $0x130] sm:$0xff]
    %v80 = vld [vmem:[%s1 + $0x138] sm:$0xff]
    %v81 = vld [vmem:[%s1 + $0x140] sm:$0xff]
    %v82 = vld [vmem:[%s1 + $0x148] sm:$0xff]
    %v83 = vld [vmem:[%s1 + $0x150] sm:$0xff]
    %v84 = vld [vmem:[%s1 + $0x158] sm:$0xff]
    %v85 = vld [vmem:[%s1 + $0x160] sm:$0xff]
    %v86 = vld [vmem:[%s1 + $0x168] sm:$0xff]
    %v87 = vld [vmem:[%s1 + $0x170] sm:$0xff]
    %v88 = vld [vmem:[%s1 + $0x178] sm:$0xff]
    %v89 = vld [vmem:[%s1 + $0x180] sm:$0xff]
    %v90 = vld [vmem:[%s1 + $0x188] sm:$0xff]
    %v91 = vld [vmem:[%s1 + $0x190] sm:$0xff]
    %v92 = vld [vmem:[%s1 + $0x198] sm:$0xff]
    %v93 = vld [vmem:[%s1 + $0x1a0] sm:$0xff]
    %v94 = vld [vmem:[%s1 + $0x1a8] sm:$0xff]
    %v95 = vld [vmem:[%s1 + $0x1b0] sm:$0xff]
    %v96 = vld [vmem:[%s1 + $0x1b8] sm:$0xff]
    %v97 = vld [vmem:[%s1 + $0x1c0] sm:$0xff]
    %v98 = vld [vmem:[%s1 + $0x1c8] sm:$0xff]
    %v99 = vld [vmem:[%s1 + $0x1d0] sm:$0xff]
    %v100 = vld [vmem:[%s1 + $0x1d8] sm:$0xff]
    %v101 = vld [vmem:[%s1 + $0x1e0] sm:$0xff]
    %v102 = vld [vmem:[%s1 + $0x1e8] sm:$0xff]
    %v103 = vld [vmem:[%s1 + $0x1f0] sm:$0xff]
    %v104 = vld [vmem:[%s1 + $0x1f8] sm:$0xff]
    %v105 = vld [vmem:[%s1 + $0x200] sm:$0xff]
    %v106 = vld [vmem:[%s1 + $0x208] sm:$0xff]
    %v107 = vld [vmem:[%s1 + $0x210] sm:$0xff]
    %v108 = vld [vmem:[%s1 + $0x218] sm:$0xff]
    %v109 = vld [vmem:[%s1 + $0x220] sm:$0xff]
    %v110 = vld [vmem:[%s1 + $0x228] sm:$0xff]
    %v111 = vld [vmem:[%s1 + $0x230] sm:$0xff]
    %v112 = vld [vmem:[%s1 + $0x238] sm:$0xff]
    %v113 = vld [vmem:[%s1 + $0x240] sm:$0xff]
    %v114 = vld [vmem:[%s1 + $0x248] sm:$0xff]
    %v115 = vld [vmem:[%s1 + $0x250] sm:$0xff]
    %v116 = vld [vmem:[%s1 + $0x258] sm:$0xff]
    %v117 = vld [vmem:[%s1 + $0x260] sm:$0xff]
    %v118 = vld [vmem:[%s1 + $0x268] sm:$0xff]
    %v119 = vld [vmem:[%s1 + $0x270] sm:$0xff]
    %v120 = vld [vmem:[%s1 + $0x278] sm:$0xff]
    %v121 = vld [vmem:[%s1 + $0x280] sm:$0xff]
    %v122 = vld [vmem:[%s1 + $0x288] sm:$0xff]
    %v123 = vld [vmem:[%s1 + $0x290] sm:$0xff]
    %v124 = vld [vmem:[%s1 + $0x298] sm:$0xff]
    %v125 = vld [vmem:[%s1 + $0x2a0] sm:$0xff]
    %v126 = vld [vmem:[%s1 + $0x2a8] sm:$0xff]
    %v127 = vld [vmem:[%s1 + $0x2b0] sm:$0xff]
    %v128 = vld [vmem:[%s1 + $0x2b8] sm:$0xff]
    %v129 = vld [vmem:[%s1 + $0x2c0] sm:$0xff]
    %v130 = vld [vmem:[%s1 + $0x2c8] sm:$0xff]
    %v131 = vld [vmem:[%s1 + $0x2d0] sm:$0xff]
    %v132 = vld [vmem:[%s1 + $0x2d8] sm:$0xff]
    %v133 = vld [vmem:[%s1 + $0x2e0] sm:$0xff]
    %v134 = vld [vmem:[%s1 + $0x2e8] sm:$0xff]
    %v135 = vld [vmem:[%s1 + $0x2f0] sm:$0xff]
    %v136 = vld [vmem:[%s1 + $0x2f8] sm:$0xff]
    %v137 = vld [vmem:[%s1 + $0x300] sm:$0xff]
    %v138 = vld [vmem:[%s1 + $0x308] sm:$0xff]
    %v139 = vld [vmem:[%s1 + $0x310] sm:$0xff]
    %v140 = vld [vmem:[%s1 + $0x318] sm:$0xff]
    %v141 = vld [vmem:[%s1 + $0x320] sm:$0xff]
    %v142 = vld [vmem:[%s1 + $0x328] sm:$0xff]
    %v143 = vld [vmem:[%s1 + $0x330] sm:$0xff]
    %v144 = vld [vmem:[%s1 + $0x338] sm:$0xff]
    %v145 = vld [vmem:[%s1 + $0x340] sm:$0xff]
    %v146 = vld [vmem:[%s1 + $0x348] sm:$0xff]
    %v147 = vld [vmem:[%s1 + $0x350] sm:$0xff]
    %v148 = vld [vmem:[%s1 + $0x358] sm:$0xff]
    %v149 = vld [vmem:[%s1 + $0x360] sm:$0xff]
    %v150 = vld [vmem:[%s1 + $0x368] sm:$0xff]
    %v151 = vld [vmem:[%s1 + $0x370] sm:$0xff]
    %v152 = vld [vmem:[%s1 + $0x378] sm:$0xff]
    %v153 = vld [vmem:[%s1 + $0x380] sm:$0xff]
    %v154 = vld [vmem:[%s1 + $0x388] sm:$0xff]
    %v155 = vld [vmem:[%s1 + $0x390] sm:$0xff]
    %v156 = vld [vmem:[%s1 + $0x398] sm:$0xff]
    %v157 = vld [vmem:[%s1 + $0x3a0] sm:$0xff]
    %v158 = vld [vmem:[%s1 + $0x3a8] sm:$0xff]
    %v159 = vld [vmem:[%s1 + $0x3b0] sm:$0xff]
    %v160 = vld [vmem:[%s1 + $0x3b8] sm:$0xff]
    %v161 = vld [vmem:[%s1 + $0x3c0] sm:$0xff]
    %v162 = vld [vmem:[%s1 + $0x3c8] sm:$0xff]
    %v163 = vld [vmem:[%s1 + $0x3d0] sm:$0xff]
    %v164 = vld [vmem:[%s1 + $0x3d8] sm:$0xff]
    %v165 = vld [vmem:[%s1 + $0x3e0] sm:$0xff]
    %v166 = vld [vmem:[%s1 + $0x3e8] sm:$0xff]
    %v167 = vld [vmem:[%s1 + $0x3f0] sm:$0xff]
    %v168 = vld [vmem:[%s1 + $0x3f8] sm:$0xff]
    %v169 = vld [vmem:[%s1 + $0x400] sm:$0xff]
    %v170 = vld [vmem:[%s1 + $0x408] sm:$0xff]
    %v171 = vld [vmem:[%s1 + $0x410] sm:$0xff]
    %v172 = vld [vmem:[%s1 + $0x418] sm:$0xff]
    %v173 = vld [vmem:[%s1 + $0x420] sm:$0xff]
    %v174 = vld [vmem:[%s1 + $0x428] sm:$0xff]
    %v175 = vld [vmem:[%s1 + $0x430] sm:$0xff]
    %v176 = vld [vmem:[%s1 + $0x438] sm:$0xff]
    %v177 = vld [vmem:[%s1 + $0x440] sm:$0xff]
    %v178 = vld [vmem:[%s1 + $0x448] sm:$0xff]
    %v179 = vld [vmem:[%s1 + $0x450] sm:$0xff]
    %v180 = vld [vmem:[%s1 + $0x458] sm:$0xff]
    %v181 = vld [vmem:[%s1 + $0x460] sm:$0xff]
    %v182 = vld [vmem:[%s1 + $0x468] sm:$0xff]
    %v183 = vld [vmem:[%s1 + $0x470] sm:$0xff]
    %v184 = vld [vmem:[%s1 + $0x478] sm:$0xff]
    %v185 = vld [vmem:[%s1 + $0x480] sm:$0xff]
    %v186 = vld [vmem:[%s1 + $0x488] sm:$0xff]
    %v187 = vld [vmem:[%s1 + $0x490] sm:$0xff]
    %v188 = vld [vmem:[%s1 + $0x498] sm:$0xff]
    %v189 = vld [vmem:[%s1 + $0x4a0] sm:$0xff]
    %v190 = vld [vmem:[%s1 + $0x4a8] sm:$0xff]
    %v191 = vld [vmem:[%s1 + $0x4b0] sm:$0xff]
    %v192 = vld [vmem:[%s1 + $0x4b8] sm:$0xff]
    %v193 = vld [vmem:[%s1 + $0x4c0] sm:$0xff]
    %v194 = vld [vmem:[%s1 + $0x4c8] sm:$0xff]
    %v195 = vld [vmem:[%s1 + $0x4d0] sm:$0xff]
    %v196 = vld [vmem:[%s1 + $0x4d8] sm:$0xff]
    %v197 = vld [vmem:[%s1 + $0x4e0] sm:$0xff]
    %v198 = vld [vmem:[%s1 + $0x4e8] sm:$0xff]
    %v199 = vld [vmem:[%s1 + $0x4f0] sm:$0xff]
    %v200 = vld [vmem:[%s1 + $0x4f8] sm:$0xff]
    %v201 = vld [vmem:[%s1 + $0x500] sm:$0xff]
    %v202 = vld [vmem:[%s1 + $0x508] sm:$0xff]
    %v203 = vld [vmem:[%s1 + $0x510] sm:$0xff]
    %v204 = vld [vmem:[%s1 + $0x518] sm:$0xff]
    %v205 = vld [vmem:[%s1 + $0x520] sm:$0xff]
    %v206 = vld [vmem:[%s1 + $0x528] sm:$0xff]
    %v207 = vld [vmem:[%s1 + $0x530] sm:$0xff]
    %v208 = vld [vmem:[%s1 + $0x538] sm:$0xff]
    %v209 = vld [vmem:[%s1 + $0x540] sm:$0xff]
    %v210 = vld [vmem:[%s1 + $0x548] sm:$0xff]
    %v211 = vld [vmem:[%s1 + $0x550] sm:$0xff]
    %v212 = vld [vmem:[%s1 + $0x558] sm:$0xff]
    %v213 = vld [vmem:[%s1 + $0x560] sm:$0xff]
    %v214 = vld [vmem:[%s1 + $0x568] sm:$0xff]
    %v215 = vld [vmem:[%s1 + $0x570] sm:$0xff]
    %v216 = vld [vmem:[%s1 + $0x578] sm:$0xff]
    %v217 = vld [vmem:[%s1 + $0x580] sm:$0xff]
    %v218 = vld [vmem:[%s1 + $0x588] sm:$0xff]
    %v219 = vld [vmem:[%s1 + $0x590] sm:$0xff]
    %v220 = vld [vmem:[%s1 + $0x598] sm:$0xff]
    %v221 = vld [vmem:[%s1 + $0x5a0] sm:$0xff]
    %v222 = vld [vmem:[%s1 + $0x5a8] sm:$0xff]
    %v223 = vld [vmem:[%s1 + $0x5b0] sm:$0xff]
    %v224 = vld [vmem:[%s1 + $0x5b8] sm:$0xff]
    %v225 = vld [vmem:[%s1 + $0x5c0] sm:$0xff]
    %v226 = vld [vmem:[%s1 + $0x5c8] sm:$0xff]
    %v227 = vld [vmem:[%s1 + $0x5d0] sm:$0xff]
    %v228 = vld [vmem:[%s1 + $0x5d8] sm:$0xff]
    %v229 = vld [vmem:[%s1 + $0x5e0] sm:$0xff]
    %v230 = vld [vmem:[%s1 + $0x5e8] sm:$0xff]
    %v231 = vld [vmem:[%s1 + $0x5f0] sm:$0xff]
    %v232 = vld [vmem:[%s1 + $0x5f8] sm:$0xff]
    %v233 = vld [vmem:[%s1 + $0x600] sm:$0xff]
    %v234 = vld [vmem:[%s1 + $0x608] sm:$0xff]
    %v235 = vld [vmem:[%s1 + $0x610] sm:$0xff]
    %v236 = vld [vmem:[%s1 + $0x618] sm:$0xff]
    %v237 = vld [vmem:[%s1 + $0x620] sm:$0xff]
    %v238 = vld [vmem:[%s1 + $0x628] sm:$0xff]
    %v239 = vld [vmem:[%s1 + $0x630] sm:$0xff]
    %v240 = vld [vmem:[%s1 + $0x638] sm:$0xff]
    %v241 = vld [vmem:[%s1 + $0x640] sm:$0xff]
    %v242 = vld [vmem:[%s1 + $0x648] sm:$0xff]
    %v243 = vld [vmem:[%s1 + $0x650] sm:$0xff]
    %v244 = vld [vmem:[%s1 + $0x658] sm:$0xff]
    %v245 = vld [vmem:[%s1 + $0x660] sm:$0xff]
    %v246 = vld [vmem:[%s1 + $0x668] sm:$0xff]
    %v247 = vld [vmem:[%s1 + $0x670] sm:$0xff]
    %v248 = vld [vmem:[%s1 + $0x678] sm:$0xff]
    %v249 = vld [vmem:[%s1 + $0x680] sm:$0xff]
    %v250 = vld [vmem:[%s1 + $0x688] sm:$0xff]
    %v251 = vld [vmem:[%s1 + $0x690] sm:$0xff]
    %v252 = vld [vmem:[%s1 + $0x698] sm:$0xff]
    %v253 = vld [vmem:[%s1 + $0x6a0] sm:$0xff]
    %v254 = vld [vmem:[%s1 + $0x6a8] sm:$0xff]
    %v255 = vld [vmem:[%s1 + $0x6b0] sm:$0xff]
    %v256 = vld [vmem:[%s1 + $0x6b8] sm:$0xff]
    %v257 = vld [vmem:[%s1 + $0x6c0] sm:$0xff]
    %v258 = vld [vmem:[%s1 + $0x6c8] sm:$0xff]
    %v259 = vld [vmem:[%s1 + $0x6d0] sm:$0xff]
    %v260 = vld [vmem:[%s1 + $0x6d8] sm:$0xff]
    %v261 = vld [vmem:[%s1 + $0x6e0] sm:$0xff]
    %v262 = vld [vmem:[%s1 + $0x6e8] sm:$0xff]
    %v263 = vld [vmem:[%s1 + $0x6f0] sm:$0xff]
    %v264 = vld [vmem:[%s1 + $0x6f8] sm:$0xff]
    %v265 = vld [vmem:[%s1 + $0x700] sm:$0xff]
    %v266 = vld [vmem:[%s1 + $0x708] sm:$0xff]
    %v267 = vld [vmem:[%s1 + $0x710] sm:$0xff]
    %v268 = vld [vmem:[%s1 + $0x718] sm:$0xff]
    %v269 = vld [vmem:[%s1 + $0x720] sm:$0xff]
    %v270 = vld [vmem:[%s1 + $0x728] sm:$0xff]
    %v271 = vld [vmem:[%s1 + $0x730] sm:$0xff]
    %v272 = vld [vmem:[%s1 + $0x738] sm:$0xff]
    %v273 = vld [vmem:[%s1 + $0x740] sm:$0xff]
    %v274 = vld [vmem:[%s1 + $0x748] sm:$0xff]
    %v275 = vld [vmem:[%s1 + $0x750] sm:$0xff]
    %v276 = vld [vmem:[%s1 + $0x758] sm:$0xff]
    %v277 = vld [vmem:[%s1 + $0x760] sm:$0xff]
    %v278 = vld [vmem:[%s1 + $0x768] sm:$0xff]
    %v279 = vld [vmem:[%s1 + $0x770] sm:$0xff]
    %v280 = vld [vmem:[%s1 + $0x778] sm:$0xff]
    %v281 = vld [vmem:[%s1 + $0x780] sm:$0xff]
    %v282 = vld [vmem:[%s1 + $0x788] sm:$0xff]
    %v283 = vld [vmem:[%s1 + $0x790] sm:$0xff]
    %v284 = vld [vmem:[%s1 + $0x798] sm:$0xff]
    %v285 = vld [vmem:[%s1 + $0x7a0] sm:$0xff]
    %v286 = vld [vmem:[%s1 + $0x7a8] sm:$0xff]
    %v287 = vld [vmem:[%s1 + $0x7b0] sm:$0xff]
    %v288 = vld [vmem:[%s1 + $0x7b8] sm:$0xff]
    %v289 = vld [vmem:[%s1 + $0x7c0] sm:$0xff]
    %v290 = vld [vmem:[%s1 + $0x7c8] sm:$0xff]
    %v291 = vld [vmem:[%s1 + $0x7d0] sm:$0xff]
    %v292 = vld [vmem:[%s1 + $0x7d8] sm:$0xff]
    %v293 = vld [vmem:[%s1 + $0x7e0] sm:$0xff]
    %v294 = vld [vmem:[%s1 + $0x7e8] sm:$0xff]
    %v295 = vld [vmem:[%s1 + $0x7f0] sm:$0xff]
    %v296 = vld [vmem:[%s1 + $0x7f8] sm:$0xff]
    %v305 = vcombine.high %v33, %v33
    %v306 = vcombine.high %v34, %v34
    %v307 = vcombine.high %v35, %v35
    %v308 = vcombine.high %v36, %v36
    %v309 = vcombine.high %v37, %v37
    %v310 = vcombine.high %v38, %v38
    %v311 = vcombine.high %v39, %v39
    %v312 = vcombine.high %v40, %v40
    %v321 = vpack.c.bf16 %v33, %v33
    %v322 = vpack.c.bf16 %v305, %v305
    %v323 = vpack.c.bf16 %v34, %v34
    %v324 = vpack.c.bf16 %v306, %v306
    %v325 = vpack.c.bf16 %v35, %v35
    %v326 = vpack.c.bf16 %v307, %v307
    %v327 = vpack.c.bf16 %v36, %v36
    %v328 = vpack.c.bf16 %v308, %v308
    %v329 = vpack.c.bf16 %v37, %v37
    %v330 = vpack.c.bf16 %v309, %v309
    %v331 = vpack.c.bf16 %v38, %v38
    %v332 = vpack.c.bf16 %v310, %v310
    %v333 = vpack.c.bf16 %v39, %v39
    %v334 = vpack.c.bf16 %v311, %v311
    %v335 = vpack.c.bf16 %v40, %v40
    %v336 = vpack.c.bf16 %v312, %v312
    %v337 = vld [vmem:[%s2] sm:$0x3]
    %v339 = vlaneseq
    %v340 = vshrl.u32 %v339, 7
    %v341 = vsub.s32 0, %v340
    %v342 = vrot.slane %v337, %v341
    %v343 = vlaneseq
    %v344 = vshrl.u32 %v343, 7
    %v345 = vsub.s32 1, %v344
    %v346 = vrot.slane %v337, %v345
    %v605 = vunpack.c.l.b16 %v41
    %v606 = vunpack.c.h.b16 %v41
    %v607 = vunpack.c.l.b16 %v42
    %v608 = vunpack.c.h.b16 %v42
    %v609 = vunpack.c.l.b16 %v43
    %v610 = vunpack.c.h.b16 %v43
    %v611 = vunpack.c.l.b16 %v44
    %v612 = vunpack.c.h.b16 %v44
    %v613 = vunpack.c.l.b16 %v45
    %v614 = vunpack.c.h.b16 %v45
    %v615 = vunpack.c.l.b16 %v46
    %v616 = vunpack.c.h.b16 %v46
    %v617 = vunpack.c.l.b16 %v47
    %v618 = vunpack.c.h.b16 %v47
    %v619 = vunpack.c.l.b16 %v48
    %v620 = vunpack.c.h.b16 %v48
    %v621 = vunpack.c.l.b16 %v49
    %v622 = vunpack.c.h.b16 %v49
    %v623 = vunpack.c.l.b16 %v50
    %v624 = vunpack.c.h.b16 %v50
    %v625 = vunpack.c.l.b16 %v51
    %v626 = vunpack.c.h.b16 %v51
    %v627 = vunpack.c.l.b16 %v52
    %v628 = vunpack.c.h.b16 %v52
    %v629 = vunpack.c.l.b16 %v53
    %v630 = vunpack.c.h.b16 %v53
    %v631 = vunpack.c.l.b16 %v54
    %v632 = vunpack.c.h.b16 %v54
    %v633 = vunpack.c.l.b16 %v55
    %v634 = vunpack.c.h.b16 %v55
    %v635 = vunpack.c.l.b16 %v56
    %v636 = vunpack.c.h.b16 %v56
    %v637 = vunpack.c.l.b16 %v57
    %v638 = vunpack.c.h.b16 %v57
    %v639 = vunpack.c.l.b16 %v58
    %v640 = vunpack.c.h.b16 %v58
    %v641 = vunpack.c.l.b16 %v59
    %v642 = vunpack.c.h.b16 %v59
    %v643 = vunpack.c.l.b16 %v60
    %v644 = vunpack.c.h.b16 %v60
    %v645 = vunpack.c.l.b16 %v61
    %v646 = vunpack.c.h.b16 %v61
    %v647 = vunpack.c.l.b16 %v62
    %v648 = vunpack.c.h.b16 %v62
    %v649 = vunpack.c.l.b16 %v63
    %v650 = vunpack.c.h.b16 %v63
    %v651 = vunpack.c.l.b16 %v64
    %v652 = vunpack.c.h.b16 %v64
    %v653 = vunpack.c.l.b16 %v65
    %v654 = vunpack.c.h.b16 %v65
    %v655 = vunpack.c.l.b16 %v66
    %v656 = vunpack.c.h.b16 %v66
    %v657 = vunpack.c.l.b16 %v67
    %v658 = vunpack.c.h.b16 %v67
    %v659 = vunpack.c.l.b16 %v68
    %v660 = vunpack.c.h.b16 %v68
    %v661 = vunpack.c.l.b16 %v69
    %v662 = vunpack.c.h.b16 %v69
    %v663 = vunpack.c.l.b16 %v70
    %v664 = vunpack.c.h.b16 %v70
    %v665 = vunpack.c.l.b16 %v71
    %v666 = vunpack.c.h.b16 %v71
    %v667 = vunpack.c.l.b16 %v72
    %v668 = vunpack.c.h.b16 %v72
    %v669 = vunpack.c.l.b16 %v73
    %v670 = vunpack.c.h.b16 %v73
    %v671 = vunpack.c.l.b16 %v74
    %v672 = vunpack.c.h.b16 %v74
    %v673 = vunpack.c.l.b16 %v75
    %v674 = vunpack.c.h.b16 %v75
    %v675 = vunpack.c.l.b16 %v76
    %v676 = vunpack.c.h.b16 %v76
    %v677 = vunpack.c.l.b16 %v77
    %v678 = vunpack.c.h.b16 %v77
    %v679 = vunpack.c.l.b16 %v78
    %v680 = vunpack.c.h.b16 %v78
    %v681 = vunpack.c.l.b16 %v79
    %v682 = vunpack.c.h.b16 %v79
    %v683 = vunpack.c.l.b16 %v80
    %v684 = vunpack.c.h.b16 %v80
    %v685 = vunpack.c.l.b16 %v81
    %v686 = vunpack.c.h.b16 %v81
    %v687 = vunpack.c.l.b16 %v82
    %v688 = vunpack.c.h.b16 %v82
    %v689 = vunpack.c.l.b16 %v83
    %v690 = vunpack.c.h.b16 %v83
    %v691 = vunpack.c.l.b16 %v84
    %v692 = vunpack.c.h.b16 %v84
    %v693 = vunpack.c.l.b16 %v85
    %v694 = vunpack.c.h.b16 %v85
    %v695 = vunpack.c.l.b16 %v86
    %v696 = vunpack.c.h.b16 %v86
    %v697 = vunpack.c.l.b16 %v87
    %v698 = vunpack.c.h.b16 %v87
    %v699 = vunpack.c.l.b16 %v88
    %v700 = vunpack.c.h.b16 %v88
    %v701 = vunpack.c.l.b16 %v89
    %v702 = vunpack.c.h.b16 %v89
    %v703 = vunpack.c.l.b16 %v90
    %v704 = vunpack.c.h.b16 %v90
    %v705 = vunpack.c.l.b16 %v91
    %v706 = vunpack.c.h.b16 %v91
    %v707 = vunpack.c.l.b16 %v92
    %v708 = vunpack.c.h.b16 %v92
    %v709 = vunpack.c.l.b16 %v93
    %v710 = vunpack.c.h.b16 %v93
    %v711 = vunpack.c.l.b16 %v94
    %v712 = vunpack.c.h.b16 %v94
    %v713 = vunpack.c.l.b16 %v95
    %v714 = vunpack.c.h.b16 %v95
    %v715 = vunpack.c.l.b16 %v96
    %v716 = vunpack.c.h.b16 %v96
    %v717 = vunpack.c.l.b16 %v97
    %v718 = vunpack.c.h.b16 %v97
    %v719 = vunpack.c.l.b16 %v98
    %v720 = vunpack.c.h.b16 %v98
    %v721 = vunpack.c.l.b16 %v99
    %v722 = vunpack.c.h.b16 %v99
    %v723 = vunpack.c.l.b16 %v100
    %v724 = vunpack.c.h.b16 %v100
    %v725 = vunpack.c.l.b16 %v101
    %v726 = vunpack.c.h.b16 %v101
    %v727 = vunpack.c.l.b16 %v102
    %v728 = vunpack.c.h.b16 %v102
    %v729 = vunpack.c.l.b16 %v103
    %v730 = vunpack.c.h.b16 %v103
    %v731 = vunpack.c.l.b16 %v104
    %v732 = vunpack.c.h.b16 %v104
    %v733 = vunpack.c.l.b16 %v105
    %v734 = vunpack.c.h.b16 %v105
    %v735 = vunpack.c.l.b16 %v106
    %v736 = vunpack.c.h.b16 %v106
    %v737 = vunpack.c.l.b16 %v107
    %v738 = vunpack.c.h.b16 %v107
    %v739 = vunpack.c.l.b16 %v108
    %v740 = vunpack.c.h.b16 %v108
    %v741 = vunpack.c.l.b16 %v109
    %v742 = vunpack.c.h.b16 %v109
    %v743 = vunpack.c.l.b16 %v110
    %v744 = vunpack.c.h.b16 %v110
    %v745 = vunpack.c.l.b16 %v111
    %v746 = vunpack.c.h.b16 %v111
    %v747 = vunpack.c.l.b16 %v112
    %v748 = vunpack.c.h.b16 %v112
    %v749 = vunpack.c.l.b16 %v113
    %v750 = vunpack.c.h.b16 %v113
    %v751 = vunpack.c.l.b16 %v114
    %v752 = vunpack.c.h.b16 %v114
    %v753 = vunpack.c.l.b16 %v115
    %v754 = vunpack.c.h.b16 %v115
    %v755 = vunpack.c.l.b16 %v116
    %v756 = vunpack.c.h.b16 %v116
    %v757 = vunpack.c.l.b16 %v117
    %v758 = vunpack.c.h.b16 %v117
    %v759 = vunpack.c.l.b16 %v118
    %v760 = vunpack.c.h.b16 %v118
    %v761 = vunpack.c.l.b16 %v119
    %v762 = vunpack.c.h.b16 %v119
    %v763 = vunpack.c.l.b16 %v120
    %v764 = vunpack.c.h.b16 %v120
    %v765 = vunpack.c.l.b16 %v121
    %v766 = vunpack.c.h.b16 %v121
    %v767 = vunpack.c.l.b16 %v122
    %v768 = vunpack.c.h.b16 %v122
    %v769 = vunpack.c.l.b16 %v123
    %v770 = vunpack.c.h.b16 %v123
    %v771 = vunpack.c.l.b16 %v124
    %v772 = vunpack.c.h.b16 %v124
    %v773 = vunpack.c.l.b16 %v125
    %v774 = vunpack.c.h.b16 %v125
    %v775 = vunpack.c.l.b16 %v126
    %v776 = vunpack.c.h.b16 %v126
    %v777 = vunpack.c.l.b16 %v127
    %v778 = vunpack.c.h.b16 %v127
    %v779 = vunpack.c.l.b16 %v128
    %v780 = vunpack.c.h.b16 %v128
    %v781 = vunpack.c.l.b16 %v129
    %v782 = vunpack.c.h.b16 %v129
    %v783 = vunpack.c.l.b16 %v130
    %v784 = vunpack.c.h.b16 %v130
    %v785 = vunpack.c.l.b16 %v131
    %v786 = vunpack.c.h.b16 %v131
    %v787 = vunpack.c.l.b16 %v132
    %v788 = vunpack.c.h.b16 %v132
    %v789 = vunpack.c.l.b16 %v133
    %v790 = vunpack.c.h.b16 %v133
    %v791 = vunpack.c.l.b16 %v134
    %v792 = vunpack.c.h.b16 %v134
    %v793 = vunpack.c.l.b16 %v135
    %v794 = vunpack.c.h.b16 %v135
    %v795 = vunpack.c.l.b16 %v136
    %v796 = vunpack.c.h.b16 %v136
    %v797 = vunpack.c.l.b16 %v137
    %v798 = vunpack.c.h.b16 %v137
    %v799 = vunpack.c.l.b16 %v138
    %v800 = vunpack.c.h.b16 %v138
    %v801 = vunpack.c.l.b16 %v139
    %v802 = vunpack.c.h.b16 %v139
    %v803 = vunpack.c.l.b16 %v140
    %v804 = vunpack.c.h.b16 %v140
    %v805 = vunpack.c.l.b16 %v141
    %v806 = vunpack.c.h.b16 %v141
    %v807 = vunpack.c.l.b16 %v142
    %v808 = vunpack.c.h.b16 %v142
    %v809 = vunpack.c.l.b16 %v143
    %v810 = vunpack.c.h.b16 %v143
    %v811 = vunpack.c.l.b16 %v144
    %v812 = vunpack.c.h.b16 %v144
    %v813 = vunpack.c.l.b16 %v145
    %v814 = vunpack.c.h.b16 %v145
    %v815 = vunpack.c.l.b16 %v146
    %v816 = vunpack.c.h.b16 %v146
    %v817 = vunpack.c.l.b16 %v147
    %v818 = vunpack.c.h.b16 %v147
    %v819 = vunpack.c.l.b16 %v148
    %v820 = vunpack.c.h.b16 %v148
    %v821 = vunpack.c.l.b16 %v149
    %v822 = vunpack.c.h.b16 %v149
    %v823 = vunpack.c.l.b16 %v150
    %v824 = vunpack.c.h.b16 %v150
    %v825 = vunpack.c.l.b16 %v151
    %v826 = vunpack.c.h.b16 %v151
    %v827 = vunpack.c.l.b16 %v152
    %v828 = vunpack.c.h.b16 %v152
    %v829 = vunpack.c.l.b16 %v153
    %v830 = vunpack.c.h.b16 %v153
    %v831 = vunpack.c.l.b16 %v154
    %v832 = vunpack.c.h.b16 %v154
    %v833 = vunpack.c.l.b16 %v155
    %v834 = vunpack.c.h.b16 %v155
    %v835 = vunpack.c.l.b16 %v156
    %v836 = vunpack.c.h.b16 %v156
    %v837 = vunpack.c.l.b16 %v157
    %v838 = vunpack.c.h.b16 %v157
    %v839 = vunpack.c.l.b16 %v158
    %v840 = vunpack.c.h.b16 %v158
    %v841 = vunpack.c.l.b16 %v159
    %v842 = vunpack.c.h.b16 %v159
    %v843 = vunpack.c.l.b16 %v160
    %v844 = vunpack.c.h.b16 %v160
    %v845 = vunpack.c.l.b16 %v161
    %v846 = vunpack.c.h.b16 %v161
    %v847 = vunpack.c.l.b16 %v162
    %v848 = vunpack.c.h.b16 %v162
    %v849 = vunpack.c.l.b16 %v163
    %v850 = vunpack.c.h.b16 %v163
    %v851 = vunpack.c.l.b16 %v164
    %v852 = vunpack.c.h.b16 %v164
    %v853 = vunpack.c.l.b16 %v165
    %v854 = vunpack.c.h.b16 %v165
    %v855 = vunpack.c.l.b16 %v166
    %v856 = vunpack.c.h.b16 %v166
    %v857 = vunpack.c.l.b16 %v167
    %v858 = vunpack.c.h.b16 %v167
    %v859 = vunpack.c.l.b16 %v168
    %v860 = vunpack.c.h.b16 %v168
    %v861 = vunpack.c.l.b16 %v169
    %v862 = vunpack.c.h.b16 %v169
    %v863 = vunpack.c.l.b16 %v170
    %v864 = vunpack.c.h.b16 %v170
    %v865 = vunpack.c.l.b16 %v171
    %v866 = vunpack.c.h.b16 %v171
    %v867 = vunpack.c.l.b16 %v172
    %v868 = vunpack.c.h.b16 %v172
    %v869 = vunpack.c.l.b16 %v173
    %v870 = vunpack.c.h.b16 %v173
    %v871 = vunpack.c.l.b16 %v174
    %v872 = vunpack.c.h.b16 %v174
    %v873 = vunpack.c.l.b16 %v175
    %v874 = vunpack.c.h.b16 %v175
    %v875 = vunpack.c.l.b16 %v176
    %v876 = vunpack.c.h.b16 %v176
    %v877 = vunpack.c.l.b16 %v177
    %v878 = vunpack.c.h.b16 %v177
    %v879 = vunpack.c.l.b16 %v178
    %v880 = vunpack.c.h.b16 %v178
    %v881 = vunpack.c.l.b16 %v179
    %v882 = vunpack.c.h.b16 %v179
    %v883 = vunpack.c.l.b16 %v180
    %v884 = vunpack.c.h.b16 %v180
    %v885 = vunpack.c.l.b16 %v181
    %v886 = vunpack.c.h.b16 %v181
    %v887 = vunpack.c.l.b16 %v182
    %v888 = vunpack.c.h.b16 %v182
    %v889 = vunpack.c.l.b16 %v183
    %v890 = vunpack.c.h.b16 %v183
    %v891 = vunpack.c.l.b16 %v184
    %v892 = vunpack.c.h.b16 %v184
    %v893 = vunpack.c.l.b16 %v185
    %v894 = vunpack.c.h.b16 %v185
    %v895 = vunpack.c.l.b16 %v186
    %v896 = vunpack.c.h.b16 %v186
    %v897 = vunpack.c.l.b16 %v187
    %v898 = vunpack.c.h.b16 %v187
    %v899 = vunpack.c.l.b16 %v188
    %v900 = vunpack.c.h.b16 %v188
    %v901 = vunpack.c.l.b16 %v189
    %v902 = vunpack.c.h.b16 %v189
    %v903 = vunpack.c.l.b16 %v190
    %v904 = vunpack.c.h.b16 %v190
    %v905 = vunpack.c.l.b16 %v191
    %v906 = vunpack.c.h.b16 %v191
    %v907 = vunpack.c.l.b16 %v192
    %v908 = vunpack.c.h.b16 %v192
    %v909 = vunpack.c.l.b16 %v193
    %v910 = vunpack.c.h.b16 %v193
    %v911 = vunpack.c.l.b16 %v194
    %v912 = vunpack.c.h.b16 %v194
    %v913 = vunpack.c.l.b16 %v195
    %v914 = vunpack.c.h.b16 %v195
    %v915 = vunpack.c.l.b16 %v196
    %v916 = vunpack.c.h.b16 %v196
    %v917 = vunpack.c.l.b16 %v197
    %v918 = vunpack.c.h.b16 %v197
    %v919 = vunpack.c.l.b16 %v198
    %v920 = vunpack.c.h.b16 %v198
    %v921 = vunpack.c.l.b16 %v199
    %v922 = vunpack.c.h.b16 %v199
    %v923 = vunpack.c.l.b16 %v200
    %v924 = vunpack.c.h.b16 %v200
    %v925 = vunpack.c.l.b16 %v201
    %v926 = vunpack.c.h.b16 %v201
    %v927 = vunpack.c.l.b16 %v202
    %v928 = vunpack.c.h.b16 %v202
    %v929 = vunpack.c.l.b16 %v203
    %v930 = vunpack.c.h.b16 %v203
    %v931 = vunpack.c.l.b16 %v204
    %v932 = vunpack.c.h.b16 %v204
    %v933 = vunpack.c.l.b16 %v205
    %v934 = vunpack.c.h.b16 %v205
    %v935 = vunpack.c.l.b16 %v206
    %v936 = vunpack.c.h.b16 %v206
    %v937 = vunpack.c.l.b16 %v207
    %v938 = vunpack.c.h.b16 %v207
    %v939 = vunpack.c.l.b16 %v208
    %v940 = vunpack.c.h.b16 %v208
    %v941 = vunpack.c.l.b16 %v209
    %v942 = vunpack.c.h.b16 %v209
    %v943 = vunpack.c.l.b16 %v210
    %v944 = vunpack.c.h.b16 %v210
    %v945 = vunpack.c.l.b16 %v211
    %v946 = vunpack.c.h.b16 %v211
    %v947 = vunpack.c.l.b16 %v212
    %v948 = vunpack.c.h.b16 %v212
    %v949 = vunpack.c.l.b16 %v213
    %v950 = vunpack.c.h.b16 %v213
    %v951 = vunpack.c.l.b16 %v214
    %v952 = vunpack.c.h.b16 %v214
    %v953 = vunpack.c.l.b16 %v215
    %v954 = vunpack.c.h.b16 %v215
    %v955 = vunpack.c.l.b16 %v216
    %v956 = vunpack.c.h.b16 %v216
    %v957 = vunpack.c.l.b16 %v217
    %v958 = vunpack.c.h.b16 %v217
    %v959 = vunpack.c.l.b16 %v218
    %v960 = vunpack.c.h.b16 %v218
    %v961 = vunpack.c.l.b16 %v219
    %v962 = vunpack.c.h.b16 %v219
    %v963 = vunpack.c.l.b16 %v220
    %v964 = vunpack.c.h.b16 %v220
    %v965 = vunpack.c.l.b16 %v221
    %v966 = vunpack.c.h.b16 %v221
    %v967 = vunpack.c.l.b16 %v222
    %v968 = vunpack.c.h.b16 %v222
    %v969 = vunpack.c.l.b16 %v223
    %v970 = vunpack.c.h.b16 %v223
    %v971 = vunpack.c.l.b16 %v224
    %v972 = vunpack.c.h.b16 %v224
    %v973 = vunpack.c.l.b16 %v225
    %v974 = vunpack.c.h.b16 %v225
    %v975 = vunpack.c.l.b16 %v226
    %v976 = vunpack.c.h.b16 %v226
    %v977 = vunpack.c.l.b16 %v227
    %v978 = vunpack.c.h.b16 %v227
    %v979 = vunpack.c.l.b16 %v228
    %v980 = vunpack.c.h.b16 %v228
    %v981 = vunpack.c.l.b16 %v229
    %v982 = vunpack.c.h.b16 %v229
    %v983 = vunpack.c.l.b16 %v230
    %v984 = vunpack.c.h.b16 %v230
    %v985 = vunpack.c.l.b16 %v231
    %v986 = vunpack.c.h.b16 %v231
    %v987 = vunpack.c.l.b16 %v232
    %v988 = vunpack.c.h.b16 %v232
    %v989 = vunpack.c.l.b16 %v233
    %v990 = vunpack.c.h.b16 %v233
    %v991 = vunpack.c.l.b16 %v234
    %v992 = vunpack.c.h.b16 %v234
    %v993 = vunpack.c.l.b16 %v235
    %v994 = vunpack.c.h.b16 %v235
    %v995 = vunpack.c.l.b16 %v236
    %v996 = vunpack.c.h.b16 %v236
    %v997 = vunpack.c.l.b16 %v237
    %v998 = vunpack.c.h.b16 %v237
    %v999 = vunpack.c.l.b16 %v238
    %v1000 = vunpack.c.h.b16 %v238
    %v1001 = vunpack.c.l.b16 %v239
    %v1002 = vunpack.c.h.b16 %v239
    %v1003 = vunpack.c.l.b16 %v240
    %v1004 = vunpack.c.h.b16 %v240
    %v1005 = vunpack.c.l.b16 %v241
    %v1006 = vunpack.c.h.b16 %v241
    %v1007 = vunpack.c.l.b16 %v242
    %v1008 = vunpack.c.h.b16 %v242
    %v1009 = vunpack.c.l.b16 %v243
    %v1010 = vunpack.c.h.b16 %v243
    %v1011 = vunpack.c.l.b16 %v244
    %v1012 = vunpack.c.h.b16 %v244
    %v1013 = vunpack.c.l.b16 %v245
    %v1014 = vunpack.c.h.b16 %v245
    %v1015 = vunpack.c.l.b16 %v246
    %v1016 = vunpack.c.h.b16 %v246
    %v1017 = vunpack.c.l.b16 %v247
    %v1018 = vunpack.c.h.b16 %v247
    %v1019 = vunpack.c.l.b16 %v248
    %v1020 = vunpack.c.h.b16 %v248
    %v1021 = vunpack.c.l.b16 %v249
    %v1022 = vunpack.c.h.b16 %v249
    %v1023 = vunpack.c.l.b16 %v250
    %v1024 = vunpack.c.h.b16 %v250
    %v1025 = vunpack.c.l.b16 %v251
    %v1026 = vunpack.c.h.b16 %v251
    %v1027 = vunpack.c.l.b16 %v252
    %v1028 = vunpack.c.h.b16 %v252
    %v1029 = vunpack.c.l.b16 %v253
    %v1030 = vunpack.c.h.b16 %v253
    %v1031 = vunpack.c.l.b16 %v254
    %v1032 = vunpack.c.h.b16 %v254
    %v1033 = vunpack.c.l.b16 %v255
    %v1034 = vunpack.c.h.b16 %v255
    %v1035 = vunpack.c.l.b16 %v256
    %v1036 = vunpack.c.h.b16 %v256
    %v1037 = vunpack.c.l.b16 %v257
    %v1038 = vunpack.c.h.b16 %v257
    %v1039 = vunpack.c.l.b16 %v258
    %v1040 = vunpack.c.h.b16 %v258
    %v1041 = vunpack.c.l.b16 %v259
    %v1042 = vunpack.c.h.b16 %v259
    %v1043 = vunpack.c.l.b16 %v260
    %v1044 = vunpack.c.h.b16 %v260
    %v1045 = vunpack.c.l.b16 %v261
    %v1046 = vunpack.c.h.b16 %v261
    %v1047 = vunpack.c.l.b16 %v262
    %v1048 = vunpack.c.h.b16 %v262
    %v1049 = vunpack.c.l.b16 %v263
    %v1050 = vunpack.c.h.b16 %v263
    %v1051 = vunpack.c.l.b16 %v264
    %v1052 = vunpack.c.h.b16 %v264
    %v1053 = vunpack.c.l.b16 %v265
    %v1054 = vunpack.c.h.b16 %v265
    %v1055 = vunpack.c.l.b16 %v266
    %v1056 = vunpack.c.h.b16 %v266
    %v1057 = vunpack.c.l.b16 %v267
    %v1058 = vunpack.c.h.b16 %v267
    %v1059 = vunpack.c.l.b16 %v268
    %v1060 = vunpack.c.h.b16 %v268
    %v1061 = vunpack.c.l.b16 %v269
    %v1062 = vunpack.c.h.b16 %v269
    %v1063 = vunpack.c.l.b16 %v270
    %v1064 = vunpack.c.h.b16 %v270
    %v1065 = vunpack.c.l.b16 %v271
    %v1066 = vunpack.c.h.b16 %v271
    %v1067 = vunpack.c.l.b16 %v272
    %v1068 = vunpack.c.h.b16 %v272
    %v1069 = vunpack.c.l.b16 %v273
    %v1070 = vunpack.c.h.b16 %v273
    %v1071 = vunpack.c.l.b16 %v274
    %v1072 = vunpack.c.h.b16 %v274
    %v1073 = vunpack.c.l.b16 %v275
    %v1074 = vunpack.c.h.b16 %v275
    %v1075 = vunpack.c.l.b16 %v276
    %v1076 = vunpack.c.h.b16 %v276
    %v1077 = vunpack.c.l.b16 %v277
    %v1078 = vunpack.c.h.b16 %v277
    %v1079 = vunpack.c.l.b16 %v278
    %v1080 = vunpack.c.h.b16 %v278
    %v1081 = vunpack.c.l.b16 %v279
    %v1082 = vunpack.c.h.b16 %v279
    %v1083 = vunpack.c.l.b16 %v280
    %v1084 = vunpack.c.h.b16 %v280
    %v1085 = vunpack.c.l.b16 %v281
    %v1086 = vunpack.c.h.b16 %v281
    %v1087 = vunpack.c.l.b16 %v282
    %v1088 = vunpack.c.h.b16 %v282
    %v1089 = vunpack.c.l.b16 %v283
    %v1090 = vunpack.c.h.b16 %v283
    %v1091 = vunpack.c.l.b16 %v284
    %v1092 = vunpack.c.h.b16 %v284
    %v1093 = vunpack.c.l.b16 %v285
    %v1094 = vunpack.c.h.b16 %v285
    %v1095 = vunpack.c.l.b16 %v286
    %v1096 = vunpack.c.h.b16 %v286
    %v1097 = vunpack.c.l.b16 %v287
    %v1098 = vunpack.c.h.b16 %v287
    %v1099 = vunpack.c.l.b16 %v288
    %v1100 = vunpack.c.h.b16 %v288
    %v1101 = vunpack.c.l.b16 %v289
    %v1102 = vunpack.c.h.b16 %v289
    %v1103 = vunpack.c.l.b16 %v290
    %v1104 = vunpack.c.h.b16 %v290
    %v1105 = vunpack.c.l.b16 %v291
    %v1106 = vunpack.c.h.b16 %v291
    %v1107 = vunpack.c.l.b16 %v292
    %v1108 = vunpack.c.h.b16 %v292
    %v1109 = vunpack.c.l.b16 %v293
    %v1110 = vunpack.c.h.b16 %v293
    %v1111 = vunpack.c.l.b16 %v294
    %v1112 = vunpack.c.h.b16 %v294
    %v1113 = vunpack.c.l.b16 %v295
    %v1114 = vunpack.c.h.b16 %v295
    %v1115 = vunpack.c.l.b16 %v296
    %v1116 = vunpack.c.h.b16 %v296
    %v1117 = vpack.c.b16 %v607, %v605
    %v1118 = vpack.c.b16 %v608, %v606
    %v1119 = vpack.c.b16 %v611, %v609
    %v1120 = vpack.c.b16 %v612, %v610
    %v1121 = vpack.c.b16 %v615, %v613
    %v1122 = vpack.c.b16 %v616, %v614
    %v1123 = vpack.c.b16 %v619, %v617
    %v1124 = vpack.c.b16 %v620, %v618
    %v1125 = vpack.c.b16 %v623, %v621
    %v1126 = vpack.c.b16 %v624, %v622
    %v1127 = vpack.c.b16 %v627, %v625
    %v1128 = vpack.c.b16 %v628, %v626
    %v1129 = vpack.c.b16 %v631, %v629
    %v1130 = vpack.c.b16 %v632, %v630
    %v1131 = vpack.c.b16 %v635, %v633
    %v1132 = vpack.c.b16 %v636, %v634
    %v1133 = vpack.c.b16 %v639, %v637
    %v1134 = vpack.c.b16 %v640, %v638
    %v1135 = vpack.c.b16 %v643, %v641
    %v1136 = vpack.c.b16 %v644, %v642
    %v1137 = vpack.c.b16 %v647, %v645
    %v1138 = vpack.c.b16 %v648, %v646
    %v1139 = vpack.c.b16 %v651, %v649
    %v1140 = vpack.c.b16 %v652, %v650
    %v1141 = vpack.c.b16 %v655, %v653
    %v1142 = vpack.c.b16 %v656, %v654
    %v1143 = vpack.c.b16 %v659, %v657
    %v1144 = vpack.c.b16 %v660, %v658
    %v1145 = vpack.c.b16 %v663, %v661
    %v1146 = vpack.c.b16 %v664, %v662
    %v1147 = vpack.c.b16 %v667, %v665
    %v1148 = vpack.c.b16 %v668, %v666
    %v1149 = vpack.c.b16 %v671, %v669
    %v1150 = vpack.c.b16 %v672, %v670
    %v1151 = vpack.c.b16 %v675, %v673
    %v1152 = vpack.c.b16 %v676, %v674
    %v1153 = vpack.c.b16 %v679, %v677
    %v1154 = vpack.c.b16 %v680, %v678
    %v1155 = vpack.c.b16 %v683, %v681
    %v1156 = vpack.c.b16 %v684, %v682
    %v1157 = vpack.c.b16 %v687, %v685
    %v1158 = vpack.c.b16 %v688, %v686
    %v1159 = vpack.c.b16 %v691, %v689
    %v1160 = vpack.c.b16 %v692, %v690
    %v1161 = vpack.c.b16 %v695, %v693
    %v1162 = vpack.c.b16 %v696, %v694
    %v1163 = vpack.c.b16 %v699, %v697
    %v1164 = vpack.c.b16 %v700, %v698
    %v1165 = vpack.c.b16 %v703, %v701
    %v1166 = vpack.c.b16 %v704, %v702
    %v1167 = vpack.c.b16 %v707, %v705
    %v1168 = vpack.c.b16 %v708, %v706
    %v1169 = vpack.c.b16 %v711, %v709
    %v1170 = vpack.c.b16 %v712, %v710
    %v1171 = vpack.c.b16 %v715, %v713
    %v1172 = vpack.c.b16 %v716, %v714
    %v1173 = vpack.c.b16 %v719, %v717
    %v1174 = vpack.c.b16 %v720, %v718
    %v1175 = vpack.c.b16 %v723, %v721
    %v1176 = vpack.c.b16 %v724, %v722
    %v1177 = vpack.c.b16 %v727, %v725
    %v1178 = vpack.c.b16 %v728, %v726
    %v1179 = vpack.c.b16 %v731, %v729
    %v1180 = vpack.c.b16 %v732, %v730
    %v1181 = vpack.c.b16 %v735, %v733
    %v1182 = vpack.c.b16 %v736, %v734
    %v1183 = vpack.c.b16 %v739, %v737
    %v1184 = vpack.c.b16 %v740, %v738
    %v1185 = vpack.c.b16 %v743, %v741
    %v1186 = vpack.c.b16 %v744, %v742
    %v1187 = vpack.c.b16 %v747, %v745
    %v1188 = vpack.c.b16 %v748, %v746
    %v1189 = vpack.c.b16 %v751, %v749
    %v1190 = vpack.c.b16 %v752, %v750
    %v1191 = vpack.c.b16 %v755, %v753
    %v1192 = vpack.c.b16 %v756, %v754
    %v1193 = vpack.c.b16 %v759, %v757
    %v1194 = vpack.c.b16 %v760, %v758
    %v1195 = vpack.c.b16 %v763, %v761
    %v1196 = vpack.c.b16 %v764, %v762
    %v1197 = vpack.c.b16 %v767, %v765
    %v1198 = vpack.c.b16 %v768, %v766
    %v1199 = vpack.c.b16 %v771, %v769
    %v1200 = vpack.c.b16 %v772, %v770
    %v1201 = vpack.c.b16 %v775, %v773
    %v1202 = vpack.c.b16 %v776, %v774
    %v1203 = vpack.c.b16 %v779, %v777
    %v1204 = vpack.c.b16 %v780, %v778
    %v1205 = vpack.c.b16 %v783, %v781
    %v1206 = vpack.c.b16 %v784, %v782
    %v1207 = vpack.c.b16 %v787, %v785
    %v1208 = vpack.c.b16 %v788, %v786
    %v1209 = vpack.c.b16 %v791, %v789
    %v1210 = vpack.c.b16 %v792, %v790
    %v1211 = vpack.c.b16 %v795, %v793
    %v1212 = vpack.c.b16 %v796, %v794
    %v1213 = vpack.c.b16 %v799, %v797
    %v1214 = vpack.c.b16 %v800, %v798
    %v1215 = vpack.c.b16 %v803, %v801
    %v1216 = vpack.c.b16 %v804, %v802
    %v1217 = vpack.c.b16 %v807, %v805
    %v1218 = vpack.c.b16 %v808, %v806
    %v1219 = vpack.c.b16 %v811, %v809
    %v1220 = vpack.c.b16 %v812, %v810
    %v1221 = vpack.c.b16 %v815, %v813
    %v1222 = vpack.c.b16 %v816, %v814
    %v1223 = vpack.c.b16 %v819, %v817
    %v1224 = vpack.c.b16 %v820, %v818
    %v1225 = vpack.c.b16 %v823, %v821
    %v1226 = vpack.c.b16 %v824, %v822
    %v1227 = vpack.c.b16 %v827, %v825
    %v1228 = vpack.c.b16 %v828, %v826
    %v1229 = vpack.c.b16 %v831, %v829
    %v1230 = vpack.c.b16 %v832, %v830
    %v1231 = vpack.c.b16 %v835, %v833
    %v1232 = vpack.c.b16 %v836, %v834
    %v1233 = vpack.c.b16 %v839, %v837
    %v1234 = vpack.c.b16 %v840, %v838
    %v1235 = vpack.c.b16 %v843, %v841
    %v1236 = vpack.c.b16 %v844, %v842
    %v1237 = vpack.c.b16 %v847, %v845
    %v1238 = vpack.c.b16 %v848, %v846
    %v1239 = vpack.c.b16 %v851, %v849
    %v1240 = vpack.c.b16 %v852, %v850
    %v1241 = vpack.c.b16 %v855, %v853
    %v1242 = vpack.c.b16 %v856, %v854
    %v1243 = vpack.c.b16 %v859, %v857
    %v1244 = vpack.c.b16 %v860, %v858
    %v1245 = vpack.c.b16 %v863, %v861
    %v1246 = vpack.c.b16 %v864, %v862
    %v1247 = vpack.c.b16 %v867, %v865
    %v1248 = vpack.c.b16 %v868, %v866
    %v1249 = vpack.c.b16 %v871, %v869
    %v1250 = vpack.c.b16 %v872, %v870
    %v1251 = vpack.c.b16 %v875, %v873
    %v1252 = vpack.c.b16 %v876, %v874
    %v1253 = vpack.c.b16 %v879, %v877
    %v1254 = vpack.c.b16 %v880, %v878
    %v1255 = vpack.c.b16 %v883, %v881
    %v1256 = vpack.c.b16 %v884, %v882
    %v1257 = vpack.c.b16 %v887, %v885
    %v1258 = vpack.c.b16 %v888, %v886
    %v1259 = vpack.c.b16 %v891, %v889
    %v1260 = vpack.c.b16 %v892, %v890
    %v1261 = vpack.c.b16 %v895, %v893
    %v1262 = vpack.c.b16 %v896, %v894
    %v1263 = vpack.c.b16 %v899, %v897
    %v1264 = vpack.c.b16 %v900, %v898
    %v1265 = vpack.c.b16 %v903, %v901
    %v1266 = vpack.c.b16 %v904, %v902
    %v1267 = vpack.c.b16 %v907, %v905
    %v1268 = vpack.c.b16 %v908, %v906
    %v1269 = vpack.c.b16 %v911, %v909
    %v1270 = vpack.c.b16 %v912, %v910
    %v1271 = vpack.c.b16 %v915, %v913
    %v1272 = vpack.c.b16 %v916, %v914
    %v1273 = vpack.c.b16 %v919, %v917
    %v1274 = vpack.c.b16 %v920, %v918
    %v1275 = vpack.c.b16 %v923, %v921
    %v1276 = vpack.c.b16 %v924, %v922
    %v1277 = vpack.c.b16 %v927, %v925
    %v1278 = vpack.c.b16 %v928, %v926
    %v1279 = vpack.c.b16 %v931, %v929
    %v1280 = vpack.c.b16 %v932, %v930
    %v1281 = vpack.c.b16 %v935, %v933
    %v1282 = vpack.c.b16 %v936, %v934
    %v1283 = vpack.c.b16 %v939, %v937
    %v1284 = vpack.c.b16 %v940, %v938
    %v1285 = vpack.c.b16 %v943, %v941
    %v1286 = vpack.c.b16 %v944, %v942
    %v1287 = vpack.c.b16 %v947, %v945
    %v1288 = vpack.c.b16 %v948, %v946
    %v1289 = vpack.c.b16 %v951, %v949
    %v1290 = vpack.c.b16 %v952, %v950
    %v1291 = vpack.c.b16 %v955, %v953
    %v1292 = vpack.c.b16 %v956, %v954
    %v1293 = vpack.c.b16 %v959, %v957
    %v1294 = vpack.c.b16 %v960, %v958
    %v1295 = vpack.c.b16 %v963, %v961
    %v1296 = vpack.c.b16 %v964, %v962
    %v1297 = vpack.c.b16 %v967, %v965
    %v1298 = vpack.c.b16 %v968, %v966
    %v1299 = vpack.c.b16 %v971, %v969
    %v1300 = vpack.c.b16 %v972, %v970
    %v1301 = vpack.c.b16 %v975, %v973
    %v1302 = vpack.c.b16 %v976, %v974
    %v1303 = vpack.c.b16 %v979, %v977
    %v1304 = vpack.c.b16 %v980, %v978
    %v1305 = vpack.c.b16 %v983, %v981
    %v1306 = vpack.c.b16 %v984, %v982
    %v1307 = vpack.c.b16 %v987, %v985
    %v1308 = vpack.c.b16 %v988, %v986
    %v1309 = vpack.c.b16 %v991, %v989
    %v1310 = vpack.c.b16 %v992, %v990
    %v1311 = vpack.c.b16 %v995, %v993
    %v1312 = vpack.c.b16 %v996, %v994
    %v1313 = vpack.c.b16 %v999, %v997
    %v1314 = vpack.c.b16 %v1000, %v998
    %v1315 = vpack.c.b16 %v1003, %v1001
    %v1316 = vpack.c.b16 %v1004, %v1002
    %v1317 = vpack.c.b16 %v1007, %v1005
    %v1318 = vpack.c.b16 %v1008, %v1006
    %v1319 = vpack.c.b16 %v1011, %v1009
    %v1320 = vpack.c.b16 %v1012, %v1010
    %v1321 = vpack.c.b16 %v1015, %v1013
    %v1322 = vpack.c.b16 %v1016, %v1014
    %v1323 = vpack.c.b16 %v1019, %v1017
    %v1324 = vpack.c.b16 %v1020, %v1018
    %v1325 = vpack.c.b16 %v1023, %v1021
    %v1326 = vpack.c.b16 %v1024, %v1022
    %v1327 = vpack.c.b16 %v1027, %v1025
    %v1328 = vpack.c.b16 %v1028, %v1026
    %v1329 = vpack.c.b16 %v1031, %v1029
    %v1330 = vpack.c.b16 %v1032, %v1030
    %v1331 = vpack.c.b16 %v1035, %v1033
    %v1332 = vpack.c.b16 %v1036, %v1034
    %v1333 = vpack.c.b16 %v1039, %v1037
    %v1334 = vpack.c.b16 %v1040, %v1038
    %v1335 = vpack.c.b16 %v1043, %v1041
    %v1336 = vpack.c.b16 %v1044, %v1042
    %v1337 = vpack.c.b16 %v1047, %v1045
    %v1338 = vpack.c.b16 %v1048, %v1046
    %v1339 = vpack.c.b16 %v1051, %v1049
    %v1340 = vpack.c.b16 %v1052, %v1050
    %v1341 = vpack.c.b16 %v1055, %v1053
    %v1342 = vpack.c.b16 %v1056, %v1054
    %v1343 = vpack.c.b16 %v1059, %v1057
    %v1344 = vpack.c.b16 %v1060, %v1058
    %v1345 = vpack.c.b16 %v1063, %v1061
    %v1346 = vpack.c.b16 %v1064, %v1062
    %v1347 = vpack.c.b16 %v1067, %v1065
    %v1348 = vpack.c.b16 %v1068, %v1066
    %v1349 = vpack.c.b16 %v1071, %v1069
    %v1350 = vpack.c.b16 %v1072, %v1070
    %v1351 = vpack.c.b16 %v1075, %v1073
    %v1352 = vpack.c.b16 %v1076, %v1074
    %v1353 = vpack.c.b16 %v1079, %v1077
    %v1354 = vpack.c.b16 %v1080, %v1078
    %v1355 = vpack.c.b16 %v1083, %v1081
    %v1356 = vpack.c.b16 %v1084, %v1082
    %v1357 = vpack.c.b16 %v1087, %v1085
    %v1358 = vpack.c.b16 %v1088, %v1086
    %v1359 = vpack.c.b16 %v1091, %v1089
    %v1360 = vpack.c.b16 %v1092, %v1090
    %v1361 = vpack.c.b16 %v1095, %v1093
    %v1362 = vpack.c.b16 %v1096, %v1094
    %v1363 = vpack.c.b16 %v1099, %v1097
    %v1364 = vpack.c.b16 %v1100, %v1098
    %v1365 = vpack.c.b16 %v1103, %v1101
    %v1366 = vpack.c.b16 %v1104, %v1102
    %v1367 = vpack.c.b16 %v1107, %v1105
    %v1368 = vpack.c.b16 %v1108, %v1106
    %v1369 = vpack.c.b16 %v1111, %v1109
    %v1370 = vpack.c.b16 %v1112, %v1110
    %v1371 = vpack.c.b16 %v1115, %v1113
    %v1372 = vpack.c.b16 %v1116, %v1114
    %1629 = vmatprep.subr.bf16.mxu0 %v1118
    %1630 = vmatpush1.bf16.msra.mxu0 %v1117
    %1631 = vmatprep.subr.bf16.mxu0 %v1120
    %1632 = vmatpush1.bf16.msra.mxu0 %v1119
    %1633 = vmatprep.subr.bf16.mxu0 %v1122
    %1634 = vmatpush1.bf16.msra.mxu0 %v1121
    %1635 = vmatprep.subr.bf16.mxu0 %v1124
    %1636 = vmatpush1.bf16.msra.mxu0 %v1123
    %1637 = vmatprep.subr.bf16.mxu0 %v1126
    %1638 = vmatpush1.bf16.msra.mxu0 %v1125
    %1639 = vmatprep.subr.bf16.mxu0 %v1128
    %1640 = vmatpush1.bf16.msra.mxu0 %v1127
    %1641 = vmatprep.subr.bf16.mxu0 %v1130
    %1642 = vmatpush1.bf16.msra.mxu0 %v1129
    %1643 = vmatprep.subr.bf16.mxu0 %v1132
    %1644 = vmatpush1.bf16.msra.mxu0 %v1131
    %1645 = vmatprep.subr.bf16.mxu0 %v1134
    %1646 = vmatpush1.bf16.msra.mxu0 %v1133
    %1647 = vmatprep.subr.bf16.mxu0 %v1136
    %1648 = vmatpush1.bf16.msra.mxu0 %v1135
    %1649 = vmatprep.subr.bf16.mxu0 %v1138
    %1650 = vmatpush1.bf16.msra.mxu0 %v1137
    %1651 = vmatprep.subr.bf16.mxu0 %v1140
    %1652 = vmatpush1.bf16.msra.mxu0 %v1139
    %1653 = vmatprep.subr.bf16.mxu0 %v1142
    %1654 = vmatpush1.bf16.msra.mxu0 %v1141
    %1655 = vmatprep.subr.bf16.mxu0 %v1144
    %1656 = vmatpush1.bf16.msra.mxu0 %v1143
    %1657 = vmatprep.subr.bf16.mxu0 %v1146
    %1658 = vmatpush1.bf16.msra.mxu0 %v1145
    %1659 = vmatprep.subr.bf16.mxu0 %v1148
    %1660 = vmatpush1.bf16.msra.mxu0 %v1147
    %1661 = vmatprep.mubr.bf16.mxu0 %v322
    %1662 = vmatmul.mubr.bf16.gmra.mrb[0].mxu0 %v321
    %v1663 = vpop.f32.mrb[0].mxu0
    %v1664 = vadd.f32 %v342, %v1663
    %v1665 = vpop.f32.mrb[0].mxu0
    %v1666 = vadd.f32 %v346, %v1665
    %v1667 = vpop.f32.mrb[0].mxu0
    %v1668 = vpop.f32.mrb[0].mxu0
    %1669 = vdwg.mxu0
    %1670 = vmatprep.subr.bf16.mxu0 %v1150
    %1671 = vmatpush1.bf16.msra.mxu0 %v1149
    %1672 = vmatprep.subr.bf16.mxu0 %v1152
    %1673 = vmatpush1.bf16.msra.mxu0 %v1151
    %1674 = vmatprep.subr.bf16.mxu0 %v1154
    %1675 = vmatpush1.bf16.msra.mxu0 %v1153
    %1676 = vmatprep.subr.bf16.mxu0 %v1156
    %1677 = vmatpush1.bf16.msra.mxu0 %v1155
    %1678 = vmatprep.subr.bf16.mxu0 %v1158
    %1679 = vmatpush1.bf16.msra.mxu0 %v1157
    %1680 = vmatprep.subr.bf16.mxu0 %v1160
    %1681 = vmatpush1.bf16.msra.mxu0 %v1159
    %1682 = vmatprep.subr.bf16.mxu0 %v1162
    %1683 = vmatpush1.bf16.msra.mxu0 %v1161
    %1684 = vmatprep.subr.bf16.mxu0 %v1164
    %1685 = vmatpush1.bf16.msra.mxu0 %v1163
    %1686 = vmatprep.subr.bf16.mxu0 %v1166
    %1687 = vmatpush1.bf16.msra.mxu0 %v1165
    %1688 = vmatprep.subr.bf16.mxu0 %v1168
    %1689 = vmatpush1.bf16.msra.mxu0 %v1167
    %1690 = vmatprep.subr.bf16.mxu0 %v1170
    %1691 = vmatpush1.bf16.msra.mxu0 %v1169
    %1692 = vmatprep.subr.bf16.mxu0 %v1172
    %1693 = vmatpush1.bf16.msra.mxu0 %v1171
    %1694 = vmatprep.subr.bf16.mxu0 %v1174
    %1695 = vmatpush1.bf16.msra.mxu0 %v1173
    %1696 = vmatprep.subr.bf16.mxu0 %v1176
    %1697 = vmatpush1.bf16.msra.mxu0 %v1175
    %1698 = vmatprep.subr.bf16.mxu0 %v1178
    %1699 = vmatpush1.bf16.msra.mxu0 %v1177
    %1700 = vmatprep.subr.bf16.mxu0 %v1180
    %1701 = vmatpush1.bf16.msra.mxu0 %v1179
    %1702 = vmatprep.mubr.bf16.mxu0 %v324
    %1703 = vmatmul.mubr.bf16.gmra.mrb[0].mxu0 %v323
    %v1704 = vpop.f32.mrb[0].mxu0
    %v1705 = vadd.f32 %v1664, %v1704
    %v1706 = vpop.f32.mrb[0].mxu0
    %v1707 = vadd.f32 %v1666, %v1706
    %v1708 = vpop.f32.mrb[0].mxu0
    %v1709 = vpop.f32.mrb[0].mxu0
    %1710 = vdwg.mxu0
    %1711 = vmatprep.subr.bf16.mxu0 %v1182
    %1712 = vmatpush1.bf16.msra.mxu0 %v1181
    %1713 = vmatprep.subr.bf16.mxu0 %v1184
    %1714 = vmatpush1.bf16.msra.mxu0 %v1183
    %1715 = vmatprep.subr.bf16.mxu0 %v1186
    %1716 = vmatpush1.bf16.msra.mxu0 %v1185
    %1717 = vmatprep.subr.bf16.mxu0 %v1188
    %1718 = vmatpush1.bf16.msra.mxu0 %v1187
    %1719 = vmatprep.subr.bf16.mxu0 %v1190
    %1720 = vmatpush1.bf16.msra.mxu0 %v1189
    %1721 = vmatprep.subr.bf16.mxu0 %v1192
    %1722 = vmatpush1.bf16.msra.mxu0 %v1191
    %1723 = vmatprep.subr.bf16.mxu0 %v1194
    %1724 = vmatpush1.bf16.msra.mxu0 %v1193
    %1725 = vmatprep.subr.bf16.mxu0 %v1196
    %1726 = vmatpush1.bf16.msra.mxu0 %v1195
    %1727 = vmatprep.subr.bf16.mxu0 %v1198
    %1728 = vmatpush1.bf16.msra.mxu0 %v1197
    %1729 = vmatprep.subr.bf16.mxu0 %v1200
    %1730 = vmatpush1.bf16.msra.mxu0 %v1199
    %1731 = vmatprep.subr.bf16.mxu0 %v1202
    %1732 = vmatpush1.bf16.msra.mxu0 %v1201
    %1733 = vmatprep.subr.bf16.mxu0 %v1204
    %1734 = vmatpush1.bf16.msra.mxu0 %v1203
    %1735 = vmatprep.subr.bf16.mxu0 %v1206
    %1736 = vmatpush1.bf16.msra.mxu0 %v1205
    %1737 = vmatprep.subr.bf16.mxu0 %v1208
    %1738 = vmatpush1.bf16.msra.mxu0 %v1207
    %1739 = vmatprep.subr.bf16.mxu0 %v1210
    %1740 = vmatpush1.bf16.msra.mxu0 %v1209
    %1741 = vmatprep.subr.bf16.mxu0 %v1212
    %1742 = vmatpush1.bf16.msra.mxu0 %v1211
    %1743 = vmatprep.mubr.bf16.mxu0 %v326
    %1744 = vmatmul.mubr.bf16.gmra.mrb[0].mxu0 %v325
    %v1745 = vpop.f32.mrb[0].mxu0
    %v1746 = vadd.f32 %v1705, %v1745
    %v1747 = vpop.f32.mrb[0].mxu0
    %v1748 = vadd.f32 %v1707, %v1747
    %v1749 = vpop.f32.mrb[0].mxu0
    %v1750 = vpop.f32.mrb[0].mxu0
    %1751 = vdwg.mxu0
    %1752 = vmatprep.subr.bf16.mxu0 %v1214
    %1753 = vmatpush1.bf16.msra.mxu0 %v1213
    %1754 = vmatprep.subr.bf16.mxu0 %v1216
    %1755 = vmatpush1.bf16.msra.mxu0 %v1215
    %1756 = vmatprep.subr.bf16.mxu0 %v1218
    %1757 = vmatpush1.bf16.msra.mxu0 %v1217
    %1758 = vmatprep.subr.bf16.mxu0 %v1220
    %1759 = vmatpush1.bf16.msra.mxu0 %v1219
    %1760 = vmatprep.subr.bf16.mxu0 %v1222
    %1761 = vmatpush1.bf16.msra.mxu0 %v1221
    %1762 = vmatprep.subr.bf16.mxu0 %v1224
    %1763 = vmatpush1.bf16.msra.mxu0 %v1223
    %1764 = vmatprep.subr.bf16.mxu0 %v1226
    %1765 = vmatpush1.bf16.msra.mxu0 %v1225
    %1766 = vmatprep.subr.bf16.mxu0 %v1228
    %1767 = vmatpush1.bf16.msra.mxu0 %v1227
    %1768 = vmatprep.subr.bf16.mxu0 %v1230
    %1769 = vmatpush1.bf16.msra.mxu0 %v1229
    %1770 = vmatprep.subr.bf16.mxu0 %v1232
    %1771 = vmatpush1.bf16.msra.mxu0 %v1231
    %1772 = vmatprep.subr.bf16.mxu0 %v1234
    %1773 = vmatpush1.bf16.msra.mxu0 %v1233
    %1774 = vmatprep.subr.bf16.mxu0 %v1236
    %1775 = vmatpush1.bf16.msra.mxu0 %v1235
    %1776 = vmatprep.subr.bf16.mxu0 %v1238
    %1777 = vmatpush1.bf16.msra.mxu0 %v1237
    %1778 = vmatprep.subr.bf16.mxu0 %v1240
    %1779 = vmatpush1.bf16.msra.mxu0 %v1239
    %1780 = vmatprep.subr.bf16.mxu0 %v1242
    %1781 = vmatpush1.bf16.msra.mxu0 %v1241
    %1782 = vmatprep.subr.bf16.mxu0 %v1244
    %1783 = vmatpush1.bf16.msra.mxu0 %v1243
    %1784 = vmatprep.mubr.bf16.mxu0 %v328
    %1785 = vmatmul.mubr.bf16.gmra.mrb[0].mxu0 %v327
    %v1786 = vpop.f32.mrb[0].mxu0
    %v1787 = vadd.f32 %v1746, %v1786
    %v1788 = vpop.f32.mrb[0].mxu0
    %v1789 = vadd.f32 %v1748, %v1788
    %v1790 = vpop.f32.mrb[0].mxu0
    %v1791 = vpop.f32.mrb[0].mxu0
    %1792 = vdwg.mxu0
    %1793 = vmatprep.subr.bf16.mxu0 %v1246
    %1794 = vmatpush1.bf16.msra.mxu0 %v1245
    %1795 = vmatprep.subr.bf16.mxu0 %v1248
    %1796 = vmatpush1.bf16.msra.mxu0 %v1247
    %1797 = vmatprep.subr.bf16.mxu0 %v1250
    %1798 = vmatpush1.bf16.msra.mxu0 %v1249
    %1799 = vmatprep.subr.bf16.mxu0 %v1252
    %1800 = vmatpush1.bf16.msra.mxu0 %v1251
    %1801 = vmatprep.subr.bf16.mxu0 %v1254
    %1802 = vmatpush1.bf16.msra.mxu0 %v1253
    %1803 = vmatprep.subr.bf16.mxu0 %v1256
    %1804 = vmatpush1.bf16.msra.mxu0 %v1255
    %1805 = vmatprep.subr.bf16.mxu0 %v1258
    %1806 = vmatpush1.bf16.msra.mxu0 %v1257
    %1807 = vmatprep.subr.bf16.mxu0 %v1260
    %1808 = vmatpush1.bf16.msra.mxu0 %v1259
    %1809 = vmatprep.subr.bf16.mxu0 %v1262
    %1810 = vmatpush1.bf16.msra.mxu0 %v1261
    %1811 = vmatprep.subr.bf16.mxu0 %v1264
    %1812 = vmatpush1.bf16.msra.mxu0 %v1263
    %1813 = vmatprep.subr.bf16.mxu0 %v1266
    %1814 = vmatpush1.bf16.msra.mxu0 %v1265
    %1815 = vmatprep.subr.bf16.mxu0 %v1268
    %1816 = vmatpush1.bf16.msra.mxu0 %v1267
    %1817 = vmatprep.subr.bf16.mxu0 %v1270
    %1818 = vmatpush1.bf16.msra.mxu0 %v1269
    %1819 = vmatprep.subr.bf16.mxu0 %v1272
    %1820 = vmatpush1.bf16.msra.mxu0 %v1271
    %1821 = vmatprep.subr.bf16.mxu0 %v1274
    %1822 = vmatpush1.bf16.msra.mxu0 %v1273
    %1823 = vmatprep.subr.bf16.mxu0 %v1276
    %1824 = vmatpush1.bf16.msra.mxu0 %v1275
    %1825 = vmatprep.mubr.bf16.mxu0 %v330
    %1826 = vmatmul.mubr.bf16.gmra.mrb[0].mxu0 %v329
    %v1827 = vpop.f32.mrb[0].mxu0
    %v1828 = vadd.f32 %v1787, %v1827
    %v1829 = vpop.f32.mrb[0].mxu0
    %v1830 = vadd.f32 %v1789, %v1829
    %v1831 = vpop.f32.mrb[0].mxu0
    %v1832 = vpop.f32.mrb[0].mxu0
    %1833 = vdwg.mxu0
    %1834 = vmatprep.subr.bf16.mxu0 %v1278
    %1835 = vmatpush1.bf16.msra.mxu0 %v1277
    %1836 = vmatprep.subr.bf16.mxu0 %v1280
    %1837 = vmatpush1.bf16.msra.mxu0 %v1279
    %1838 = vmatprep.subr.bf16.mxu0 %v1282
    %1839 = vmatpush1.bf16.msra.mxu0 %v1281
    %1840 = vmatprep.subr.bf16.mxu0 %v1284
    %1841 = vmatpush1.bf16.msra.mxu0 %v1283
    %1842 = vmatprep.subr.bf16.mxu0 %v1286
    %1843 = vmatpush1.bf16.msra.mxu0 %v1285
    %1844 = vmatprep.subr.bf16.mxu0 %v1288
    %1845 = vmatpush1.bf16.msra.mxu0 %v1287
    %1846 = vmatprep.subr.bf16.mxu0 %v1290
    %1847 = vmatpush1.bf16.msra.mxu0 %v1289
    %1848 = vmatprep.subr.bf16.mxu0 %v1292
    %1849 = vmatpush1.bf16.msra.mxu0 %v1291
    %1850 = vmatprep.subr.bf16.mxu0 %v1294
    %1851 = vmatpush1.bf16.msra.mxu0 %v1293
    %1852 = vmatprep.subr.bf16.mxu0 %v1296
    %1853 = vmatpush1.bf16.msra.mxu0 %v1295
    %1854 = vmatprep.subr.bf16.mxu0 %v1298
    %1855 = vmatpush1.bf16.msra.mxu0 %v1297
    %1856 = vmatprep.subr.bf16.mxu0 %v1300
    %1857 = vmatpush1.bf16.msra.mxu0 %v1299
    %1858 = vmatprep.subr.bf16.mxu0 %v1302
    %1859 = vmatpush1.bf16.msra.mxu0 %v1301
    %1860 = vmatprep.subr.bf16.mxu0 %v1304
    %1861 = vmatpush1.bf16.msra.mxu0 %v1303
    %1862 = vmatprep.subr.bf16.mxu0 %v1306
    %1863 = vmatpush1.bf16.msra.mxu0 %v1305
    %1864 = vmatprep.subr.bf16.mxu0 %v1308
    %1865 = vmatpush1.bf16.msra.mxu0 %v1307
    %1866 = vmatprep.mubr.bf16.mxu0 %v332
    %1867 = vmatmul.mubr.bf16.gmra.mrb[0].mxu0 %v331
    %v1868 = vpop.f32.mrb[0].mxu0
    %v1869 = vadd.f32 %v1828, %v1868
    %v1870 = vpop.f32.mrb[0].mxu0
    %v1871 = vadd.f32 %v1830, %v1870
    %v1872 = vpop.f32.mrb[0].mxu0
    %v1873 = vpop.f32.mrb[0].mxu0
    %1874 = vdwg.mxu0
    %1875 = vmatprep.subr.bf16.mxu0 %v1310
    %1876 = vmatpush1.bf16.msra.mxu0 %v1309
    %1877 = vmatprep.subr.bf16.mxu0 %v1312
    %1878 = vmatpush1.bf16.msra.mxu0 %v1311
    %1879 = vmatprep.subr.bf16.mxu0 %v1314
    %1880 = vmatpush1.bf16.msra.mxu0 %v1313
    %1881 = vmatprep.subr.bf16.mxu0 %v1316
    %1882 = vmatpush1.bf16.msra.mxu0 %v1315
    %1883 = vmatprep.subr.bf16.mxu0 %v1318
    %1884 = vmatpush1.bf16.msra.mxu0 %v1317
    %1885 = vmatprep.subr.bf16.mxu0 %v1320
    %1886 = vmatpush1.bf16.msra.mxu0 %v1319
    %1887 = vmatprep.subr.bf16.mxu0 %v1322
    %1888 = vmatpush1.bf16.msra.mxu0 %v1321
    %1889 = vmatprep.subr.bf16.mxu0 %v1324
    %1890 = vmatpush1.bf16.msra.mxu0 %v1323
    %1891 = vmatprep.subr.bf16.mxu0 %v1326
    %1892 = vmatpush1.bf16.msra.mxu0 %v1325
    %1893 = vmatprep.subr.bf16.mxu0 %v1328
    %1894 = vmatpush1.bf16.msra.mxu0 %v1327
    %1895 = vmatprep.subr.bf16.mxu0 %v1330
    %1896 = vmatpush1.bf16.msra.mxu0 %v1329
    %1897 = vmatprep.subr.bf16.mxu0 %v1332
    %1898 = vmatpush1.bf16.msra.mxu0 %v1331
    %1899 = vmatprep.subr.bf16.mxu0 %v1334
    %1900 = vmatpush1.bf16.msra.mxu0 %v1333
    %1901 = vmatprep.subr.bf16.mxu0 %v1336
    %1902 = vmatpush1.bf16.msra.mxu0 %v1335
    %1903 = vmatprep.subr.bf16.mxu0 %v1338
    %1904 = vmatpush1.bf16.msra.mxu0 %v1337
    %1905 = vmatprep.subr.bf16.mxu0 %v1340
    %1906 = vmatpush1.bf16.msra.mxu0 %v1339
    %1907 = vmatprep.mubr.bf16.mxu0 %v334
    %1908 = vmatmul.mubr.bf16.gmra.mrb[0].mxu0 %v333
    %v1909 = vpop.f32.mrb[0].mxu0
    %v1910 = vadd.f32 %v1869, %v1909
    %v1911 = vpop.f32.mrb[0].mxu0
    %v1912 = vadd.f32 %v1871, %v1911
    %v1913 = vpop.f32.mrb[0].mxu0
    %v1914 = vpop.f32.mrb[0].mxu0
    %1915 = vdwg.mxu0
    %1916 = vmatprep.subr.bf16.mxu0 %v1342
    %1917 = vmatpush1.bf16.msra.mxu0 %v1341
    %1918 = vmatprep.subr.bf16.mxu0 %v1344
    %1919 = vmatpush1.bf16.msra.mxu0 %v1343
    %1920 = vmatprep.subr.bf16.mxu0 %v1346
    %1921 = vmatpush1.bf16.msra.mxu0 %v1345
    %1922 = vmatprep.subr.bf16.mxu0 %v1348
    %1923 = vmatpush1.bf16.msra.mxu0 %v1347
    %1924 = vmatprep.subr.bf16.mxu0 %v1350
    %1925 = vmatpush1.bf16.msra.mxu0 %v1349
    %1926 = vmatprep.subr.bf16.mxu0 %v1352
    %1927 = vmatpush1.bf16.msra.mxu0 %v1351
    %1928 = vmatprep.subr.bf16.mxu0 %v1354
    %1929 = vmatpush1.bf16.msra.mxu0 %v1353
    %1930 = vmatprep.subr.bf16.mxu0 %v1356
    %1931 = vmatpush1.bf16.msra.mxu0 %v1355
    %1932 = vmatprep.subr.bf16.mxu0 %v1358
    %1933 = vmatpush1.bf16.msra.mxu0 %v1357
    %1934 = vmatprep.subr.bf16.mxu0 %v1360
    %1935 = vmatpush1.bf16.msra.mxu0 %v1359
    %1936 = vmatprep.subr.bf16.mxu0 %v1362
    %1937 = vmatpush1.bf16.msra.mxu0 %v1361
    %1938 = vmatprep.subr.bf16.mxu0 %v1364
    %1939 = vmatpush1.bf16.msra.mxu0 %v1363
    %1940 = vmatprep.subr.bf16.mxu0 %v1366
    %1941 = vmatpush1.bf16.msra.mxu0 %v1365
    %1942 = vmatprep.subr.bf16.mxu0 %v1368
    %1943 = vmatpush1.bf16.msra.mxu0 %v1367
    %1944 = vmatprep.subr.bf16.mxu0 %v1370
    %1945 = vmatpush1.bf16.msra.mxu0 %v1369
    %1946 = vmatprep.subr.bf16.mxu0 %v1372
    %1947 = vmatpush1.bf16.msra.mxu0 %v1371
    %1948 = vmatprep.mubr.bf16.mxu0 %v336
    %1949 = vmatmul.mubr.bf16.gmra.mrb[0].mxu0 %v335
    %v1950 = vpop.f32.mrb[0].mxu0
    %v1951 = vadd.f32 %v1910, %v1950
    %v1952 = vpop.f32.mrb[0].mxu0
    %v1953 = vadd.f32 %v1912, %v1952
    %v1954 = vpop.f32.mrb[0].mxu0
    %v1955 = vpop.f32.mrb[0].mxu0
    %1956 = vdwg.mxu0
    %v1957 = vmax.f32 %v1951, 0.0
    %v1958 = vmax.f32 %v1953, 0.0
    %v1959 = vld [vmem:[%s3] sm:$0xf]
    %v1960 = vld [vmem:[%s3 + $0x4] sm:$0xf]
    %v1961 = vld [vmem:[%s3 + $0x8] sm:$0xf]
    %v1962 = vld [vmem:[%s3 + $0xc] sm:$0xf]
    %v1963 = vld [vmem:[%s3 + $0x10] sm:$0xf]
    %v1964 = vld [vmem:[%s3 + $0x14] sm:$0xf]
    %v1965 = vld [vmem:[%s3 + $0x18] sm:$0xf]
    %v1966 = vld [vmem:[%s3 + $0x1c] sm:$0xf]
    %v1967 = vld [vmem:[%s3 + $0x20] sm:$0xf]
    %v1968 = vld [vmem:[%s3 + $0x24] sm:$0xf]
    %v1969 = vld [vmem:[%s3 + $0x28] sm:$0xf]
    %v1970 = vld [vmem:[%s3 + $0x2c] sm:$0xf]
    %v1971 = vld [vmem:[%s3 + $0x30] sm:$0xf]
    %v1972 = vld [vmem:[%s3 + $0x34] sm:$0xf]
    %v1973 = vld [vmem:[%s3 + $0x38] sm:$0xf]
    %v1974 = vld [vmem:[%s3 + $0x3c] sm:$0xf]
    %v1975 = vld [vmem:[%s3 + $0x40] sm:$0xf]
    %v1976 = vld [vmem:[%s3 + $0x44] sm:$0xf]
    %v1977 = vld [vmem:[%s3 + $0x48] sm:$0xf]
    %v1978 = vld [vmem:[%s3 + $0x4c] sm:$0xf]
    %v1979 = vld [vmem:[%s3 + $0x50] sm:$0xf]
    %v1980 = vld [vmem:[%s3 + $0x54] sm:$0xf]
    %v1981 = vld [vmem:[%s3 + $0x58] sm:$0xf]
    %v1982 = vld [vmem:[%s3 + $0x5c] sm:$0xf]
    %v1983 = vld [vmem:[%s3 + $0x60] sm:$0xf]
    %v1984 = vld [vmem:[%s3 + $0x64] sm:$0xf]
    %v1985 = vld [vmem:[%s3 + $0x68] sm:$0xf]
    %v1986 = vld [vmem:[%s3 + $0x6c] sm:$0xf]
    %v1987 = vld [vmem:[%s3 + $0x70] sm:$0xf]
    %v1988 = vld [vmem:[%s3 + $0x74] sm:$0xf]
    %v1989 = vld [vmem:[%s3 + $0x78] sm:$0xf]
    %v1990 = vld [vmem:[%s3 + $0x7c] sm:$0xf]
    %v1991 = vpack.c.bf16 %v1957, %v1957
    %v1992 = vpack.c.bf16 %v1958, %v1958
    %v1993 = vld [vmem:[%s4] sm:$0x1]
    %v1995 = vlaneseq
    %v1996 = vshrl.u32 %v1995, 7
    %v1997 = vsub.s32 0, %v1996
    %v1998 = vrot.slane %v1993, %v1997
    %v2032 = vunpack.c.l.b16 %v1959
    %v2033 = vunpack.c.l.b16 %v1960
    %v2034 = vunpack.c.l.b16 %v1961
    %v2035 = vunpack.c.l.b16 %v1962
    %v2036 = vunpack.c.l.b16 %v1963
    %v2037 = vunpack.c.l.b16 %v1964
    %v2038 = vunpack.c.l.b16 %v1965
    %v2039 = vunpack.c.l.b16 %v1966
    %v2040 = vunpack.c.l.b16 %v1967
    %v2041 = vunpack.c.l.b16 %v1968
    %v2042 = vunpack.c.l.b16 %v1969
    %v2043 = vunpack.c.l.b16 %v1970
    %v2044 = vunpack.c.l.b16 %v1971
    %v2045 = vunpack.c.l.b16 %v1972
    %v2046 = vunpack.c.l.b16 %v1973
    %v2047 = vunpack.c.l.b16 %v1974
    %v2048 = vunpack.c.l.b16 %v1975
    %v2049 = vunpack.c.l.b16 %v1976
    %v2050 = vunpack.c.l.b16 %v1977
    %v2051 = vunpack.c.l.b16 %v1978
    %v2052 = vunpack.c.l.b16 %v1979
    %v2053 = vunpack.c.l.b16 %v1980
    %v2054 = vunpack.c.l.b16 %v1981
    %v2055 = vunpack.c.l.b16 %v1982
    %v2056 = vunpack.c.l.b16 %v1983
    %v2057 = vunpack.c.l.b16 %v1984
    %v2058 = vunpack.c.l.b16 %v1985
    %v2059 = vunpack.c.l.b16 %v1986
    %v2060 = vunpack.c.l.b16 %v1987
    %v2061 = vunpack.c.l.b16 %v1988
    %v2062 = vunpack.c.l.b16 %v1989
    %v2063 = vunpack.c.l.b16 %v1990
    %v2064 = vpack.c.b16 %v2033, %v2032
    %v2065 = vpack.c.b16 %v2035, %v2034
    %v2066 = vpack.c.b16 %v2037, %v2036
    %v2067 = vpack.c.b16 %v2039, %v2038
    %v2068 = vpack.c.b16 %v2041, %v2040
    %v2069 = vpack.c.b16 %v2043, %v2042
    %v2070 = vpack.c.b16 %v2045, %v2044
    %v2071 = vpack.c.b16 %v2047, %v2046
    %v2072 = vpack.c.b16 %v2049, %v2048
    %v2073 = vpack.c.b16 %v2051, %v2050
    %v2074 = vpack.c.b16 %v2053, %v2052
    %v2075 = vpack.c.b16 %v2055, %v2054
    %v2076 = vpack.c.b16 %v2057, %v2056
    %v2077 = vpack.c.b16 %v2059, %v2058
    %v2078 = vpack.c.b16 %v2061, %v2060
    %v2079 = vpack.c.b16 %v2063, %v2062
    %2096 = vmatprep.subr.bf16.mxu0 0
    %2097 = vmatpush1.bf16.msra.mxu0 %v2064
    %2098 = vmatprep.subr.bf16.mxu0 0
    %2099 = vmatpush1.bf16.msra.mxu0 %v2065
    %2100 = vmatprep.subr.bf16.mxu0 0
    %2101 = vmatpush1.bf16.msra.mxu0 %v2066
    %2102 = vmatprep.subr.bf16.mxu0 0
    %2103 = vmatpush1.bf16.msra.mxu0 %v2067
    %2104 = vmatprep.subr.bf16.mxu0 0
    %2105 = vmatpush1.bf16.msra.mxu0 %v2068
    %2106 = vmatprep.subr.bf16.mxu0 0
    %2107 = vmatpush1.bf16.msra.mxu0 %v2069
    %2108 = vmatprep.subr.bf16.mxu0 0
    %2109 = vmatpush1.bf16.msra.mxu0 %v2070
    %2110 = vmatprep.subr.bf16.mxu0 0
    %2111 = vmatpush1.bf16.msra.mxu0 %v2071
    %2112 = vmatprep.subr.bf16.mxu0 0
    %2113 = vmatpush1.bf16.msra.mxu0 %v2072
    %2114 = vmatprep.subr.bf16.mxu0 0
    %2115 = vmatpush1.bf16.msra.mxu0 %v2073
    %2116 = vmatprep.subr.bf16.mxu0 0
    %2117 = vmatpush1.bf16.msra.mxu0 %v2074
    %2118 = vmatprep.subr.bf16.mxu0 0
    %2119 = vmatpush1.bf16.msra.mxu0 %v2075
    %2120 = vmatprep.subr.bf16.mxu0 0
    %2121 = vmatpush1.bf16.msra.mxu0 %v2076
    %2122 = vmatprep.subr.bf16.mxu0 0
    %2123 = vmatpush1.bf16.msra.mxu0 %v2077
    %2124 = vmatprep.subr.bf16.mxu0 0
    %2125 = vmatpush1.bf16.msra.mxu0 %v2078
    %2126 = vmatprep.subr.bf16.mxu0 0
    %2127 = vmatpush1.bf16.msra.mxu0 %v2079
    %2128 = vmatprep.mubr.bf16.mxu0 %v1992
    %2129 = vmatmul.mubr.bf16.gmra.mrb[0].mxu0 %v1991
    %v2130 = vpop.f32.mrb[0].mxu0
    %v2131 = vadd.f32 %v1998, %v2130
    %v2132 = vpop.f32.mrb[0].mxu0
    %v2133 = vpop.f32.mrb[0].mxu0
    %v2134 = vpop.f32.mrb[0].mxu0
    %2135 = vdwg.mxu0
    %v2136 = vmax.f32 %v2131, 0.0
    %v2137 = vld [vmem:[%s5] sm:$0xf]
    %v2138 = vld [vmem:[%s5 + $0x4] sm:$0xf]
    %v2139 = vld [vmem:[%s5 + $0x8] sm:$0xf]
    %v2140 = vld [vmem:[%s5 + $0xc] sm:$0xf]
    %v2141 = vld [vmem:[%s5 + $0x10] sm:$0xf]
    %v2142 = vld [vmem:[%s5 + $0x14] sm:$0xf]
    %v2143 = vld [vmem:[%s5 + $0x18] sm:$0xf]
    %v2144 = vld [vmem:[%s5 + $0x1c] sm:$0xf]
    %v2145 = vpack.c.bf16 %v2136, %v2136
    %v2146 = vld [vmem:[%s6] sm:$0x1]
    %v2148 = vlaneseq
    %v2149 = vshrl.u32 %v2148, 7
    %v2150 = vsub.s32 0, %v2149
    %v2151 = vrot.slane %v2146, %v2150
    %v2161 = vunpack.c.l.b16 %v2137
    %v2162 = vunpack.c.l.b16 %v2138
    %v2163 = vunpack.c.l.b16 %v2139
    %v2164 = vunpack.c.l.b16 %v2140
    %v2165 = vunpack.c.l.b16 %v2141
    %v2166 = vunpack.c.l.b16 %v2142
    %v2167 = vunpack.c.l.b16 %v2143
    %v2168 = vunpack.c.l.b16 %v2144
    %v2169 = vpack.c.b16 %v2162, %v2161
    %v2170 = vpack.c.b16 %v2164, %v2163
    %v2171 = vpack.c.b16 %v2166, %v2165
    %v2172 = vpack.c.b16 %v2168, %v2167
    %vm2177 = vcmask 523264
    %v2179 = vsel %vm2177, %v2145, 0
    %2181 = vmatprep.subr.bf16.mxu0 0
    %2182 = vmatpush1.bf16.msra.mxu0 %v2169
    %2183 = vmatprep.subr.bf16.mxu0 0
    %2184 = vmatpush1.bf16.msra.mxu0 %v2170
    %2185 = vmatprep.subr.bf16.mxu0 0
    %2186 = vmatpush1.bf16.msra.mxu0 %v2171
    %2187 = vmatprep.subr.bf16.mxu0 0
    %2188 = vmatpush1.bf16.msra.mxu0 %v2172
    %2189 = vmatprep.subr.bf16.mxu0 0
    %2190 = vmatpush1.bf16.msra.mxu0 0
    %2191 = vmatprep.subr.bf16.mxu0 0
    %2192 = vmatpush1.bf16.msra.mxu0 0
    %2193 = vmatprep.subr.bf16.mxu0 0
    %2194 = vmatpush1.bf16.msra.mxu0 0
    %2195 = vmatprep.subr.bf16.mxu0 0
    %2196 = vmatpush1.bf16.msra.mxu0 0
    %2197 = vmatprep.subr.bf16.mxu0 0
    %2198 = vmatpush1.bf16.msra.mxu0 0
    %2199 = vmatprep.subr.bf16.mxu0 0
    %2200 = vmatpush1.bf16.msra.mxu0 0
    %2201 = vmatprep.subr.bf16.mxu0 0
    %2202 = vmatpush1.bf16.msra.mxu0 0
    %2203 = vmatprep.subr.bf16.mxu0 0
    %2204 = vmatpush1.bf16.msra.mxu0 0
    %2205 = vmatprep.subr.bf16.mxu0 0
    %2206 = vmatpush1.bf16.msra.mxu0 0
    %2207 = vmatprep.subr.bf16.mxu0 0
    %2208 = vmatpush1.bf16.msra.mxu0 0
    %2209 = vmatprep.subr.bf16.mxu0 0
    %2210 = vmatpush1.bf16.msra.mxu0 0
    %2211 = vmatprep.subr.bf16.mxu0 0
    %2212 = vmatpush1.bf16.msra.mxu0 0
    %2213 = vmatprep.mubr.bf16.mxu0 0
    %2214 = vmatmul.mubr.bf16.gmra.mrb[0].mxu0 %v2179
    %v2215 = vpop.f32.mrb[0].mxu0
    %v2216 = vadd.f32 %v2151, %v2215
    %v2217 = vpop.f32.mrb[0].mxu0
    %v2218 = vpop.f32.mrb[0].mxu0
    %v2219 = vpop.f32.mrb[0].mxu0
    %2220 = vdwg.mxu0
    %2221 = vst [vmem:[%s8] sm:$0xf] %v2216
    %v2222 = vld [vmem:[%s7] sm:$0xf]
    %v2223 = vlaneseq
    %v2224 = vshrl.u32 %v2223, 7
    %v2225 = vlaneseq
    %v2226 = vand.u32 %v2225, 127
    %vm2227 = vcmp.eq.s32.totalorder %v2224, %v2226
    %v2228 = vsel %vm2227, 1, 0
    %v2229 = vcvt.s32.f32 %v2228
    %2230 = vmatprep.subr.mxu0 %v1958
    %2231 = vmatpush1.xpose.msra.mxu0 %v1957
    %2232 = vmatprep.subr.mxu0 0.0
    %2233 = vmatpush1.xpose.msra.mxu0 0.0
    %2234 = vmatprep.subr.mxu0 0.0
    %2235 = vmatpush1.xpose.msra.mxu0 0.0
    %2236 = vmatprep.subr.mxu0 0.0
    %2237 = vmatpush1.xpose.msra.mxu0 0.0
    %2238 = vmatprep.subr.mxu0 0.0
    %2239 = vmatpush1.xpose.msra.mxu0 0.0
    %2240 = vmatprep.subr.mxu0 0.0
    %2241 = vmatpush1.xpose.msra.mxu0 0.0
    %2242 = vmatprep.subr.mxu0 0.0
    %2243 = vmatpush1.xpose.msra.mxu0 0.0
    %2244 = vmatprep.subr.mxu0 0.0
    %2245 = vmatpush1.xpose.msra.mxu0 0.0
    %2246 = vmatprep.subr.mxu0 0.0
    %2247 = vmatpush1.xpose.msra.mxu0 0.0
    %2248 = vmatprep.subr.mxu0 0.0
    %2249 = vmatpush1.xpose.msra.mxu0 0.0
    %2250 = vmatprep.subr.mxu0 0.0
    %2251 = vmatpush1.xpose.msra.mxu0 0.0
    %2252 = vmatprep.subr.mxu0 0.0
    %2253 = vmatpush1.xpose.msra.mxu0 0.0
    %2254 = vmatprep.subr.mxu0 0.0
    %2255 = vmatpush1.xpose.msra.mxu0 0.0
    %2256 = vmatprep.subr.mxu0 0.0
    %2257 = vmatpush1.xpose.msra.mxu0 0.0
    %2258 = vmatprep.subr.mxu0 0.0
    %2259 = vmatpush1.xpose.msra.mxu0 0.0
    %2260 = vmatprep.subr.mxu0 0.0
    %2261 = vmatpush1.xpose.msra.mxu0 0.0
    %2262 = vmatprep.subr.mxu0 0.0
    %2263 = vmatpush1.xpose.msra.mxu0 0.0
    %2264 = vmatprep.subr.mxu0 0.0
    %2265 = vmatpush1.xpose.msra.mxu0 0.0
    %2266 = vmatprep.subr.mxu0 0.0
    %2267 = vmatpush1.xpose.msra.mxu0 0.0
    %2268 = vmatprep.subr.mxu0 0.0
    %2269 = vmatpush1.xpose.msra.mxu0 0.0
    %2270 = vmatprep.subr.mxu0 0.0
    %2271 = vmatpush1.xpose.msra.mxu0 0.0
    %2272 = vmatprep.subr.mxu0 0.0
    %2273 = vmatpush1.xpose.msra.mxu0 0.0
    %2274 = vmatprep.subr.mxu0 0.0
    %2275 = vmatpush1.xpose.msra.mxu0 0.0
    %2276 = vmatprep.subr.mxu0 0.0
    %2277 = vmatpush1.xpose.msra.mxu0 0.0
    %2278 = vmatprep.subr.mxu0 0.0
    %2279 = vmatpush1.xpose.msra.mxu0 0.0
    %2280 = vmatprep.subr.mxu0 0.0
    %2281 = vmatpush1.xpose.msra.mxu0 0.0
    %2282 = vmatprep.subr.mxu0 0.0
    %2283 = vmatpush1.xpose.msra.mxu0 0.0
    %2284 = vmatprep.subr.mxu0 0.0
    %2285 = vmatpush1.xpose.msra.mxu0 0.0
    %2286 = vmatprep.subr.mxu0 0.0
    %2287 = vmatpush1.xpose.msra.mxu0 0.0
    %2288 = vmatprep.subr.mxu0 0.0
    %2289 = vmatpush1.xpose.msra.mxu0 0.0
    %2290 = vmatprep.subr.mxu0 0.0
    %2291 = vmatpush1.xpose.msra.mxu0 0.0
    %2292 = vmatprep.subr.mxu0 0.0
    %2293 = vmatpush1.xpose.msra.mxu0 0.0
    %2294 = vmatprep.mubr.f32.mxu0 %v1958
    %2295 = vmatmul.mubr.f32.gmra.mrb[0].mxu0 %v1957
    %v2296 = vpop.f32.mrb[0].mxu0
    %v2297 = vadd.f32 0.0, %v2296
    %v2298 = vpop.f32.mrb[0].mxu0
    %2299 = vdwg.mxu0
    %v2300 = vmul.f32 %v1957, %v1957
    %v2301 = vmul.f32 %v1958, %v1958
    %vm2302 = vcmask 1043456
    %v2303 = vsel %vm2302, %v2300, 0.0
    %v2304 = vsel %vm2302, %v2301, 0.0
    %v2305 = vadd.f32 %v2303, %v2304
    %2306 = vadd.xlane.f32.xlu0 %v2305
    %v2307 = vpop.xlane.xlu0 %2306
    %v2308 = vmul.f32 %v2297, %v2229
    %vm2309 = vcmask 27648
    %v2310 = vsel %vm2309, %v2308, 0.0
    %v2311 = vrot.slane %v2310, 4
    %v2312 = vadd.f32 %v2310, %v2311
    %v2313 = vrot.slane %v2312, 2
    %v2314 = vadd.f32 %v2312, %v2313
    %v2315 = vrot.slane %v2314, 1
    %v2316 = vadd.f32 %v2314, %v2315
    %v2317 = vadd.f32 %v2307, %v2316
    %v2318 = vmul.f32 %v2297, 2.0
    %v2319 = vsub.f32 %v2317, %v2318
    %v2320 = vmax.f32 %v2319, 0.0
    %v2321 = vsel %vm2309, %v2320, 0.0
    %2322 = vadd.xlane.f32.xlu0 %v2321
    %v2323 = vpop.xlane.xlu0 %2322
    %v2324 = vrot.slane %v2323, 4
    %v2325 = vadd.f32 %v2323, %v2324
    %v2326 = vrot.slane %v2325, 2
    %v2327 = vadd.f32 %v2325, %v2326
    %v2328 = vrot.slane %v2327, 1
    %v2329 = vadd.f32 %v2327, %v2328
    %s2330 = vtos %v2329
    %s2331 = smul.f32 %s2330, 0.0625
    %s2332 = smax.f32 %s2331, 1e-12
    %v2333 = vstv %s2332
    %v2334 = vrcp.pop %v2333
    %s2335 = vtos %v2334
    %s2336 = smul.f32 %s2335, -4.0
    %v2337 = vstv %s2336
    %v2338 = vmul.f32 %v2320, %v2337
    %v2339 = vmul.f32 %v2338, 1.442695
    %v2340 = vpow.pop %v2339
    %s2341 = smul.f32 %s2335, -2.0
    %v2342 = vstv %s2341
    %v2343 = vmul.f32 %v2320, %v2342
    %v2344 = vmul.f32 %v2343, 1.442695
    %v2345 = vpow.pop %v2344
    %v2346 = vadd.f32 %v2340, %v2345
    %s2347 = smul.f32 %s2335, -1.0
    %v2348 = vstv %s2347
    %v2349 = vmul.f32 %v2320, %v2348
    %v2350 = vmul.f32 %v2349, 1.442695
    %v2351 = vpow.pop %v2350
    %v2352 = vadd.f32 %v2346, %v2351
    %s2353 = smul.f32 %s2335, -0.5
    %v2354 = vstv %s2353
    %v2355 = vmul.f32 %v2320, %v2354
    %v2356 = vmul.f32 %v2355, 1.442695
    %v2357 = vpow.pop %v2356
    %v2358 = vadd.f32 %v2352, %v2357
    %s2359 = smul.f32 %s2335, -0.25
    %v2360 = vstv %s2359
    %v2361 = vmul.f32 %v2320, %v2360
    %v2362 = vmul.f32 %v2361, 1.442695
    %v2363 = vpow.pop %v2362
    %v2364 = vadd.f32 %v2358, %v2363
    %v2365 = vmul.f32 %v2364, %v2222
    %v2366 = vsel %vm2309, %v2365, 0.0
    %2367 = vadd.xlane.f32.xlu0 %v2366
    %v2368 = vpop.xlane.xlu0 %2367
    %v2369 = vrot.slane %v2368, 4
    %v2370 = vadd.f32 %v2368, %v2369
    %v2371 = vrot.slane %v2370, 2
    %v2372 = vadd.f32 %v2370, %v2371
    %v2373 = vrot.slane %v2372, 1
    %v2374 = vadd.f32 %v2372, %v2373
    %s2375 = vtos %v2374
    %s2376 = sadd.f32 %s2375, 2.0
    %v2378 = vsel %vm2177, %v2136, 0
    %2380 = vmatprep.subr.mxu0 0.0
    %2381 = vmatpush1.xpose.msra.mxu0 %v2378
    %2382 = vmatprep.subr.mxu0 0.0
    %2383 = vmatpush1.xpose.msra.mxu0 0.0
    %2384 = vmatprep.subr.mxu0 0.0
    %2385 = vmatpush1.xpose.msra.mxu0 0.0
    %2386 = vmatprep.subr.mxu0 0.0
    %2387 = vmatpush1.xpose.msra.mxu0 0.0
    %2388 = vmatprep.subr.mxu0 0.0
    %2389 = vmatpush1.xpose.msra.mxu0 0.0
    %2390 = vmatprep.subr.mxu0 0.0
    %2391 = vmatpush1.xpose.msra.mxu0 0.0
    %2392 = vmatprep.subr.mxu0 0.0
    %2393 = vmatpush1.xpose.msra.mxu0 0.0
    %2394 = vmatprep.subr.mxu0 0.0
    %2395 = vmatpush1.xpose.msra.mxu0 0.0
    %2396 = vmatprep.subr.mxu0 0.0
    %2397 = vmatpush1.xpose.msra.mxu0 0.0
    %2398 = vmatprep.subr.mxu0 0.0
    %2399 = vmatpush1.xpose.msra.mxu0 0.0
    %2400 = vmatprep.subr.mxu0 0.0
    %2401 = vmatpush1.xpose.msra.mxu0 0.0
    %2402 = vmatprep.subr.mxu0 0.0
    %2403 = vmatpush1.xpose.msra.mxu0 0.0
    %2404 = vmatprep.subr.mxu0 0.0
    %2405 = vmatpush1.xpose.msra.mxu0 0.0
    %2406 = vmatprep.subr.mxu0 0.0
    %2407 = vmatpush1.xpose.msra.mxu0 0.0
    %2408 = vmatprep.subr.mxu0 0.0
    %2409 = vmatpush1.xpose.msra.mxu0 0.0
    %2410 = vmatprep.subr.mxu0 0.0
    %2411 = vmatpush1.xpose.msra.mxu0 0.0
    %2412 = vmatprep.subr.mxu0 0.0
    %2413 = vmatpush1.xpose.msra.mxu0 0.0
    %2414 = vmatprep.subr.mxu0 0.0
    %2415 = vmatpush1.xpose.msra.mxu0 0.0
    %2416 = vmatprep.subr.mxu0 0.0
    %2417 = vmatpush1.xpose.msra.mxu0 0.0
    %2418 = vmatprep.subr.mxu0 0.0
    %2419 = vmatpush1.xpose.msra.mxu0 0.0
    %2420 = vmatprep.subr.mxu0 0.0
    %2421 = vmatpush1.xpose.msra.mxu0 0.0
    %2422 = vmatprep.subr.mxu0 0.0
    %2423 = vmatpush1.xpose.msra.mxu0 0.0
    %2424 = vmatprep.subr.mxu0 0.0
    %2425 = vmatpush1.xpose.msra.mxu0 0.0
    %2426 = vmatprep.subr.mxu0 0.0
    %2427 = vmatpush1.xpose.msra.mxu0 0.0
    %2428 = vmatprep.subr.mxu0 0.0
    %2429 = vmatpush1.xpose.msra.mxu0 0.0
    %2430 = vmatprep.subr.mxu0 0.0
    %2431 = vmatpush1.xpose.msra.mxu0 0.0
    %2432 = vmatprep.subr.mxu0 0.0
    %2433 = vmatpush1.xpose.msra.mxu0 0.0
    %2434 = vmatprep.subr.mxu0 0.0
    %2435 = vmatpush1.xpose.msra.mxu0 0.0
    %2436 = vmatprep.subr.mxu0 0.0
    %2437 = vmatpush1.xpose.msra.mxu0 0.0
    %2438 = vmatprep.subr.mxu0 0.0
    %2439 = vmatpush1.xpose.msra.mxu0 0.0
    %2440 = vmatprep.subr.mxu0 0.0
    %2441 = vmatpush1.xpose.msra.mxu0 0.0
    %2442 = vmatprep.subr.mxu0 0.0
    %2443 = vmatpush1.xpose.msra.mxu0 0.0
    %2444 = vmatprep.mubr.f32.mxu0 0.0
    %2445 = vmatmul.mubr.f32.gmra.mrb[0].mxu0 %v2378
    %v2446 = vpop.f32.mrb[0].mxu0
    %v2447 = vadd.f32 0.0, %v2446
    %v2448 = vpop.f32.mrb[0].mxu0
    %2449 = vdwg.mxu0
    %v2450 = vmul.f32 %v2136, %v2136
    %vm2451 = vcmask 519168
    %v2452 = vsel %vm2451, %v2450, 0.0
    %2453 = vadd.xlane.f32.xlu0 %v2452
    %v2454 = vpop.xlane.xlu0 %2453
    %v2455 = vmul.f32 %v2447, %v2229
    %v2456 = vsel %vm2309, %v2455, 0.0
    %v2457 = vrot.slane %v2456, 4
    %v2458 = vadd.f32 %v2456, %v2457
    %v2459 = vrot.slane %v2458, 2
    %v2460 = vadd.f32 %v2458, %v2459
    %v2461 = vrot.slane %v2460, 1
    %v2462 = vadd.f32 %v2460, %v2461
    %v2463 = vadd.f32 %v2454, %v2462
    %v2464 = vmul.f32 %v2447, 2.0
    %v2465 = vsub.f32 %v2463, %v2464
    %v2466 = vmax.f32 %v2465, 0.0
    %v2467 = vsel %vm2309, %v2466, 0.0
    %2468 = vadd.xlane.f32.xlu0 %v2467
    %v2469 = vpop.xlane.xlu0 %2468
    %v2470 = vrot.slane %v2469, 4
    %v2471 = vadd.f32 %v2469, %v2470
    %v2472 = vrot.slane %v2471, 2
    %v2473 = vadd.f32 %v2471, %v2472
    %v2474 = vrot.slane %v2473, 1
    %v2475 = vadd.f32 %v2473, %v2474
    %s2476 = vtos %v2475
    %s2477 = smul.f32 %s2476, 0.0625
    %s2478 = smax.f32 %s2477, 1e-12
    %v2479 = vstv %s2478
    %v2480 = vrcp.pop %v2479
    %s2481 = vtos %v2480
    %s2482 = smul.f32 %s2481, -4.0
    %v2483 = vstv %s2482
    %v2484 = vmul.f32 %v2466, %v2483
    %v2485 = vmul.f32 %v2484, 1.442695
    %v2486 = vpow.pop %v2485
    %s2487 = smul.f32 %s2481, -2.0
    %v2488 = vstv %s2487
    %v2489 = vmul.f32 %v2466, %v2488
    %v2490 = vmul.f32 %v2489, 1.442695
    %v2491 = vpow.pop %v2490
    %v2492 = vadd.f32 %v2486, %v2491
    %s2493 = smul.f32 %s2481, -1.0
    %v2494 = vstv %s2493
    %v2495 = vmul.f32 %v2466, %v2494
    %v2496 = vmul.f32 %v2495, 1.442695
    %v2497 = vpow.pop %v2496
    %v2498 = vadd.f32 %v2492, %v2497
    %s2499 = smul.f32 %s2481, -0.5
    %v2500 = vstv %s2499
    %v2501 = vmul.f32 %v2466, %v2500
    %v2502 = vmul.f32 %v2501, 1.442695
    %v2503 = vpow.pop %v2502
    %v2504 = vadd.f32 %v2498, %v2503
    %s2505 = smul.f32 %s2481, -0.25
    %v2506 = vstv %s2505
    %v2507 = vmul.f32 %v2466, %v2506
    %v2508 = vmul.f32 %v2507, 1.442695
    %v2509 = vpow.pop %v2508
    %v2510 = vadd.f32 %v2504, %v2509
    %v2511 = vmul.f32 %v2510, %v2222
    %v2512 = vsel %vm2309, %v2511, 0.0
    %2513 = vadd.xlane.f32.xlu0 %v2512
    %v2514 = vpop.xlane.xlu0 %2513
    %v2515 = vrot.slane %v2514, 4
    %v2516 = vadd.f32 %v2514, %v2515
    %v2517 = vrot.slane %v2516, 2
    %v2518 = vadd.f32 %v2516, %v2517
    %v2519 = vrot.slane %v2518, 1
    %v2520 = vadd.f32 %v2518, %v2519
    %s2521 = vtos %v2520
    %s2522 = sadd.f32 %s2521, 2.0
    %s2523 = sadd.f32 %s2376, %s2522
    %2524 = vmatprep.subr.mxu0 0.0
    %2525 = vmatpush1.xpose.msra.mxu0 %v2216
    %2526 = vmatprep.subr.mxu0 0.0
    %2527 = vmatpush1.xpose.msra.mxu0 0.0
    %2528 = vmatprep.subr.mxu0 0.0
    %2529 = vmatpush1.xpose.msra.mxu0 0.0
    %2530 = vmatprep.subr.mxu0 0.0
    %2531 = vmatpush1.xpose.msra.mxu0 0.0
    %2532 = vmatprep.subr.mxu0 0.0
    %2533 = vmatpush1.xpose.msra.mxu0 0.0
    %2534 = vmatprep.subr.mxu0 0.0
    %2535 = vmatpush1.xpose.msra.mxu0 0.0
    %2536 = vmatprep.subr.mxu0 0.0
    %2537 = vmatpush1.xpose.msra.mxu0 0.0
    %2538 = vmatprep.subr.mxu0 0.0
    %2539 = vmatpush1.xpose.msra.mxu0 0.0
    %2540 = vmatprep.subr.mxu0 0.0
    %2541 = vmatpush1.xpose.msra.mxu0 0.0
    %2542 = vmatprep.subr.mxu0 0.0
    %2543 = vmatpush1.xpose.msra.mxu0 0.0
    %2544 = vmatprep.subr.mxu0 0.0
    %2545 = vmatpush1.xpose.msra.mxu0 0.0
    %2546 = vmatprep.subr.mxu0 0.0
    %2547 = vmatpush1.xpose.msra.mxu0 0.0
    %2548 = vmatprep.subr.mxu0 0.0
    %2549 = vmatpush1.xpose.msra.mxu0 0.0
    %2550 = vmatprep.subr.mxu0 0.0
    %2551 = vmatpush1.xpose.msra.mxu0 0.0
    %2552 = vmatprep.subr.mxu0 0.0
    %2553 = vmatpush1.xpose.msra.mxu0 0.0
    %2554 = vmatprep.subr.mxu0 0.0
    %2555 = vmatpush1.xpose.msra.mxu0 0.0
    %2556 = vmatprep.subr.mxu0 0.0
    %2557 = vmatpush1.xpose.msra.mxu0 0.0
    %2558 = vmatprep.subr.mxu0 0.0
    %2559 = vmatpush1.xpose.msra.mxu0 0.0
    %2560 = vmatprep.subr.mxu0 0.0
    %2561 = vmatpush1.xpose.msra.mxu0 0.0
    %2562 = vmatprep.subr.mxu0 0.0
    %2563 = vmatpush1.xpose.msra.mxu0 0.0
    %2564 = vmatprep.subr.mxu0 0.0
    %2565 = vmatpush1.xpose.msra.mxu0 0.0
    %2566 = vmatprep.subr.mxu0 0.0
    %2567 = vmatpush1.xpose.msra.mxu0 0.0
    %2568 = vmatprep.subr.mxu0 0.0
    %2569 = vmatpush1.xpose.msra.mxu0 0.0
    %2570 = vmatprep.subr.mxu0 0.0
    %2571 = vmatpush1.xpose.msra.mxu0 0.0
    %2572 = vmatprep.subr.mxu0 0.0
    %2573 = vmatpush1.xpose.msra.mxu0 0.0
    %2574 = vmatprep.subr.mxu0 0.0
    %2575 = vmatpush1.xpose.msra.mxu0 0.0
    %2576 = vmatprep.subr.mxu0 0.0
    %2577 = vmatpush1.xpose.msra.mxu0 0.0
    %2578 = vmatprep.subr.mxu0 0.0
    %2579 = vmatpush1.xpose.msra.mxu0 0.0
    %2580 = vmatprep.subr.mxu0 0.0
    %2581 = vmatpush1.xpose.msra.mxu0 0.0
    %2582 = vmatprep.subr.mxu0 0.0
    %2583 = vmatpush1.xpose.msra.mxu0 0.0
    %2584 = vmatprep.subr.mxu0 0.0
    %2585 = vmatpush1.xpose.msra.mxu0 0.0
    %2586 = vmatprep.subr.mxu0 0.0
    %2587 = vmatpush1.xpose.msra.mxu0 0.0
    %2588 = vmatprep.mubr.f32.mxu0 0.0
    %2589 = vmatmul.mubr.f32.gmra.mrb[0].mxu0 %v2216
    %v2590 = vpop.f32.mrb[0].mxu0
    %v2591 = vadd.f32 0.0, %v2590
    %v2592 = vpop.f32.mrb[0].mxu0
    %2593 = vdwg.mxu0
    %v2594 = vmul.f32 %v2216, %v2216
    %v2595 = vsel %vm2302, %v2594, 0.0
    %2596 = vadd.xlane.f32.xlu0 %v2595
    %v2597 = vpop.xlane.xlu0 %2596
    %v2598 = vmul.f32 %v2591, %v2229
    %v2599 = vsel %vm2309, %v2598, 0.0
    %v2600 = vrot.slane %v2599, 4
    %v2601 = vadd.f32 %v2599, %v2600
    %v2602 = vrot.slane %v2601, 2
    %v2603 = vadd.f32 %v2601, %v2602
    %v2604 = vrot.slane %v2603, 1
    %v2605 = vadd.f32 %v2603, %v2604
    %v2606 = vadd.f32 %v2597, %v2605
    %v2607 = vmul.f32 %v2591, 2.0
    %v2608 = vsub.f32 %v2606, %v2607
    %v2609 = vmax.f32 %v2608, 0.0
    %v2610 = vsel %vm2309, %v2609, 0.0
    %2611 = vadd.xlane.f32.xlu0 %v2610
    %v2612 = vpop.xlane.xlu0 %2611
    %v2613 = vrot.slane %v2612, 4
    %v2614 = vadd.f32 %v2612, %v2613
    %v2615 = vrot.slane %v2614, 2
    %v2616 = vadd.f32 %v2614, %v2615
    %v2617 = vrot.slane %v2616, 1
    %v2618 = vadd.f32 %v2616, %v2617
    %s2619 = vtos %v2618
    %s2620 = smul.f32 %s2619, 0.0625
    %s2621 = smax.f32 %s2620, 1e-12
    %v2622 = vstv %s2621
    %v2623 = vrcp.pop %v2622
    %s2624 = vtos %v2623
    %s2625 = smul.f32 %s2624, -4.0
    %v2626 = vstv %s2625
    %v2627 = vmul.f32 %v2609, %v2626
    %v2628 = vmul.f32 %v2627, 1.442695
    %v2629 = vpow.pop %v2628
    %s2630 = smul.f32 %s2624, -2.0
    %v2631 = vstv %s2630
    %v2632 = vmul.f32 %v2609, %v2631
    %v2633 = vmul.f32 %v2632, 1.442695
    %v2634 = vpow.pop %v2633
    %v2635 = vadd.f32 %v2629, %v2634
    %s2636 = smul.f32 %s2624, -1.0
    %v2637 = vstv %s2636
    %v2638 = vmul.f32 %v2609, %v2637
    %v2639 = vmul.f32 %v2638, 1.442695
    %v2640 = vpow.pop %v2639
    %v2641 = vadd.f32 %v2635, %v2640
    %s2642 = smul.f32 %s2624, -0.5
    %v2643 = vstv %s2642
    %v2644 = vmul.f32 %v2609, %v2643
    %v2645 = vmul.f32 %v2644, 1.442695
    %v2646 = vpow.pop %v2645
    %v2647 = vadd.f32 %v2641, %v2646
    %s2648 = smul.f32 %s2624, -0.25
    %v2649 = vstv %s2648
    %v2650 = vmul.f32 %v2609, %v2649
    %v2651 = vmul.f32 %v2650, 1.442695
    %v2652 = vpow.pop %v2651
    %v2653 = vadd.f32 %v2647, %v2652
    %v2654 = vmul.f32 %v2653, %v2222
    %v2655 = vsel %vm2309, %v2654, 0.0
    %2656 = vadd.xlane.f32.xlu0 %v2655
    %v2657 = vpop.xlane.xlu0 %2656
    %v2658 = vrot.slane %v2657, 4
    %v2659 = vadd.f32 %v2657, %v2658
    %v2660 = vrot.slane %v2659, 2
    %v2661 = vadd.f32 %v2659, %v2660
    %v2662 = vrot.slane %v2661, 1
    %v2663 = vadd.f32 %v2661, %v2662
    %s2664 = vtos %v2663
    %s2665 = sadd.f32 %s2664, 2.0
    %s2666 = sadd.f32 %s2523, %s2665
    %v2667 = vstv %s2666
    %v2668 = vadd.f32 %v2667, 0.0
    %2669 = vst [vmem:[#allocation2] sm:$0x1] %v2668
    // Predicated region
    $region34: #{dan_forward.3} parent=1 // pred_check
      _
    $region35: #{dan_forward.3} parent=1 // pred_check_branch
      %2671 = sbr.rel (0) target = $region37
    $region36: #{dan_forward.3} parent=1 // pred_region
      _
    $region37: #{dan_forward.3} parent=1 // pred_fallthru
      _
    // Predicated region
    $region38: #{dan_forward.3} parent=1 // pred_check
      _
    $region39: #{dan_forward.3} parent=1 // pred_check_branch
      %2673 = sbr.rel (0) target = $region41
    $region40: #{dan_forward.3} parent=1 // pred_region
      %s2675 = ssub.s32 16, 16
      %2676 = vsyncadd [#allocation3], %s2675
      %s2678 = sshll.u32 [#allocation2], 4
      %s2679 = int_to_ptr.vmem [resolvable:$true] %s2678
      %2681 = dma.vmem_to_hbm [thread:$0]  %s2679, 16, %s9, [#allocation3]
    $region41: #{dan_forward.3} parent=1 // pred_fallthru
      _
    // Predicated region
    $region42: #{dan_forward.3} parent=1 // pred_check
      _
    $region43: #{dan_forward.3} parent=1 // pred_check_branch
      %2683 = sbr.rel (0) target = $region45
    $region44: #{dan_forward.3} parent=1 // pred_region
      _
    $region45: #{dan_forward.3} parent=1 // pred_fallthru
      _
    // Predicated region
    $region46: #{dan_forward.3} parent=1 // pred_check
      _
    $region47: #{dan_forward.3} parent=1 // pred_check_branch
      %2685 = sbr.rel (0) target = $region49
    $region48: #{dan_forward.3} parent=1 // pred_region
      %2686 = dma.done [#allocation3], 16
    $region49: #{dan_forward.3} parent=1 // pred_fallthru
      _
    %2687 = vsyncpa [#allocation3], 1

// kernel: dan_forward.2
$region0: #{dan_forward.2}
  #allocation0 [shape = 'u32[]', space=smem, size = 0x4, offset = 0x4, fixed_abs, tag = 'smem constant byte address 0x4 - core index']
  #allocation1 [shape = 'u32[144,128]{1,0:T(1,128)}', space=vmem, size = 0x12000, scoped, tag = 'internal scratch']
  %s0 = inlined_call_operand.smem [shape: u32[33], index: -1, kind: input, shape index: {}]
  %s1 = sld [smem:[%s0]]
  %s2 = scalar_lea.smem %s0, 1
  %s3 = sld [smem:[%s2]]
  %s4 = scalar_lea.smem %s0, 2
  %s5 = sld [smem:[%s4]]
  %s6 = scalar_lea.smem %s0, 3
  %s7 = sld [smem:[%s6]]
  %s8 = scalar_lea.smem %s0, 4
  %s9 = sld [smem:[%s8]]
  %s10 = scalar_lea.smem %s0, 5
  %s11 = sld [smem:[%s10]]
  %s12 = scalar_lea.smem %s0, 6
  %s13 = sld [smem:[%s12]]
  %s14 = scalar_lea.smem %s0, 7
  %s15 = sld [smem:[%s14]]
  %s16 = scalar_lea.smem %s0, 8
  %s17 = sld [smem:[%s16]]
  %s18 = scalar_lea.smem %s0, 9
  %s19 = sld [smem:[%s18]]
  %s20 = scalar_lea.smem %s0, 10
  %s21 = sld [smem:[%s20]]
  %s22 = scalar_lea.smem %s0, 11
  %s23 = sld [smem:[%s22]]
  %s24 = scalar_lea.smem %s0, 12
  %s25 = sld [smem:[%s24]]
  %s26 = scalar_lea.smem %s0, 13
  %s27 = sld [smem:[%s26]]
  %s28 = scalar_lea.smem %s0, 14
  %s29 = sld [smem:[%s28]]
  %s30 = scalar_lea.smem %s0, 15
  %s31 = sld [smem:[%s30]]
  %s32 = scalar_lea.smem %s0, 16
  %s33 = sld [smem:[%s32]]
  %s34 = scalar_lea.smem %s0, 17
  %s35 = sld [smem:[%s34]]
  %s36 = scalar_lea.smem %s0, 18
  %s37 = sld [smem:[%s36]]
  %s38 = scalar_lea.smem %s0, 19
  %s39 = sld [smem:[%s38]]
  %s40 = scalar_lea.smem %s0, 20
  %s41 = sld [smem:[%s40]]
  %s42 = scalar_lea.smem %s0, 21
  %s43 = sld [smem:[%s42]]
  %s44 = scalar_lea.smem %s0, 22
  %s45 = sld [smem:[%s44]]
  %s46 = scalar_lea.smem %s0, 23
  %s47 = sld [smem:[%s46]]
  %s48 = scalar_lea.smem %s0, 24
  %s49 = sld [smem:[%s48]]
  %s50 = scalar_lea.smem %s0, 25
  %s51 = sld [smem:[%s50]]
  %s52 = scalar_lea.smem %s0, 26
  %s53 = sld [smem:[%s52]]
  %s54 = scalar_lea.smem %s0, 27
  %s55 = sld [smem:[%s54]]
  %s56 = scalar_lea.smem %s0, 28
  %s57 = sld [smem:[%s56]]
  %s58 = scalar_lea.smem %s0, 29
  %s59 = sld [smem:[%s58]]
  %s60 = scalar_lea.smem %s0, 30
  %s61 = sld [smem:[%s60]]
  %s62 = scalar_lea.smem %s0, 31
  %s63 = sld [smem:[%s62]]
  %s64 = scalar_lea.smem %s0, 32
  %s65 = sld [smem:[%s64]]
  %66 = xla_tuple %s63, %s65
  %s67 = sld [smem:[#allocation0]]
  $region169: #{dan_forward.2} parent=0
    _
  %s69 = ssub.s32 1, %s67
  %s70 = scalar_select 0, %s69, %s67
  $region1: #{dan_forward.2} parent=0
    #allocation2 [shape = 'u8[786432]{0}', space=vmem, size = 0xc0000, scoped, tag = 'input window, operand 25, single buffered']
    #allocation3 [shape = 's32[2]{0}', space=sflag, size = 0x8, scoped, tag = 'scoped memory for dan_forward.2']
    %71 = vsyncpa [#allocation3], 0
    loop: start=0, step=1, limit=4
    $region2: #{dan_forward.2} parent=1 // loop_pre_header
      _
    $region3: #{dan_forward.2} parent=1 // loop_header
      %s73 = sphi 0, %s77
      %p74 = scmp.ge.s32.totalorder %s73, 4
      %s83 = sphi 0, %s85
      %s86 = sphi 0, %s83
      %s87 = sphi 0, %s86
      %s103 = sphi 0, %s87
      %s107 = sphi 0, %s107
      %s109 = sphi 0, %s107
      %s110 = sphi 0, %s109
      %s124 = sphi 0, %s110
      %s128 = sphi 0, %s128
      %s130 = sphi 0, %s128
      %s131 = sphi 0, %s130
      %s145 = sphi 0, %s131
      %s149 = sphi 0, %s149
      %s151 = sphi 0, %s149
      %s152 = sphi 0, %s151
      %s166 = sphi 0, %s152
      %s170 = sphi 0, %s170
      %s172 = sphi 0, %s170
      %s173 = sphi 0, %s172
      %s187 = sphi 0, %s173
      %s191 = sphi 0, %s191
      %s193 = sphi 0, %s191
      %s194 = sphi 0, %s193
      %s208 = sphi 0, %s194
      %s212 = sphi 0, %s212
      %s214 = sphi 0, %s212
      %s215 = sphi 0, %s214
      %s229 = sphi 0, %s215
      %s233 = sphi 0, %s233
      %s235 = sphi 0, %s233
      %s236 = sphi 0, %s235
      %s250 = sphi 0, %s236
      %s254 = sphi 0, %s254
      %s256 = sphi 0, %s254
      %s257 = sphi 0, %s256
      %s271 = sphi 0, %s257
      %s275 = sphi 0, %s275
      %s277 = sphi 0, %s275
      %s278 = sphi 0, %s277
      %s292 = sphi 0, %s278
      %s296 = sphi 0, %s296
      %s298 = sphi 0, %s296
      %s299 = sphi 0, %s298
      %s313 = sphi 0, %s299
      %s317 = sphi 0, %s317
      %s319 = sphi 0, %s317
      %s320 = sphi 0, %s319
      %s334 = sphi 0, %s320
      %s338 = sphi 0, %s338
      %s340 = sphi 0, %s338
      %s341 = sphi 0, %s340
      %s355 = sphi 0, %s341
      %s359 = sphi 0, %s359
      %s361 = sphi 0, %s359
      %s362 = sphi 0, %s361
      %s376 = sphi 0, %s362
      %s380 = sphi 0, %s380
      %s382 = sphi 0, %s380
      %s383 = sphi 0, %s382
      %s397 = sphi 0, %s383
      %s401 = sphi 0, %s401
      %s403 = sphi 0, %s401
      %s404 = sphi 0, %s403
      %s418 = sphi 0, %s404
      %s422 = sphi 0, %s422
      %s424 = sphi 0, %s422
      %s425 = sphi 0, %s424
      %s439 = sphi 0, %s425
      %s443 = sphi 0, %s443
      %s445 = sphi 0, %s443
      %s446 = sphi 0, %s445
      %s460 = sphi 0, %s446
      %s464 = sphi 0, %s464
      %s466 = sphi 0, %s464
      %s467 = sphi 0, %s466
      %s481 = sphi 0, %s467
      %s485 = sphi 0, %s485
      %s487 = sphi 0, %s485
      %s488 = sphi 0, %s487
      %s502 = sphi 0, %s488
      %s506 = sphi 0, %s506
      %s508 = sphi 0, %s506
      %s509 = sphi 0, %s508
      %s523 = sphi 0, %s509
      %s527 = sphi 0, %s527
      %s529 = sphi 0, %s527
      %s530 = sphi 0, %s529
      %s544 = sphi 0, %s530
      %s548 = sphi 0, %s548
      %s550 = sphi 0, %s548
      %s551 = sphi 0, %s550
      %s565 = sphi 0, %s551
      %s569 = sphi 0, %s569
      %s571 = sphi 0, %s569
      %s572 = sphi 0, %s571
      %s586 = sphi 0, %s572
      %s590 = sphi 0, %s590
      %s592 = sphi 0, %s590
      %s593 = sphi 0, %s592
      %s607 = sphi 0, %s593
      %s611 = sphi 0, %s611
      %s613 = sphi 0, %s611
      %s614 = sphi 0, %s613
      %s628 = sphi 0, %s614
      %s632 = sphi 0, %s632
      %s634 = sphi 0, %s632
      %s635 = sphi 0, %s634
      %s649 = sphi 0, %s635
      %s653 = sphi 0, %s653
      %s655 = sphi 0, %s653
      %s656 = sphi 0, %s655
      %s670 = sphi 0, %s656
      %s674 = sphi 0, %s674
      %s676 = sphi 0, %s674
      %s677 = sphi 0, %s676
      %s691 = sphi 0, %s677
      %s695 = sphi 0, %s695
      %s697 = sphi 0, %s695
      %s698 = sphi 0, %s697
      %s712 = sphi 0, %s698
      %s716 = sphi 0, %s716
      %s718 = sphi 0, %s716
      %s719 = sphi 0, %s718
      %s733 = sphi 0, %s719
      %s739 = sphi 0, %s741
      %s742 = sphi 0, %s739
      %s743 = sphi 0, %s742
      %s759 = sphi 0, %s743
      %s765 = sphi 0, %s767
      %s768 = sphi 0, %s765
      %s769 = sphi 0, %s768
      %s785 = sphi 0, %s769
    $region4: #{dan_forward.2} parent=1 // loop_header_branch
      %76 = sbr.rel (%p74) target = $region8
    $region5: #{dan_forward.2} parent=1 // loop_body
      %s78 = ssub.s32 %s73, 1
      %s79 = ssub.s32 %s73, 2
      %s80 = sadd.s32 %s73, 1
      %s81 = ssub.s32 %s73, %s80
      %p82 = scmp.eq.s32.totalorder %s81, 0
      %s84 = sadd.s32 %s83, 1
      %s85 = scalar_select %p82, %s83, %s84
      %p88 = pneg %p82
      %p89 = scmp.eq.s32.totalorder %s73, 1
      %p90 = por %p88, %p89
      %p91 = scmp.ne.s32.totalorder %s83, %s86
      %p92 = scmp.eq.s32.totalorder %s73, 0
      %p93 = por %p91, %p92
      %p94 = scmp.ne.s32.totalorder %s83, %s86
      %p95 = scmp.eq.s32.totalorder %s78, 1
      %p96 = por %p94, %p95
      %p97 = scmp.ne.s32.totalorder %s86, %s87
      %p98 = scmp.eq.s32.totalorder %s78, 0
      %p99 = por %p97, %p98
      %p100 = scmp.ne.s32.totalorder %s86, %s87
      %p101 = scmp.eq.s32.totalorder %s79, 1
      %p102 = por %p100, %p101
      %p104 = scmp.ne.s32.totalorder %s87, %s103
      %p105 = scmp.eq.s32.totalorder %s79, 0
      %p106 = por %p104, %p105
      %s108 = sadd.s32 %s107, 1
      %p111 = scmp.eq.s32.totalorder %s73, 1
      %p112 = scmp.ne.s32.totalorder %s107, %s109
      %p113 = scmp.eq.s32.totalorder %s73, 0
      %p114 = por %p112, %p113
      %p115 = scmp.ne.s32.totalorder %s107, %s109
      %p116 = scmp.eq.s32.totalorder %s78, 1
      %p117 = por %p115, %p116
      %p118 = scmp.ne.s32.totalorder %s109, %s110
      %p119 = scmp.eq.s32.totalorder %s78, 0
      %p120 = por %p118, %p119
      %p121 = scmp.ne.s32.totalorder %s109, %s110
      %p122 = scmp.eq.s32.totalorder %s79, 1
      %p123 = por %p121, %p122
      %p125 = scmp.ne.s32.totalorder %s110, %s124
      %p126 = scmp.eq.s32.totalorder %s79, 0
      %p127 = por %p125, %p126
      %s129 = sadd.s32 %s128, 1
      %p132 = scmp.eq.s32.totalorder %s73, 1
      %p133 = scmp.ne.s32.totalorder %s128, %s130
      %p134 = scmp.eq.s32.totalorder %s73, 0
      %p135 = por %p133, %p134
      %p136 = scmp.ne.s32.totalorder %s128, %s130
      %p137 = scmp.eq.s32.totalorder %s78, 1
      %p138 = por %p136, %p137
      %p139 = scmp.ne.s32.totalorder %s130, %s131
      %p140 = scmp.eq.s32.totalorder %s78, 0
      %p141 = por %p139, %p140
      %p142 = scmp.ne.s32.totalorder %s130, %s131
      %p143 = scmp.eq.s32.totalorder %s79, 1
      %p144 = por %p142, %p143
      %p146 = scmp.ne.s32.totalorder %s131, %s145
      %p147 = scmp.eq.s32.totalorder %s79, 0
      %p148 = por %p146, %p147
      %s150 = sadd.s32 %s149, 1
      %p153 = scmp.eq.s32.totalorder %s73, 1
      %p154 = scmp.ne.s32.totalorder %s149, %s151
      %p155 = scmp.eq.s32.totalorder %s73, 0
      %p156 = por %p154, %p155
      %p157 = scmp.ne.s32.totalorder %s149, %s151
      %p158 = scmp.eq.s32.totalorder %s78, 1
      %p159 = por %p157, %p158
      %p160 = scmp.ne.s32.totalorder %s151, %s152
      %p161 = scmp.eq.s32.totalorder %s78, 0
      %p162 = por %p160, %p161
      %p163 = scmp.ne.s32.totalorder %s151, %s152
      %p164 = scmp.eq.s32.totalorder %s79, 1
      %p165 = por %p163, %p164
      %p167 = scmp.ne.s32.totalorder %s152, %s166
      %p168 = scmp.eq.s32.totalorder %s79, 0
      %p169 = por %p167, %p168
      %s171 = sadd.s32 %s170, 1
      %p174 = scmp.eq.s32.totalorder %s73, 1
      %p175 = scmp.ne.s32.totalorder %s170, %s172
      %p176 = scmp.eq.s32.totalorder %s73, 0
      %p177 = por %p175, %p176
      %p178 = scmp.ne.s32.totalorder %s170, %s172
      %p179 = scmp.eq.s32.totalorder %s78, 1
      %p180 = por %p178, %p179
      %p181 = scmp.ne.s32.totalorder %s172, %s173
      %p182 = scmp.eq.s32.totalorder %s78, 0
      %p183 = por %p181, %p182
      %p184 = scmp.ne.s32.totalorder %s172, %s173
      %p185 = scmp.eq.s32.totalorder %s79, 1
      %p186 = por %p184, %p185
      %p188 = scmp.ne.s32.totalorder %s173, %s187
      %p189 = scmp.eq.s32.totalorder %s79, 0
      %p190 = por %p188, %p189
      %s192 = sadd.s32 %s191, 1
      %p195 = scmp.eq.s32.totalorder %s73, 1
      %p196 = scmp.ne.s32.totalorder %s191, %s193
      %p197 = scmp.eq.s32.totalorder %s73, 0
      %p198 = por %p196, %p197
      %p199 = scmp.ne.s32.totalorder %s191, %s193
      %p200 = scmp.eq.s32.totalorder %s78, 1
      %p201 = por %p199, %p200
      %p202 = scmp.ne.s32.totalorder %s193, %s194
      %p203 = scmp.eq.s32.totalorder %s78, 0
      %p204 = por %p202, %p203
      %p205 = scmp.ne.s32.totalorder %s193, %s194
      %p206 = scmp.eq.s32.totalorder %s79, 1
      %p207 = por %p205, %p206
      %p209 = scmp.ne.s32.totalorder %s194, %s208
      %p210 = scmp.eq.s32.totalorder %s79, 0
      %p211 = por %p209, %p210
      %s213 = sadd.s32 %s212, 1
      %p216 = scmp.eq.s32.totalorder %s73, 1
      %p217 = scmp.ne.s32.totalorder %s212, %s214
      %p218 = scmp.eq.s32.totalorder %s73, 0
      %p219 = por %p217, %p218
      %p220 = scmp.ne.s32.totalorder %s212, %s214
      %p221 = scmp.eq.s32.totalorder %s78, 1
      %p222 = por %p220, %p221
      %p223 = scmp.ne.s32.totalorder %s214, %s215
      %p224 = scmp.eq.s32.totalorder %s78, 0
      %p225 = por %p223, %p224
      %p226 = scmp.ne.s32.totalorder %s214, %s215
      %p227 = scmp.eq.s32.totalorder %s79, 1
      %p228 = por %p226, %p227
      %p230 = scmp.ne.s32.totalorder %s215, %s229
      %p231 = scmp.eq.s32.totalorder %s79, 0
      %p232 = por %p230, %p231
      %s234 = sadd.s32 %s233, 1
      %p237 = scmp.eq.s32.totalorder %s73, 1
      %p238 = scmp.ne.s32.totalorder %s233, %s235
      %p239 = scmp.eq.s32.totalorder %s73, 0
      %p240 = por %p238, %p239
      %p241 = scmp.ne.s32.totalorder %s233, %s235
      %p242 = scmp.eq.s32.totalorder %s78, 1
      %p243 = por %p241, %p242
      %p244 = scmp.ne.s32.totalorder %s235, %s236
      %p245 = scmp.eq.s32.totalorder %s78, 0
      %p246 = por %p244, %p245
      %p247 = scmp.ne.s32.totalorder %s235, %s236
      %p248 = scmp.eq.s32.totalorder %s79, 1
      %p249 = por %p247, %p248
      %p251 = scmp.ne.s32.totalorder %s236, %s250
      %p252 = scmp.eq.s32.totalorder %s79, 0
      %p253 = por %p251, %p252
      %s255 = sadd.s32 %s254, 1
      %p258 = scmp.eq.s32.totalorder %s73, 1
      %p259 = scmp.ne.s32.totalorder %s254, %s256
      %p260 = scmp.eq.s32.totalorder %s73, 0
      %p261 = por %p259, %p260
      %p262 = scmp.ne.s32.totalorder %s254, %s256
      %p263 = scmp.eq.s32.totalorder %s78, 1
      %p264 = por %p262, %p263
      %p265 = scmp.ne.s32.totalorder %s256, %s257
      %p266 = scmp.eq.s32.totalorder %s78, 0
      %p267 = por %p265, %p266
      %p268 = scmp.ne.s32.totalorder %s256, %s257
      %p269 = scmp.eq.s32.totalorder %s79, 1
      %p270 = por %p268, %p269
      %p272 = scmp.ne.s32.totalorder %s257, %s271
      %p273 = scmp.eq.s32.totalorder %s79, 0
      %p274 = por %p272, %p273
      %s276 = sadd.s32 %s275, 1
      %p279 = scmp.eq.s32.totalorder %s73, 1
      %p280 = scmp.ne.s32.totalorder %s275, %s277
      %p281 = scmp.eq.s32.totalorder %s73, 0
      %p282 = por %p280, %p281
      %p283 = scmp.ne.s32.totalorder %s275, %s277
      %p284 = scmp.eq.s32.totalorder %s78, 1
      %p285 = por %p283, %p284
      %p286 = scmp.ne.s32.totalorder %s277, %s278
      %p287 = scmp.eq.s32.totalorder %s78, 0
      %p288 = por %p286, %p287
      %p289 = scmp.ne.s32.totalorder %s277, %s278
      %p290 = scmp.eq.s32.totalorder %s79, 1
      %p291 = por %p289, %p290
      %p293 = scmp.ne.s32.totalorder %s278, %s292
      %p294 = scmp.eq.s32.totalorder %s79, 0
      %p295 = por %p293, %p294
      %s297 = sadd.s32 %s296, 1
      %p300 = scmp.eq.s32.totalorder %s73, 1
      %p301 = scmp.ne.s32.totalorder %s296, %s298
      %p302 = scmp.eq.s32.totalorder %s73, 0
      %p303 = por %p301, %p302
      %p304 = scmp.ne.s32.totalorder %s296, %s298
      %p305 = scmp.eq.s32.totalorder %s78, 1
      %p306 = por %p304, %p305
      %p307 = scmp.ne.s32.totalorder %s298, %s299
      %p308 = scmp.eq.s32.totalorder %s78, 0
      %p309 = por %p307, %p308
      %p310 = scmp.ne.s32.totalorder %s298, %s299
      %p311 = scmp.eq.s32.totalorder %s79, 1
      %p312 = por %p310, %p311
      %p314 = scmp.ne.s32.totalorder %s299, %s313
      %p315 = scmp.eq.s32.totalorder %s79, 0
      %p316 = por %p314, %p315
      %s318 = sadd.s32 %s317, 1
      %p321 = scmp.eq.s32.totalorder %s73, 1
      %p322 = scmp.ne.s32.totalorder %s317, %s319
      %p323 = scmp.eq.s32.totalorder %s73, 0
      %p324 = por %p322, %p323
      %p325 = scmp.ne.s32.totalorder %s317, %s319
      %p326 = scmp.eq.s32.totalorder %s78, 1
      %p327 = por %p325, %p326
      %p328 = scmp.ne.s32.totalorder %s319, %s320
      %p329 = scmp.eq.s32.totalorder %s78, 0
      %p330 = por %p328, %p329
      %p331 = scmp.ne.s32.totalorder %s319, %s320
      %p332 = scmp.eq.s32.totalorder %s79, 1
      %p333 = por %p331, %p332
      %p335 = scmp.ne.s32.totalorder %s320, %s334
      %p336 = scmp.eq.s32.totalorder %s79, 0
      %p337 = por %p335, %p336
      %s339 = sadd.s32 %s338, 1
      %p342 = scmp.eq.s32.totalorder %s73, 1
      %p343 = scmp.ne.s32.totalorder %s338, %s340
      %p344 = scmp.eq.s32.totalorder %s73, 0
      %p345 = por %p343, %p344
      %p346 = scmp.ne.s32.totalorder %s338, %s340
      %p347 = scmp.eq.s32.totalorder %s78, 1
      %p348 = por %p346, %p347
      %p349 = scmp.ne.s32.totalorder %s340, %s341
      %p350 = scmp.eq.s32.totalorder %s78, 0
      %p351 = por %p349, %p350
      %p352 = scmp.ne.s32.totalorder %s340, %s341
      %p353 = scmp.eq.s32.totalorder %s79, 1
      %p354 = por %p352, %p353
      %p356 = scmp.ne.s32.totalorder %s341, %s355
      %p357 = scmp.eq.s32.totalorder %s79, 0
      %p358 = por %p356, %p357
      %s360 = sadd.s32 %s359, 1
      %p363 = scmp.eq.s32.totalorder %s73, 1
      %p364 = scmp.ne.s32.totalorder %s359, %s361
      %p365 = scmp.eq.s32.totalorder %s73, 0
      %p366 = por %p364, %p365
      %p367 = scmp.ne.s32.totalorder %s359, %s361
      %p368 = scmp.eq.s32.totalorder %s78, 1
      %p369 = por %p367, %p368
      %p370 = scmp.ne.s32.totalorder %s361, %s362
      %p371 = scmp.eq.s32.totalorder %s78, 0
      %p372 = por %p370, %p371
      %p373 = scmp.ne.s32.totalorder %s361, %s362
      %p374 = scmp.eq.s32.totalorder %s79, 1
      %p375 = por %p373, %p374
      %p377 = scmp.ne.s32.totalorder %s362, %s376
      %p378 = scmp.eq.s32.totalorder %s79, 0
      %p379 = por %p377, %p378
      %s381 = sadd.s32 %s380, 1
      %p384 = scmp.eq.s32.totalorder %s73, 1
      %p385 = scmp.ne.s32.totalorder %s380, %s382
      %p386 = scmp.eq.s32.totalorder %s73, 0
      %p387 = por %p385, %p386
      %p388 = scmp.ne.s32.totalorder %s380, %s382
      %p389 = scmp.eq.s32.totalorder %s78, 1
      %p390 = por %p388, %p389
      %p391 = scmp.ne.s32.totalorder %s382, %s383
      %p392 = scmp.eq.s32.totalorder %s78, 0
      %p393 = por %p391, %p392
      %p394 = scmp.ne.s32.totalorder %s382, %s383
      %p395 = scmp.eq.s32.totalorder %s79, 1
      %p396 = por %p394, %p395
      %p398 = scmp.ne.s32.totalorder %s383, %s397
      %p399 = scmp.eq.s32.totalorder %s79, 0
      %p400 = por %p398, %p399
      %s402 = sadd.s32 %s401, 1
      %p405 = scmp.eq.s32.totalorder %s73, 1
      %p406 = scmp.ne.s32.totalorder %s401, %s403
      %p407 = scmp.eq.s32.totalorder %s73, 0
      %p408 = por %p406, %p407
      %p409 = scmp.ne.s32.totalorder %s401, %s403
      %p410 = scmp.eq.s32.totalorder %s78, 1
      %p411 = por %p409, %p410
      %p412 = scmp.ne.s32.totalorder %s403, %s404
      %p413 = scmp.eq.s32.totalorder %s78, 0
      %p414 = por %p412, %p413
      %p415 = scmp.ne.s32.totalorder %s403, %s404
      %p416 = scmp.eq.s32.totalorder %s79, 1
      %p417 = por %p415, %p416
      %p419 = scmp.ne.s32.totalorder %s404, %s418
      %p420 = scmp.eq.s32.totalorder %s79, 0
      %p421 = por %p419, %p420
      %s423 = sadd.s32 %s422, 1
      %p426 = scmp.eq.s32.totalorder %s73, 1
      %p427 = scmp.ne.s32.totalorder %s422, %s424
      %p428 = scmp.eq.s32.totalorder %s73, 0
      %p429 = por %p427, %p428
      %p430 = scmp.ne.s32.totalorder %s422, %s424
      %p431 = scmp.eq.s32.totalorder %s78, 1
      %p432 = por %p430, %p431
      %p433 = scmp.ne.s32.totalorder %s424, %s425
      %p434 = scmp.eq.s32.totalorder %s78, 0
      %p435 = por %p433, %p434
      %p436 = scmp.ne.s32.totalorder %s424, %s425
      %p437 = scmp.eq.s32.totalorder %s79, 1
      %p438 = por %p436, %p437
      %p440 = scmp.ne.s32.totalorder %s425, %s439
      %p441 = scmp.eq.s32.totalorder %s79, 0
      %p442 = por %p440, %p441
      %s444 = sadd.s32 %s443, 1
      %p447 = scmp.eq.s32.totalorder %s73, 1
      %p448 = scmp.ne.s32.totalorder %s443, %s445
      %p449 = scmp.eq.s32.totalorder %s73, 0
      %p450 = por %p448, %p449
      %p451 = scmp.ne.s32.totalorder %s443, %s445
      %p452 = scmp.eq.s32.totalorder %s78, 1
      %p453 = por %p451, %p452
      %p454 = scmp.ne.s32.totalorder %s445, %s446
      %p455 = scmp.eq.s32.totalorder %s78, 0
      %p456 = por %p454, %p455
      %p457 = scmp.ne.s32.totalorder %s445, %s446
      %p458 = scmp.eq.s32.totalorder %s79, 1
      %p459 = por %p457, %p458
      %p461 = scmp.ne.s32.totalorder %s446, %s460
      %p462 = scmp.eq.s32.totalorder %s79, 0
      %p463 = por %p461, %p462
      %s465 = sadd.s32 %s464, 1
      %p468 = scmp.eq.s32.totalorder %s73, 1
      %p469 = scmp.ne.s32.totalorder %s464, %s466
      %p470 = scmp.eq.s32.totalorder %s73, 0
      %p471 = por %p469, %p470
      %p472 = scmp.ne.s32.totalorder %s464, %s466
      %p473 = scmp.eq.s32.totalorder %s78, 1
      %p474 = por %p472, %p473
      %p475 = scmp.ne.s32.totalorder %s466, %s467
      %p476 = scmp.eq.s32.totalorder %s78, 0
      %p477 = por %p475, %p476
      %p478 = scmp.ne.s32.totalorder %s466, %s467
      %p479 = scmp.eq.s32.totalorder %s79, 1
      %p480 = por %p478, %p479
      %p482 = scmp.ne.s32.totalorder %s467, %s481
      %p483 = scmp.eq.s32.totalorder %s79, 0
      %p484 = por %p482, %p483
      %s486 = sadd.s32 %s485, 1
      %p489 = scmp.eq.s32.totalorder %s73, 1
      %p490 = scmp.ne.s32.totalorder %s485, %s487
      %p491 = scmp.eq.s32.totalorder %s73, 0
      %p492 = por %p490, %p491
      %p493 = scmp.ne.s32.totalorder %s485, %s487
      %p494 = scmp.eq.s32.totalorder %s78, 1
      %p495 = por %p493, %p494
      %p496 = scmp.ne.s32.totalorder %s487, %s488
      %p497 = scmp.eq.s32.totalorder %s78, 0
      %p498 = por %p496, %p497
      %p499 = scmp.ne.s32.totalorder %s487, %s488
      %p500 = scmp.eq.s32.totalorder %s79, 1
      %p501 = por %p499, %p500
      %p503 = scmp.ne.s32.totalorder %s488, %s502
      %p504 = scmp.eq.s32.totalorder %s79, 0
      %p505 = por %p503, %p504
      %s507 = sadd.s32 %s506, 1
      %p510 = scmp.eq.s32.totalorder %s73, 1
      %p511 = scmp.ne.s32.totalorder %s506, %s508
      %p512 = scmp.eq.s32.totalorder %s73, 0
      %p513 = por %p511, %p512
      %p514 = scmp.ne.s32.totalorder %s506, %s508
      %p515 = scmp.eq.s32.totalorder %s78, 1
      %p516 = por %p514, %p515
      %p517 = scmp.ne.s32.totalorder %s508, %s509
      %p518 = scmp.eq.s32.totalorder %s78, 0
      %p519 = por %p517, %p518
      %p520 = scmp.ne.s32.totalorder %s508, %s509
      %p521 = scmp.eq.s32.totalorder %s79, 1
      %p522 = por %p520, %p521
      %p524 = scmp.ne.s32.totalorder %s509, %s523
      %p525 = scmp.eq.s32.totalorder %s79, 0
      %p526 = por %p524, %p525
      %s528 = sadd.s32 %s527, 1
      %p531 = scmp.eq.s32.totalorder %s73, 1
      %p532 = scmp.ne.s32.totalorder %s527, %s529
      %p533 = scmp.eq.s32.totalorder %s73, 0
      %p534 = por %p532, %p533
      %p535 = scmp.ne.s32.totalorder %s527, %s529
      %p536 = scmp.eq.s32.totalorder %s78, 1
      %p537 = por %p535, %p536
      %p538 = scmp.ne.s32.totalorder %s529, %s530
      %p539 = scmp.eq.s32.totalorder %s78, 0
      %p540 = por %p538, %p539
      %p541 = scmp.ne.s32.totalorder %s529, %s530
      %p542 = scmp.eq.s32.totalorder %s79, 1
      %p543 = por %p541, %p542
      %p545 = scmp.ne.s32.totalorder %s530, %s544
      %p546 = scmp.eq.s32.totalorder %s79, 0
      %p547 = por %p545, %p546
      %s549 = sadd.s32 %s548, 1
      %p552 = scmp.eq.s32.totalorder %s73, 1
      %p553 = scmp.ne.s32.totalorder %s548, %s550
      %p554 = scmp.eq.s32.totalorder %s73, 0
      %p555 = por %p553, %p554
      %p556 = scmp.ne.s32.totalorder %s548, %s550
      %p557 = scmp.eq.s32.totalorder %s78, 1
      %p558 = por %p556, %p557
      %p559 = scmp.ne.s32.totalorder %s550, %s551
      %p560 = scmp.eq.s32.totalorder %s78, 0
      %p561 = por %p559, %p560
      %p562 = scmp.ne.s32.totalorder %s550, %s551
      %p563 = scmp.eq.s32.totalorder %s79, 1
      %p564 = por %p562, %p563
      %p566 = scmp.ne.s32.totalorder %s551, %s565
      %p567 = scmp.eq.s32.totalorder %s79, 0
      %p568 = por %p566, %p567
      %s570 = sadd.s32 %s569, 1
      %p573 = scmp.eq.s32.totalorder %s73, 1
      %p574 = scmp.ne.s32.totalorder %s569, %s571
      %p575 = scmp.eq.s32.totalorder %s73, 0
      %p576 = por %p574, %p575
      %p577 = scmp.ne.s32.totalorder %s569, %s571
      %p578 = scmp.eq.s32.totalorder %s78, 1
      %p579 = por %p577, %p578
      %p580 = scmp.ne.s32.totalorder %s571, %s572
      %p581 = scmp.eq.s32.totalorder %s78, 0
      %p582 = por %p580, %p581
      %p583 = scmp.ne.s32.totalorder %s571, %s572
      %p584 = scmp.eq.s32.totalorder %s79, 1
      %p585 = por %p583, %p584
      %p587 = scmp.ne.s32.totalorder %s572, %s586
      %p588 = scmp.eq.s32.totalorder %s79, 0
      %p589 = por %p587, %p588
      %s591 = sadd.s32 %s590, 1
      %p594 = scmp.eq.s32.totalorder %s73, 1
      %p595 = scmp.ne.s32.totalorder %s590, %s592
      %p596 = scmp.eq.s32.totalorder %s73, 0
      %p597 = por %p595, %p596
      %p598 = scmp.ne.s32.totalorder %s590, %s592
      %p599 = scmp.eq.s32.totalorder %s78, 1
      %p600 = por %p598, %p599
      %p601 = scmp.ne.s32.totalorder %s592, %s593
      %p602 = scmp.eq.s32.totalorder %s78, 0
      %p603 = por %p601, %p602
      %p604 = scmp.ne.s32.totalorder %s592, %s593
      %p605 = scmp.eq.s32.totalorder %s79, 1
      %p606 = por %p604, %p605
      %p608 = scmp.ne.s32.totalorder %s593, %s607
      %p609 = scmp.eq.s32.totalorder %s79, 0
      %p610 = por %p608, %p609
      %s612 = sadd.s32 %s611, 1
      %p615 = scmp.eq.s32.totalorder %s73, 1
      %p616 = scmp.ne.s32.totalorder %s611, %s613
      %p617 = scmp.eq.s32.totalorder %s73, 0
      %p618 = por %p616, %p617
      %p619 = scmp.ne.s32.totalorder %s611, %s613
      %p620 = scmp.eq.s32.totalorder %s78, 1
      %p621 = por %p619, %p620
      %p622 = scmp.ne.s32.totalorder %s613, %s614
      %p623 = scmp.eq.s32.totalorder %s78, 0
      %p624 = por %p622, %p623
      %p625 = scmp.ne.s32.totalorder %s613, %s614
      %p626 = scmp.eq.s32.totalorder %s79, 1
      %p627 = por %p625, %p626
      %p629 = scmp.ne.s32.totalorder %s614, %s628
      %p630 = scmp.eq.s32.totalorder %s79, 0
      %p631 = por %p629, %p630
      %s633 = sadd.s32 %s632, 1
      %p636 = scmp.eq.s32.totalorder %s73, 1
      %p637 = scmp.ne.s32.totalorder %s632, %s634
      %p638 = scmp.eq.s32.totalorder %s73, 0
      %p639 = por %p637, %p638
      %p640 = scmp.ne.s32.totalorder %s632, %s634
      %p641 = scmp.eq.s32.totalorder %s78, 1
      %p642 = por %p640, %p641
      %p643 = scmp.ne.s32.totalorder %s634, %s635
      %p644 = scmp.eq.s32.totalorder %s78, 0
      %p645 = por %p643, %p644
      %p646 = scmp.ne.s32.totalorder %s634, %s635
      %p647 = scmp.eq.s32.totalorder %s79, 1
      %p648 = por %p646, %p647
      %p650 = scmp.ne.s32.totalorder %s635, %s649
      %p651 = scmp.eq.s32.totalorder %s79, 0
      %p652 = por %p650, %p651
      %s654 = sadd.s32 %s653, 1
      %p657 = scmp.eq.s32.totalorder %s73, 1
      %p658 = scmp.ne.s32.totalorder %s653, %s655
      %p659 = scmp.eq.s32.totalorder %s73, 0
      %p660 = por %p658, %p659
      %p661 = scmp.ne.s32.totalorder %s653, %s655
      %p662 = scmp.eq.s32.totalorder %s78, 1
      %p663 = por %p661, %p662
      %p664 = scmp.ne.s32.totalorder %s655, %s656
      %p665 = scmp.eq.s32.totalorder %s78, 0
      %p666 = por %p664, %p665
      %p667 = scmp.ne.s32.totalorder %s655, %s656
      %p668 = scmp.eq.s32.totalorder %s79, 1
      %p669 = por %p667, %p668
      %p671 = scmp.ne.s32.totalorder %s656, %s670
      %p672 = scmp.eq.s32.totalorder %s79, 0
      %p673 = por %p671, %p672
      %s675 = sadd.s32 %s674, 1
      %p678 = scmp.eq.s32.totalorder %s73, 1
      %p679 = scmp.ne.s32.totalorder %s674, %s676
      %p680 = scmp.eq.s32.totalorder %s73, 0
      %p681 = por %p679, %p680
      %p682 = scmp.ne.s32.totalorder %s674, %s676
      %p683 = scmp.eq.s32.totalorder %s78, 1
      %p684 = por %p682, %p683
      %p685 = scmp.ne.s32.totalorder %s676, %s677
      %p686 = scmp.eq.s32.totalorder %s78, 0
      %p687 = por %p685, %p686
      %p688 = scmp.ne.s32.totalorder %s676, %s677
      %p689 = scmp.eq.s32.totalorder %s79, 1
      %p690 = por %p688, %p689
      %p692 = scmp.ne.s32.totalorder %s677, %s691
      %p693 = scmp.eq.s32.totalorder %s79, 0
      %p694 = por %p692, %p693
      %s696 = sadd.s32 %s695, 1
      %p699 = scmp.eq.s32.totalorder %s73, 1
      %p700 = scmp.ne.s32.totalorder %s695, %s697
      %p701 = scmp.eq.s32.totalorder %s73, 0
      %p702 = por %p700, %p701
      %p703 = scmp.ne.s32.totalorder %s695, %s697
      %p704 = scmp.eq.s32.totalorder %s78, 1
      %p705 = por %p703, %p704
      %p706 = scmp.ne.s32.totalorder %s697, %s698
      %p707 = scmp.eq.s32.totalorder %s78, 0
      %p708 = por %p706, %p707
      %p709 = scmp.ne.s32.totalorder %s697, %s698
      %p710 = scmp.eq.s32.totalorder %s79, 1
      %p711 = por %p709, %p710
      %p713 = scmp.ne.s32.totalorder %s698, %s712
      %p714 = scmp.eq.s32.totalorder %s79, 0
      %p715 = por %p713, %p714
      %s717 = sadd.s32 %s716, 1
      %p720 = scmp.eq.s32.totalorder %s73, 1
      %p721 = scmp.ne.s32.totalorder %s716, %s718
      %p722 = scmp.eq.s32.totalorder %s73, 0
      %p723 = por %p721, %p722
      %p724 = scmp.ne.s32.totalorder %s716, %s718
      %p725 = scmp.eq.s32.totalorder %s78, 1
      %p726 = por %p724, %p725
      %p727 = scmp.ne.s32.totalorder %s718, %s719
      %p728 = scmp.eq.s32.totalorder %s78, 0
      %p729 = por %p727, %p728
      %p730 = scmp.ne.s32.totalorder %s718, %s719
      %p731 = scmp.eq.s32.totalorder %s79, 1
      %p732 = por %p730, %p731
      %p734 = scmp.ne.s32.totalorder %s719, %s733
      %p735 = scmp.eq.s32.totalorder %s79, 0
      %p736 = por %p734, %p735
      %s737 = ssub.s32 %s73, %s80
      %p738 = scmp.eq.s32.totalorder %s737, 0
      %s740 = sadd.s32 %s739, 1
      %s741 = scalar_select %p738, %s739, %s740
      %p744 = pneg %p738
      %p745 = scmp.eq.s32.totalorder %s73, 1
      %p746 = por %p744, %p745
      %p747 = scmp.ne.s32.totalorder %s739, %s742
      %p748 = scmp.eq.s32.totalorder %s73, 0
      %p749 = por %p747, %p748
      %p750 = scmp.ne.s32.totalorder %s739, %s742
      %p751 = scmp.eq.s32.totalorder %s78, 1
      %p752 = por %p750, %p751
      %p753 = scmp.ne.s32.totalorder %s742, %s743
      %p754 = scmp.eq.s32.totalorder %s78, 0
      %p755 = por %p753, %p754
      %p756 = scmp.ne.s32.totalorder %s742, %s743
      %p757 = scmp.eq.s32.totalorder %s79, 1
      %p758 = por %p756, %p757
      %p760 = scmp.ne.s32.totalorder %s743, %s759
      %p761 = scmp.eq.s32.totalorder %s79, 0
      %p762 = por %p760, %p761
      %s763 = ssub.s32 %s73, %s80
      %p764 = scmp.eq.s32.totalorder %s763, 0
      %s766 = sadd.s32 %s765, 1
      %s767 = scalar_select %p764, %s765, %s766
      %p770 = pneg %p764
      %p771 = scmp.eq.s32.totalorder %s73, 1
      %p772 = por %p770, %p771
      %p773 = scmp.ne.s32.totalorder %s765, %s768
      %p774 = scmp.eq.s32.totalorder %s73, 0
      %p775 = por %p773, %p774
      %p776 = scmp.ne.s32.totalorder %s765, %s768
      %p777 = scmp.eq.s32.totalorder %s78, 1
      %p778 = por %p776, %p777
      %p779 = scmp.ne.s32.totalorder %s768, %s769
      %p780 = scmp.eq.s32.totalorder %s78, 0
      %p781 = por %p779, %p780
      %p782 = scmp.ne.s32.totalorder %s768, %s769
      %p783 = scmp.eq.s32.totalorder %s79, 1
      %p784 = por %p782, %p783
      %p786 = scmp.ne.s32.totalorder %s769, %s785
      %p787 = scmp.eq.s32.totalorder %s79, 0
      %p788 = por %p786, %p787
      %p789 = scmp.le.s32.totalorder 1, %s73
      %p790 = scmp.lt.s32.totalorder %s73, 3
      %p791 = pnand %p789, %p790
      %p792 = pneg %p791
      // Predicated region
      $region9: #{dan_forward.2} parent=5 // pred_check
        _
      $region10: #{dan_forward.2} parent=5 // pred_check_branch
        %794 = sbr.rel (%p791) target = $region12
      $region11: #{dan_forward.2} parent=5 // pred_region
        %s795 = ssub.s32 %s73, 1
        // Predicated region
        $region13: #{dan_forward.2} parent=11 // pred_check
          %p796 = pneg %p120
        $region14: #{dan_forward.2} parent=11 // pred_check_branch
          %798 = sbr.rel (%p796) target = $region16
        $region15: #{dan_forward.2} parent=11 // pred_region
          _
        $region16: #{dan_forward.2} parent=11 // pred_fallthru
          _
        // Predicated region
        $region17: #{dan_forward.2} parent=11 // pred_check
          %p799 = pneg %p141
        $region18: #{dan_forward.2} parent=11 // pred_check_branch
          %801 = sbr.rel (%p799) target = $region20
        $region19: #{dan_forward.2} parent=11 // pred_region
          _
        $region20: #{dan_forward.2} parent=11 // pred_fallthru
          _
        // Predicated region
        $region21: #{dan_forward.2} parent=11 // pred_check
          %p802 = pneg %p162
        $region22: #{dan_forward.2} parent=11 // pred_check_branch
          %804 = sbr.rel (%p802) target = $region24
        $region23: #{dan_forward.2} parent=11 // pred_region
          _
        $region24: #{dan_forward.2} parent=11 // pred_fallthru
          _
        // Predicated region
        $region25: #{dan_forward.2} parent=11 // pred_check
          %p805 = pneg %p183
        $region26: #{dan_forward.2} parent=11 // pred_check_branch
          %807 = sbr.rel (%p805) target = $region28
        $region27: #{dan_forward.2} parent=11 // pred_region
          _
        $region28: #{dan_forward.2} parent=11 // pred_fallthru
          _
        // Predicated region
        $region29: #{dan_forward.2} parent=11 // pred_check
          %p808 = pneg %p204
        $region30: #{dan_forward.2} parent=11 // pred_check_branch
          %810 = sbr.rel (%p808) target = $region32
        $region31: #{dan_forward.2} parent=11 // pred_region
          _
        $region32: #{dan_forward.2} parent=11 // pred_fallthru
          _
        // Predicated region
        $region33: #{dan_forward.2} parent=11 // pred_check
          %p811 = pneg %p225
        $region34: #{dan_forward.2} parent=11 // pred_check_branch
          %813 = sbr.rel (%p811) target = $region36
        $region35: #{dan_forward.2} parent=11 // pred_region
          _
        $region36: #{dan_forward.2} parent=11 // pred_fallthru
          _
        // Predicated region
        $region37: #{dan_forward.2} parent=11 // pred_check
          %p814 = pneg %p246
        $region38: #{dan_forward.2} parent=11 // pred_check_branch
          %816 = sbr.rel (%p814) target = $region40
        $region39: #{dan_forward.2} parent=11 // pred_region
          _
        $region40: #{dan_forward.2} parent=11 // pred_fallthru
          _
        // Predicated region
        $region41: #{dan_forward.2} parent=11 // pred_check
          %p817 = pneg %p267
        $region42: #{dan_forward.2} parent=11 // pred_check_branch
          %819 = sbr.rel (%p817) target = $region44
        $region43: #{dan_forward.2} parent=11 // pred_region
          _
        $region44: #{dan_forward.2} parent=11 // pred_fallthru
          _
        // Predicated region
        $region45: #{dan_forward.2} parent=11 // pred_check
          %p820 = pneg %p288
        $region46: #{dan_forward.2} parent=11 // pred_check_branch
          %822 = sbr.rel (%p820) target = $region48
        $region47: #{dan_forward.2} parent=11 // pred_region
          _
        $region48: #{dan_forward.2} parent=11 // pred_fallthru
          _
        // Predicated region
        $region49: #{dan_forward.2} parent=11 // pred_check
          %p823 = pneg %p309
        $region50: #{dan_forward.2} parent=11 // pred_check_branch
          %825 = sbr.rel (%p823) target = $region52
        $region51: #{dan_forward.2} parent=11 // pred_region
          _
        $region52: #{dan_forward.2} parent=11 // pred_fallthru
          _
        // Predicated region
        $region53: #{dan_forward.2} parent=11 // pred_check
          %p826 = pneg %p330
        $region54: #{dan_forward.2} parent=11 // pred_check_branch
          %828 = sbr.rel (%p826) target = $region56
        $region55: #{dan_forward.2} parent=11 // pred_region
          _
        $region56: #{dan_forward.2} parent=11 // pred_fallthru
          _
        // Predicated region
        $region57: #{dan_forward.2} parent=11 // pred_check
          %p829 = pneg %p351
        $region58: #{dan_forward.2} parent=11 // pred_check_branch
          %831 = sbr.rel (%p829) target = $region60
        $region59: #{dan_forward.2} parent=11 // pred_region
          _
        $region60: #{dan_forward.2} parent=11 // pred_fallthru
          _
        // Predicated region
        $region61: #{dan_forward.2} parent=11 // pred_check
          %p832 = pneg %p372
        $region62: #{dan_forward.2} parent=11 // pred_check_branch
          %834 = sbr.rel (%p832) target = $region64
        $region63: #{dan_forward.2} parent=11 // pred_region
          _
        $region64: #{dan_forward.2} parent=11 // pred_fallthru
          _
        // Predicated region
        $region65: #{dan_forward.2} parent=11 // pred_check
          %p835 = pneg %p393
        $region66: #{dan_forward.2} parent=11 // pred_check_branch
          %837 = sbr.rel (%p835) target = $region68
        $region67: #{dan_forward.2} parent=11 // pred_region
          _
        $region68: #{dan_forward.2} parent=11 // pred_fallthru
          _
        // Predicated region
        $region69: #{dan_forward.2} parent=11 // pred_check
          %p838 = pneg %p414
        $region70: #{dan_forward.2} parent=11 // pred_check_branch
          %840 = sbr.rel (%p838) target = $region72
        $region71: #{dan_forward.2} parent=11 // pred_region
          _
        $region72: #{dan_forward.2} parent=11 // pred_fallthru
          _
        // Predicated region
        $region73: #{dan_forward.2} parent=11 // pred_check
          %p841 = pneg %p435
        $region74: #{dan_forward.2} parent=11 // pred_check_branch
          %843 = sbr.rel (%p841) target = $region76
        $region75: #{dan_forward.2} parent=11 // pred_region
          _
        $region76: #{dan_forward.2} parent=11 // pred_fallthru
          _
        // Predicated region
        $region77: #{dan_forward.2} parent=11 // pred_check
          %p844 = pneg %p456
        $region78: #{dan_forward.2} parent=11 // pred_check_branch
          %846 = sbr.rel (%p844) target = $region80
        $region79: #{dan_forward.2} parent=11 // pred_region
          _
        $region80: #{dan_forward.2} parent=11 // pred_fallthru
          _
        // Predicated region
        $region81: #{dan_forward.2} parent=11 // pred_check
          %p847 = pneg %p477
        $region82: #{dan_forward.2} parent=11 // pred_check_branch
          %849 = sbr.rel (%p847) target = $region84
        $region83: #{dan_forward.2} parent=11 // pred_region
          _
        $region84: #{dan_forward.2} parent=11 // pred_fallthru
          _
        // Predicated region
        $region85: #{dan_forward.2} parent=11 // pred_check
          %p850 = pneg %p498
        $region86: #{dan_forward.2} parent=11 // pred_check_branch
          %852 = sbr.rel (%p850) target = $region88
        $region87: #{dan_forward.2} parent=11 // pred_region
          _
        $region88: #{dan_forward.2} parent=11 // pred_fallthru
          _
        // Predicated region
        $region89: #{dan_forward.2} parent=11 // pred_check
          %p853 = pneg %p519
        $region90: #{dan_forward.2} parent=11 // pred_check_branch
          %855 = sbr.rel (%p853) target = $region92
        $region91: #{dan_forward.2} parent=11 // pred_region
          _
        $region92: #{dan_forward.2} parent=11 // pred_fallthru
          _
        // Predicated region
        $region93: #{dan_forward.2} parent=11 // pred_check
          %p856 = pneg %p540
        $region94: #{dan_forward.2} parent=11 // pred_check_branch
          %858 = sbr.rel (%p856) target = $region96
        $region95: #{dan_forward.2} parent=11 // pred_region
          _
        $region96: #{dan_forward.2} parent=11 // pred_fallthru
          _
        // Predicated region
        $region97: #{dan_forward.2} parent=11 // pred_check
          %p859 = pneg %p561
        $region98: #{dan_forward.2} parent=11 // pred_check_branch
          %861 = sbr.rel (%p859) target = $region100
        $region99: #{dan_forward.2} parent=11 // pred_region
          _
        $region100: #{dan_forward.2} parent=11 // pred_fallthru
          _
        // Predicated region
        $region101: #{dan_forward.2} parent=11 // pred_check
          %p862 = pneg %p582
        $region102: #{dan_forward.2} parent=11 // pred_check_branch
          %864 = sbr.rel (%p862) target = $region104
        $region103: #{dan_forward.2} parent=11 // pred_region
          _
        $region104: #{dan_forward.2} parent=11 // pred_fallthru
          _
        // Predicated region
        $region105: #{dan_forward.2} parent=11 // pred_check
          %p865 = pneg %p603
        $region106: #{dan_forward.2} parent=11 // pred_check_branch
          %867 = sbr.rel (%p865) target = $region108
        $region107: #{dan_forward.2} parent=11 // pred_region
          _
        $region108: #{dan_forward.2} parent=11 // pred_fallthru
          _
        // Predicated region
        $region109: #{dan_forward.2} parent=11 // pred_check
          %p868 = pneg %p624
        $region110: #{dan_forward.2} parent=11 // pred_check_branch
          %870 = sbr.rel (%p868) target = $region112
        $region111: #{dan_forward.2} parent=11 // pred_region
          %s872 = ssub.s32 24576, 24576
          %873 = vsyncadd [#allocation3], %s872
          %s874 = sshll.u32 [#allocation2], 4
          %s875 = int_to_ptr.vmem [resolvable:$true] %s874
          %880 = dma.hbm_to_vmem [thread:$0]  %s51, 24576, %s875, [#allocation3], 256, 256, 16
        $region112: #{dan_forward.2} parent=11 // pred_fallthru
          _
        // Predicated region
        $region113: #{dan_forward.2} parent=11 // pred_check
          %p881 = pneg %p645
        $region114: #{dan_forward.2} parent=11 // pred_check_branch
          %883 = sbr.rel (%p881) target = $region116
        $region115: #{dan_forward.2} parent=11 // pred_region
          _
        $region116: #{dan_forward.2} parent=11 // pred_fallthru
          _
        // Predicated region
        $region117: #{dan_forward.2} parent=11 // pred_check
          %p884 = pneg %p666
        $region118: #{dan_forward.2} parent=11 // pred_check_branch
          %886 = sbr.rel (%p884) target = $region120
        $region119: #{dan_forward.2} parent=11 // pred_region
          _
        $region120: #{dan_forward.2} parent=11 // pred_fallthru
          _
        // Predicated region
        $region121: #{dan_forward.2} parent=11 // pred_check
          %p887 = pneg %p687
        $region122: #{dan_forward.2} parent=11 // pred_check_branch
          %889 = sbr.rel (%p887) target = $region124
        $region123: #{dan_forward.2} parent=11 // pred_region
          _
        $region124: #{dan_forward.2} parent=11 // pred_fallthru
          _
        // Predicated region
        $region125: #{dan_forward.2} parent=11 // pred_check
          %p890 = pneg %p708
        $region126: #{dan_forward.2} parent=11 // pred_check_branch
          %892 = sbr.rel (%p890) target = $region128
        $region127: #{dan_forward.2} parent=11 // pred_region
          _
        $region128: #{dan_forward.2} parent=11 // pred_fallthru
          _
        // Predicated region
        $region129: #{dan_forward.2} parent=11 // pred_check
          %p893 = pneg %p729
        $region130: #{dan_forward.2} parent=11 // pred_check_branch
          %895 = sbr.rel (%p893) target = $region132
        $region131: #{dan_forward.2} parent=11 // pred_region
          _
        $region132: #{dan_forward.2} parent=11 // pred_fallthru
          _
      $region12: #{dan_forward.2} parent=5 // pred_fallthru
        _
      %p896 = scmp.lt.s32.totalorder %s73, 2
      // Predicated region
      $region133: #{dan_forward.2} parent=5 // pred_check
        %p897 = pneg %p896
      $region134: #{dan_forward.2} parent=5 // pred_check_branch
        %899 = sbr.rel (%p897) target = $region136
      $region135: #{dan_forward.2} parent=5 // pred_region
        // Predicated region
        $region137: #{dan_forward.2} parent=135 // pred_check
          %p900 = pneg %p93
        $region138: #{dan_forward.2} parent=135 // pred_check_branch
          %902 = sbr.rel (%p900) target = $region140
        $region139: #{dan_forward.2} parent=135 // pred_region
          %s903 = smul.u32 2, %s73
          %p904 = scmp.lt.s32.totalorder %s903, 3
          %s905 = scalar_select %p904, %s903, 3
          %s906 = smul.addr %s905, 7
          %s907 = smul.addr %s906, 8
          %s908 = scalar_lea.vmem %s1, %s907
          %s909 = smul.u32 2, %s73
        $region140: #{dan_forward.2} parent=135 // pred_fallthru
          _
      $region136: #{dan_forward.2} parent=5 // pred_fallthru
        _
      %p910 = scmp.le.s32.totalorder 1, %s73
      %p911 = scmp.lt.s32.totalorder %s73, 3
      %p912 = pnand %p910, %p911
      %p913 = pneg %p912
      // Predicated region
      $region141: #{dan_forward.2} parent=5 // pred_check
        _
      $region142: #{dan_forward.2} parent=5 // pred_check_branch
        %915 = sbr.rel (%p912) target = $region144
      $region143: #{dan_forward.2} parent=5 // pred_region
        %s916 = ssub.s32 %s73, 1
        // Predicated region
        $region145: #{dan_forward.2} parent=143 // pred_check
          %p917 = pneg %p624
        $region146: #{dan_forward.2} parent=143 // pred_check_branch
          %919 = sbr.rel (%p917) target = $region148
        $region147: #{dan_forward.2} parent=143 // pred_region
          %920 = dma.done [#allocation3], 24576
        $region148: #{dan_forward.2} parent=143 // pred_fallthru
          _
        %s921 = smul.u32 2, %s78
        %p922 = scmp.lt.s32.totalorder %s921, 3
        %s923 = scalar_select %p922, %s921, 3
        %s924 = smul.addr %s923, 7
        %s925 = smul.addr %s924, 8
        %s926 = scalar_lea.vmem %s1, %s925
        %p927 = pneg %p99
        %p928 = pneg %p96
        %p929 = pneg %p120
        %p930 = pneg %p117
        %p931 = pneg %p141
        %p932 = pneg %p138
        %p933 = pneg %p162
        %p934 = pneg %p159
        %p935 = pneg %p183
        %p936 = pneg %p180
        %p937 = pneg %p204
        %p938 = pneg %p201
        %p939 = pneg %p225
        %p940 = pneg %p222
        %p941 = pneg %p246
        %p942 = pneg %p243
        %p943 = pneg %p267
        %p944 = pneg %p264
        %p945 = pneg %p288
        %p946 = pneg %p285
        %p947 = pneg %p309
        %p948 = pneg %p306
        %p949 = pneg %p330
        %p950 = pneg %p327
        %p951 = pneg %p351
        %p952 = pneg %p348
        %p953 = pneg %p372
        %p954 = pneg %p369
        %p955 = pneg %p393
        %p956 = pneg %p390
        %p957 = pneg %p414
        %p958 = pneg %p411
        %p959 = pneg %p435
        %p960 = pneg %p432
        %p961 = pneg %p456
        %p962 = pneg %p453
        %p963 = pneg %p477
        %p964 = pneg %p474
        %p965 = pneg %p498
        %p966 = pneg %p495
        %p967 = pneg %p519
        %p968 = pneg %p516
        %p969 = pneg %p540
        %p970 = pneg %p537
        %p971 = pneg %p561
        %p972 = pneg %p558
        %p973 = pneg %p582
        %p974 = pneg %p579
        %p975 = pneg %p603
        %p976 = pneg %p600
        %p977 = pneg %p624
        %p978 = pneg %p621
        %p979 = pneg %p645
        %p980 = pneg %p642
        %p981 = pneg %p666
        %p982 = pneg %p663
        %p983 = pneg %p687
        %p984 = pneg %p684
        %p985 = pneg %p708
        %p986 = pneg %p705
        %p987 = pneg %p729
        %p988 = pneg %p726
        %p989 = pneg %p755
        %p990 = pneg %p752
        %p991 = scmp.lt.s32.totalorder %s78, 1
        %s992 = scalar_select %p991, %s78, 1
        %s993 = smul.addr %s992, 4
        %s994 = smul.addr %s993, 8
        %s995 = scalar_lea.vmem %s63, %s994
        %p996 = pneg %p781
        %p997 = pneg %p778
        %p998 = scmp.lt.s32.totalorder %s78, 1
        %s999 = scalar_select %p998, %s78, 1
        %s1000 = smul.addr %s999, 8
        %s1001 = smul.addr %s1000, 8
        %s1002 = scalar_lea.vmem %s65, %s1001
        %s1003 = smul.u32 2, %s78
        %p1004 = scmp.lt.s32.totalorder %s1003, 3
        %s1005 = scalar_select %p1004, %s1003, 3
        %s1006 = smul.addr %s1005, 7
        %s1007 = smul.addr %s1006, 8
        %s1008 = scalar_lea.vmem %s1, %s1007
        %s1009 = smul.u32 2, %s78
        %p1010 = scmp.lt.s32.totalorder %s78, 1
        %s1011 = scalar_select %p1010, %s78, 1
        %s1012 = smul.addr %s1011, 4
        %s1013 = smul.addr %s1012, 8
        %s1014 = scalar_lea.vmem %s63, %s1013
        %p1015 = scmp.lt.s32.totalorder %s78, 1
        %s1016 = scalar_select %p1015, %s78, 1
        %s1017 = smul.addr %s1016, 8
        %s1018 = smul.addr %s1017, 8
        %s1019 = scalar_lea.vmem %s65, %s1018
        %v1021 = vld [vmem:[%s1008] sm:$0xff]
        %v1022 = vld [vmem:[%s1008 + $0x8] sm:$0xff]
        %v1023 = vld [vmem:[%s1008 + $0x10] sm:$0xff]
        %v1024 = vld [vmem:[%s1008 + $0x18] sm:$0xff]
        %v1025 = vld [vmem:[%s1008 + $0x20] sm:$0xff]
        %v1026 = vld [vmem:[%s1008 + $0x28] sm:$0xff]
        %v1027 = vld [vmem:[%s1008 + $0x30] sm:$0x3f]
        %v1028 = vld [vmem:[%s1008 + $0x38] sm:$0xff]
        %v1029 = vld [vmem:[%s1008 + $0x40] sm:$0xff]
        %v1030 = vld [vmem:[%s1008 + $0x48] sm:$0xff]
        %v1031 = vld [vmem:[%s1008 + $0x50] sm:$0xff]
        %v1032 = vld [vmem:[%s1008 + $0x58] sm:$0xff]
        %v1033 = vld [vmem:[%s1008 + $0x60] sm:$0xff]
        %v1034 = vld [vmem:[%s1008 + $0x68] sm:$0x3f]
        %v1049 = vcombine.high %v1021, %v1021
        %v1051 = vunpack.c.l.s4 1983009808
        %v1052 = vunpack.c.0.s8 %v1051
        %v1053 = vlaneseq
        %v1054 = vshrl.u32 %v1053, 7
        %v1055 = vsub.s32 %v1052, %v1054
        %v1056 = vrot.slane %v1021, %v1055
        %v1058 = vunpack.c.l.s4 1983009808
        %v1059 = vunpack.c.0.s8 %v1058
        %v1060 = vlaneseq
        %v1061 = vshrl.u32 %v1060, 7
        %v1062 = vsub.s32 %v1059, %v1061
        %v1063 = vrot.slane %v1049, %v1062
        %v1064 = vcombine.high %v1056, %v1056
        %v1065 = vcombine.high %v1063, %v1063
        %v1066 = vcombine.high %v1022, %v1022
        %v1068 = vunpack.c.l.s4 1983009808
        %v1069 = vunpack.c.0.s8 %v1068
        %v1070 = vlaneseq
        %v1071 = vshrl.u32 %v1070, 7
        %v1072 = vsub.s32 %v1069, %v1071
        %v1073 = vrot.slane %v1022, %v1072
        %v1075 = vunpack.c.l.s4 1983009808
        %v1076 = vunpack.c.0.s8 %v1075
        %v1077 = vlaneseq
        %v1078 = vshrl.u32 %v1077, 7
        %v1079 = vsub.s32 %v1076, %v1078
        %v1080 = vrot.slane %v1066, %v1079
        %v1081 = vcombine.high %v1073, %v1073
        %v1082 = vcombine.high %v1080, %v1080
        %v1083 = vcombine.high %v1023, %v1023
        %v1085 = vunpack.c.l.s4 1983009808
        %v1086 = vunpack.c.0.s8 %v1085
        %v1087 = vlaneseq
        %v1088 = vshrl.u32 %v1087, 7
        %v1089 = vsub.s32 %v1086, %v1088
        %v1090 = vrot.slane %v1023, %v1089
        %v1092 = vunpack.c.l.s4 1983009808
        %v1093 = vunpack.c.0.s8 %v1092
        %v1094 = vlaneseq
        %v1095 = vshrl.u32 %v1094, 7
        %v1096 = vsub.s32 %v1093, %v1095
        %v1097 = vrot.slane %v1083, %v1096
        %v1098 = vcombine.high %v1090, %v1090
        %v1099 = vcombine.high %v1097, %v1097
        %v1100 = vcombine.high %v1024, %v1024
        %v1102 = vunpack.c.l.s4 1983009808
        %v1103 = vunpack.c.0.s8 %v1102
        %v1104 = vlaneseq
        %v1105 = vshrl.u32 %v1104, 7
        %v1106 = vsub.s32 %v1103, %v1105
        %v1107 = vrot.slane %v1024, %v1106
        %v1109 = vunpack.c.l.s4 1983009808
        %v1110 = vunpack.c.0.s8 %v1109
        %v1111 = vlaneseq
        %v1112 = vshrl.u32 %v1111, 7
        %v1113 = vsub.s32 %v1110, %v1112
        %v1114 = vrot.slane %v1100, %v1113
        %v1115 = vcombine.high %v1107, %v1107
        %v1116 = vcombine.high %v1114, %v1114
        %v1117 = vcombine.high %v1025, %v1025
        %v1119 = vunpack.c.l.s4 1983009808
        %v1120 = vunpack.c.0.s8 %v1119
        %v1121 = vlaneseq
        %v1122 = vshrl.u32 %v1121, 7
        %v1123 = vsub.s32 %v1120, %v1122
        %v1124 = vrot.slane %v1025, %v1123
        %v1126 = vunpack.c.l.s4 1983009808
        %v1127 = vunpack.c.0.s8 %v1126
        %v1128 = vlaneseq
        %v1129 = vshrl.u32 %v1128, 7
        %v1130 = vsub.s32 %v1127, %v1129
        %v1131 = vrot.slane %v1117, %v1130
        %v1132 = vcombine.high %v1124, %v1124
        %v1133 = vcombine.high %v1131, %v1131
        %v1134 = vcombine.high %v1026, %v1026
        %v1136 = vunpack.c.l.s4 1983009808
        %v1137 = vunpack.c.0.s8 %v1136
        %v1138 = vlaneseq
        %v1139 = vshrl.u32 %v1138, 7
        %v1140 = vsub.s32 %v1137, %v1139
        %v1141 = vrot.slane %v1026, %v1140
        %v1143 = vunpack.c.l.s4 1983009808
        %v1144 = vunpack.c.0.s8 %v1143
        %v1145 = vlaneseq
        %v1146 = vshrl.u32 %v1145, 7
        %v1147 = vsub.s32 %v1144, %v1146
        %v1148 = vrot.slane %v1134, %v1147
        %v1149 = vcombine.high %v1141, %v1141
        %v1150 = vcombine.high %v1148, %v1148
        %v1151 = vcombine.high %v1027, %v1027
        %v1153 = vunpack.c.l.s4 1983009808
        %v1154 = vunpack.c.0.s8 %v1153
        %v1155 = vlaneseq
        %v1156 = vshrl.u32 %v1155, 7
        %v1157 = vsub.s32 %v1154, %v1156
        %v1158 = vrot.slane %v1027, %v1157
        %v1160 = vunpack.c.l.s4 1983009808
        %v1161 = vunpack.c.0.s8 %v1160
        %v1162 = vlaneseq
        %v1163 = vshrl.u32 %v1162, 7
        %v1164 = vsub.s32 %v1161, %v1163
        %v1165 = vrot.slane %v1151, %v1164
        %v1166 = vcombine.high %v1158, %v1158
        %v1167 = vcombine.high %v1028, %v1028
        %v1169 = vunpack.c.l.s4 1983009808
        %v1170 = vunpack.c.0.s8 %v1169
        %v1171 = vlaneseq
        %v1172 = vshrl.u32 %v1171, 7
        %v1173 = vsub.s32 %v1170, %v1172
        %v1174 = vrot.slane %v1028, %v1173
        %v1176 = vunpack.c.l.s4 1983009808
        %v1177 = vunpack.c.0.s8 %v1176
        %v1178 = vlaneseq
        %v1179 = vshrl.u32 %v1178, 7
        %v1180 = vsub.s32 %v1177, %v1179
        %v1181 = vrot.slane %v1167, %v1180
        %v1182 = vcombine.high %v1174, %v1174
        %v1183 = vcombine.high %v1181, %v1181
        %v1184 = vcombine.high %v1029, %v1029
        %v1186 = vunpack.c.l.s4 1983009808
        %v1187 = vunpack.c.0.s8 %v1186
        %v1188 = vlaneseq
        %v1189 = vshrl.u32 %v1188, 7
        %v1190 = vsub.s32 %v1187, %v1189
        %v1191 = vrot.slane %v1029, %v1190
        %v1193 = vunpack.c.l.s4 1983009808
        %v1194 = vunpack.c.0.s8 %v1193
        %v1195 = vlaneseq
        %v1196 = vshrl.u32 %v1195, 7
        %v1197 = vsub.s32 %v1194, %v1196
        %v1198 = vrot.slane %v1184, %v1197
        %v1199 = vcombine.high %v1191, %v1191
        %v1200 = vcombine.high %v1198, %v1198
        %v1201 = vcombine.high %v1030, %v1030
        %v1203 = vunpack.c.l.s4 1983009808
        %v1204 = vunpack.c.0.s8 %v1203
        %v1205 = vlaneseq
        %v1206 = vshrl.u32 %v1205, 7
        %v1207 = vsub.s32 %v1204, %v1206
        %v1208 = vrot.slane %v1030, %v1207
        %v1210 = vunpack.c.l.s4 1983009808
        %v1211 = vunpack.c.0.s8 %v1210
        %v1212 = vlaneseq
        %v1213 = vshrl.u32 %v1212, 7
        %v1214 = vsub.s32 %v1211, %v1213
        %v1215 = vrot.slane %v1201, %v1214
        %v1216 = vcombine.high %v1208, %v1208
        %v1217 = vcombine.high %v1215, %v1215
        %v1218 = vcombine.high %v1031, %v1031
        %v1220 = vunpack.c.l.s4 1983009808
        %v1221 = vunpack.c.0.s8 %v1220
        %v1222 = vlaneseq
        %v1223 = vshrl.u32 %v1222, 7
        %v1224 = vsub.s32 %v1221, %v1223
        %v1225 = vrot.slane %v1031, %v1224
        %v1227 = vunpack.c.l.s4 1983009808
        %v1228 = vunpack.c.0.s8 %v1227
        %v1229 = vlaneseq
        %v1230 = vshrl.u32 %v1229, 7
        %v1231 = vsub.s32 %v1228, %v1230
        %v1232 = vrot.slane %v1218, %v1231
        %v1233 = vcombine.high %v1225, %v1225
        %v1234 = vcombine.high %v1232, %v1232
        %v1235 = vcombine.high %v1032, %v1032
        %v1237 = vunpack.c.l.s4 1983009808
        %v1238 = vunpack.c.0.s8 %v1237
        %v1239 = vlaneseq
        %v1240 = vshrl.u32 %v1239, 7
        %v1241 = vsub.s32 %v1238, %v1240
        %v1242 = vrot.slane %v1032, %v1241
        %v1244 = vunpack.c.l.s4 1983009808
        %v1245 = vunpack.c.0.s8 %v1244
        %v1246 = vlaneseq
        %v1247 = vshrl.u32 %v1246, 7
        %v1248 = vsub.s32 %v1245, %v1247
        %v1249 = vrot.slane %v1235, %v1248
        %v1250 = vcombine.high %v1242, %v1242
        %v1251 = vcombine.high %v1249, %v1249
        %v1252 = vcombine.high %v1033, %v1033
        %v1254 = vunpack.c.l.s4 1983009808
        %v1255 = vunpack.c.0.s8 %v1254
        %v1256 = vlaneseq
        %v1257 = vshrl.u32 %v1256, 7
        %v1258 = vsub.s32 %v1255, %v1257
        %v1259 = vrot.slane %v1033, %v1258
        %v1261 = vunpack.c.l.s4 1983009808
        %v1262 = vunpack.c.0.s8 %v1261
        %v1263 = vlaneseq
        %v1264 = vshrl.u32 %v1263, 7
        %v1265 = vsub.s32 %v1262, %v1264
        %v1266 = vrot.slane %v1252, %v1265
        %v1267 = vcombine.high %v1259, %v1259
        %v1268 = vcombine.high %v1266, %v1266
        %v1269 = vcombine.high %v1034, %v1034
        %v1271 = vunpack.c.l.s4 1983009808
        %v1272 = vunpack.c.0.s8 %v1271
        %v1273 = vlaneseq
        %v1274 = vshrl.u32 %v1273, 7
        %v1275 = vsub.s32 %v1272, %v1274
        %v1276 = vrot.slane %v1034, %v1275
        %v1278 = vunpack.c.l.s4 1983009808
        %v1279 = vunpack.c.0.s8 %v1278
        %v1280 = vlaneseq
        %v1281 = vshrl.u32 %v1280, 7
        %v1282 = vsub.s32 %v1279, %v1281
        %v1283 = vrot.slane %v1269, %v1282
        %v1284 = vcombine.high %v1276, %v1276
        %v1285 = vcombine.low %v1056, %v1064
        %v1286 = vcombine.low %v1063, %v1065
        %v1288 = vunpack.c.l.s4 1983009808
        %v1289 = vunpack.c.0.s8 %v1288
        %v1290 = vlaneseq
        %v1291 = vshrl.u32 %v1290, 7
        %v1292 = vsub.s32 %v1289, %v1291
        %v1293 = vrot.slane %v1285, %v1292
        %v1295 = vunpack.c.l.s4 1983009808
        %v1296 = vunpack.c.0.s8 %v1295
        %v1297 = vlaneseq
        %v1298 = vshrl.u32 %v1297, 7
        %v1299 = vsub.s32 %v1296, %v1298
        %v1300 = vrot.slane %v1286, %v1299
        %v1301 = vcombine.low %v1293, %v1300
        %v1302 = vcombine.low %v1073, %v1081
        %v1303 = vcombine.low %v1080, %v1082
        %v1305 = vunpack.c.l.s4 1983009808
        %v1306 = vunpack.c.0.s8 %v1305
        %v1307 = vlaneseq
        %v1308 = vshrl.u32 %v1307, 7
        %v1309 = vsub.s32 %v1306, %v1308
        %v1310 = vrot.slane %v1302, %v1309
        %v1312 = vunpack.c.l.s4 1983009808
        %v1313 = vunpack.c.0.s8 %v1312
        %v1314 = vlaneseq
        %v1315 = vshrl.u32 %v1314, 7
        %v1316 = vsub.s32 %v1313, %v1315
        %v1317 = vrot.slane %v1303, %v1316
        %v1318 = vcombine.low %v1310, %v1317
        %v1319 = vcombine.low %v1090, %v1098
        %v1320 = vcombine.low %v1097, %v1099
        %v1322 = vunpack.c.l.s4 1983009808
        %v1323 = vunpack.c.0.s8 %v1322
        %v1324 = vlaneseq
        %v1325 = vshrl.u32 %v1324, 7
        %v1326 = vsub.s32 %v1323, %v1325
        %v1327 = vrot.slane %v1319, %v1326
        %v1329 = vunpack.c.l.s4 1983009808
        %v1330 = vunpack.c.0.s8 %v1329
        %v1331 = vlaneseq
        %v1332 = vshrl.u32 %v1331, 7
        %v1333 = vsub.s32 %v1330, %v1332
        %v1334 = vrot.slane %v1320, %v1333
        %v1335 = vcombine.low %v1327, %v1334
        %v1336 = vcombine.low %v1107, %v1115
        %v1337 = vcombine.low %v1114, %v1116
        %v1339 = vunpack.c.l.s4 1983009808
        %v1340 = vunpack.c.0.s8 %v1339
        %v1341 = vlaneseq
        %v1342 = vshrl.u32 %v1341, 7
        %v1343 = vsub.s32 %v1340, %v1342
        %v1344 = vrot.slane %v1336, %v1343
        %v1346 = vunpack.c.l.s4 1983009808
        %v1347 = vunpack.c.0.s8 %v1346
        %v1348 = vlaneseq
        %v1349 = vshrl.u32 %v1348, 7
        %v1350 = vsub.s32 %v1347, %v1349
        %v1351 = vrot.slane %v1337, %v1350
        %v1352 = vcombine.low %v1344, %v1351
        %v1353 = vcombine.low %v1124, %v1132
        %v1354 = vcombine.low %v1131, %v1133
        %v1356 = vunpack.c.l.s4 1983009808
        %v1357 = vunpack.c.0.s8 %v1356
        %v1358 = vlaneseq
        %v1359 = vshrl.u32 %v1358, 7
        %v1360 = vsub.s32 %v1357, %v1359
        %v1361 = vrot.slane %v1353, %v1360
        %v1363 = vunpack.c.l.s4 1983009808
        %v1364 = vunpack.c.0.s8 %v1363
        %v1365 = vlaneseq
        %v1366 = vshrl.u32 %v1365, 7
        %v1367 = vsub.s32 %v1364, %v1366
        %v1368 = vrot.slane %v1354, %v1367
        %v1369 = vcombine.low %v1361, %v1368
        %v1370 = vcombine.low %v1141, %v1149
        %v1371 = vcombine.low %v1148, %v1150
        %v1373 = vunpack.c.l.s4 1983009808
        %v1374 = vunpack.c.0.s8 %v1373
        %v1375 = vlaneseq
        %v1376 = vshrl.u32 %v1375, 7
        %v1377 = vsub.s32 %v1374, %v1376
        %v1378 = vrot.slane %v1370, %v1377
        %v1380 = vunpack.c.l.s4 1983009808
        %v1381 = vunpack.c.0.s8 %v1380
        %v1382 = vlaneseq
        %v1383 = vshrl.u32 %v1382, 7
        %v1384 = vsub.s32 %v1381, %v1383
        %v1385 = vrot.slane %v1371, %v1384
        %v1386 = vcombine.low %v1378, %v1385
        %v1387 = vcombine.low %v1158, %v1166
        %v1388 = vcombine.low %v1165, %v1174
        %v1390 = vunpack.c.l.s4 1983009808
        %v1391 = vunpack.c.0.s8 %v1390
        %v1392 = vlaneseq
        %v1393 = vshrl.u32 %v1392, 7
        %v1394 = vsub.s32 %v1391, %v1393
        %v1395 = vrot.slane %v1387, %v1394
        %v1397 = vunpack.c.l.s4 1983009808
        %v1398 = vunpack.c.0.s8 %v1397
        %v1399 = vlaneseq
        %v1400 = vshrl.u32 %v1399, 7
        %v1401 = vsub.s32 %v1398, %v1400
        %v1402 = vrot.slane %v1388, %v1401
        %v1403 = vcombine.low %v1395, %v1402
        %v1404 = vcombine.low %v1182, %v1181
        %v1405 = vcombine.low %v1183, %v1191
        %v1407 = vunpack.c.l.s4 1983009808
        %v1408 = vunpack.c.0.s8 %v1407
        %v1409 = vlaneseq
        %v1410 = vshrl.u32 %v1409, 7
        %v1411 = vsub.s32 %v1408, %v1410
        %v1412 = vrot.slane %v1404, %v1411
        %v1414 = vunpack.c.l.s4 1983009808
        %v1415 = vunpack.c.0.s8 %v1414
        %v1416 = vlaneseq
        %v1417 = vshrl.u32 %v1416, 7
        %v1418 = vsub.s32 %v1415, %v1417
        %v1419 = vrot.slane %v1405, %v1418
        %v1420 = vcombine.low %v1412, %v1419
        %v1421 = vcombine.low %v1199, %v1198
        %v1422 = vcombine.low %v1200, %v1208
        %v1424 = vunpack.c.l.s4 1983009808
        %v1425 = vunpack.c.0.s8 %v1424
        %v1426 = vlaneseq
        %v1427 = vshrl.u32 %v1426, 7
        %v1428 = vsub.s32 %v1425, %v1427
        %v1429 = vrot.slane %v1421, %v1428
        %v1431 = vunpack.c.l.s4 1983009808
        %v1432 = vunpack.c.0.s8 %v1431
        %v1433 = vlaneseq
        %v1434 = vshrl.u32 %v1433, 7
        %v1435 = vsub.s32 %v1432, %v1434
        %v1436 = vrot.slane %v1422, %v1435
        %v1437 = vcombine.low %v1429, %v1436
        %v1438 = vcombine.low %v1216, %v1215
        %v1439 = vcombine.low %v1217, %v1225
        %v1441 = vunpack.c.l.s4 1983009808
        %v1442 = vunpack.c.0.s8 %v1441
        %v1443 = vlaneseq
        %v1444 = vshrl.u32 %v1443, 7
        %v1445 = vsub.s32 %v1442, %v1444
        %v1446 = vrot.slane %v1438, %v1445
        %v1448 = vunpack.c.l.s4 1983009808
        %v1449 = vunpack.c.0.s8 %v1448
        %v1450 = vlaneseq
        %v1451 = vshrl.u32 %v1450, 7
        %v1452 = vsub.s32 %v1449, %v1451
        %v1453 = vrot.slane %v1439, %v1452
        %v1454 = vcombine.low %v1446, %v1453
        %v1455 = vcombine.low %v1233, %v1232
        %v1456 = vcombine.low %v1234, %v1242
        %v1458 = vunpack.c.l.s4 1983009808
        %v1459 = vunpack.c.0.s8 %v1458
        %v1460 = vlaneseq
        %v1461 = vshrl.u32 %v1460, 7
        %v1462 = vsub.s32 %v1459, %v1461
        %v1463 = vrot.slane %v1455, %v1462
        %v1465 = vunpack.c.l.s4 1983009808
        %v1466 = vunpack.c.0.s8 %v1465
        %v1467 = vlaneseq
        %v1468 = vshrl.u32 %v1467, 7
        %v1469 = vsub.s32 %v1466, %v1468
        %v1470 = vrot.slane %v1456, %v1469
        %v1471 = vcombine.low %v1463, %v1470
        %v1472 = vcombine.low %v1250, %v1249
        %v1473 = vcombine.low %v1251, %v1259
        %v1475 = vunpack.c.l.s4 1983009808
        %v1476 = vunpack.c.0.s8 %v1475
        %v1477 = vlaneseq
        %v1478 = vshrl.u32 %v1477, 7
        %v1479 = vsub.s32 %v1476, %v1478
        %v1480 = vrot.slane %v1472, %v1479
        %v1482 = vunpack.c.l.s4 1983009808
        %v1483 = vunpack.c.0.s8 %v1482
        %v1484 = vlaneseq
        %v1485 = vshrl.u32 %v1484, 7
        %v1486 = vsub.s32 %v1483, %v1485
        %v1487 = vrot.slane %v1473, %v1486
        %v1488 = vcombine.low %v1480, %v1487
        %v1489 = vcombine.low %v1267, %v1266
        %v1490 = vcombine.low %v1268, %v1276
        %v1492 = vunpack.c.l.s4 1983009808
        %v1493 = vunpack.c.0.s8 %v1492
        %v1494 = vlaneseq
        %v1495 = vshrl.u32 %v1494, 7
        %v1496 = vsub.s32 %v1493, %v1495
        %v1497 = vrot.slane %v1489, %v1496
        %v1499 = vunpack.c.l.s4 1983009808
        %v1500 = vunpack.c.0.s8 %v1499
        %v1501 = vlaneseq
        %v1502 = vshrl.u32 %v1501, 7
        %v1503 = vsub.s32 %v1500, %v1502
        %v1504 = vrot.slane %v1490, %v1503
        %v1505 = vcombine.low %v1497, %v1504
        %v1506 = vcombine.low %v1284, %v1283
        %v1508 = vunpack.c.l.s4 1983009808
        %v1509 = vunpack.c.0.s8 %v1508
        %v1510 = vlaneseq
        %v1511 = vshrl.u32 %v1510, 7
        %v1512 = vsub.s32 %v1509, %v1511
        %v1513 = vrot.slane %v1506, %v1512
        %vm1514 = vcmask 1046528
        %v1515 = vrot.slane %v1301, 1
        %v1516 = vrot.slane %v1318, 1
        %v1517 = vsel %vm1514, %v1515, %v1516
        %v1518 = vrot.slane %v1335, 1
        %v1519 = vsel %vm1514, %v1516, %v1518
        %v1520 = vrot.slane %v1352, 1
        %v1521 = vsel %vm1514, %v1518, %v1520
        %v1522 = vrot.slane %v1369, 1
        %v1523 = vsel %vm1514, %v1520, %v1522
        %v1524 = vrot.slane %v1386, 1
        %v1525 = vsel %vm1514, %v1522, %v1524
        %v1526 = vrot.slane %v1403, 1
        %v1527 = vsel %vm1514, %v1524, %v1526
        %v1528 = vrot.slane %v1420, 1
        %v1529 = vsel %vm1514, %v1526, %v1528
        %v1530 = vrot.slane %v1437, 1
        %v1531 = vsel %vm1514, %v1528, %v1530
        %v1532 = vrot.slane %v1454, 1
        %v1533 = vsel %vm1514, %v1530, %v1532
        %v1534 = vrot.slane %v1471, 1
        %v1535 = vsel %vm1514, %v1532, %v1534
        %v1536 = vrot.slane %v1488, 1
        %v1537 = vsel %vm1514, %v1534, %v1536
        %v1538 = vrot.slane %v1505, 1
        %v1539 = vsel %vm1514, %v1536, %v1538
        %v1540 = vrot.slane %v1513, 1
        %v1541 = vsel %vm1514, %v1538, %v1540
        %v1543 = vrot.slane %v1021, 5
        %vm1545 = vcmask 1042432
        %v1546 = vsel %vm1545, %v1540, %v1543
        %v1547 = vcombine.low %v1064, %v1063
        %v1548 = vcombine.low %v1065, %v1073
        %v1550 = vunpack.c.l.s4 1983009808
        %v1551 = vunpack.c.0.s8 %v1550
        %v1552 = vlaneseq
        %v1553 = vshrl.u32 %v1552, 7
        %v1554 = vsub.s32 %v1551, %v1553
        %v1555 = vrot.slane %v1547, %v1554
        %v1557 = vunpack.c.l.s4 1983009808
        %v1558 = vunpack.c.0.s8 %v1557
        %v1559 = vlaneseq
        %v1560 = vshrl.u32 %v1559, 7
        %v1561 = vsub.s32 %v1558, %v1560
        %v1562 = vrot.slane %v1548, %v1561
        %v1563 = vcombine.low %v1555, %v1562
        %v1564 = vcombine.low %v1081, %v1080
        %v1565 = vcombine.low %v1082, %v1090
        %v1567 = vunpack.c.l.s4 1983009808
        %v1568 = vunpack.c.0.s8 %v1567
        %v1569 = vlaneseq
        %v1570 = vshrl.u32 %v1569, 7
        %v1571 = vsub.s32 %v1568, %v1570
        %v1572 = vrot.slane %v1564, %v1571
        %v1574 = vunpack.c.l.s4 1983009808
        %v1575 = vunpack.c.0.s8 %v1574
        %v1576 = vlaneseq
        %v1577 = vshrl.u32 %v1576, 7
        %v1578 = vsub.s32 %v1575, %v1577
        %v1579 = vrot.slane %v1565, %v1578
        %v1580 = vcombine.low %v1572, %v1579
        %v1581 = vcombine.low %v1098, %v1097
        %v1582 = vcombine.low %v1099, %v1107
        %v1584 = vunpack.c.l.s4 1983009808
        %v1585 = vunpack.c.0.s8 %v1584
        %v1586 = vlaneseq
        %v1587 = vshrl.u32 %v1586, 7
        %v1588 = vsub.s32 %v1585, %v1587
        %v1589 = vrot.slane %v1581, %v1588
        %v1591 = vunpack.c.l.s4 1983009808
        %v1592 = vunpack.c.0.s8 %v1591
        %v1593 = vlaneseq
        %v1594 = vshrl.u32 %v1593, 7
        %v1595 = vsub.s32 %v1592, %v1594
        %v1596 = vrot.slane %v1582, %v1595
        %v1597 = vcombine.low %v1589, %v1596
        %v1598 = vcombine.low %v1115, %v1114
        %v1599 = vcombine.low %v1116, %v1124
        %v1601 = vunpack.c.l.s4 1983009808
        %v1602 = vunpack.c.0.s8 %v1601
        %v1603 = vlaneseq
        %v1604 = vshrl.u32 %v1603, 7
        %v1605 = vsub.s32 %v1602, %v1604
        %v1606 = vrot.slane %v1598, %v1605
        %v1608 = vunpack.c.l.s4 1983009808
        %v1609 = vunpack.c.0.s8 %v1608
        %v1610 = vlaneseq
        %v1611 = vshrl.u32 %v1610, 7
        %v1612 = vsub.s32 %v1609, %v1611
        %v1613 = vrot.slane %v1599, %v1612
        %v1614 = vcombine.low %v1606, %v1613
        %v1615 = vcombine.low %v1132, %v1131
        %v1616 = vcombine.low %v1133, %v1141
        %v1618 = vunpack.c.l.s4 1983009808
        %v1619 = vunpack.c.0.s8 %v1618
        %v1620 = vlaneseq
        %v1621 = vshrl.u32 %v1620, 7
        %v1622 = vsub.s32 %v1619, %v1621
        %v1623 = vrot.slane %v1615, %v1622
        %v1625 = vunpack.c.l.s4 1983009808
        %v1626 = vunpack.c.0.s8 %v1625
        %v1627 = vlaneseq
        %v1628 = vshrl.u32 %v1627, 7
        %v1629 = vsub.s32 %v1626, %v1628
        %v1630 = vrot.slane %v1616, %v1629
        %v1631 = vcombine.low %v1623, %v1630
        %v1632 = vcombine.low %v1149, %v1148
        %v1633 = vcombine.low %v1150, %v1158
        %v1635 = vunpack.c.l.s4 1983009808
        %v1636 = vunpack.c.0.s8 %v1635
        %v1637 = vlaneseq
        %v1638 = vshrl.u32 %v1637, 7
        %v1639 = vsub.s32 %v1636, %v1638
        %v1640 = vrot.slane %v1632, %v1639
        %v1642 = vunpack.c.l.s4 1983009808
        %v1643 = vunpack.c.0.s8 %v1642
        %v1644 = vlaneseq
        %v1645 = vshrl.u32 %v1644, 7
        %v1646 = vsub.s32 %v1643, %v1645
        %v1647 = vrot.slane %v1633, %v1646
        %v1648 = vcombine.low %v1640, %v1647
        %v1649 = vcombine.low %v1166, %v1165
        %v1650 = vcombine.low %v1174, %v1182
        %v1652 = vunpack.c.l.s4 1983009808
        %v1653 = vunpack.c.0.s8 %v1652
        %v1654 = vlaneseq
        %v1655 = vshrl.u32 %v1654, 7
        %v1656 = vsub.s32 %v1653, %v1655
        %v1657 = vrot.slane %v1649, %v1656
        %v1659 = vunpack.c.l.s4 1983009808
        %v1660 = vunpack.c.0.s8 %v1659
        %v1661 = vlaneseq
        %v1662 = vshrl.u32 %v1661, 7
        %v1663 = vsub.s32 %v1660, %v1662
        %v1664 = vrot.slane %v1650, %v1663
        %v1665 = vcombine.low %v1657, %v1664
        %v1666 = vcombine.low %v1181, %v1183
        %v1667 = vcombine.low %v1191, %v1199
        %v1669 = vunpack.c.l.s4 1983009808
        %v1670 = vunpack.c.0.s8 %v1669
        %v1671 = vlaneseq
        %v1672 = vshrl.u32 %v1671, 7
        %v1673 = vsub.s32 %v1670, %v1672
        %v1674 = vrot.slane %v1666, %v1673
        %v1676 = vunpack.c.l.s4 1983009808
        %v1677 = vunpack.c.0.s8 %v1676
        %v1678 = vlaneseq
        %v1679 = vshrl.u32 %v1678, 7
        %v1680 = vsub.s32 %v1677, %v1679
        %v1681 = vrot.slane %v1667, %v1680
        %v1682 = vcombine.low %v1674, %v1681
        %v1683 = vcombine.low %v1198, %v1200
        %v1684 = vcombine.low %v1208, %v1216
        %v1686 = vunpack.c.l.s4 1983009808
        %v1687 = vunpack.c.0.s8 %v1686
        %v1688 = vlaneseq
        %v1689 = vshrl.u32 %v1688, 7
        %v1690 = vsub.s32 %v1687, %v1689
        %v1691 = vrot.slane %v1683, %v1690
        %v1693 = vunpack.c.l.s4 1983009808
        %v1694 = vunpack.c.0.s8 %v1693
        %v1695 = vlaneseq
        %v1696 = vshrl.u32 %v1695, 7
        %v1697 = vsub.s32 %v1694, %v1696
        %v1698 = vrot.slane %v1684, %v1697
        %v1699 = vcombine.low %v1691, %v1698
        %v1700 = vcombine.low %v1215, %v1217
        %v1701 = vcombine.low %v1225, %v1233
        %v1703 = vunpack.c.l.s4 1983009808
        %v1704 = vunpack.c.0.s8 %v1703
        %v1705 = vlaneseq
        %v1706 = vshrl.u32 %v1705, 7
        %v1707 = vsub.s32 %v1704, %v1706
        %v1708 = vrot.slane %v1700, %v1707
        %v1710 = vunpack.c.l.s4 1983009808
        %v1711 = vunpack.c.0.s8 %v1710
        %v1712 = vlaneseq
        %v1713 = vshrl.u32 %v1712, 7
        %v1714 = vsub.s32 %v1711, %v1713
        %v1715 = vrot.slane %v1701, %v1714
        %v1716 = vcombine.low %v1708, %v1715
        %v1717 = vcombine.low %v1232, %v1234
        %v1718 = vcombine.low %v1242, %v1250
        %v1720 = vunpack.c.l.s4 1983009808
        %v1721 = vunpack.c.0.s8 %v1720
        %v1722 = vlaneseq
        %v1723 = vshrl.u32 %v1722, 7
        %v1724 = vsub.s32 %v1721, %v1723
        %v1725 = vrot.slane %v1717, %v1724
        %v1727 = vunpack.c.l.s4 1983009808
        %v1728 = vunpack.c.0.s8 %v1727
        %v1729 = vlaneseq
        %v1730 = vshrl.u32 %v1729, 7
        %v1731 = vsub.s32 %v1728, %v1730
        %v1732 = vrot.slane %v1718, %v1731
        %v1733 = vcombine.low %v1725, %v1732
        %v1734 = vcombine.low %v1249, %v1251
        %v1735 = vcombine.low %v1259, %v1267
        %v1737 = vunpack.c.l.s4 1983009808
        %v1738 = vunpack.c.0.s8 %v1737
        %v1739 = vlaneseq
        %v1740 = vshrl.u32 %v1739, 7
        %v1741 = vsub.s32 %v1738, %v1740
        %v1742 = vrot.slane %v1734, %v1741
        %v1744 = vunpack.c.l.s4 1983009808
        %v1745 = vunpack.c.0.s8 %v1744
        %v1746 = vlaneseq
        %v1747 = vshrl.u32 %v1746, 7
        %v1748 = vsub.s32 %v1745, %v1747
        %v1749 = vrot.slane %v1735, %v1748
        %v1750 = vcombine.low %v1742, %v1749
        %v1751 = vcombine.low %v1266, %v1268
        %v1752 = vcombine.low %v1276, %v1284
        %v1754 = vunpack.c.l.s4 1983009808
        %v1755 = vunpack.c.0.s8 %v1754
        %v1756 = vlaneseq
        %v1757 = vshrl.u32 %v1756, 7
        %v1758 = vsub.s32 %v1755, %v1757
        %v1759 = vrot.slane %v1751, %v1758
        %v1761 = vunpack.c.l.s4 1983009808
        %v1762 = vunpack.c.0.s8 %v1761
        %v1763 = vlaneseq
        %v1764 = vshrl.u32 %v1763, 7
        %v1765 = vsub.s32 %v1762, %v1764
        %v1766 = vrot.slane %v1752, %v1765
        %v1767 = vcombine.low %v1759, %v1766
        %v1769 = vunpack.c.l.s4 1983009808
        %v1770 = vunpack.c.0.s8 %v1769
        %v1771 = vlaneseq
        %v1772 = vshrl.u32 %v1771, 7
        %v1773 = vsub.s32 %v1770, %v1772
        %v1774 = vrot.slane %v1283, %v1773
        %v1776 = vcombine.low %v1056, %v1056
        %v1778 = vunpack.c.l.s4 1983009808
        %v1779 = vunpack.c.0.s8 %v1778
        %v1780 = vlaneseq
        %v1781 = vshrl.u32 %v1780, 7
        %v1782 = vsub.s32 %v1779, %v1781
        %v1783 = vrot.slane %v1776, %v1782
        %vm1785 = vcmask 1041408
        %v1786 = vsel %vm1785, %v1774, %v1783
        %v1787 = vrot.slane %v1563, 1
        %v1788 = vrot.slane %v1580, 1
        %v1789 = vsel %vm1514, %v1787, %v1788
        %v1790 = vrot.slane %v1597, 1
        %v1791 = vsel %vm1514, %v1788, %v1790
        %v1792 = vrot.slane %v1614, 1
        %v1793 = vsel %vm1514, %v1790, %v1792
        %v1794 = vrot.slane %v1631, 1
        %v1795 = vsel %vm1514, %v1792, %v1794
        %v1796 = vrot.slane %v1648, 1
        %v1797 = vsel %vm1514, %v1794, %v1796
        %v1798 = vrot.slane %v1665, 1
        %v1799 = vsel %vm1514, %v1796, %v1798
        %v1800 = vrot.slane %v1682, 1
        %v1801 = vsel %vm1514, %v1798, %v1800
        %v1802 = vrot.slane %v1699, 1
        %v1803 = vsel %vm1514, %v1800, %v1802
        %v1804 = vrot.slane %v1716, 1
        %v1805 = vsel %vm1514, %v1802, %v1804
        %v1806 = vrot.slane %v1733, 1
        %v1807 = vsel %vm1514, %v1804, %v1806
        %v1808 = vrot.slane %v1750, 1
        %v1809 = vsel %vm1514, %v1806, %v1808
        %v1810 = vrot.slane %v1767, 1
        %v1811 = vsel %vm1514, %v1808, %v1810
        %v1812 = vrot.slane %v1774, 1
        %v1813 = vsel %vm1514, %v1810, %v1812
        %v1815 = vrot.slane %v1293, 7
        %vm1817 = vcmask 1040384
        %v1818 = vsel %vm1817, %v1812, %v1815
        %v1819 = vcombine.low %v1300, %v1310
        %v1820 = vcombine.low %v1317, %v1327
        %v1821 = vcombine.low %v1334, %v1344
        %v1822 = vcombine.low %v1351, %v1361
        %v1823 = vcombine.low %v1368, %v1378
        %v1824 = vcombine.low %v1385, %v1395
        %v1825 = vcombine.low %v1402, %v1412
        %v1826 = vcombine.low %v1419, %v1429
        %v1827 = vcombine.low %v1436, %v1446
        %v1828 = vcombine.low %v1453, %v1463
        %v1829 = vcombine.low %v1470, %v1480
        %v1830 = vcombine.low %v1487, %v1497
        %v1831 = vcombine.low %v1504, %v1513
        %v1832 = vrot.slane %v1819, 1
        %v1833 = vrot.slane %v1820, 1
        %v1834 = vsel %vm1514, %v1832, %v1833
        %v1835 = vrot.slane %v1821, 1
        %v1836 = vsel %vm1514, %v1833, %v1835
        %v1837 = vrot.slane %v1822, 1
        %v1838 = vsel %vm1514, %v1835, %v1837
        %v1839 = vrot.slane %v1823, 1
        %v1840 = vsel %vm1514, %v1837, %v1839
        %v1841 = vrot.slane %v1824, 1
        %v1842 = vsel %vm1514, %v1839, %v1841
        %v1843 = vrot.slane %v1825, 1
        %v1844 = vsel %vm1514, %v1841, %v1843
        %v1845 = vrot.slane %v1826, 1
        %v1846 = vsel %vm1514, %v1843, %v1845
        %v1847 = vrot.slane %v1827, 1
        %v1848 = vsel %vm1514, %v1845, %v1847
        %v1849 = vrot.slane %v1828, 1
        %v1850 = vsel %vm1514, %v1847, %v1849
        %v1851 = vrot.slane %v1829, 1
        %v1852 = vsel %vm1514, %v1849, %v1851
        %v1853 = vrot.slane %v1830, 1
        %v1854 = vsel %vm1514, %v1851, %v1853
        %v1855 = vrot.slane %v1831, 1
        %v1856 = vsel %vm1514, %v1853, %v1855
        %v1859 = vunpack.c.l.s4 1983009808
        %v1860 = vunpack.c.0.s8 %v1859
        %v1861 = vlaneseq
        %v1862 = vshrl.u32 %v1861, 7
        %v1863 = vsub.s32 %v1860, %v1862
        %v1864 = vrot.slane %v1063, %v1863
        %v1865 = vcombine.low %v1293, %v1864
        %v1866 = vrot.slane %v1865, 1
        %v1868 = vsel %vm1514, %v1855, %v1866
        %v1869 = vcombine.low %v1562, %v1572
        %v1870 = vcombine.low %v1579, %v1589
        %v1871 = vcombine.low %v1596, %v1606
        %v1872 = vcombine.low %v1613, %v1623
        %v1873 = vcombine.low %v1630, %v1640
        %v1874 = vcombine.low %v1647, %v1657
        %v1875 = vcombine.low %v1664, %v1674
        %v1876 = vcombine.low %v1681, %v1691
        %v1877 = vcombine.low %v1698, %v1708
        %v1878 = vcombine.low %v1715, %v1725
        %v1879 = vcombine.low %v1732, %v1742
        %v1880 = vcombine.low %v1749, %v1759
        %v1881 = vcombine.low %v1766, %v1774
        %v1883 = vcombine.low %v1783, %v1783
        %vm1885 = vcmask 1045504
        %v1886 = vsel %vm1885, %v1881, %v1883
        %1902 = vrot.lane.b32.xlu0 %v1517, 2
        %v1903 = vpop.permute.xlu0 %1902
        %1904 = vrot.lane.b32.xlu0 %v1519, 2
        %v1905 = vpop.permute.xlu0 %1904
        %1906 = vrot.lane.b32.xlu0 %v1521, 2
        %v1907 = vpop.permute.xlu0 %1906
        %1908 = vrot.lane.b32.xlu0 %v1523, 2
        %v1909 = vpop.permute.xlu0 %1908
        %1910 = vrot.lane.b32.xlu0 %v1525, 2
        %v1911 = vpop.permute.xlu0 %1910
        %1912 = vrot.lane.b32.xlu0 %v1527, 2
        %v1913 = vpop.permute.xlu0 %1912
        %1914 = vrot.lane.b32.xlu0 %v1529, 2
        %v1915 = vpop.permute.xlu0 %1914
        %1916 = vrot.lane.b32.xlu0 %v1531, 2
        %v1917 = vpop.permute.xlu0 %1916
        %1918 = vrot.lane.b32.xlu0 %v1533, 2
        %v1919 = vpop.permute.xlu0 %1918
        %1920 = vrot.lane.b32.xlu0 %v1535, 2
        %v1921 = vpop.permute.xlu0 %1920
        %1922 = vrot.lane.b32.xlu0 %v1537, 2
        %v1923 = vpop.permute.xlu0 %1922
        %1924 = vrot.lane.b32.xlu0 %v1539, 2
        %v1925 = vpop.permute.xlu0 %1924
        %1926 = vrot.lane.b32.xlu0 %v1541, 2
        %v1927 = vpop.permute.xlu0 %1926
        %1928 = vrot.lane.b32.xlu0 %v1546, 2
        %v1929 = vpop.permute.xlu0 %1928
        %1945 = vrot.lane.b32.xlu0 %v1563, 4
        %v1946 = vpop.permute.xlu0 %1945
        %1947 = vrot.lane.b32.xlu0 %v1580, 4
        %v1948 = vpop.permute.xlu0 %1947
        %1949 = vrot.lane.b32.xlu0 %v1597, 4
        %v1950 = vpop.permute.xlu0 %1949
        %1951 = vrot.lane.b32.xlu0 %v1614, 4
        %v1952 = vpop.permute.xlu0 %1951
        %1953 = vrot.lane.b32.xlu0 %v1631, 4
        %v1954 = vpop.permute.xlu0 %1953
        %1955 = vrot.lane.b32.xlu0 %v1648, 4
        %v1956 = vpop.permute.xlu0 %1955
        %1957 = vrot.lane.b32.xlu0 %v1665, 4
        %v1958 = vpop.permute.xlu0 %1957
        %1959 = vrot.lane.b32.xlu0 %v1682, 4
        %v1960 = vpop.permute.xlu0 %1959
        %1961 = vrot.lane.b32.xlu0 %v1699, 4
        %v1962 = vpop.permute.xlu0 %1961
        %1963 = vrot.lane.b32.xlu0 %v1716, 4
        %v1964 = vpop.permute.xlu0 %1963
        %1965 = vrot.lane.b32.xlu0 %v1733, 4
        %v1966 = vpop.permute.xlu0 %1965
        %1967 = vrot.lane.b32.xlu0 %v1750, 4
        %v1968 = vpop.permute.xlu0 %1967
        %1969 = vrot.lane.b32.xlu0 %v1767, 4
        %v1970 = vpop.permute.xlu0 %1969
        %1971 = vrot.lane.b32.xlu0 %v1786, 4
        %v1972 = vpop.permute.xlu0 %1971
        %1988 = vrot.lane.b32.xlu0 %v1789, 6
        %v1989 = vpop.permute.xlu0 %1988
        %1990 = vrot.lane.b32.xlu0 %v1791, 6
        %v1991 = vpop.permute.xlu0 %1990
        %1992 = vrot.lane.b32.xlu0 %v1793, 6
        %v1993 = vpop.permute.xlu0 %1992
        %1994 = vrot.lane.b32.xlu0 %v1795, 6
        %v1995 = vpop.permute.xlu0 %1994
        %1996 = vrot.lane.b32.xlu0 %v1797, 6
        %v1997 = vpop.permute.xlu0 %1996
        %1998 = vrot.lane.b32.xlu0 %v1799, 6
        %v1999 = vpop.permute.xlu0 %1998
        %2000 = vrot.lane.b32.xlu0 %v1801, 6
        %v2001 = vpop.permute.xlu0 %2000
        %2002 = vrot.lane.b32.xlu0 %v1803, 6
        %v2003 = vpop.permute.xlu0 %2002
        %2004 = vrot.lane.b32.xlu0 %v1805, 6
        %v2005 = vpop.permute.xlu0 %2004
        %2006 = vrot.lane.b32.xlu0 %v1807, 6
        %v2007 = vpop.permute.xlu0 %2006
        %2008 = vrot.lane.b32.xlu0 %v1809, 6
        %v2009 = vpop.permute.xlu0 %2008
        %2010 = vrot.lane.b32.xlu0 %v1811, 6
        %v2011 = vpop.permute.xlu0 %2010
        %2012 = vrot.lane.b32.xlu0 %v1813, 6
        %v2013 = vpop.permute.xlu0 %2012
        %2014 = vrot.lane.b32.xlu0 %v1818, 6
        %v2015 = vpop.permute.xlu0 %2014
        %2030 = vrot.lane.b32.xlu0 %v1819, 8
        %v2031 = vpop.permute.xlu0 %2030
        %2032 = vrot.lane.b32.xlu0 %v1820, 8
        %v2033 = vpop.permute.xlu0 %2032
        %2034 = vrot.lane.b32.xlu0 %v1821, 8
        %v2035 = vpop.permute.xlu0 %2034
        %2036 = vrot.lane.b32.xlu0 %v1822, 8
        %v2037 = vpop.permute.xlu0 %2036
        %2038 = vrot.lane.b32.xlu0 %v1823, 8
        %v2039 = vpop.permute.xlu0 %2038
        %2040 = vrot.lane.b32.xlu0 %v1824, 8
        %v2041 = vpop.permute.xlu0 %2040
        %2042 = vrot.lane.b32.xlu0 %v1825, 8
        %v2043 = vpop.permute.xlu0 %2042
        %2044 = vrot.lane.b32.xlu0 %v1826, 8
        %v2045 = vpop.permute.xlu0 %2044
        %2046 = vrot.lane.b32.xlu0 %v1827, 8
        %v2047 = vpop.permute.xlu0 %2046
        %2048 = vrot.lane.b32.xlu0 %v1828, 8
        %v2049 = vpop.permute.xlu0 %2048
        %2050 = vrot.lane.b32.xlu0 %v1829, 8
        %v2051 = vpop.permute.xlu0 %2050
        %2052 = vrot.lane.b32.xlu0 %v1830, 8
        %v2053 = vpop.permute.xlu0 %2052
        %2054 = vrot.lane.b32.xlu0 %v1831, 8
        %v2055 = vpop.permute.xlu0 %2054
        %2056 = vrot.lane.b32.xlu0 %v1293, 8
        %v2057 = vpop.permute.xlu0 %2056
        %2073 = vrot.lane.b32.xlu0 %v1834, 10
        %v2074 = vpop.permute.xlu0 %2073
        %2075 = vrot.lane.b32.xlu0 %v1836, 10
        %v2076 = vpop.permute.xlu0 %2075
        %2077 = vrot.lane.b32.xlu0 %v1838, 10
        %v2078 = vpop.permute.xlu0 %2077
        %2079 = vrot.lane.b32.xlu0 %v1840, 10
        %v2080 = vpop.permute.xlu0 %2079
        %2081 = vrot.lane.b32.xlu0 %v1842, 10
        %v2082 = vpop.permute.xlu0 %2081
        %2083 = vrot.lane.b32.xlu0 %v1844, 10
        %v2084 = vpop.permute.xlu0 %2083
        %2085 = vrot.lane.b32.xlu0 %v1846, 10
        %v2086 = vpop.permute.xlu0 %2085
        %2087 = vrot.lane.b32.xlu0 %v1848, 10
        %v2088 = vpop.permute.xlu0 %2087
        %2089 = vrot.lane.b32.xlu0 %v1850, 10
        %v2090 = vpop.permute.xlu0 %2089
        %2091 = vrot.lane.b32.xlu0 %v1852, 10
        %v2092 = vpop.permute.xlu0 %2091
        %2093 = vrot.lane.b32.xlu0 %v1854, 10
        %v2094 = vpop.permute.xlu0 %2093
        %2095 = vrot.lane.b32.xlu0 %v1856, 10
        %v2096 = vpop.permute.xlu0 %2095
        %2097 = vrot.lane.b32.xlu0 %v1868, 10
        %v2098 = vpop.permute.xlu0 %2097
        %2099 = vrot.lane.b32.xlu0 %v1866, 10
        %v2100 = vpop.permute.xlu0 %2099
        %2116 = vrot.lane.b32.xlu0 %v1869, 12
        %v2117 = vpop.permute.xlu0 %2116
        %2118 = vrot.lane.b32.xlu0 %v1870, 12
        %v2119 = vpop.permute.xlu0 %2118
        %2120 = vrot.lane.b32.xlu0 %v1871, 12
        %v2121 = vpop.permute.xlu0 %2120
        %2122 = vrot.lane.b32.xlu0 %v1872, 12
        %v2123 = vpop.permute.xlu0 %2122
        %2124 = vrot.lane.b32.xlu0 %v1873, 12
        %v2125 = vpop.permute.xlu0 %2124
        %2126 = vrot.lane.b32.xlu0 %v1874, 12
        %v2127 = vpop.permute.xlu0 %2126
        %2128 = vrot.lane.b32.xlu0 %v1875, 12
        %v2129 = vpop.permute.xlu0 %2128
        %2130 = vrot.lane.b32.xlu0 %v1876, 12
        %v2131 = vpop.permute.xlu0 %2130
        %2132 = vrot.lane.b32.xlu0 %v1877, 12
        %v2133 = vpop.permute.xlu0 %2132
        %2134 = vrot.lane.b32.xlu0 %v1878, 12
        %v2135 = vpop.permute.xlu0 %2134
        %2136 = vrot.lane.b32.xlu0 %v1879, 12
        %v2137 = vpop.permute.xlu0 %2136
        %2138 = vrot.lane.b32.xlu0 %v1880, 12
        %v2139 = vpop.permute.xlu0 %2138
        %2140 = vrot.lane.b32.xlu0 %v1886, 12
        %v2141 = vpop.permute.xlu0 %2140
        %2142 = vrot.lane.b32.xlu0 %v1555, 12
        %v2143 = vpop.permute.xlu0 %2142
        %vm2158 = vcmask 15360
        %v2159 = vsel %vm2158, %v1301, %v1903
        %v2160 = vsel %vm2158, %v1318, %v1905
        %v2161 = vsel %vm2158, %v1335, %v1907
        %v2162 = vsel %vm2158, %v1352, %v1909
        %v2163 = vsel %vm2158, %v1369, %v1911
        %v2164 = vsel %vm2158, %v1386, %v1913
        %v2165 = vsel %vm2158, %v1403, %v1915
        %v2166 = vsel %vm2158, %v1420, %v1917
        %v2167 = vsel %vm2158, %v1437, %v1919
        %v2168 = vsel %vm2158, %v1454, %v1921
        %v2169 = vsel %vm2158, %v1471, %v1923
        %v2170 = vsel %vm2158, %v1488, %v1925
        %v2171 = vsel %vm2158, %v1505, %v1927
        %v2172 = vsel %vm2158, %v1513, %v1929
        %vm2173 = vcmask 31744
        %v2174 = vsel %vm2173, %v2159, %v1946
        %v2175 = vsel %vm2173, %v2160, %v1948
        %v2176 = vsel %vm2173, %v2161, %v1950
        %v2177 = vsel %vm2173, %v2162, %v1952
        %v2178 = vsel %vm2173, %v2163, %v1954
        %v2179 = vsel %vm2173, %v2164, %v1956
        %v2180 = vsel %vm2173, %v2165, %v1958
        %v2181 = vsel %vm2173, %v2166, %v1960
        %v2182 = vsel %vm2173, %v2167, %v1962
        %v2183 = vsel %vm2173, %v2168, %v1964
        %v2184 = vsel %vm2173, %v2169, %v1966
        %v2185 = vsel %vm2173, %v2170, %v1968
        %v2186 = vsel %vm2173, %v2171, %v1970
        %v2187 = vsel %vm2173, %v2172, %v1972
        %vm2188 = vcmask 48128
        %v2189 = vsel %vm2188, %v2174, %v1989
        %v2190 = vsel %vm2188, %v2175, %v1991
        %v2191 = vsel %vm2188, %v2176, %v1993
        %v2192 = vsel %vm2188, %v2177, %v1995
        %v2193 = vsel %vm2188, %v2178, %v1997
        %v2194 = vsel %vm2188, %v2179, %v1999
        %v2195 = vsel %vm2188, %v2180, %v2001
        %v2196 = vsel %vm2188, %v2181, %v2003
        %v2197 = vsel %vm2188, %v2182, %v2005
        %v2198 = vsel %vm2188, %v2183, %v2007
        %v2199 = vsel %vm2188, %v2184, %v2009
        %v2200 = vsel %vm2188, %v2185, %v2011
        %v2201 = vsel %vm2188, %v2186, %v2013
        %v2202 = vsel %vm2188, %v2187, %v2015
        %vm2203 = vcmask 64512
        %v2204 = vsel %vm2203, %v2189, %v2031
        %v2205 = vsel %vm2203, %v2190, %v2033
        %v2206 = vsel %vm2203, %v2191, %v2035
        %v2207 = vsel %vm2203, %v2192, %v2037
        %v2208 = vsel %vm2203, %v2193, %v2039
        %v2209 = vsel %vm2203, %v2194, %v2041
        %v2210 = vsel %vm2203, %v2195, %v2043
        %v2211 = vsel %vm2203, %v2196, %v2045
        %v2212 = vsel %vm2203, %v2197, %v2047
        %v2213 = vsel %vm2203, %v2198, %v2049
        %v2214 = vsel %vm2203, %v2199, %v2051
        %v2215 = vsel %vm2203, %v2200, %v2053
        %v2216 = vsel %vm2203, %v2201, %v2055
        %v2217 = vsel %vm2203, %v2202, %v2057
        %vm2218 = vcmask 80896
        %v2219 = vsel %vm2218, %v2204, %v2074
        %v2220 = vsel %vm2218, %v2205, %v2076
        %v2221 = vsel %vm2218, %v2206, %v2078
        %v2222 = vsel %vm2218, %v2207, %v2080
        %v2223 = vsel %vm2218, %v2208, %v2082
        %v2224 = vsel %vm2218, %v2209, %v2084
        %v2225 = vsel %vm2218, %v2210, %v2086
        %v2226 = vsel %vm2218, %v2211, %v2088
        %v2227 = vsel %vm2218, %v2212, %v2090
        %v2228 = vsel %vm2218, %v2213, %v2092
        %v2229 = vsel %vm2218, %v2214, %v2094
        %v2230 = vsel %vm2218, %v2215, %v2096
        %v2231 = vsel %vm2218, %v2216, %v2098
        %v2232 = vsel %vm2218, %v2217, %v2100
        %vm2233 = vcmask 97280
        %v2234 = vsel %vm2233, %v2219, %v2117
        %v2235 = vsel %vm2233, %v2220, %v2119
        %v2236 = vsel %vm2233, %v2221, %v2121
        %v2237 = vsel %vm2233, %v2222, %v2123
        %v2238 = vsel %vm2233, %v2223, %v2125
        %v2239 = vsel %vm2233, %v2224, %v2127
        %v2240 = vsel %vm2233, %v2225, %v2129
        %v2241 = vsel %vm2233, %v2226, %v2131
        %v2242 = vsel %vm2233, %v2227, %v2133
        %v2243 = vsel %vm2233, %v2228, %v2135
        %v2244 = vsel %vm2233, %v2229, %v2137
        %v2245 = vsel %vm2233, %v2230, %v2139
        %v2246 = vsel %vm2233, %v2231, %v2141
        %v2247 = vsel %vm2233, %v2232, %v2143
        %v2248 = vld [vmem:[%s3] sm:$0xf]
        %v2249 = vld [vmem:[%s3 + $0x4] sm:$0x7]
        %v2250 = vpack.c.bf16 %v2235, %v2234
        %v2251 = vpack.c.bf16 %v2237, %v2236
        %v2252 = vpack.c.bf16 %v2239, %v2238
        %v2253 = vpack.c.bf16 %v2241, %v2240
        %v2254 = vpack.c.bf16 %v2243, %v2242
        %v2255 = vpack.c.bf16 %v2245, %v2244
        %v2256 = vpack.c.bf16 %v2247, %v2246
        %v2257 = vld [vmem:[%s5] sm:$0x1]
        %v2259 = vlaneseq
        %v2260 = vshrl.u32 %v2259, 7
        %v2261 = vsub.s32 0, %v2260
        %v2262 = vrot.slane %v2257, %v2261
        %v2266 = vunpack.c.l.b16 %v2248
        %v2267 = vunpack.c.l.b16 %v2249
        %v2268 = vpack.c.b16 %v2267, %v2266
        %vm2269 = vcmask 113664
        %v2271 = vsel %vm2269, %v2250, 0
        %v2274 = vsel %vm2269, %v2251, 0
        %v2277 = vsel %vm2269, %v2252, 0
        %v2280 = vsel %vm2269, %v2253, 0
        %v2283 = vsel %vm2269, %v2254, 0
        %v2286 = vsel %vm2269, %v2255, 0
        %v2289 = vsel %vm2269, %v2256, 0
        %v2292 = vsel %vm1514, %v2268, 0
        %2294 = vmatprep.subr.bf16.mxu0 0
        %2295 = vmatpush1.bf16.msra.mxu0 %v2292
        %2296 = vmatprep.subr.bf16.mxu0 0
        %2297 = vmatpush1.bf16.msra.mxu0 0
        %2298 = vmatprep.subr.bf16.mxu0 0
        %2299 = vmatpush1.bf16.msra.mxu0 0
        %2300 = vmatprep.subr.bf16.mxu0 0
        %2301 = vmatpush1.bf16.msra.mxu0 0
        %2302 = vmatprep.subr.bf16.mxu0 0
        %2303 = vmatpush1.bf16.msra.mxu0 0
        %2304 = vmatprep.subr.bf16.mxu0 0
        %2305 = vmatpush1.bf16.msra.mxu0 0
        %2306 = vmatprep.subr.bf16.mxu0 0
        %2307 = vmatpush1.bf16.msra.mxu0 0
        %2308 = vmatprep.subr.bf16.mxu0 0
        %2309 = vmatpush1.bf16.msra.mxu0 0
        %2310 = vmatprep.subr.bf16.mxu0 0
        %2311 = vmatpush1.bf16.msra.mxu0 0
        %2312 = vmatprep.subr.bf16.mxu0 0
        %2313 = vmatpush1.bf16.msra.mxu0 0
        %2314 = vmatprep.subr.bf16.mxu0 0
        %2315 = vmatpush1.bf16.msra.mxu0 0
        %2316 = vmatprep.subr.bf16.mxu0 0
        %2317 = vmatpush1.bf16.msra.mxu0 0
        %2318 = vmatprep.subr.bf16.mxu0 0
        %2319 = vmatpush1.bf16.msra.mxu0 0
        %2320 = vmatprep.subr.bf16.mxu0 0
        %2321 = vmatpush1.bf16.msra.mxu0 0
        %2322 = vmatprep.subr.bf16.mxu0 0
        %2323 = vmatpush1.bf16.msra.mxu0 0
        %2324 = vmatprep.subr.bf16.mxu0 0
        %2325 = vmatpush1.bf16.msra.mxu0 0
        %2326 = vmatprep.mubr.bf16.mxu0 0
        %2327 = vmatmul.mubr.bf16.gmra.mrb[0].mxu0 %v2271
        %v2328 = vpop.f32.mrb[0].mxu0
        %v2329 = vadd.f32 %v2262, %v2328
        %v2330 = vpop.f32.mrb[0].mxu0
        %v2331 = vpop.f32.mrb[0].mxu0
        %v2332 = vadd.f32 %v2262, %v2331
        %v2333 = vpop.f32.mrb[0].mxu0
        %2334 = vmatprep.mubr.bf16.mxu0 0
        %2335 = vmatmul.mubr.bf16.gmra.mrb[0].mxu0 %v2274
        %v2336 = vpop.f32.mrb[0].mxu0
        %v2337 = vadd.f32 %v2262, %v2336
        %v2338 = vpop.f32.mrb[0].mxu0
        %v2339 = vpop.f32.mrb[0].mxu0
        %v2340 = vadd.f32 %v2262, %v2339
        %v2341 = vpop.f32.mrb[0].mxu0
        %2342 = vmatprep.mubr.bf16.mxu0 0
        %2343 = vmatmul.mubr.bf16.gmra.mrb[0].mxu0 %v2277
        %v2344 = vpop.f32.mrb[0].mxu0
        %v2345 = vadd.f32 %v2262, %v2344
        %v2346 = vpop.f32.mrb[0].mxu0
        %v2347 = vpop.f32.mrb[0].mxu0
        %v2348 = vadd.f32 %v2262, %v2347
        %v2349 = vpop.f32.mrb[0].mxu0
        %2350 = vmatprep.mubr.bf16.mxu0 0
        %2351 = vmatmul.mubr.bf16.gmra.mrb[0].mxu0 %v2280
        %v2352 = vpop.f32.mrb[0].mxu0
        %v2353 = vadd.f32 %v2262, %v2352
        %v2354 = vpop.f32.mrb[0].mxu0
        %v2355 = vpop.f32.mrb[0].mxu0
        %v2356 = vadd.f32 %v2262, %v2355
        %v2357 = vpop.f32.mrb[0].mxu0
        %2358 = vmatprep.mubr.bf16.mxu0 0
        %2359 = vmatmul.mubr.bf16.gmra.mrb[0].mxu0 %v2283
        %v2360 = vpop.f32.mrb[0].mxu0
        %v2361 = vadd.f32 %v2262, %v2360
        %v2362 = vpop.f32.mrb[0].mxu0
        %v2363 = vpop.f32.mrb[0].mxu0
        %v2364 = vadd.f32 %v2262, %v2363
        %v2365 = vpop.f32.mrb[0].mxu0
        %2366 = vmatprep.mubr.bf16.mxu0 0
        %2367 = vmatmul.mubr.bf16.gmra.mrb[0].mxu0 %v2286
        %v2368 = vpop.f32.mrb[0].mxu0
        %v2369 = vadd.f32 %v2262, %v2368
        %v2370 = vpop.f32.mrb[0].mxu0
        %v2371 = vpop.f32.mrb[0].mxu0
        %v2372 = vadd.f32 %v2262, %v2371
        %v2373 = vpop.f32.mrb[0].mxu0
        %2374 = vmatprep.mubr.bf16.mxu0 0
        %2375 = vmatmul.mubr.bf16.gmra.mrb[0].mxu0 %v2289
        %v2376 = vpop.f32.mrb[0].mxu0
        %v2377 = vadd.f32 %v2262, %v2376
        %v2378 = vpop.f32.mrb[0].mxu0
        %v2379 = vpop.f32.mrb[0].mxu0
        %v2380 = vpop.f32.mrb[0].mxu0
        %2381 = vdwg.mxu0
        %v2389 = vrot.slane %v2353, 6
        %v2390 = vrot.slane %v2356, 6
        %v2391 = vsel %vm1785, %v2389, %v2390
        %v2392 = vrot.slane %v2361, 6
        %v2393 = vsel %vm1785, %v2390, %v2392
        %v2394 = vrot.slane %v2364, 6
        %v2395 = vsel %vm1785, %v2392, %v2394
        %v2396 = vrot.slane %v2369, 6
        %v2397 = vsel %vm1785, %v2394, %v2396
        %v2398 = vrot.slane %v2372, 6
        %v2399 = vsel %vm1785, %v2396, %v2398
        %v2400 = vrot.slane %v2377, 6
        %v2401 = vsel %vm1785, %v2398, %v2400
        %vm2408 = vcmask 261120
        %v2409 = vsel %vm2408, %v2329, 0.0
        %v2410 = vsel %vm2408, %v2332, 0.0
        %v2411 = vadd.f32 %v2409, %v2410
        %v2412 = vsel %vm2408, %v2337, 0.0
        %v2413 = vadd.f32 %v2411, %v2412
        %v2414 = vsel %vm2408, %v2340, 0.0
        %v2415 = vadd.f32 %v2413, %v2414
        %v2416 = vsel %vm2408, %v2345, 0.0
        %v2417 = vadd.f32 %v2415, %v2416
        %v2418 = vsel %vm2408, %v2348, 0.0
        %v2419 = vadd.f32 %v2417, %v2418
        %v2420 = vsel %vm2408, %v2391, 0.0
        %v2421 = vadd.f32 %v2419, %v2420
        %v2422 = vsel %vm2408, %v2393, 0.0
        %v2423 = vadd.f32 %v2421, %v2422
        %v2424 = vsel %vm2408, %v2395, 0.0
        %v2425 = vadd.f32 %v2423, %v2424
        %v2426 = vsel %vm2408, %v2397, 0.0
        %v2427 = vadd.f32 %v2425, %v2426
        %v2428 = vsel %vm2408, %v2399, 0.0
        %v2429 = vadd.f32 %v2427, %v2428
        %v2430 = vsel %vm2408, %v2401, 0.0
        %v2431 = vadd.f32 %v2429, %v2430
        %v2432 = vrot.slane %v2431, 4
        %v2433 = vadd.f32 %v2431, %v2432
        %v2434 = vrot.slane %v2433, 2
        %v2435 = vadd.f32 %v2433, %v2434
        %v2436 = vrot.slane %v2435, 1
        %v2437 = vadd.f32 %v2435, %v2436
        %v2438 = vmul.f32 %v2437, 0.010416667
        %v2439 = vsub.f32 %v2329, %v2438
        %v2440 = vsub.f32 %v2332, %v2438
        %v2441 = vsub.f32 %v2337, %v2438
        %v2442 = vsub.f32 %v2340, %v2438
        %v2443 = vsub.f32 %v2345, %v2438
        %v2444 = vsub.f32 %v2348, %v2438
        %v2445 = vsub.f32 %v2391, %v2438
        %v2446 = vsub.f32 %v2393, %v2438
        %v2447 = vsub.f32 %v2395, %v2438
        %v2448 = vsub.f32 %v2397, %v2438
        %v2449 = vsub.f32 %v2399, %v2438
        %v2450 = vsub.f32 %v2401, %v2438
        %v2451 = vmul.f32 %v2439, %v2439
        %v2452 = vmul.f32 %v2440, %v2440
        %v2453 = vmul.f32 %v2441, %v2441
        %v2454 = vmul.f32 %v2442, %v2442
        %v2455 = vmul.f32 %v2443, %v2443
        %v2456 = vmul.f32 %v2444, %v2444
        %v2457 = vmul.f32 %v2445, %v2445
        %v2458 = vmul.f32 %v2446, %v2446
        %v2459 = vmul.f32 %v2447, %v2447
        %v2460 = vmul.f32 %v2448, %v2448
        %v2461 = vmul.f32 %v2449, %v2449
        %v2462 = vmul.f32 %v2450, %v2450
        %v2463 = vsel %vm2408, %v2451, 0.0
        %v2464 = vsel %vm2408, %v2452, 0.0
        %v2465 = vadd.f32 %v2463, %v2464
        %v2466 = vsel %vm2408, %v2453, 0.0
        %v2467 = vadd.f32 %v2465, %v2466
        %v2468 = vsel %vm2408, %v2454, 0.0
        %v2469 = vadd.f32 %v2467, %v2468
        %v2470 = vsel %vm2408, %v2455, 0.0
        %v2471 = vadd.f32 %v2469, %v2470
        %v2472 = vsel %vm2408, %v2456, 0.0
        %v2473 = vadd.f32 %v2471, %v2472
        %v2474 = vsel %vm2408, %v2457, 0.0
        %v2475 = vadd.f32 %v2473, %v2474
        %v2476 = vsel %vm2408, %v2458, 0.0
        %v2477 = vadd.f32 %v2475, %v2476
        %v2478 = vsel %vm2408, %v2459, 0.0
        %v2479 = vadd.f32 %v2477, %v2478
        %v2480 = vsel %vm2408, %v2460, 0.0
        %v2481 = vadd.f32 %v2479, %v2480
        %v2482 = vsel %vm2408, %v2461, 0.0
        %v2483 = vadd.f32 %v2481, %v2482
        %v2484 = vsel %vm2408, %v2462, 0.0
        %v2485 = vadd.f32 %v2483, %v2484
        %v2486 = vrot.slane %v2485, 4
        %v2487 = vadd.f32 %v2485, %v2486
        %v2488 = vrot.slane %v2487, 2
        %v2489 = vadd.f32 %v2487, %v2488
        %v2490 = vrot.slane %v2489, 1
        %v2491 = vadd.f32 %v2489, %v2490
        %v2492 = vmul.f32 %v2491, 0.010416667
        %v2493 = vsel %vm2408, %v2438, 0.0
        %v2494 = vsel %vm2408, %v2492, 0.0
        %v2495 = vadd.f32 %v2492, 1e-05
        %v2496 = vrsqrt.pop %v2495
        %v2497 = vmul.f32 %v2439, %v2496
        %v2498 = vmul.f32 %v2440, %v2496
        %v2499 = vmul.f32 %v2441, %v2496
        %v2500 = vmul.f32 %v2442, %v2496
        %v2501 = vmul.f32 %v2443, %v2496
        %v2502 = vmul.f32 %v2444, %v2496
        %v2503 = vmul.f32 %v2445, %v2496
        %v2504 = vmul.f32 %v2446, %v2496
        %v2505 = vmul.f32 %v2447, %v2496
        %v2506 = vmul.f32 %v2448, %v2496
        %v2507 = vmul.f32 %v2449, %v2496
        %v2508 = vmul.f32 %v2450, %v2496
        %v2509 = vld [vmem:[%s7] sm:$0x1]
        %v2511 = vlaneseq
        %v2512 = vshrl.u32 %v2511, 7
        %v2513 = vsub.s32 0, %v2512
        %v2514 = vrot.slane %v2509, %v2513
        %v2516 = vmul.f32 %v2497, %v2514
        %v2517 = vmul.f32 %v2498, %v2514
        %v2518 = vmul.f32 %v2499, %v2514
        %v2519 = vmul.f32 %v2500, %v2514
        %v2520 = vmul.f32 %v2501, %v2514
        %v2521 = vmul.f32 %v2502, %v2514
        %v2522 = vmul.f32 %v2503, %v2514
        %v2523 = vmul.f32 %v2504, %v2514
        %v2524 = vmul.f32 %v2505, %v2514
        %v2525 = vmul.f32 %v2506, %v2514
        %v2526 = vmul.f32 %v2507, %v2514
        %v2527 = vmul.f32 %v2508, %v2514
        %v2528 = vld [vmem:[%s9] sm:$0x1]
        %v2530 = vlaneseq
        %v2531 = vshrl.u32 %v2530, 7
        %v2532 = vsub.s32 0, %v2531
        %v2533 = vrot.slane %v2528, %v2532
        %v2535 = vadd.f32 %v2516, %v2533
        %v2536 = vadd.f32 %v2517, %v2533
        %v2537 = vadd.f32 %v2518, %v2533
        %v2538 = vadd.f32 %v2519, %v2533
        %v2539 = vadd.f32 %v2520, %v2533
        %v2540 = vadd.f32 %v2521, %v2533
        %v2541 = vadd.f32 %v2522, %v2533
        %v2542 = vadd.f32 %v2523, %v2533
        %v2543 = vadd.f32 %v2524, %v2533
        %v2544 = vadd.f32 %v2525, %v2533
        %v2545 = vadd.f32 %v2526, %v2533
        %v2546 = vadd.f32 %v2527, %v2533
        %v2547 = vmax.f32 %v2535, 0.0
        %v2548 = vmax.f32 %v2536, 0.0
        %v2549 = vmax.f32 %v2537, 0.0
        %v2550 = vmax.f32 %v2538, 0.0
        %v2551 = vmax.f32 %v2539, 0.0
        %v2552 = vmax.f32 %v2540, 0.0
        %v2553 = vmax.f32 %v2541, 0.0
        %v2554 = vmax.f32 %v2542, 0.0
        %v2555 = vmax.f32 %v2543, 0.0
        %v2556 = vmax.f32 %v2544, 0.0
        %v2557 = vmax.f32 %v2545, 0.0
        %v2558 = vmax.f32 %v2546, 0.0
        %v2571 = vcombine.high %v2547, %v2547
        %v2573 = vunpack.c.l.s4 1983009808
        %v2574 = vunpack.c.0.s8 %v2573
        %v2575 = vlaneseq
        %v2576 = vshrl.u32 %v2575, 7
        %v2577 = vsub.s32 %v2574, %v2576
        %v2578 = vrot.slane %v2547, %v2577
        %v2580 = vunpack.c.l.s4 1983009808
        %v2581 = vunpack.c.0.s8 %v2580
        %v2582 = vlaneseq
        %v2583 = vshrl.u32 %v2582, 7
        %v2584 = vsub.s32 %v2581, %v2583
        %v2585 = vrot.slane %v2571, %v2584
        %v2586 = vcombine.high %v2578, %v2578
        %v2587 = vcombine.high %v2585, %v2585
        %v2588 = vcombine.high %v2548, %v2548
        %v2590 = vunpack.c.l.s4 1983009808
        %v2591 = vunpack.c.0.s8 %v2590
        %v2592 = vlaneseq
        %v2593 = vshrl.u32 %v2592, 7
        %v2594 = vsub.s32 %v2591, %v2593
        %v2595 = vrot.slane %v2548, %v2594
        %v2597 = vunpack.c.l.s4 1983009808
        %v2598 = vunpack.c.0.s8 %v2597
        %v2599 = vlaneseq
        %v2600 = vshrl.u32 %v2599, 7
        %v2601 = vsub.s32 %v2598, %v2600
        %v2602 = vrot.slane %v2588, %v2601
        %v2603 = vcombine.high %v2595, %v2595
        %v2604 = vcombine.high %v2602, %v2602
        %v2605 = vcombine.high %v2549, %v2549
        %v2607 = vunpack.c.l.s4 1983009808
        %v2608 = vunpack.c.0.s8 %v2607
        %v2609 = vlaneseq
        %v2610 = vshrl.u32 %v2609, 7
        %v2611 = vsub.s32 %v2608, %v2610
        %v2612 = vrot.slane %v2549, %v2611
        %v2614 = vunpack.c.l.s4 1983009808
        %v2615 = vunpack.c.0.s8 %v2614
        %v2616 = vlaneseq
        %v2617 = vshrl.u32 %v2616, 7
        %v2618 = vsub.s32 %v2615, %v2617
        %v2619 = vrot.slane %v2605, %v2618
        %v2620 = vcombine.high %v2612, %v2612
        %v2621 = vcombine.high %v2619, %v2619
        %v2622 = vcombine.high %v2550, %v2550
        %v2624 = vunpack.c.l.s4 1983009808
        %v2625 = vunpack.c.0.s8 %v2624
        %v2626 = vlaneseq
        %v2627 = vshrl.u32 %v2626, 7
        %v2628 = vsub.s32 %v2625, %v2627
        %v2629 = vrot.slane %v2550, %v2628
        %v2631 = vunpack.c.l.s4 1983009808
        %v2632 = vunpack.c.0.s8 %v2631
        %v2633 = vlaneseq
        %v2634 = vshrl.u32 %v2633, 7
        %v2635 = vsub.s32 %v2632, %v2634
        %v2636 = vrot.slane %v2622, %v2635
        %v2637 = vcombine.high %v2629, %v2629
        %v2638 = vcombine.high %v2636, %v2636
        %v2639 = vcombine.high %v2551, %v2551
        %v2641 = vunpack.c.l.s4 1983009808
        %v2642 = vunpack.c.0.s8 %v2641
        %v2643 = vlaneseq
        %v2644 = vshrl.u32 %v2643, 7
        %v2645 = vsub.s32 %v2642, %v2644
        %v2646 = vrot.slane %v2551, %v2645
        %v2648 = vunpack.c.l.s4 1983009808
        %v2649 = vunpack.c.0.s8 %v2648
        %v2650 = vlaneseq
        %v2651 = vshrl.u32 %v2650, 7
        %v2652 = vsub.s32 %v2649, %v2651
        %v2653 = vrot.slane %v2639, %v2652
        %v2654 = vcombine.high %v2646, %v2646
        %v2655 = vcombine.high %v2653, %v2653
        %v2656 = vcombine.high %v2552, %v2552
        %v2658 = vunpack.c.l.s4 1983009808
        %v2659 = vunpack.c.0.s8 %v2658
        %v2660 = vlaneseq
        %v2661 = vshrl.u32 %v2660, 7
        %v2662 = vsub.s32 %v2659, %v2661
        %v2663 = vrot.slane %v2552, %v2662
        %v2665 = vunpack.c.l.s4 1983009808
        %v2666 = vunpack.c.0.s8 %v2665
        %v2667 = vlaneseq
        %v2668 = vshrl.u32 %v2667, 7
        %v2669 = vsub.s32 %v2666, %v2668
        %v2670 = vrot.slane %v2656, %v2669
        %v2671 = vcombine.high %v2663, %v2663
        %v2672 = vcombine.high %v2670, %v2670
        %v2673 = vcombine.high %v2553, %v2553
        %v2675 = vunpack.c.l.s4 1983009808
        %v2676 = vunpack.c.0.s8 %v2675
        %v2677 = vlaneseq
        %v2678 = vshrl.u32 %v2677, 7
        %v2679 = vsub.s32 %v2676, %v2678
        %v2680 = vrot.slane %v2553, %v2679
        %v2682 = vunpack.c.l.s4 1983009808
        %v2683 = vunpack.c.0.s8 %v2682
        %v2684 = vlaneseq
        %v2685 = vshrl.u32 %v2684, 7
        %v2686 = vsub.s32 %v2683, %v2685
        %v2687 = vrot.slane %v2673, %v2686
        %v2688 = vcombine.high %v2680, %v2680
        %v2689 = vcombine.high %v2687, %v2687
        %v2690 = vcombine.high %v2554, %v2554
        %v2692 = vunpack.c.l.s4 1983009808
        %v2693 = vunpack.c.0.s8 %v2692
        %v2694 = vlaneseq
        %v2695 = vshrl.u32 %v2694, 7
        %v2696 = vsub.s32 %v2693, %v2695
        %v2697 = vrot.slane %v2554, %v2696
        %v2699 = vunpack.c.l.s4 1983009808
        %v2700 = vunpack.c.0.s8 %v2699
        %v2701 = vlaneseq
        %v2702 = vshrl.u32 %v2701, 7
        %v2703 = vsub.s32 %v2700, %v2702
        %v2704 = vrot.slane %v2690, %v2703
        %v2705 = vcombine.high %v2697, %v2697
        %v2706 = vcombine.high %v2704, %v2704
        %v2707 = vcombine.high %v2555, %v2555
        %v2709 = vunpack.c.l.s4 1983009808
        %v2710 = vunpack.c.0.s8 %v2709
        %v2711 = vlaneseq
        %v2712 = vshrl.u32 %v2711, 7
        %v2713 = vsub.s32 %v2710, %v2712
        %v2714 = vrot.slane %v2555, %v2713
        %v2716 = vunpack.c.l.s4 1983009808
        %v2717 = vunpack.c.0.s8 %v2716
        %v2718 = vlaneseq
        %v2719 = vshrl.u32 %v2718, 7
        %v2720 = vsub.s32 %v2717, %v2719
        %v2721 = vrot.slane %v2707, %v2720
        %v2722 = vcombine.high %v2714, %v2714
        %v2723 = vcombine.high %v2721, %v2721
        %v2724 = vcombine.high %v2556, %v2556
        %v2726 = vunpack.c.l.s4 1983009808
        %v2727 = vunpack.c.0.s8 %v2726
        %v2728 = vlaneseq
        %v2729 = vshrl.u32 %v2728, 7
        %v2730 = vsub.s32 %v2727, %v2729
        %v2731 = vrot.slane %v2556, %v2730
        %v2733 = vunpack.c.l.s4 1983009808
        %v2734 = vunpack.c.0.s8 %v2733
        %v2735 = vlaneseq
        %v2736 = vshrl.u32 %v2735, 7
        %v2737 = vsub.s32 %v2734, %v2736
        %v2738 = vrot.slane %v2724, %v2737
        %v2739 = vcombine.high %v2731, %v2731
        %v2740 = vcombine.high %v2738, %v2738
        %v2741 = vcombine.high %v2557, %v2557
        %v2743 = vunpack.c.l.s4 1983009808
        %v2744 = vunpack.c.0.s8 %v2743
        %v2745 = vlaneseq
        %v2746 = vshrl.u32 %v2745, 7
        %v2747 = vsub.s32 %v2744, %v2746
        %v2748 = vrot.slane %v2557, %v2747
        %v2750 = vunpack.c.l.s4 1983009808
        %v2751 = vunpack.c.0.s8 %v2750
        %v2752 = vlaneseq
        %v2753 = vshrl.u32 %v2752, 7
        %v2754 = vsub.s32 %v2751, %v2753
        %v2755 = vrot.slane %v2741, %v2754
        %v2756 = vcombine.high %v2748, %v2748
        %v2757 = vcombine.high %v2755, %v2755
        %v2758 = vcombine.high %v2558, %v2558
        %v2760 = vunpack.c.l.s4 1983009808
        %v2761 = vunpack.c.0.s8 %v2760
        %v2762 = vlaneseq
        %v2763 = vshrl.u32 %v2762, 7
        %v2764 = vsub.s32 %v2761, %v2763
        %v2765 = vrot.slane %v2558, %v2764
        %v2767 = vunpack.c.l.s4 1983009808
        %v2768 = vunpack.c.0.s8 %v2767
        %v2769 = vlaneseq
        %v2770 = vshrl.u32 %v2769, 7
        %v2771 = vsub.s32 %v2768, %v2770
        %v2772 = vrot.slane %v2758, %v2771
        %v2773 = vcombine.high %v2765, %v2765
        %v2774 = vcombine.high %v2772, %v2772
        %vm2823 = vcmask 254976
        %v2824 = vsel %vm2823, %v2578, -inf
        %v2825 = vrot.slane %v2824, 4
        %v2826 = vmax.f32 %v2824, %v2825
        %v2827 = vrot.slane %v2826, 2
        %v2828 = vmax.f32 %v2826, %v2827
        %v2829 = vrot.slane %v2828, 1
        %v2830 = vmax.f32 %v2828, %v2829
        %v2831 = vsel %vm2823, %v2586, -inf
        %v2832 = vrot.slane %v2831, 4
        %v2833 = vmax.f32 %v2831, %v2832
        %v2834 = vrot.slane %v2833, 2
        %v2835 = vmax.f32 %v2833, %v2834
        %v2836 = vrot.slane %v2835, 1
        %v2837 = vmax.f32 %v2835, %v2836
        %v2838 = vsel %vm2823, %v2585, -inf
        %v2839 = vrot.slane %v2838, 4
        %v2840 = vmax.f32 %v2838, %v2839
        %v2841 = vrot.slane %v2840, 2
        %v2842 = vmax.f32 %v2840, %v2841
        %v2843 = vrot.slane %v2842, 1
        %v2844 = vmax.f32 %v2842, %v2843
        %v2845 = vsel %vm2823, %v2587, -inf
        %v2846 = vrot.slane %v2845, 4
        %v2847 = vmax.f32 %v2845, %v2846
        %v2848 = vrot.slane %v2847, 2
        %v2849 = vmax.f32 %v2847, %v2848
        %v2850 = vrot.slane %v2849, 1
        %v2851 = vmax.f32 %v2849, %v2850
        %v2852 = vsel %vm2823, %v2595, -inf
        %v2853 = vrot.slane %v2852, 4
        %v2854 = vmax.f32 %v2852, %v2853
        %v2855 = vrot.slane %v2854, 2
        %v2856 = vmax.f32 %v2854, %v2855
        %v2857 = vrot.slane %v2856, 1
        %v2858 = vmax.f32 %v2856, %v2857
        %v2859 = vsel %vm2823, %v2603, -inf
        %v2860 = vrot.slane %v2859, 4
        %v2861 = vmax.f32 %v2859, %v2860
        %v2862 = vrot.slane %v2861, 2
        %v2863 = vmax.f32 %v2861, %v2862
        %v2864 = vrot.slane %v2863, 1
        %v2865 = vmax.f32 %v2863, %v2864
        %v2866 = vsel %vm2823, %v2602, -inf
        %v2867 = vrot.slane %v2866, 4
        %v2868 = vmax.f32 %v2866, %v2867
        %v2869 = vrot.slane %v2868, 2
        %v2870 = vmax.f32 %v2868, %v2869
        %v2871 = vrot.slane %v2870, 1
        %v2872 = vmax.f32 %v2870, %v2871
        %v2873 = vsel %vm2823, %v2604, -inf
        %v2874 = vrot.slane %v2873, 4
        %v2875 = vmax.f32 %v2873, %v2874
        %v2876 = vrot.slane %v2875, 2
        %v2877 = vmax.f32 %v2875, %v2876
        %v2878 = vrot.slane %v2877, 1
        %v2879 = vmax.f32 %v2877, %v2878
        %v2880 = vsel %vm2823, %v2612, -inf
        %v2881 = vrot.slane %v2880, 4
        %v2882 = vmax.f32 %v2880, %v2881
        %v2883 = vrot.slane %v2882, 2
        %v2884 = vmax.f32 %v2882, %v2883
        %v2885 = vrot.slane %v2884, 1
        %v2886 = vmax.f32 %v2884, %v2885
        %v2887 = vsel %vm2823, %v2620, -inf
        %v2888 = vrot.slane %v2887, 4
        %v2889 = vmax.f32 %v2887, %v2888
        %v2890 = vrot.slane %v2889, 2
        %v2891 = vmax.f32 %v2889, %v2890
        %v2892 = vrot.slane %v2891, 1
        %v2893 = vmax.f32 %v2891, %v2892
        %v2894 = vsel %vm2823, %v2619, -inf
        %v2895 = vrot.slane %v2894, 4
        %v2896 = vmax.f32 %v2894, %v2895
        %v2897 = vrot.slane %v2896, 2
        %v2898 = vmax.f32 %v2896, %v2897
        %v2899 = vrot.slane %v2898, 1
        %v2900 = vmax.f32 %v2898, %v2899
        %v2901 = vsel %vm2823, %v2621, -inf
        %v2902 = vrot.slane %v2901, 4
        %v2903 = vmax.f32 %v2901, %v2902
        %v2904 = vrot.slane %v2903, 2
        %v2905 = vmax.f32 %v2903, %v2904
        %v2906 = vrot.slane %v2905, 1
        %v2907 = vmax.f32 %v2905, %v2906
        %v2908 = vsel %vm2823, %v2629, -inf
        %v2909 = vrot.slane %v2908, 4
        %v2910 = vmax.f32 %v2908, %v2909
        %v2911 = vrot.slane %v2910, 2
        %v2912 = vmax.f32 %v2910, %v2911
        %v2913 = vrot.slane %v2912, 1
        %v2914 = vmax.f32 %v2912, %v2913
        %v2915 = vsel %vm2823, %v2637, -inf
        %v2916 = vrot.slane %v2915, 4
        %v2917 = vmax.f32 %v2915, %v2916
        %v2918 = vrot.slane %v2917, 2
        %v2919 = vmax.f32 %v2917, %v2918
        %v2920 = vrot.slane %v2919, 1
        %v2921 = vmax.f32 %v2919, %v2920
        %v2922 = vsel %vm2823, %v2636, -inf
        %v2923 = vrot.slane %v2922, 4
        %v2924 = vmax.f32 %v2922, %v2923
        %v2925 = vrot.slane %v2924, 2
        %v2926 = vmax.f32 %v2924, %v2925
        %v2927 = vrot.slane %v2926, 1
        %v2928 = vmax.f32 %v2926, %v2927
        %v2929 = vsel %vm2823, %v2638, -inf
        %v2930 = vrot.slane %v2929, 4
        %v2931 = vmax.f32 %v2929, %v2930
        %v2932 = vrot.slane %v2931, 2
        %v2933 = vmax.f32 %v2931, %v2932
        %v2934 = vrot.slane %v2933, 1
        %v2935 = vmax.f32 %v2933, %v2934
        %v2936 = vsel %vm2823, %v2646, -inf
        %v2937 = vrot.slane %v2936, 4
        %v2938 = vmax.f32 %v2936, %v2937
        %v2939 = vrot.slane %v2938, 2
        %v2940 = vmax.f32 %v2938, %v2939
        %v2941 = vrot.slane %v2940, 1
        %v2942 = vmax.f32 %v2940, %v2941
        %v2943 = vsel %vm2823, %v2654, -inf
        %v2944 = vrot.slane %v2943, 4
        %v2945 = vmax.f32 %v2943, %v2944
        %v2946 = vrot.slane %v2945, 2
        %v2947 = vmax.f32 %v2945, %v2946
        %v2948 = vrot.slane %v2947, 1
        %v2949 = vmax.f32 %v2947, %v2948
        %v2950 = vsel %vm2823, %v2653, -inf
        %v2951 = vrot.slane %v2950, 4
        %v2952 = vmax.f32 %v2950, %v2951
        %v2953 = vrot.slane %v2952, 2
        %v2954 = vmax.f32 %v2952, %v2953
        %v2955 = vrot.slane %v2954, 1
        %v2956 = vmax.f32 %v2954, %v2955
        %v2957 = vsel %vm2823, %v2655, -inf
        %v2958 = vrot.slane %v2957, 4
        %v2959 = vmax.f32 %v2957, %v2958
        %v2960 = vrot.slane %v2959, 2
        %v2961 = vmax.f32 %v2959, %v2960
        %v2962 = vrot.slane %v2961, 1
        %v2963 = vmax.f32 %v2961, %v2962
        %v2964 = vsel %vm2823, %v2663, -inf
        %v2965 = vrot.slane %v2964, 4
        %v2966 = vmax.f32 %v2964, %v2965
        %v2967 = vrot.slane %v2966, 2
        %v2968 = vmax.f32 %v2966, %v2967
        %v2969 = vrot.slane %v2968, 1
        %v2970 = vmax.f32 %v2968, %v2969
        %v2971 = vsel %vm2823, %v2671, -inf
        %v2972 = vrot.slane %v2971, 4
        %v2973 = vmax.f32 %v2971, %v2972
        %v2974 = vrot.slane %v2973, 2
        %v2975 = vmax.f32 %v2973, %v2974
        %v2976 = vrot.slane %v2975, 1
        %v2977 = vmax.f32 %v2975, %v2976
        %v2978 = vsel %vm2823, %v2670, -inf
        %v2979 = vrot.slane %v2978, 4
        %v2980 = vmax.f32 %v2978, %v2979
        %v2981 = vrot.slane %v2980, 2
        %v2982 = vmax.f32 %v2980, %v2981
        %v2983 = vrot.slane %v2982, 1
        %v2984 = vmax.f32 %v2982, %v2983
        %v2985 = vsel %vm2823, %v2672, -inf
        %v2986 = vrot.slane %v2985, 4
        %v2987 = vmax.f32 %v2985, %v2986
        %v2988 = vrot.slane %v2987, 2
        %v2989 = vmax.f32 %v2987, %v2988
        %v2990 = vrot.slane %v2989, 1
        %v2991 = vmax.f32 %v2989, %v2990
        %v2992 = vsel %vm2823, %v2680, -inf
        %v2993 = vrot.slane %v2992, 4
        %v2994 = vmax.f32 %v2992, %v2993
        %v2995 = vrot.slane %v2994, 2
        %v2996 = vmax.f32 %v2994, %v2995
        %v2997 = vrot.slane %v2996, 1
        %v2998 = vmax.f32 %v2996, %v2997
        %v2999 = vsel %vm2823, %v2688, -inf
        %v3000 = vrot.slane %v2999, 4
        %v3001 = vmax.f32 %v2999, %v3000
        %v3002 = vrot.slane %v3001, 2
        %v3003 = vmax.f32 %v3001, %v3002
        %v3004 = vrot.slane %v3003, 1
        %v3005 = vmax.f32 %v3003, %v3004
        %v3006 = vsel %vm2823, %v2687, -inf
        %v3007 = vrot.slane %v3006, 4
        %v3008 = vmax.f32 %v3006, %v3007
        %v3009 = vrot.slane %v3008, 2
        %v3010 = vmax.f32 %v3008, %v3009
        %v3011 = vrot.slane %v3010, 1
        %v3012 = vmax.f32 %v3010, %v3011
        %v3013 = vsel %vm2823, %v2689, -inf
        %v3014 = vrot.slane %v3013, 4
        %v3015 = vmax.f32 %v3013, %v3014
        %v3016 = vrot.slane %v3015, 2
        %v3017 = vmax.f32 %v3015, %v3016
        %v3018 = vrot.slane %v3017, 1
        %v3019 = vmax.f32 %v3017, %v3018
        %v3020 = vsel %vm2823, %v2697, -inf
        %v3021 = vrot.slane %v3020, 4
        %v3022 = vmax.f32 %v3020, %v3021
        %v3023 = vrot.slane %v3022, 2
        %v3024 = vmax.f32 %v3022, %v3023
        %v3025 = vrot.slane %v3024, 1
        %v3026 = vmax.f32 %v3024, %v3025
        %v3027 = vsel %vm2823, %v2705, -inf
        %v3028 = vrot.slane %v3027, 4
        %v3029 = vmax.f32 %v3027, %v3028
        %v3030 = vrot.slane %v3029, 2
        %v3031 = vmax.f32 %v3029, %v3030
        %v3032 = vrot.slane %v3031, 1
        %v3033 = vmax.f32 %v3031, %v3032
        %v3034 = vsel %vm2823, %v2704, -inf
        %v3035 = vrot.slane %v3034, 4
        %v3036 = vmax.f32 %v3034, %v3035
        %v3037 = vrot.slane %v3036, 2
        %v3038 = vmax.f32 %v3036, %v3037
        %v3039 = vrot.slane %v3038, 1
        %v3040 = vmax.f32 %v3038, %v3039
        %v3041 = vsel %vm2823, %v2706, -inf
        %v3042 = vrot.slane %v3041, 4
        %v3043 = vmax.f32 %v3041, %v3042
        %v3044 = vrot.slane %v3043, 2
        %v3045 = vmax.f32 %v3043, %v3044
        %v3046 = vrot.slane %v3045, 1
        %v3047 = vmax.f32 %v3045, %v3046
        %v3048 = vsel %vm2823, %v2714, -inf
        %v3049 = vrot.slane %v3048, 4
        %v3050 = vmax.f32 %v3048, %v3049
        %v3051 = vrot.slane %v3050, 2
        %v3052 = vmax.f32 %v3050, %v3051
        %v3053 = vrot.slane %v3052, 1
        %v3054 = vmax.f32 %v3052, %v3053
        %v3055 = vsel %vm2823, %v2722, -inf
        %v3056 = vrot.slane %v3055, 4
        %v3057 = vmax.f32 %v3055, %v3056
        %v3058 = vrot.slane %v3057, 2
        %v3059 = vmax.f32 %v3057, %v3058
        %v3060 = vrot.slane %v3059, 1
        %v3061 = vmax.f32 %v3059, %v3060
        %v3062 = vsel %vm2823, %v2721, -inf
        %v3063 = vrot.slane %v3062, 4
        %v3064 = vmax.f32 %v3062, %v3063
        %v3065 = vrot.slane %v3064, 2
        %v3066 = vmax.f32 %v3064, %v3065
        %v3067 = vrot.slane %v3066, 1
        %v3068 = vmax.f32 %v3066, %v3067
        %v3069 = vsel %vm2823, %v2723, -inf
        %v3070 = vrot.slane %v3069, 4
        %v3071 = vmax.f32 %v3069, %v3070
        %v3072 = vrot.slane %v3071, 2
        %v3073 = vmax.f32 %v3071, %v3072
        %v3074 = vrot.slane %v3073, 1
        %v3075 = vmax.f32 %v3073, %v3074
        %v3076 = vsel %vm2823, %v2731, -inf
        %v3077 = vrot.slane %v3076, 4
        %v3078 = vmax.f32 %v3076, %v3077
        %v3079 = vrot.slane %v3078, 2
        %v3080 = vmax.f32 %v3078, %v3079
        %v3081 = vrot.slane %v3080, 1
        %v3082 = vmax.f32 %v3080, %v3081
        %v3083 = vsel %vm2823, %v2739, -inf
        %v3084 = vrot.slane %v3083, 4
        %v3085 = vmax.f32 %v3083, %v3084
        %v3086 = vrot.slane %v3085, 2
        %v3087 = vmax.f32 %v3085, %v3086
        %v3088 = vrot.slane %v3087, 1
        %v3089 = vmax.f32 %v3087, %v3088
        %v3090 = vsel %vm2823, %v2738, -inf
        %v3091 = vrot.slane %v3090, 4
        %v3092 = vmax.f32 %v3090, %v3091
        %v3093 = vrot.slane %v3092, 2
        %v3094 = vmax.f32 %v3092, %v3093
        %v3095 = vrot.slane %v3094, 1
        %v3096 = vmax.f32 %v3094, %v3095
        %v3097 = vsel %vm2823, %v2740, -inf
        %v3098 = vrot.slane %v3097, 4
        %v3099 = vmax.f32 %v3097, %v3098
        %v3100 = vrot.slane %v3099, 2
        %v3101 = vmax.f32 %v3099, %v3100
        %v3102 = vrot.slane %v3101, 1
        %v3103 = vmax.f32 %v3101, %v3102
        %v3104 = vsel %vm2823, %v2748, -inf
        %v3105 = vrot.slane %v3104, 4
        %v3106 = vmax.f32 %v3104, %v3105
        %v3107 = vrot.slane %v3106, 2
        %v3108 = vmax.f32 %v3106, %v3107
        %v3109 = vrot.slane %v3108, 1
        %v3110 = vmax.f32 %v3108, %v3109
        %v3111 = vsel %vm2823, %v2756, -inf
        %v3112 = vrot.slane %v3111, 4
        %v3113 = vmax.f32 %v3111, %v3112
        %v3114 = vrot.slane %v3113, 2
        %v3115 = vmax.f32 %v3113, %v3114
        %v3116 = vrot.slane %v3115, 1
        %v3117 = vmax.f32 %v3115, %v3116
        %v3118 = vsel %vm2823, %v2755, -inf
        %v3119 = vrot.slane %v3118, 4
        %v3120 = vmax.f32 %v3118, %v3119
        %v3121 = vrot.slane %v3120, 2
        %v3122 = vmax.f32 %v3120, %v3121
        %v3123 = vrot.slane %v3122, 1
        %v3124 = vmax.f32 %v3122, %v3123
        %v3125 = vsel %vm2823, %v2757, -inf
        %v3126 = vrot.slane %v3125, 4
        %v3127 = vmax.f32 %v3125, %v3126
        %v3128 = vrot.slane %v3127, 2
        %v3129 = vmax.f32 %v3127, %v3128
        %v3130 = vrot.slane %v3129, 1
        %v3131 = vmax.f32 %v3129, %v3130
        %v3132 = vsel %vm2823, %v2765, -inf
        %v3133 = vrot.slane %v3132, 4
        %v3134 = vmax.f32 %v3132, %v3133
        %v3135 = vrot.slane %v3134, 2
        %v3136 = vmax.f32 %v3134, %v3135
        %v3137 = vrot.slane %v3136, 1
        %v3138 = vmax.f32 %v3136, %v3137
        %v3139 = vsel %vm2823, %v2773, -inf
        %v3140 = vrot.slane %v3139, 4
        %v3141 = vmax.f32 %v3139, %v3140
        %v3142 = vrot.slane %v3141, 2
        %v3143 = vmax.f32 %v3141, %v3142
        %v3144 = vrot.slane %v3143, 1
        %v3145 = vmax.f32 %v3143, %v3144
        %v3146 = vsel %vm2823, %v2772, -inf
        %v3147 = vrot.slane %v3146, 4
        %v3148 = vmax.f32 %v3146, %v3147
        %v3149 = vrot.slane %v3148, 2
        %v3150 = vmax.f32 %v3148, %v3149
        %v3151 = vrot.slane %v3150, 1
        %v3152 = vmax.f32 %v3150, %v3151
        %v3153 = vsel %vm2823, %v2774, -inf
        %v3154 = vrot.slane %v3153, 4
        %v3155 = vmax.f32 %v3153, %v3154
        %v3156 = vrot.slane %v3155, 2
        %v3157 = vmax.f32 %v3155, %v3156
        %v3158 = vrot.slane %v3157, 1
        %v3159 = vmax.f32 %v3157, %v3158
        %vm3207 = vcmask 1041409
        %v3208 = vsel %vm3207, %v2844, %v2837
        %vm3209 = vcmask 1042434
        %v3210 = vsel %vm3209, %v2851, %v3208
        %vm3211 = vcmask 1043459
        %v3212 = vsel %vm3211, %v2858, %v3210
        %vm3213 = vcmask 1044484
        %v3214 = vsel %vm3213, %v2865, %v3212
        %vm3215 = vcmask 1045509
        %v3216 = vsel %vm3215, %v2872, %v3214
        %vm3217 = vcmask 1046534
        %v3218 = vsel %vm3217, %v2879, %v3216
        %vm3219 = vcmask 1047559
        %v3220 = vsel %vm3219, %v2886, %v3218
        %v3221 = vsel %vm3207, %v2900, %v2893
        %v3222 = vsel %vm3209, %v2907, %v3221
        %v3223 = vsel %vm3211, %v2914, %v3222
        %v3224 = vsel %vm3213, %v2921, %v3223
        %v3225 = vsel %vm3215, %v2928, %v3224
        %v3226 = vsel %vm3217, %v2935, %v3225
        %v3227 = vsel %vm3219, %v2942, %v3226
        %v3228 = vsel %vm3207, %v2956, %v2949
        %v3229 = vsel %vm3209, %v2963, %v3228
        %v3230 = vsel %vm3211, %v2970, %v3229
        %v3231 = vsel %vm3213, %v2977, %v3230
        %v3232 = vsel %vm3215, %v2984, %v3231
        %v3233 = vsel %vm3217, %v2991, %v3232
        %v3234 = vsel %vm3219, %v2998, %v3233
        %v3235 = vsel %vm3207, %v3012, %v3005
        %v3236 = vsel %vm3209, %v3019, %v3235
        %v3237 = vsel %vm3211, %v3026, %v3236
        %v3238 = vsel %vm3213, %v3033, %v3237
        %v3239 = vsel %vm3215, %v3040, %v3238
        %v3240 = vsel %vm3217, %v3047, %v3239
        %v3241 = vsel %vm3219, %v3054, %v3240
        %v3242 = vsel %vm3207, %v3068, %v3061
        %v3243 = vsel %vm3209, %v3075, %v3242
        %v3244 = vsel %vm3211, %v3082, %v3243
        %v3245 = vsel %vm3213, %v3089, %v3244
        %v3246 = vsel %vm3215, %v3096, %v3245
        %v3247 = vsel %vm3217, %v3103, %v3246
        %v3248 = vsel %vm3219, %v3110, %v3247
        %v3249 = vsel %vm3207, %v3124, %v3117
        %v3250 = vsel %vm3209, %v3131, %v3249
        %v3251 = vsel %vm3211, %v3138, %v3250
        %v3252 = vsel %vm3213, %v3145, %v3251
        %v3253 = vsel %vm3215, %v3152, %v3252
        %v3254 = vsel %vm3217, %v3159, %v3253
        %v3256 = vsel %vm1514, %v3254, %v2830
        %v3257 = vsel %vm3207, %v2851, %v2844
        %v3258 = vsel %vm3209, %v2858, %v3257
        %v3259 = vsel %vm3211, %v2865, %v3258
        %v3260 = vsel %vm3213, %v2872, %v3259
        %v3261 = vsel %vm3215, %v2879, %v3260
        %v3262 = vsel %vm3217, %v2886, %v3261
        %v3263 = vsel %vm3219, %v2893, %v3262
        %v3264 = vsel %vm3207, %v2907, %v2900
        %v3265 = vsel %vm3209, %v2914, %v3264
        %v3266 = vsel %vm3211, %v2921, %v3265
        %v3267 = vsel %vm3213, %v2928, %v3266
        %v3268 = vsel %vm3215, %v2935, %v3267
        %v3269 = vsel %vm3217, %v2942, %v3268
        %v3270 = vsel %vm3219, %v2949, %v3269
        %v3271 = vsel %vm3207, %v2963, %v2956
        %v3272 = vsel %vm3209, %v2970, %v3271
        %v3273 = vsel %vm3211, %v2977, %v3272
        %v3274 = vsel %vm3213, %v2984, %v3273
        %v3275 = vsel %vm3215, %v2991, %v3274
        %v3276 = vsel %vm3217, %v2998, %v3275
        %v3277 = vsel %vm3219, %v3005, %v3276
        %v3278 = vsel %vm3207, %v3019, %v3012
        %v3279 = vsel %vm3209, %v3026, %v3278
        %v3280 = vsel %vm3211, %v3033, %v3279
        %v3281 = vsel %vm3213, %v3040, %v3280
        %v3282 = vsel %vm3215, %v3047, %v3281
        %v3283 = vsel %vm3217, %v3054, %v3282
        %v3284 = vsel %vm3219, %v3061, %v3283
        %v3285 = vsel %vm3207, %v3075, %v3068
        %v3286 = vsel %vm3209, %v3082, %v3285
        %v3287 = vsel %vm3211, %v3089, %v3286
        %v3288 = vsel %vm3213, %v3096, %v3287
        %v3289 = vsel %vm3215, %v3103, %v3288
        %v3290 = vsel %vm3217, %v3110, %v3289
        %v3291 = vsel %vm3219, %v3117, %v3290
        %v3292 = vsel %vm3207, %v3131, %v3124
        %v3293 = vsel %vm3209, %v3138, %v3292
        %v3294 = vsel %vm3211, %v3145, %v3293
        %v3295 = vsel %vm3213, %v3152, %v3294
        %v3296 = vsel %vm3215, %v3159, %v3295
        %v3299 = vsel %vm3219, %v2837, %v2830
        %v3301 = vsel %vm1885, %v3296, %v3299
        %v3302 = vsel %vm3207, %v2837, %v2830
        %v3303 = vsel %vm3209, %v2844, %v3302
        %v3304 = vsel %vm3211, %v2851, %v3303
        %v3305 = vsel %vm3213, %v2858, %v3304
        %v3306 = vsel %vm3215, %v2865, %v3305
        %v3307 = vsel %vm3217, %v2872, %v3306
        %v3308 = vsel %vm3219, %v2879, %v3307
        %v3309 = vsel %vm3207, %v2893, %v2886
        %v3310 = vsel %vm3209, %v2900, %v3309
        %v3311 = vsel %vm3211, %v2907, %v3310
        %v3312 = vsel %vm3213, %v2914, %v3311
        %v3313 = vsel %vm3215, %v2921, %v3312
        %v3314 = vsel %vm3217, %v2928, %v3313
        %v3315 = vsel %vm3219, %v2935, %v3314
        %v3316 = vsel %vm3207, %v2949, %v2942
        %v3317 = vsel %vm3209, %v2956, %v3316
        %v3318 = vsel %vm3211, %v2963, %v3317
        %v3319 = vsel %vm3213, %v2970, %v3318
        %v3320 = vsel %vm3215, %v2977, %v3319
        %v3321 = vsel %vm3217, %v2984, %v3320
        %v3322 = vsel %vm3219, %v2991, %v3321
        %v3323 = vsel %vm3207, %v3005, %v2998
        %v3324 = vsel %vm3209, %v3012, %v3323
        %v3325 = vsel %vm3211, %v3019, %v3324
        %v3326 = vsel %vm3213, %v3026, %v3325
        %v3327 = vsel %vm3215, %v3033, %v3326
        %v3328 = vsel %vm3217, %v3040, %v3327
        %v3329 = vsel %vm3219, %v3047, %v3328
        %v3330 = vsel %vm3207, %v3061, %v3054
        %v3331 = vsel %vm3209, %v3068, %v3330
        %v3332 = vsel %vm3211, %v3075, %v3331
        %v3333 = vsel %vm3213, %v3082, %v3332
        %v3334 = vsel %vm3215, %v3089, %v3333
        %v3335 = vsel %vm3217, %v3096, %v3334
        %v3336 = vsel %vm3219, %v3103, %v3335
        %v3337 = vsel %vm3207, %v3117, %v3110
        %v3338 = vsel %vm3209, %v3124, %v3337
        %v3339 = vsel %vm3211, %v3131, %v3338
        %v3340 = vsel %vm3213, %v3138, %v3339
        %v3341 = vsel %vm3215, %v3145, %v3340
        %v3342 = vsel %vm3217, %v3152, %v3341
        %v3343 = vsel %vm3219, %v3159, %v3342
        %3351 = vrot.lane.b32.xlu0 %v3220, 32
        %v3352 = vpop.permute.xlu0 %3351
        %3353 = vrot.lane.b32.xlu0 %v3227, 32
        %v3354 = vpop.permute.xlu0 %3353
        %3355 = vrot.lane.b32.xlu0 %v3234, 32
        %v3356 = vpop.permute.xlu0 %3355
        %3357 = vrot.lane.b32.xlu0 %v3241, 32
        %v3358 = vpop.permute.xlu0 %3357
        %3359 = vrot.lane.b32.xlu0 %v3248, 32
        %v3360 = vpop.permute.xlu0 %3359
        %3361 = vrot.lane.b32.xlu0 %v3256, 32
        %v3362 = vpop.permute.xlu0 %3361
        %3370 = vrot.lane.b32.xlu0 %v3263, 64
        %v3371 = vpop.permute.xlu0 %3370
        %3372 = vrot.lane.b32.xlu0 %v3270, 64
        %v3373 = vpop.permute.xlu0 %3372
        %3374 = vrot.lane.b32.xlu0 %v3277, 64
        %v3375 = vpop.permute.xlu0 %3374
        %3376 = vrot.lane.b32.xlu0 %v3284, 64
        %v3377 = vpop.permute.xlu0 %3376
        %3378 = vrot.lane.b32.xlu0 %v3291, 64
        %v3379 = vpop.permute.xlu0 %3378
        %3380 = vrot.lane.b32.xlu0 %v3301, 64
        %v3381 = vpop.permute.xlu0 %3380
        %v3388 = vsel %vm2408, %v3308, %v3352
        %v3389 = vsel %vm2408, %v3315, %v3354
        %v3390 = vsel %vm2408, %v3322, %v3356
        %v3391 = vsel %vm2408, %v3329, %v3358
        %v3392 = vsel %vm2408, %v3336, %v3360
        %v3393 = vsel %vm2408, %v3343, %v3362
        %vm3394 = vcmask 523264
        %v3395 = vsel %vm3394, %v3388, %v3371
        %v3396 = vsel %vm3394, %v3389, %v3373
        %v3397 = vsel %vm3394, %v3390, %v3375
        %v3398 = vsel %vm3394, %v3391, %v3377
        %v3399 = vsel %vm3394, %v3392, %v3379
        %v3400 = vsel %vm3394, %v3393, %v3381
        %v3401 = vld [vmem:[%s15] sm:$0xf]
        %v3402 = vld [vmem:[%s15 + $0x4] sm:$0xf]
        %v3403 = vld [vmem:[%s15 + $0x8] sm:$0xf]
        %v3404 = vld [vmem:[%s15 + $0xc] sm:$0xf]
        %v3405 = vld [vmem:[%s15 + $0x10] sm:$0xf]
        %v3406 = vld [vmem:[%s15 + $0x14] sm:$0xf]
        %v3407 = vld [vmem:[%s15 + $0x18] sm:$0xf]
        %v3408 = vld [vmem:[%s15 + $0x1c] sm:$0xf]
        %v3409 = vld [vmem:[%s15 + $0x20] sm:$0xf]
        %v3410 = vld [vmem:[%s15 + $0x24] sm:$0xf]
        %v3411 = vld [vmem:[%s15 + $0x28] sm:$0xf]
        %v3412 = vld [vmem:[%s15 + $0x2c] sm:$0xf]
        %v3413 = vpack.c.bf16 %v3396, %v3395
        %v3414 = vpack.c.bf16 %v3398, %v3397
        %v3415 = vpack.c.bf16 %v3400, %v3399
        %v3416 = vld [vmem:[%s17] sm:$0x1]
        %v3418 = vlaneseq
        %v3419 = vshrl.u32 %v3418, 7
        %v3420 = vsub.s32 0, %v3419
        %v3421 = vrot.slane %v3416, %v3420
        %v3435 = vunpack.c.l.b16 %v3401
        %v3436 = vunpack.c.l.b16 %v3402
        %v3437 = vunpack.c.l.b16 %v3403
        %v3438 = vunpack.c.l.b16 %v3404
        %v3439 = vunpack.c.l.b16 %v3405
        %v3440 = vunpack.c.l.b16 %v3406
        %v3441 = vunpack.c.l.b16 %v3407
        %v3442 = vunpack.c.l.b16 %v3408
        %v3443 = vunpack.c.l.b16 %v3409
        %v3444 = vunpack.c.l.b16 %v3410
        %v3445 = vunpack.c.l.b16 %v3411
        %v3446 = vunpack.c.l.b16 %v3412
        %v3447 = vpack.c.b16 %v3436, %v3435
        %v3448 = vpack.c.b16 %v3438, %v3437
        %v3449 = vpack.c.b16 %v3440, %v3439
        %v3450 = vpack.c.b16 %v3442, %v3441
        %v3451 = vpack.c.b16 %v3444, %v3443
        %v3452 = vpack.c.b16 %v3446, %v3445
        %vm3459 = vcmask 785408
        %v3461 = vsel %vm3459, %v3413, 0
        %v3464 = vsel %vm3459, %v3414, 0
        %v3467 = vsel %vm3459, %v3415, 0
        %3469 = vmatprep.subr.bf16.mxu0 0
        %3470 = vmatpush1.bf16.msra.mxu0 %v3447
        %3471 = vmatprep.subr.bf16.mxu0 0
        %3472 = vmatpush1.bf16.msra.mxu0 %v3448
        %3473 = vmatprep.subr.bf16.mxu0 0
        %3474 = vmatpush1.bf16.msra.mxu0 %v3449
        %3475 = vmatprep.subr.bf16.mxu0 0
        %3476 = vmatpush1.bf16.msra.mxu0 %v3450
        %3477 = vmatprep.subr.bf16.mxu0 0
        %3478 = vmatpush1.bf16.msra.mxu0 %v3451
        %3479 = vmatprep.subr.bf16.mxu0 0
        %3480 = vmatpush1.bf16.msra.mxu0 %v3452
        %3481 = vmatprep.subr.bf16.mxu0 0
        %3482 = vmatpush1.bf16.msra.mxu0 0
        %3483 = vmatprep.subr.bf16.mxu0 0
        %3484 = vmatpush1.bf16.msra.mxu0 0
        %3485 = vmatprep.subr.bf16.mxu0 0
        %3486 = vmatpush1.bf16.msra.mxu0 0
        %3487 = vmatprep.subr.bf16.mxu0 0
        %3488 = vmatpush1.bf16.msra.mxu0 0
        %3489 = vmatprep.subr.bf16.mxu0 0
        %3490 = vmatpush1.bf16.msra.mxu0 0
        %3491 = vmatprep.subr.bf16.mxu0 0
        %3492 = vmatpush1.bf16.msra.mxu0 0
        %3493 = vmatprep.subr.bf16.mxu0 0
        %3494 = vmatpush1.bf16.msra.mxu0 0
        %3495 = vmatprep.subr.bf16.mxu0 0
        %3496 = vmatpush1.bf16.msra.mxu0 0
        %3497 = vmatprep.subr.bf16.mxu0 0
        %3498 = vmatpush1.bf16.msra.mxu0 0
        %3499 = vmatprep.subr.bf16.mxu0 0
        %3500 = vmatpush1.bf16.msra.mxu0 0
        %3501 = vmatprep.mubr.bf16.mxu0 0
        %3502 = vmatmul.mubr.bf16.gmra.mrb[0].mxu0 %v3461
        %v3503 = vpop.f32.mrb[0].mxu0
        %v3504 = vadd.f32 %v3421, %v3503
        %v3505 = vpop.f32.mrb[0].mxu0
        %v3506 = vpop.f32.mrb[0].mxu0
        %v3507 = vadd.f32 %v3421, %v3506
        %v3508 = vpop.f32.mrb[0].mxu0
        %3509 = vmatprep.mubr.bf16.mxu0 0
        %3510 = vmatmul.mubr.bf16.gmra.mrb[0].mxu0 %v3464
        %v3511 = vpop.f32.mrb[0].mxu0
        %v3512 = vadd.f32 %v3421, %v3511
        %v3513 = vpop.f32.mrb[0].mxu0
        %v3514 = vpop.f32.mrb[0].mxu0
        %v3515 = vadd.f32 %v3421, %v3514
        %v3516 = vpop.f32.mrb[0].mxu0
        %3517 = vmatprep.mubr.bf16.mxu0 0
        %3518 = vmatmul.mubr.bf16.gmra.mrb[0].mxu0 %v3467
        %v3519 = vpop.f32.mrb[0].mxu0
        %v3520 = vadd.f32 %v3421, %v3519
        %v3521 = vpop.f32.mrb[0].mxu0
        %v3522 = vpop.f32.mrb[0].mxu0
        %v3523 = vadd.f32 %v3421, %v3522
        %v3524 = vpop.f32.mrb[0].mxu0
        %3525 = vdwg.mxu0
        %v3529 = vrot.slane %v3515, 2
        %v3530 = vrot.slane %v3520, 2
        %v3531 = vsel %vm1885, %v3529, %v3530
        %v3532 = vrot.slane %v3523, 2
        %v3533 = vsel %vm1885, %v3530, %v3532
        %v3538 = vsel %vm1885, %v3512, %v3529
        %v3539 = vsel %vm3394, %v3504, 0.0
        %v3540 = vsel %vm3394, %v3507, 0.0
        %v3541 = vadd.f32 %v3539, %v3540
        %v3542 = vsel %vm3394, %v3538, 0.0
        %v3543 = vadd.f32 %v3541, %v3542
        %v3544 = vsel %vm3394, %v3531, 0.0
        %v3545 = vadd.f32 %v3543, %v3544
        %v3546 = vsel %vm3394, %v3533, 0.0
        %v3547 = vadd.f32 %v3545, %v3546
        %vm3548 = vcmask 519168
        %v3549 = vsel %vm3548, %v3532, 0.0
        %v3550 = vadd.f32 %v3547, %v3549
        %v3551 = vrot.slane %v3550, 4
        %v3552 = vadd.f32 %v3550, %v3551
        %v3553 = vrot.slane %v3552, 2
        %v3554 = vadd.f32 %v3552, %v3553
        %v3555 = vrot.slane %v3554, 1
        %v3556 = vadd.f32 %v3554, %v3555
        %v3557 = vmul.f32 %v3556, 0.022727273
        %v3558 = vsub.f32 %v3504, %v3557
        %v3559 = vsub.f32 %v3507, %v3557
        %v3560 = vsub.f32 %v3538, %v3557
        %v3561 = vsub.f32 %v3531, %v3557
        %v3562 = vsub.f32 %v3533, %v3557
        %v3563 = vsub.f32 %v3532, %v3557
        %v3564 = vmul.f32 %v3558, %v3558
        %v3565 = vmul.f32 %v3559, %v3559
        %v3566 = vmul.f32 %v3560, %v3560
        %v3567 = vmul.f32 %v3561, %v3561
        %v3568 = vmul.f32 %v3562, %v3562
        %v3569 = vmul.f32 %v3563, %v3563
        %v3570 = vsel %vm3394, %v3564, 0.0
        %v3571 = vsel %vm3394, %v3565, 0.0
        %v3572 = vadd.f32 %v3570, %v3571
        %v3573 = vsel %vm3394, %v3566, 0.0
        %v3574 = vadd.f32 %v3572, %v3573
        %v3575 = vsel %vm3394, %v3567, 0.0
        %v3576 = vadd.f32 %v3574, %v3575
        %v3577 = vsel %vm3394, %v3568, 0.0
        %v3578 = vadd.f32 %v3576, %v3577
        %v3579 = vsel %vm3548, %v3569, 0.0
        %v3580 = vadd.f32 %v3578, %v3579
        %v3581 = vrot.slane %v3580, 4
        %v3582 = vadd.f32 %v3580, %v3581
        %v3583 = vrot.slane %v3582, 2
        %v3584 = vadd.f32 %v3582, %v3583
        %v3585 = vrot.slane %v3584, 1
        %v3586 = vadd.f32 %v3584, %v3585
        %v3587 = vmul.f32 %v3586, 0.022727273
        %v3588 = vsel %vm3394, %v3557, 0.0
        %v3589 = vsel %vm3394, %v3587, 0.0
        %v3590 = vadd.f32 %v3587, 1e-05
        %v3591 = vrsqrt.pop %v3590
        %v3592 = vmul.f32 %v3558, %v3591
        %v3593 = vmul.f32 %v3559, %v3591
        %v3594 = vmul.f32 %v3560, %v3591
        %v3595 = vmul.f32 %v3561, %v3591
        %v3596 = vmul.f32 %v3562, %v3591
        %v3597 = vmul.f32 %v3563, %v3591
        %v3598 = vld [vmem:[%s19] sm:$0x1]
        %v3600 = vlaneseq
        %v3601 = vshrl.u32 %v3600, 7
        %v3602 = vsub.s32 0, %v3601
        %v3603 = vrot.slane %v3598, %v3602
        %v3605 = vmul.f32 %v3592, %v3603
        %v3606 = vmul.f32 %v3593, %v3603
        %v3607 = vmul.f32 %v3594, %v3603
        %v3608 = vmul.f32 %v3595, %v3603
        %v3609 = vmul.f32 %v3596, %v3603
        %v3610 = vmul.f32 %v3597, %v3603
        %v3611 = vld [vmem:[%s21] sm:$0x1]
        %v3613 = vlaneseq
        %v3614 = vshrl.u32 %v3613, 7
        %v3615 = vsub.s32 0, %v3614
        %v3616 = vrot.slane %v3611, %v3615
        %v3618 = vadd.f32 %v3605, %v3616
        %v3619 = vadd.f32 %v3606, %v3616
        %v3620 = vadd.f32 %v3607, %v3616
        %v3621 = vadd.f32 %v3608, %v3616
        %v3622 = vadd.f32 %v3609, %v3616
        %v3623 = vadd.f32 %v3610, %v3616
        %v3624 = vmax.f32 %v3618, 0.0
        %v3625 = vmax.f32 %v3619, 0.0
        %v3626 = vmax.f32 %v3620, 0.0
        %v3627 = vmax.f32 %v3621, 0.0
        %v3628 = vmax.f32 %v3622, 0.0
        %v3629 = vmax.f32 %v3623, 0.0
        %v3636 = vrot.slane %v3624, 1
        %v3637 = vrot.slane %v3625, 1
        %v3638 = vsel %vm1514, %v3636, %v3637
        %v3639 = vrot.slane %v3626, 1
        %v3640 = vsel %vm1514, %v3637, %v3639
        %v3641 = vrot.slane %v3627, 1
        %v3642 = vsel %vm1514, %v3639, %v3641
        %v3643 = vrot.slane %v3628, 1
        %v3644 = vsel %vm1514, %v3641, %v3643
        %v3645 = vrot.slane %v3629, 1
        %v3646 = vsel %vm1514, %v3643, %v3645
        %v3648 = vrot.slane %v3624, 5
        %v3650 = vsel %vm1545, %v3645, %v3648
        %v3651 = vrot.slane %v3624, 2
        %v3652 = vrot.slane %v3625, 2
        %v3653 = vsel %vm1885, %v3651, %v3652
        %v3654 = vrot.slane %v3626, 2
        %v3655 = vsel %vm1885, %v3652, %v3654
        %v3656 = vrot.slane %v3627, 2
        %v3657 = vsel %vm1885, %v3654, %v3656
        %v3658 = vrot.slane %v3628, 2
        %v3659 = vsel %vm1885, %v3656, %v3658
        %v3660 = vrot.slane %v3629, 2
        %v3661 = vsel %vm1885, %v3658, %v3660
        %v3668 = vrot.slane %v3624, 6
        %v3670 = vsel %vm1785, %v3660, %v3668
        %3672 = vrot.lane.b32.xlu0 %v3638, 64
        %v3673 = vpop.permute.xlu0 %3672
        %3674 = vrot.lane.b32.xlu0 %v3640, 64
        %v3675 = vpop.permute.xlu0 %3674
        %3676 = vrot.lane.b32.xlu0 %v3642, 64
        %v3677 = vpop.permute.xlu0 %3676
        %3678 = vrot.lane.b32.xlu0 %v3644, 64
        %v3679 = vpop.permute.xlu0 %3678
        %3680 = vrot.lane.b32.xlu0 %v3646, 64
        %v3681 = vpop.permute.xlu0 %3680
        %3682 = vrot.lane.b32.xlu0 %v3650, 64
        %v3683 = vpop.permute.xlu0 %3682
        %v3690 = vsel %vm3394, %v3624, %v3673
        %v3691 = vsel %vm3394, %v3625, %v3675
        %v3692 = vsel %vm3394, %v3626, %v3677
        %v3693 = vsel %vm3394, %v3627, %v3679
        %v3694 = vsel %vm3394, %v3628, %v3681
        %v3695 = vsel %vm3394, %v3629, %v3683
        %v3696 = vld [vmem:[%s27] sm:$0xf]
        %v3697 = vld [vmem:[%s27 + $0x4] sm:$0xf]
        %v3698 = vld [vmem:[%s27 + $0x8] sm:$0xf]
        %v3699 = vld [vmem:[%s27 + $0xc] sm:$0xf]
        %v3700 = vld [vmem:[%s27 + $0x10] sm:$0xf]
        %v3701 = vld [vmem:[%s27 + $0x14] sm:$0xf]
        %v3702 = vld [vmem:[%s27 + $0x18] sm:$0xf]
        %v3703 = vld [vmem:[%s27 + $0x1c] sm:$0xf]
        %v3704 = vld [vmem:[%s27 + $0x20] sm:$0xf]
        %v3705 = vld [vmem:[%s27 + $0x24] sm:$0xf]
        %v3706 = vld [vmem:[%s27 + $0x28] sm:$0xf]
        %v3707 = vld [vmem:[%s27 + $0x2c] sm:$0xf]
        %v3708 = vld [vmem:[%s27 + $0x30] sm:$0xf]
        %v3709 = vld [vmem:[%s27 + $0x34] sm:$0xf]
        %v3710 = vld [vmem:[%s27 + $0x38] sm:$0xf]
        %v3711 = vld [vmem:[%s27 + $0x3c] sm:$0xf]
        %v3712 = vld [vmem:[%s27 + $0x40] sm:$0xf]
        %v3713 = vld [vmem:[%s27 + $0x44] sm:$0xf]
        %v3714 = vld [vmem:[%s27 + $0x48] sm:$0xf]
        %v3715 = vld [vmem:[%s27 + $0x4c] sm:$0xf]
        %v3716 = vld [vmem:[%s27 + $0x50] sm:$0xf]
        %v3717 = vld [vmem:[%s27 + $0x54] sm:$0xf]
        %v3718 = vld [vmem:[%s27 + $0x58] sm:$0xf]
        %v3719 = vld [vmem:[%s27 + $0x5c] sm:$0xf]
        %v3720 = vpack.c.bf16 %v3691, %v3690
        %v3721 = vpack.c.bf16 %v3655, %v3653
        %v3722 = vpack.c.bf16 %v3693, %v3692
        %v3723 = vpack.c.bf16 %v3659, %v3657
        %v3724 = vpack.c.bf16 %v3695, %v3694
        %v3725 = vpack.c.bf16 %v3670, %v3661
        %v3726 = vld [vmem:[%s29] sm:$0x1]
        %v3728 = vlaneseq
        %v3729 = vshrl.u32 %v3728, 7
        %v3730 = vsub.s32 0, %v3729
        %v3731 = vrot.slane %v3726, %v3730
        %v3757 = vunpack.c.l.b16 %v3696
        %v3758 = vunpack.c.l.b16 %v3697
        %v3759 = vunpack.c.l.b16 %v3698
        %v3760 = vunpack.c.l.b16 %v3699
        %v3761 = vunpack.c.l.b16 %v3700
        %v3762 = vunpack.c.l.b16 %v3701
        %v3763 = vunpack.c.l.b16 %v3702
        %v3764 = vunpack.c.l.b16 %v3703
        %v3765 = vunpack.c.l.b16 %v3704
        %v3766 = vunpack.c.l.b16 %v3705
        %v3767 = vunpack.c.l.b16 %v3706
        %v3768 = vunpack.c.l.b16 %v3707
        %v3769 = vunpack.c.l.b16 %v3708
        %v3770 = vunpack.c.l.b16 %v3709
        %v3771 = vunpack.c.l.b16 %v3710
        %v3772 = vunpack.c.l.b16 %v3711
        %v3773 = vunpack.c.l.b16 %v3712
        %v3774 = vunpack.c.l.b16 %v3713
        %v3775 = vunpack.c.l.b16 %v3714
        %v3776 = vunpack.c.l.b16 %v3715
        %v3777 = vunpack.c.l.b16 %v3716
        %v3778 = vunpack.c.l.b16 %v3717
        %v3779 = vunpack.c.l.b16 %v3718
        %v3780 = vunpack.c.l.b16 %v3719
        %v3781 = vpack.c.b16 %v3758, %v3757
        %v3782 = vpack.c.b16 %v3760, %v3759
        %v3783 = vpack.c.b16 %v3762, %v3761
        %v3784 = vpack.c.b16 %v3764, %v3763
        %v3785 = vpack.c.b16 %v3766, %v3765
        %v3786 = vpack.c.b16 %v3768, %v3767
        %v3787 = vpack.c.b16 %v3770, %v3769
        %v3788 = vpack.c.b16 %v3772, %v3771
        %v3789 = vpack.c.b16 %v3774, %v3773
        %v3790 = vpack.c.b16 %v3776, %v3775
        %v3791 = vpack.c.b16 %v3778, %v3777
        %v3792 = vpack.c.b16 %v3780, %v3779
        %v3806 = vsel %vm3394, %v3721, 0
        %v3809 = vsel %vm3394, %v3723, 0
        %v3812 = vsel %vm3394, %v3725, 0
        %3814 = vmatprep.subr.bf16.mxu0 0
        %3815 = vmatpush1.bf16.msra.mxu0 %v3781
        %3816 = vmatprep.subr.bf16.mxu0 0
        %3817 = vmatpush1.bf16.msra.mxu0 %v3782
        %3818 = vmatprep.subr.bf16.mxu0 0
        %3819 = vmatpush1.bf16.msra.mxu0 %v3783
        %3820 = vmatprep.subr.bf16.mxu0 0
        %3821 = vmatpush1.bf16.msra.mxu0 %v3784
        %3822 = vmatprep.subr.bf16.mxu0 0
        %3823 = vmatpush1.bf16.msra.mxu0 %v3785
        %3824 = vmatprep.subr.bf16.mxu0 0
        %3825 = vmatpush1.bf16.msra.mxu0 %v3786
        %3826 = vmatprep.subr.bf16.mxu0 0
        %3827 = vmatpush1.bf16.msra.mxu0 %v3787
        %3828 = vmatprep.subr.bf16.mxu0 0
        %3829 = vmatpush1.bf16.msra.mxu0 %v3788
        %3830 = vmatprep.subr.bf16.mxu0 0
        %3831 = vmatpush1.bf16.msra.mxu0 %v3789
        %3832 = vmatprep.subr.bf16.mxu0 0
        %3833 = vmatpush1.bf16.msra.mxu0 %v3790
        %3834 = vmatprep.subr.bf16.mxu0 0
        %3835 = vmatpush1.bf16.msra.mxu0 %v3791
        %3836 = vmatprep.subr.bf16.mxu0 0
        %3837 = vmatpush1.bf16.msra.mxu0 %v3792
        %3838 = vmatprep.subr.bf16.mxu0 0
        %3839 = vmatpush1.bf16.msra.mxu0 0
        %3840 = vmatprep.subr.bf16.mxu0 0
        %3841 = vmatpush1.bf16.msra.mxu0 0
        %3842 = vmatprep.subr.bf16.mxu0 0
        %3843 = vmatpush1.bf16.msra.mxu0 0
        %3844 = vmatprep.subr.bf16.mxu0 0
        %3845 = vmatpush1.bf16.msra.mxu0 0
        %3846 = vmatprep.mubr.bf16.mxu0 %v3806
        %3847 = vmatmul.mubr.bf16.gmra.mrb[0].mxu0 %v3720
        %v3848 = vpop.f32.mrb[0].mxu0
        %v3849 = vadd.f32 %v3731, %v3848
        %v3850 = vpop.f32.mrb[0].mxu0
        %v3851 = vpop.f32.mrb[0].mxu0
        %v3852 = vadd.f32 %v3731, %v3851
        %v3853 = vpop.f32.mrb[0].mxu0
        %3854 = vmatprep.mubr.bf16.mxu0 %v3809
        %3855 = vmatmul.mubr.bf16.gmra.mrb[0].mxu0 %v3722
        %v3856 = vpop.f32.mrb[0].mxu0
        %v3857 = vadd.f32 %v3731, %v3856
        %v3858 = vpop.f32.mrb[0].mxu0
        %v3859 = vpop.f32.mrb[0].mxu0
        %v3860 = vadd.f32 %v3731, %v3859
        %v3861 = vpop.f32.mrb[0].mxu0
        %3862 = vmatprep.mubr.bf16.mxu0 %v3812
        %3863 = vmatmul.mubr.bf16.gmra.mrb[0].mxu0 %v3724
        %v3864 = vpop.f32.mrb[0].mxu0
        %v3865 = vadd.f32 %v3731, %v3864
        %v3866 = vpop.f32.mrb[0].mxu0
        %v3867 = vpop.f32.mrb[0].mxu0
        %v3868 = vadd.f32 %v3731, %v3867
        %v3869 = vpop.f32.mrb[0].mxu0
        %3870 = vdwg.mxu0
        %v3875 = vrot.slane %v3857, 2
        %v3876 = vrot.slane %v3860, 2
        %v3877 = vsel %vm1885, %v3875, %v3876
        %v3878 = vrot.slane %v3865, 2
        %v3879 = vsel %vm1885, %v3876, %v3878
        %v3880 = vrot.slane %v3868, 2
        %v3881 = vsel %vm1885, %v3878, %v3880
        %vm3885 = vcmask 1043456
        %v3886 = vsel %vm3885, %v3857, %v3877
        %v3887 = vadd.f32 %v3849, %v3852
        %v3888 = vadd.f32 %v3887, %v3886
        %v3889 = vadd.f32 %v3888, %v3879
        %v3890 = vadd.f32 %v3889, %v3881
        %v3891 = vrot.slane %v3890, 4
        %v3892 = vadd.f32 %v3890, %v3891
        %v3893 = vrot.slane %v3892, 2
        %v3894 = vadd.f32 %v3892, %v3893
        %v3895 = vrot.slane %v3894, 1
        %v3896 = vadd.f32 %v3894, %v3895
        %v3897 = vmul.f32 %v3896, 0.025
        %v3898 = vsub.f32 %v3849, %v3897
        %v3899 = vsub.f32 %v3852, %v3897
        %v3900 = vsub.f32 %v3886, %v3897
        %v3901 = vsub.f32 %v3879, %v3897
        %v3902 = vsub.f32 %v3881, %v3897
        %v3903 = vmul.f32 %v3898, %v3898
        %v3904 = vmul.f32 %v3899, %v3899
        %v3905 = vmul.f32 %v3900, %v3900
        %v3906 = vmul.f32 %v3901, %v3901
        %v3907 = vmul.f32 %v3902, %v3902
        %v3908 = vadd.f32 %v3903, %v3904
        %v3909 = vadd.f32 %v3908, %v3905
        %v3910 = vadd.f32 %v3909, %v3906
        %v3911 = vadd.f32 %v3910, %v3907
        %v3912 = vrot.slane %v3911, 4
        %v3913 = vadd.f32 %v3911, %v3912
        %v3914 = vrot.slane %v3913, 2
        %v3915 = vadd.f32 %v3913, %v3914
        %v3916 = vrot.slane %v3915, 1
        %v3917 = vadd.f32 %v3915, %v3916
        %v3918 = vmul.f32 %v3917, 0.025
        %v3919 = vadd.f32 %v3918, 1e-05
        %v3920 = vrsqrt.pop %v3919
        %v3921 = vmul.f32 %v3898, %v3920
        %v3922 = vmul.f32 %v3899, %v3920
        %v3923 = vmul.f32 %v3900, %v3920
        %v3924 = vmul.f32 %v3901, %v3920
        %v3925 = vmul.f32 %v3902, %v3920
        %v3926 = vld [vmem:[%s31] sm:$0x1]
        %v3928 = vlaneseq
        %v3929 = vshrl.u32 %v3928, 7
        %v3930 = vsub.s32 0, %v3929
        %v3931 = vrot.slane %v3926, %v3930
        %v3933 = vmul.f32 %v3921, %v3931
        %v3934 = vmul.f32 %v3922, %v3931
        %v3935 = vmul.f32 %v3923, %v3931
        %v3936 = vmul.f32 %v3924, %v3931
        %v3937 = vmul.f32 %v3925, %v3931
        %v3938 = vld [vmem:[%s33] sm:$0x1]
        %v3940 = vlaneseq
        %v3941 = vshrl.u32 %v3940, 7
        %v3942 = vsub.s32 0, %v3941
        %v3943 = vrot.slane %v3938, %v3942
        %v3945 = vadd.f32 %v3933, %v3943
        %v3946 = vadd.f32 %v3934, %v3943
        %v3947 = vadd.f32 %v3935, %v3943
        %v3948 = vadd.f32 %v3936, %v3943
        %v3949 = vadd.f32 %v3937, %v3943
        %v3950 = vmax.f32 %v3945, 0.0
        %v3951 = vmax.f32 %v3946, 0.0
        %v3952 = vmax.f32 %v3947, 0.0
        %v3953 = vmax.f32 %v3948, 0.0
        %v3954 = vmax.f32 %v3949, 0.0
        %v3960 = vrot.slane %v3950, 1
        %v3961 = vrot.slane %v3951, 1
        %v3962 = vsel %vm1514, %v3960, %v3961
        %v3963 = vrot.slane %v3952, 1
        %v3964 = vsel %vm1514, %v3961, %v3963
        %v3965 = vrot.slane %v3953, 1
        %v3966 = vsel %vm1514, %v3963, %v3965
        %v3967 = vrot.slane %v3954, 1
        %v3968 = vsel %vm1514, %v3965, %v3967
        %v3975 = vsel %vm1514, %v3967, %v3960
        %v3976 = vrot.slane %v3950, 2
        %v3977 = vrot.slane %v3951, 2
        %v3978 = vsel %vm1885, %v3976, %v3977
        %v3979 = vrot.slane %v3952, 2
        %v3980 = vsel %vm1885, %v3977, %v3979
        %v3981 = vrot.slane %v3953, 2
        %v3982 = vsel %vm1885, %v3979, %v3981
        %v3983 = vrot.slane %v3954, 2
        %v3984 = vsel %vm1885, %v3981, %v3983
        %v3991 = vsel %vm1885, %v3983, %v3976
        %v3992 = vld [vmem:[%s39] sm:$0xff]
        %v3993 = vld [vmem:[%s39 + $0x8] sm:$0xff]
        %v3994 = vld [vmem:[%s39 + $0x10] sm:$0xff]
        %v3995 = vld [vmem:[%s39 + $0x18] sm:$0xff]
        %v3996 = vld [vmem:[%s39 + $0x20] sm:$0xff]
        %v3997 = vld [vmem:[%s39 + $0x28] sm:$0xff]
        %v3998 = vld [vmem:[%s39 + $0x30] sm:$0xff]
        %v3999 = vld [vmem:[%s39 + $0x38] sm:$0xff]
        %v4000 = vld [vmem:[%s39 + $0x40] sm:$0xff]
        %v4001 = vld [vmem:[%s39 + $0x48] sm:$0xff]
        %v4002 = vld [vmem:[%s39 + $0x50] sm:$0xff]
        %v4003 = vld [vmem:[%s39 + $0x58] sm:$0xff]
        %v4004 = vld [vmem:[%s39 + $0x60] sm:$0xff]
        %v4005 = vld [vmem:[%s39 + $0x68] sm:$0xff]
        %v4006 = vld [vmem:[%s39 + $0x70] sm:$0xff]
        %v4007 = vld [vmem:[%s39 + $0x78] sm:$0xff]
        %v4008 = vld [vmem:[%s39 + $0x80] sm:$0xff]
        %v4009 = vld [vmem:[%s39 + $0x88] sm:$0xff]
        %v4010 = vld [vmem:[%s39 + $0x90] sm:$0xff]
        %v4011 = vld [vmem:[%s39 + $0x98] sm:$0xff]
        %v4012 = vld [vmem:[%s39 + $0xa0] sm:$0xff]
        %v4013 = vld [vmem:[%s39 + $0xa8] sm:$0xff]
        %v4014 = vld [vmem:[%s39 + $0xb0] sm:$0xff]
        %v4015 = vld [vmem:[%s39 + $0xb8] sm:$0xff]
        %v4016 = vld [vmem:[%s39 + $0xc0] sm:$0xff]
        %v4017 = vld [vmem:[%s39 + $0xc8] sm:$0xff]
        %v4018 = vld [vmem:[%s39 + $0xd0] sm:$0xff]
        %v4019 = vld [vmem:[%s39 + $0xd8] sm:$0xff]
        %v4020 = vld [vmem:[%s39 + $0xe0] sm:$0xff]
        %v4021 = vld [vmem:[%s39 + $0xe8] sm:$0xff]
        %v4022 = vld [vmem:[%s39 + $0xf0] sm:$0xff]
        %v4023 = vld [vmem:[%s39 + $0xf8] sm:$0xff]
        %v4024 = vld [vmem:[%s39 + $0x100] sm:$0xff]
        %v4025 = vld [vmem:[%s39 + $0x108] sm:$0xff]
        %v4026 = vld [vmem:[%s39 + $0x110] sm:$0xff]
        %v4027 = vld [vmem:[%s39 + $0x118] sm:$0xff]
        %v4028 = vld [vmem:[%s39 + $0x120] sm:$0xff]
        %v4029 = vld [vmem:[%s39 + $0x128] sm:$0xff]
        %v4030 = vld [vmem:[%s39 + $0x130] sm:$0xff]
        %v4031 = vld [vmem:[%s39 + $0x138] sm:$0xff]
        %v4032 = vld [vmem:[%s39 + $0x140] sm:$0xff]
        %v4033 = vld [vmem:[%s39 + $0x148] sm:$0xff]
        %v4034 = vld [vmem:[%s39 + $0x150] sm:$0xff]
        %v4035 = vld [vmem:[%s39 + $0x158] sm:$0xff]
        %v4036 = vld [vmem:[%s39 + $0x160] sm:$0xff]
        %v4037 = vld [vmem:[%s39 + $0x168] sm:$0xff]
        %v4038 = vld [vmem:[%s39 + $0x170] sm:$0xff]
        %v4039 = vld [vmem:[%s39 + $0x178] sm:$0xff]
        %v4040 = vpack.c.bf16 %v3951, %v3950
        %v4041 = vpack.c.bf16 %v3964, %v3962
        %v4042 = vpack.c.bf16 %v3980, %v3978
        %v4043 = vpack.c.bf16 %v3953, %v3952
        %v4044 = vpack.c.bf16 %v3968, %v3966
        %v4045 = vpack.c.bf16 %v3984, %v3982
        %v4046 = vpack.c.bf16 %v3954, %v3954
        %v4047 = vpack.c.bf16 %v3975, %v3975
        %v4048 = vpack.c.bf16 %v3991, %v3991
        %v4049 = vld [vmem:[%s41] sm:$0x3]
        %v4051 = vlaneseq
        %v4052 = vshrl.u32 %v4051, 7
        %v4053 = vsub.s32 0, %v4052
        %v4054 = vrot.slane %v4049, %v4053
        %v4055 = vlaneseq
        %v4056 = vshrl.u32 %v4055, 7
        %v4057 = vsub.s32 1, %v4056
        %v4058 = vrot.slane %v4049, %v4057
        %v4109 = vunpack.c.l.b16 %v3992
        %v4110 = vunpack.c.h.b16 %v3992
        %v4111 = vunpack.c.l.b16 %v3993
        %v4112 = vunpack.c.h.b16 %v3993
        %v4113 = vunpack.c.l.b16 %v3994
        %v4114 = vunpack.c.h.b16 %v3994
        %v4115 = vunpack.c.l.b16 %v3995
        %v4116 = vunpack.c.h.b16 %v3995
        %v4117 = vunpack.c.l.b16 %v3996
        %v4118 = vunpack.c.h.b16 %v3996
        %v4119 = vunpack.c.l.b16 %v3997
        %v4120 = vunpack.c.h.b16 %v3997
        %v4121 = vunpack.c.l.b16 %v3998
        %v4122 = vunpack.c.h.b16 %v3998
        %v4123 = vunpack.c.l.b16 %v3999
        %v4124 = vunpack.c.h.b16 %v3999
        %v4125 = vunpack.c.l.b16 %v4000
        %v4126 = vunpack.c.h.b16 %v4000
        %v4127 = vunpack.c.l.b16 %v4001
        %v4128 = vunpack.c.h.b16 %v4001
        %v4129 = vunpack.c.l.b16 %v4002
        %v4130 = vunpack.c.h.b16 %v4002
        %v4131 = vunpack.c.l.b16 %v4003
        %v4132 = vunpack.c.h.b16 %v4003
        %v4133 = vunpack.c.l.b16 %v4004
        %v4134 = vunpack.c.h.b16 %v4004
        %v4135 = vunpack.c.l.b16 %v4005
        %v4136 = vunpack.c.h.b16 %v4005
        %v4137 = vunpack.c.l.b16 %v4006
        %v4138 = vunpack.c.h.b16 %v4006
        %v4139 = vunpack.c.l.b16 %v4007
        %v4140 = vunpack.c.h.b16 %v4007
        %v4141 = vunpack.c.l.b16 %v4008
        %v4142 = vunpack.c.h.b16 %v4008
        %v4143 = vunpack.c.l.b16 %v4009
        %v4144 = vunpack.c.h.b16 %v4009
        %v4145 = vunpack.c.l.b16 %v4010
        %v4146 = vunpack.c.h.b16 %v4010
        %v4147 = vunpack.c.l.b16 %v4011
        %v4148 = vunpack.c.h.b16 %v4011
        %v4149 = vunpack.c.l.b16 %v4012
        %v4150 = vunpack.c.h.b16 %v4012
        %v4151 = vunpack.c.l.b16 %v4013
        %v4152 = vunpack.c.h.b16 %v4013
        %v4153 = vunpack.c.l.b16 %v4014
        %v4154 = vunpack.c.h.b16 %v4014
        %v4155 = vunpack.c.l.b16 %v4015
        %v4156 = vunpack.c.h.b16 %v4015
        %v4157 = vunpack.c.l.b16 %v4016
        %v4158 = vunpack.c.h.b16 %v4016
        %v4159 = vunpack.c.l.b16 %v4017
        %v4160 = vunpack.c.h.b16 %v4017
        %v4161 = vunpack.c.l.b16 %v4018
        %v4162 = vunpack.c.h.b16 %v4018
        %v4163 = vunpack.c.l.b16 %v4019
        %v4164 = vunpack.c.h.b16 %v4019
        %v4165 = vunpack.c.l.b16 %v4020
        %v4166 = vunpack.c.h.b16 %v4020
        %v4167 = vunpack.c.l.b16 %v4021
        %v4168 = vunpack.c.h.b16 %v4021
        %v4169 = vunpack.c.l.b16 %v4022
        %v4170 = vunpack.c.h.b16 %v4022
        %v4171 = vunpack.c.l.b16 %v4023
        %v4172 = vunpack.c.h.b16 %v4023
        %v4173 = vunpack.c.l.b16 %v4024
        %v4174 = vunpack.c.h.b16 %v4024
        %v4175 = vunpack.c.l.b16 %v4025
        %v4176 = vunpack.c.h.b16 %v4025
        %v4177 = vunpack.c.l.b16 %v4026
        %v4178 = vunpack.c.h.b16 %v4026
        %v4179 = vunpack.c.l.b16 %v4027
        %v4180 = vunpack.c.h.b16 %v4027
        %v4181 = vunpack.c.l.b16 %v4028
        %v4182 = vunpack.c.h.b16 %v4028
        %v4183 = vunpack.c.l.b16 %v4029
        %v4184 = vunpack.c.h.b16 %v4029
        %v4185 = vunpack.c.l.b16 %v4030
        %v4186 = vunpack.c.h.b16 %v4030
        %v4187 = vunpack.c.l.b16 %v4031
        %v4188 = vunpack.c.h.b16 %v4031
        %v4189 = vunpack.c.l.b16 %v4032
        %v4190 = vunpack.c.h.b16 %v4032
        %v4191 = vunpack.c.l.b16 %v4033
        %v4192 = vunpack.c.h.b16 %v4033
        %v4193 = vunpack.c.l.b16 %v4034
        %v4194 = vunpack.c.h.b16 %v4034
        %v4195 = vunpack.c.l.b16 %v4035
        %v4196 = vunpack.c.h.b16 %v4035
        %v4197 = vunpack.c.l.b16 %v4036
        %v4198 = vunpack.c.h.b16 %v4036
        %v4199 = vunpack.c.l.b16 %v4037
        %v4200 = vunpack.c.h.b16 %v4037
        %v4201 = vunpack.c.l.b16 %v4038
        %v4202 = vunpack.c.h.b16 %v4038
        %v4203 = vunpack.c.l.b16 %v4039
        %v4204 = vunpack.c.h.b16 %v4039
        %v4205 = vpack.c.b16 %v4111, %v4109
        %v4206 = vpack.c.b16 %v4112, %v4110
        %v4207 = vpack.c.b16 %v4115, %v4113
        %v4208 = vpack.c.b16 %v4116, %v4114
        %v4209 = vpack.c.b16 %v4119, %v4117
        %v4210 = vpack.c.b16 %v4120, %v4118
        %v4211 = vpack.c.b16 %v4123, %v4121
        %v4212 = vpack.c.b16 %v4124, %v4122
        %v4213 = vpack.c.b16 %v4127, %v4125
        %v4214 = vpack.c.b16 %v4128, %v4126
        %v4215 = vpack.c.b16 %v4131, %v4129
        %v4216 = vpack.c.b16 %v4132, %v4130
        %v4217 = vpack.c.b16 %v4135, %v4133
        %v4218 = vpack.c.b16 %v4136, %v4134
        %v4219 = vpack.c.b16 %v4139, %v4137
        %v4220 = vpack.c.b16 %v4140, %v4138
        %v4221 = vpack.c.b16 %v4143, %v4141
        %v4222 = vpack.c.b16 %v4144, %v4142
        %v4223 = vpack.c.b16 %v4147, %v4145
        %v4224 = vpack.c.b16 %v4148, %v4146
        %v4225 = vpack.c.b16 %v4151, %v4149
        %v4226 = vpack.c.b16 %v4152, %v4150
        %v4227 = vpack.c.b16 %v4155, %v4153
        %v4228 = vpack.c.b16 %v4156, %v4154
        %v4229 = vpack.c.b16 %v4159, %v4157
        %v4230 = vpack.c.b16 %v4160, %v4158
        %v4231 = vpack.c.b16 %v4163, %v4161
        %v4232 = vpack.c.b16 %v4164, %v4162
        %v4233 = vpack.c.b16 %v4167, %v4165
        %v4234 = vpack.c.b16 %v4168, %v4166
        %v4235 = vpack.c.b16 %v4171, %v4169
        %v4236 = vpack.c.b16 %v4172, %v4170
        %v4237 = vpack.c.b16 %v4175, %v4173
        %v4238 = vpack.c.b16 %v4176, %v4174
        %v4239 = vpack.c.b16 %v4179, %v4177
        %v4240 = vpack.c.b16 %v4180, %v4178
        %v4241 = vpack.c.b16 %v4183, %v4181
        %v4242 = vpack.c.b16 %v4184, %v4182
        %v4243 = vpack.c.b16 %v4187, %v4185
        %v4244 = vpack.c.b16 %v4188, %v4186
        %v4245 = vpack.c.b16 %v4191, %v4189
        %v4246 = vpack.c.b16 %v4192, %v4190
        %v4247 = vpack.c.b16 %v4195, %v4193
        %v4248 = vpack.c.b16 %v4196, %v4194
        %v4249 = vpack.c.b16 %v4199, %v4197
        %v4250 = vpack.c.b16 %v4200, %v4198
        %v4251 = vpack.c.b16 %v4203, %v4201
        %v4252 = vpack.c.b16 %v4204, %v4202
        %4301 = vmatprep.subr.bf16.mxu0 %v4206
        %4302 = vmatpush1.bf16.msra.mxu0 %v4205
        %4303 = vmatprep.subr.bf16.mxu0 %v4208
        %4304 = vmatpush1.bf16.msra.mxu0 %v4207
        %4305 = vmatprep.subr.bf16.mxu0 %v4210
        %4306 = vmatpush1.bf16.msra.mxu0 %v4209
        %4307 = vmatprep.subr.bf16.mxu0 %v4212
        %4308 = vmatpush1.bf16.msra.mxu0 %v4211
        %4309 = vmatprep.subr.bf16.mxu0 %v4214
        %4310 = vmatpush1.bf16.msra.mxu0 %v4213
        %4311 = vmatprep.subr.bf16.mxu0 %v4216
        %4312 = vmatpush1.bf16.msra.mxu0 %v4215
        %4313 = vmatprep.subr.bf16.mxu0 %v4218
        %4314 = vmatpush1.bf16.msra.mxu0 %v4217
        %4315 = vmatprep.subr.bf16.mxu0 %v4220
        %4316 = vmatpush1.bf16.msra.mxu0 %v4219
        %4317 = vmatprep.subr.bf16.mxu0 %v4222
        %4318 = vmatpush1.bf16.msra.mxu0 %v4221
        %4319 = vmatprep.subr.bf16.mxu0 %v4224
        %4320 = vmatpush1.bf16.msra.mxu0 %v4223
        %4321 = vmatprep.subr.bf16.mxu0 %v4226
        %4322 = vmatpush1.bf16.msra.mxu0 %v4225
        %4323 = vmatprep.subr.bf16.mxu0 %v4228
        %4324 = vmatpush1.bf16.msra.mxu0 %v4227
        %4325 = vmatprep.subr.bf16.mxu0 %v4230
        %4326 = vmatpush1.bf16.msra.mxu0 %v4229
        %4327 = vmatprep.subr.bf16.mxu0 %v4232
        %4328 = vmatpush1.bf16.msra.mxu0 %v4231
        %4329 = vmatprep.subr.bf16.mxu0 %v4234
        %4330 = vmatpush1.bf16.msra.mxu0 %v4233
        %4331 = vmatprep.subr.bf16.mxu0 %v4236
        %4332 = vmatpush1.bf16.msra.mxu0 %v4235
        %4333 = vmatprep.mubr.bf16.mxu0 %v4041
        %4334 = vmatmul.mubr.bf16.gmra.mrb[0].mxu0 %v4040
        %v4335 = vpop.f32.mrb[0].mxu0
        %v4336 = vadd.f32 %v4054, %v4335
        %v4337 = vpop.f32.mrb[0].mxu0
        %v4338 = vadd.f32 %v4058, %v4337
        %v4339 = vpop.f32.mrb[0].mxu0
        %v4340 = vadd.f32 %v4054, %v4339
        %v4341 = vpop.f32.mrb[0].mxu0
        %v4342 = vadd.f32 %v4058, %v4341
        %4343 = vmatprep.mubr.bf16.mxu0 %v4044
        %4344 = vmatmul.mubr.bf16.gmra.mrb[0].mxu0 %v4043
        %v4345 = vpop.f32.mrb[0].mxu0
        %v4346 = vadd.f32 %v4054, %v4345
        %v4347 = vpop.f32.mrb[0].mxu0
        %v4348 = vadd.f32 %v4058, %v4347
        %v4349 = vpop.f32.mrb[0].mxu0
        %v4350 = vadd.f32 %v4054, %v4349
        %v4351 = vpop.f32.mrb[0].mxu0
        %v4352 = vadd.f32 %v4058, %v4351
        %4353 = vmatprep.mubr.bf16.mxu0 %v4047
        %4354 = vmatmul.mubr.bf16.gmra.mrb[0].mxu0 %v4046
        %v4355 = vpop.f32.mrb[0].mxu0
        %v4356 = vadd.f32 %v4054, %v4355
        %v4357 = vpop.f32.mrb[0].mxu0
        %v4358 = vadd.f32 %v4058, %v4357
        %v4359 = vpop.f32.mrb[0].mxu0
        %v4360 = vpop.f32.mrb[0].mxu0
        %4361 = vdwg.mxu0
        %4362 = vmatprep.subr.bf16.mxu0 %v4238
        %4363 = vmatpush1.bf16.msra.mxu0 %v4237
        %4364 = vmatprep.subr.bf16.mxu0 %v4240
        %4365 = vmatpush1.bf16.msra.mxu0 %v4239
        %4366 = vmatprep.subr.bf16.mxu0 %v4242
        %4367 = vmatpush1.bf16.msra.mxu0 %v4241
        %4368 = vmatprep.subr.bf16.mxu0 %v4244
        %4369 = vmatpush1.bf16.msra.mxu0 %v4243
        %4370 = vmatprep.subr.bf16.mxu0 %v4246
        %4371 = vmatpush1.bf16.msra.mxu0 %v4245
        %4372 = vmatprep.subr.bf16.mxu0 %v4248
        %4373 = vmatpush1.bf16.msra.mxu0 %v4247
        %4374 = vmatprep.subr.bf16.mxu0 %v4250
        %4375 = vmatpush1.bf16.msra.mxu0 %v4249
        %4376 = vmatprep.subr.bf16.mxu0 %v4252
        %4377 = vmatpush1.bf16.msra.mxu0 %v4251
        %4378 = vmatprep.subr.bf16.mxu0 0
        %4379 = vmatpush1.bf16.msra.mxu0 0
        %4380 = vmatprep.subr.bf16.mxu0 0
        %4381 = vmatpush1.bf16.msra.mxu0 0
        %4382 = vmatprep.subr.bf16.mxu0 0
        %4383 = vmatpush1.bf16.msra.mxu0 0
        %4384 = vmatprep.subr.bf16.mxu0 0
        %4385 = vmatpush1.bf16.msra.mxu0 0
        %4386 = vmatprep.subr.bf16.mxu0 0
        %4387 = vmatpush1.bf16.msra.mxu0 0
        %4388 = vmatprep.subr.bf16.mxu0 0
        %4389 = vmatpush1.bf16.msra.mxu0 0
        %4390 = vmatprep.subr.bf16.mxu0 0
        %4391 = vmatpush1.bf16.msra.mxu0 0
        %4392 = vmatprep.subr.bf16.mxu0 0
        %4393 = vmatpush1.bf16.msra.mxu0 0
        %4394 = vmatprep.mubr.bf16.mxu0 0
        %4395 = vmatmul.mubr.bf16.gmra.mrb[0].mxu0 %v4042
        %v4396 = vpop.f32.mrb[0].mxu0
        %v4397 = vadd.f32 %v4336, %v4396
        %v4398 = vpop.f32.mrb[0].mxu0
        %v4399 = vadd.f32 %v4338, %v4398
        %v4400 = vpop.f32.mrb[0].mxu0
        %v4401 = vadd.f32 %v4340, %v4400
        %v4402 = vpop.f32.mrb[0].mxu0
        %v4403 = vadd.f32 %v4342, %v4402
        %4404 = vmatprep.mubr.bf16.mxu0 0
        %4405 = vmatmul.mubr.bf16.gmra.mrb[0].mxu0 %v4045
        %v4406 = vpop.f32.mrb[0].mxu0
        %v4407 = vadd.f32 %v4346, %v4406
        %v4408 = vpop.f32.mrb[0].mxu0
        %v4409 = vadd.f32 %v4348, %v4408
        %v4410 = vpop.f32.mrb[0].mxu0
        %v4411 = vadd.f32 %v4350, %v4410
        %v4412 = vpop.f32.mrb[0].mxu0
        %v4413 = vadd.f32 %v4352, %v4412
        %4414 = vmatprep.mubr.bf16.mxu0 0
        %4415 = vmatmul.mubr.bf16.gmra.mrb[0].mxu0 %v4048
        %v4416 = vpop.f32.mrb[0].mxu0
        %v4417 = vadd.f32 %v4356, %v4416
        %v4418 = vpop.f32.mrb[0].mxu0
        %v4419 = vadd.f32 %v4358, %v4418
        %v4420 = vpop.f32.mrb[0].mxu0
        %v4421 = vpop.f32.mrb[0].mxu0
        %4422 = vdwg.mxu0
        %v4429 = vrot.slane %v4407, 2
        %v4430 = vrot.slane %v4411, 2
        %v4431 = vsel %vm1885, %v4429, %v4430
        %v4432 = vrot.slane %v4409, 2
        %v4433 = vrot.slane %v4413, 2
        %v4434 = vsel %vm1885, %v4432, %v4433
        %v4435 = vrot.slane %v4417, 2
        %v4436 = vsel %vm1885, %v4430, %v4435
        %v4437 = vrot.slane %v4419, 2
        %v4438 = vsel %vm1885, %v4433, %v4437
        %v4445 = vsel %vm1785, %v4407, %v4431
        %v4446 = vsel %vm1785, %v4409, %v4434
        %v4447 = vadd.f32 %v4397, %v4401
        %v4448 = vadd.f32 %v4447, %v4445
        %v4449 = vadd.f32 %v4448, %v4436
        %v4450 = vsel %vm3885, %v4435, 0.0
        %v4451 = vadd.f32 %v4449, %v4450
        %v4452 = vrot.slane %v4451, 4
        %v4453 = vadd.f32 %v4451, %v4452
        %v4454 = vrot.slane %v4453, 2
        %v4455 = vadd.f32 %v4453, %v4454
        %v4456 = vrot.slane %v4455, 1
        %v4457 = vadd.f32 %v4455, %v4456
        %v4458 = vadd.f32 %v4399, %v4403
        %v4459 = vadd.f32 %v4458, %v4446
        %v4460 = vadd.f32 %v4459, %v4438
        %v4461 = vsel %vm3885, %v4437, 0.0
        %v4462 = vadd.f32 %v4460, %v4461
        %v4463 = vrot.slane %v4462, 4
        %v4464 = vadd.f32 %v4462, %v4463
        %v4465 = vrot.slane %v4464, 2
        %v4466 = vadd.f32 %v4464, %v4465
        %v4467 = vrot.slane %v4466, 1
        %v4468 = vadd.f32 %v4466, %v4467
        %v4469 = vmul.f32 %v4457, 0.027777778
        %v4470 = vmul.f32 %v4468, 0.027777778
        %v4471 = vsub.f32 %v4397, %v4469
        %v4472 = vsub.f32 %v4399, %v4470
        %v4473 = vsub.f32 %v4401, %v4469
        %v4474 = vsub.f32 %v4403, %v4470
        %v4475 = vsub.f32 %v4445, %v4469
        %v4476 = vsub.f32 %v4446, %v4470
        %v4477 = vsub.f32 %v4436, %v4469
        %v4478 = vsub.f32 %v4438, %v4470
        %v4479 = vsub.f32 %v4435, %v4469
        %v4480 = vsub.f32 %v4437, %v4470
        %v4481 = vmul.f32 %v4471, %v4471
        %v4482 = vmul.f32 %v4472, %v4472
        %v4483 = vmul.f32 %v4473, %v4473
        %v4484 = vmul.f32 %v4474, %v4474
        %v4485 = vmul.f32 %v4475, %v4475
        %v4486 = vmul.f32 %v4476, %v4476
        %v4487 = vmul.f32 %v4477, %v4477
        %v4488 = vmul.f32 %v4478, %v4478
        %v4489 = vmul.f32 %v4479, %v4479
        %v4490 = vmul.f32 %v4480, %v4480
        %v4491 = vadd.f32 %v4481, %v4483
        %v4492 = vadd.f32 %v4491, %v4485
        %v4493 = vadd.f32 %v4492, %v4487
        %v4494 = vsel %vm3885, %v4489, 0.0
        %v4495 = vadd.f32 %v4493, %v4494
        %v4496 = vrot.slane %v4495, 4
        %v4497 = vadd.f32 %v4495, %v4496
        %v4498 = vrot.slane %v4497, 2
        %v4499 = vadd.f32 %v4497, %v4498
        %v4500 = vrot.slane %v4499, 1
        %v4501 = vadd.f32 %v4499, %v4500
        %v4502 = vadd.f32 %v4482, %v4484
        %v4503 = vadd.f32 %v4502, %v4486
        %v4504 = vadd.f32 %v4503, %v4488
        %v4505 = vsel %vm3885, %v4490, 0.0
        %v4506 = vadd.f32 %v4504, %v4505
        %v4507 = vrot.slane %v4506, 4
        %v4508 = vadd.f32 %v4506, %v4507
        %v4509 = vrot.slane %v4508, 2
        %v4510 = vadd.f32 %v4508, %v4509
        %v4511 = vrot.slane %v4510, 1
        %v4512 = vadd.f32 %v4510, %v4511
        %v4513 = vmul.f32 %v4501, 0.027777778
        %v4514 = vmul.f32 %v4512, 0.027777778
        %v4515 = vadd.f32 %v4513, 1e-05
        %v4516 = vadd.f32 %v4514, 1e-05
        %v4517 = vrsqrt.pop %v4515
        %v4518 = vrsqrt.pop %v4516
        %v4519 = vmul.f32 %v4471, %v4517
        %v4520 = vmul.f32 %v4472, %v4518
        %v4521 = vmul.f32 %v4473, %v4517
        %v4522 = vmul.f32 %v4474, %v4518
        %v4523 = vmul.f32 %v4475, %v4517
        %v4524 = vmul.f32 %v4476, %v4518
        %v4525 = vmul.f32 %v4477, %v4517
        %v4526 = vmul.f32 %v4478, %v4518
        %v4527 = vmul.f32 %v4479, %v4517
        %v4528 = vmul.f32 %v4480, %v4518
        %v4529 = vld [vmem:[%s43] sm:$0x3]
        %v4531 = vlaneseq
        %v4532 = vshrl.u32 %v4531, 7
        %v4533 = vsub.s32 0, %v4532
        %v4534 = vrot.slane %v4529, %v4533
        %v4535 = vlaneseq
        %v4536 = vshrl.u32 %v4535, 7
        %v4537 = vsub.s32 1, %v4536
        %v4538 = vrot.slane %v4529, %v4537
        %v4541 = vmul.f32 %v4519, %v4534
        %v4542 = vmul.f32 %v4520, %v4538
        %v4543 = vmul.f32 %v4521, %v4534
        %v4544 = vmul.f32 %v4522, %v4538
        %v4545 = vmul.f32 %v4523, %v4534
        %v4546 = vmul.f32 %v4524, %v4538
        %v4547 = vmul.f32 %v4525, %v4534
        %v4548 = vmul.f32 %v4526, %v4538
        %v4549 = vmul.f32 %v4527, %v4534
        %v4550 = vmul.f32 %v4528, %v4538
        %v4551 = vld [vmem:[%s45] sm:$0x3]
        %v4553 = vlaneseq
        %v4554 = vshrl.u32 %v4553, 7
        %v4555 = vsub.s32 0, %v4554
        %v4556 = vrot.slane %v4551, %v4555
        %v4557 = vlaneseq
        %v4558 = vshrl.u32 %v4557, 7
        %v4559 = vsub.s32 1, %v4558
        %v4560 = vrot.slane %v4551, %v4559
        %v4563 = vadd.f32 %v4541, %v4556
        %v4564 = vadd.f32 %v4542, %v4560
        %v4565 = vadd.f32 %v4543, %v4556
        %v4566 = vadd.f32 %v4544, %v4560
        %v4567 = vadd.f32 %v4545, %v4556
        %v4568 = vadd.f32 %v4546, %v4560
        %v4569 = vadd.f32 %v4547, %v4556
        %v4570 = vadd.f32 %v4548, %v4560
        %v4571 = vadd.f32 %v4549, %v4556
        %v4572 = vadd.f32 %v4550, %v4560
        %v4573 = vmax.f32 %v4563, 0.0
        %v4574 = vmax.f32 %v4564, 0.0
        %v4575 = vmax.f32 %v4565, 0.0
        %v4576 = vmax.f32 %v4566, 0.0
        %v4577 = vmax.f32 %v4567, 0.0
        %v4578 = vmax.f32 %v4568, 0.0
        %v4579 = vmax.f32 %v4569, 0.0
        %v4580 = vmax.f32 %v4570, 0.0
        %v4581 = vmax.f32 %v4571, 0.0
        %v4582 = vmax.f32 %v4572, 0.0
        %v4593 = vrot.slane %v4573, 1
        %v4594 = vrot.slane %v4575, 1
        %v4595 = vsel %vm1514, %v4593, %v4594
        %v4596 = vrot.slane %v4574, 1
        %v4597 = vrot.slane %v4576, 1
        %v4598 = vsel %vm1514, %v4596, %v4597
        %v4599 = vrot.slane %v4577, 1
        %v4600 = vsel %vm1514, %v4594, %v4599
        %v4601 = vrot.slane %v4578, 1
        %v4602 = vsel %vm1514, %v4597, %v4601
        %v4603 = vrot.slane %v4579, 1
        %v4604 = vsel %vm1514, %v4599, %v4603
        %v4605 = vrot.slane %v4580, 1
        %v4606 = vsel %vm1514, %v4601, %v4605
        %v4607 = vrot.slane %v4581, 1
        %v4608 = vsel %vm1514, %v4603, %v4607
        %v4609 = vrot.slane %v4582, 1
        %v4610 = vsel %vm1514, %v4605, %v4609
        %v4621 = vrot.slane %v4573, 5
        %v4622 = vrot.slane %v4574, 5
        %v4625 = vsel %vm1545, %v4607, %v4621
        %v4626 = vsel %vm1545, %v4609, %v4622
        %v4627 = vrot.slane %v4573, 2
        %v4628 = vrot.slane %v4575, 2
        %v4629 = vsel %vm1885, %v4627, %v4628
        %v4630 = vrot.slane %v4574, 2
        %v4631 = vrot.slane %v4576, 2
        %v4632 = vsel %vm1885, %v4630, %v4631
        %v4633 = vrot.slane %v4577, 2
        %v4634 = vsel %vm1885, %v4628, %v4633
        %v4635 = vrot.slane %v4578, 2
        %v4636 = vsel %vm1885, %v4631, %v4635
        %v4637 = vrot.slane %v4579, 2
        %v4638 = vsel %vm1885, %v4633, %v4637
        %v4639 = vrot.slane %v4580, 2
        %v4640 = vsel %vm1885, %v4635, %v4639
        %v4641 = vrot.slane %v4581, 2
        %v4642 = vsel %vm1885, %v4637, %v4641
        %v4643 = vrot.slane %v4582, 2
        %v4644 = vsel %vm1885, %v4639, %v4643
        %v4655 = vrot.slane %v4573, 6
        %v4656 = vrot.slane %v4574, 6
        %v4659 = vsel %vm1785, %v4641, %v4655
        %v4660 = vsel %vm1785, %v4643, %v4656
        %v4661 = vld [vmem:[#allocation2] sm:$0xff]
        %v4662 = vld [vmem:[#allocation2 + $0x8] sm:$0xff]
        %v4663 = vld [vmem:[#allocation2 + $0x10] sm:$0xff]
        %v4664 = vld [vmem:[#allocation2 + $0x18] sm:$0xff]
        %v4665 = vld [vmem:[#allocation2 + $0x20] sm:$0xff]
        %v4666 = vld [vmem:[#allocation2 + $0x28] sm:$0xff]
        %v4667 = vld [vmem:[#allocation2 + $0x30] sm:$0xff]
        %v4668 = vld [vmem:[#allocation2 + $0x38] sm:$0xff]
        %v4669 = vld [vmem:[#allocation2 + $0x40] sm:$0xff]
        %v4670 = vld [vmem:[#allocation2 + $0x48] sm:$0xff]
        %v4671 = vld [vmem:[#allocation2 + $0x50] sm:$0xff]
        %v4672 = vld [vmem:[#allocation2 + $0x58] sm:$0xff]
        %v4673 = vld [vmem:[#allocation2 + $0x60] sm:$0xff]
        %v4674 = vld [vmem:[#allocation2 + $0x68] sm:$0xff]
        %v4675 = vld [vmem:[#allocation2 + $0x70] sm:$0xff]
        %v4676 = vld [vmem:[#allocation2 + $0x78] sm:$0xff]
        %v4677 = vld [vmem:[#allocation2 + $0x80] sm:$0xff]
        %v4678 = vld [vmem:[#allocation2 + $0x88] sm:$0xff]
        %v4679 = vld [vmem:[#allocation2 + $0x90] sm:$0xff]
        %v4680 = vld [vmem:[#allocation2 + $0x98] sm:$0xff]
        %v4681 = vld [vmem:[#allocation2 + $0xa0] sm:$0xff]
        %v4682 = vld [vmem:[#allocation2 + $0xa8] sm:$0xff]
        %v4683 = vld [vmem:[#allocation2 + $0xb0] sm:$0xff]
        %v4684 = vld [vmem:[#allocation2 + $0xb8] sm:$0xff]
        %v4685 = vld [vmem:[#allocation2 + $0xc0] sm:$0xff]
        %v4686 = vld [vmem:[#allocation2 + $0xc8] sm:$0xff]
        %v4687 = vld [vmem:[#allocation2 + $0xd0] sm:$0xff]
        %v4688 = vld [vmem:[#allocation2 + $0xd8] sm:$0xff]
        %v4689 = vld [vmem:[#allocation2 + $0xe0] sm:$0xff]
        %v4690 = vld [vmem:[#allocation2 + $0xe8] sm:$0xff]
        %v4691 = vld [vmem:[#allocation2 + $0xf0] sm:$0xff]
        %v4692 = vld [vmem:[#allocation2 + $0xf8] sm:$0xff]
        %v4693 = vld [vmem:[#allocation2 + $0x100] sm:$0xff]
        %v4694 = vld [vmem:[#allocation2 + $0x108] sm:$0xff]
        %v4695 = vld [vmem:[#allocation2 + $0x110] sm:$0xff]
        %v4696 = vld [vmem:[#allocation2 + $0x118] sm:$0xff]
        %v4697 = vld [vmem:[#allocation2 + $0x120] sm:$0xff]
        %v4698 = vld [vmem:[#allocation2 + $0x128] sm:$0xff]
        %v4699 = vld [vmem:[#allocation2 + $0x130] sm:$0xff]
        %v4700 = vld [vmem:[#allocation2 + $0x138] sm:$0xff]
        %v4701 = vld [vmem:[#allocation2 + $0x140] sm:$0xff]
        %v4702 = vld [vmem:[#allocation2 + $0x148] sm:$0xff]
        %v4703 = vld [vmem:[#allocation2 + $0x150] sm:$0xff]
        %v4704 = vld [vmem:[#allocation2 + $0x158] sm:$0xff]
        %v4705 = vld [vmem:[#allocation2 + $0x160] sm:$0xff]
        %v4706 = vld [vmem:[#allocation2 + $0x168] sm:$0xff]
        %v4707 = vld [vmem:[#allocation2 + $0x170] sm:$0xff]
        %v4708 = vld [vmem:[#allocation2 + $0x178] sm:$0xff]
        %v4709 = vld [vmem:[#allocation2 + $0x180] sm:$0xff]
        %v4710 = vld [vmem:[#allocation2 + $0x188] sm:$0xff]
        %v4711 = vld [vmem:[#allocation2 + $0x190] sm:$0xff]
        %v4712 = vld [vmem:[#allocation2 + $0x198] sm:$0xff]
        %v4713 = vld [vmem:[#allocation2 + $0x1a0] sm:$0xff]
        %v4714 = vld [vmem:[#allocation2 + $0x1a8] sm:$0xff]
        %v4715 = vld [vmem:[#allocation2 + $0x1b0] sm:$0xff]
        %v4716 = vld [vmem:[#allocation2 + $0x1b8] sm:$0xff]
        %v4717 = vld [vmem:[#allocation2 + $0x1c0] sm:$0xff]
        %v4718 = vld [vmem:[#allocation2 + $0x1c8] sm:$0xff]
        %v4719 = vld [vmem:[#allocation2 + $0x1d0] sm:$0xff]
        %v4720 = vld [vmem:[#allocation2 + $0x1d8] sm:$0xff]
        %v4721 = vld [vmem:[#allocation2 + $0x1e0] sm:$0xff]
        %v4722 = vld [vmem:[#allocation2 + $0x1e8] sm:$0xff]
        %v4723 = vld [vmem:[#allocation2 + $0x1f0] sm:$0xff]
        %v4724 = vld [vmem:[#allocation2 + $0x1f8] sm:$0xff]
        %v4725 = vld [vmem:[#allocation2 + $0x200] sm:$0xff]
        %v4726 = vld [vmem:[#allocation2 + $0x208] sm:$0xff]
        %v4727 = vld [vmem:[#allocation2 + $0x210] sm:$0xff]
        %v4728 = vld [vmem:[#allocation2 + $0x218] sm:$0xff]
        %v4729 = vld [vmem:[#allocation2 + $0x220] sm:$0xff]
        %v4730 = vld [vmem:[#allocation2 + $0x228] sm:$0xff]
        %v4731 = vld [vmem:[#allocation2 + $0x230] sm:$0xff]
        %v4732 = vld [vmem:[#allocation2 + $0x238] sm:$0xff]
        %v4733 = vld [vmem:[#allocation2 + $0x240] sm:$0xff]
        %v4734 = vld [vmem:[#allocation2 + $0x248] sm:$0xff]
        %v4735 = vld [vmem:[#allocation2 + $0x250] sm:$0xff]
        %v4736 = vld [vmem:[#allocation2 + $0x258] sm:$0xff]
        %v4737 = vld [vmem:[#allocation2 + $0x260] sm:$0xff]
        %v4738 = vld [vmem:[#allocation2 + $0x268] sm:$0xff]
        %v4739 = vld [vmem:[#allocation2 + $0x270] sm:$0xff]
        %v4740 = vld [vmem:[#allocation2 + $0x278] sm:$0xff]
        %v4741 = vld [vmem:[#allocation2 + $0x280] sm:$0xff]
        %v4742 = vld [vmem:[#allocation2 + $0x288] sm:$0xff]
        %v4743 = vld [vmem:[#allocation2 + $0x290] sm:$0xff]
        %v4744 = vld [vmem:[#allocation2 + $0x298] sm:$0xff]
        %v4745 = vld [vmem:[#allocation2 + $0x2a0] sm:$0xff]
        %v4746 = vld [vmem:[#allocation2 + $0x2a8] sm:$0xff]
        %v4747 = vld [vmem:[#allocation2 + $0x2b0] sm:$0xff]
        %v4748 = vld [vmem:[#allocation2 + $0x2b8] sm:$0xff]
        %v4749 = vld [vmem:[#allocation2 + $0x2c0] sm:$0xff]
        %v4750 = vld [vmem:[#allocation2 + $0x2c8] sm:$0xff]
        %v4751 = vld [vmem:[#allocation2 + $0x2d0] sm:$0xff]
        %v4752 = vld [vmem:[#allocation2 + $0x2d8] sm:$0xff]
        %v4753 = vld [vmem:[#allocation2 + $0x2e0] sm:$0xff]
        %v4754 = vld [vmem:[#allocation2 + $0x2e8] sm:$0xff]
        %v4755 = vld [vmem:[#allocation2 + $0x2f0] sm:$0xff]
        %v4756 = vld [vmem:[#allocation2 + $0x2f8] sm:$0xff]
        %v4757 = vld [vmem:[#allocation2 + $0x300] sm:$0xff]
        %v4758 = vld [vmem:[#allocation2 + $0x308] sm:$0xff]
        %v4759 = vld [vmem:[#allocation2 + $0x310] sm:$0xff]
        %v4760 = vld [vmem:[#allocation2 + $0x318] sm:$0xff]
        %v4761 = vld [vmem:[#allocation2 + $0x320] sm:$0xff]
        %v4762 = vld [vmem:[#allocation2 + $0x328] sm:$0xff]
        %v4763 = vld [vmem:[#allocation2 + $0x330] sm:$0xff]
        %v4764 = vld [vmem:[#allocation2 + $0x338] sm:$0xff]
        %v4765 = vld [vmem:[#allocation2 + $0x340] sm:$0xff]
        %v4766 = vld [vmem:[#allocation2 + $0x348] sm:$0xff]
        %v4767 = vld [vmem:[#allocation2 + $0x350] sm:$0xff]
        %v4768 = vld [vmem:[#allocation2 + $0x358] sm:$0xff]
        %v4769 = vld [vmem:[#allocation2 + $0x360] sm:$0xff]
        %v4770 = vld [vmem:[#allocation2 + $0x368] sm:$0xff]
        %v4771 = vld [vmem:[#allocation2 + $0x370] sm:$0xff]
        %v4772 = vld [vmem:[#allocation2 + $0x378] sm:$0xff]
        %v4773 = vld [vmem:[#allocation2 + $0x380] sm:$0xff]
        %v4774 = vld [vmem:[#allocation2 + $0x388] sm:$0xff]
        %v4775 = vld [vmem:[#allocation2 + $0x390] sm:$0xff]
        %v4776 = vld [vmem:[#allocation2 + $0x398] sm:$0xff]
        %v4777 = vld [vmem:[#allocation2 + $0x3a0] sm:$0xff]
        %v4778 = vld [vmem:[#allocation2 + $0x3a8] sm:$0xff]
        %v4779 = vld [vmem:[#allocation2 + $0x3b0] sm:$0xff]
        %v4780 = vld [vmem:[#allocation2 + $0x3b8] sm:$0xff]
        %v4781 = vld [vmem:[#allocation2 + $0x3c0] sm:$0xff]
        %v4782 = vld [vmem:[#allocation2 + $0x3c8] sm:$0xff]
        %v4783 = vld [vmem:[#allocation2 + $0x3d0] sm:$0xff]
        %v4784 = vld [vmem:[#allocation2 + $0x3d8] sm:$0xff]
        %v4785 = vld [vmem:[#allocation2 + $0x3e0] sm:$0xff]
        %v4786 = vld [vmem:[#allocation2 + $0x3e8] sm:$0xff]
        %v4787 = vld [vmem:[#allocation2 + $0x3f0] sm:$0xff]
        %v4788 = vld [vmem:[#allocation2 + $0x3f8] sm:$0xff]
        %v4789 = vld [vmem:[#allocation2 + $0x400] sm:$0xff]
        %v4790 = vld [vmem:[#allocation2 + $0x408] sm:$0xff]
        %v4791 = vld [vmem:[#allocation2 + $0x410] sm:$0xff]
        %v4792 = vld [vmem:[#allocation2 + $0x418] sm:$0xff]
        %v4793 = vld [vmem:[#allocation2 + $0x420] sm:$0xff]
        %v4794 = vld [vmem:[#allocation2 + $0x428] sm:$0xff]
        %v4795 = vld [vmem:[#allocation2 + $0x430] sm:$0xff]
        %v4796 = vld [vmem:[#allocation2 + $0x438] sm:$0xff]
        %v4797 = vld [vmem:[#allocation2 + $0x440] sm:$0xff]
        %v4798 = vld [vmem:[#allocation2 + $0x448] sm:$0xff]
        %v4799 = vld [vmem:[#allocation2 + $0x450] sm:$0xff]
        %v4800 = vld [vmem:[#allocation2 + $0x458] sm:$0xff]
        %v4801 = vld [vmem:[#allocation2 + $0x460] sm:$0xff]
        %v4802 = vld [vmem:[#allocation2 + $0x468] sm:$0xff]
        %v4803 = vld [vmem:[#allocation2 + $0x470] sm:$0xff]
        %v4804 = vld [vmem:[#allocation2 + $0x478] sm:$0xff]
        %v4805 = vld [vmem:[#allocation2 + $0x480] sm:$0xff]
        %v4806 = vld [vmem:[#allocation2 + $0x488] sm:$0xff]
        %v4807 = vld [vmem:[#allocation2 + $0x490] sm:$0xff]
        %v4808 = vld [vmem:[#allocation2 + $0x498] sm:$0xff]
        %v4809 = vld [vmem:[#allocation2 + $0x4a0] sm:$0xff]
        %v4810 = vld [vmem:[#allocation2 + $0x4a8] sm:$0xff]
        %v4811 = vld [vmem:[#allocation2 + $0x4b0] sm:$0xff]
        %v4812 = vld [vmem:[#allocation2 + $0x4b8] sm:$0xff]
        %v4813 = vld [vmem:[#allocation2 + $0x4c0] sm:$0xff]
        %v4814 = vld [vmem:[#allocation2 + $0x4c8] sm:$0xff]
        %v4815 = vld [vmem:[#allocation2 + $0x4d0] sm:$0xff]
        %v4816 = vld [vmem:[#allocation2 + $0x4d8] sm:$0xff]
        %v4817 = vld [vmem:[#allocation2 + $0x4e0] sm:$0xff]
        %v4818 = vld [vmem:[#allocation2 + $0x4e8] sm:$0xff]
        %v4819 = vld [vmem:[#allocation2 + $0x4f0] sm:$0xff]
        %v4820 = vld [vmem:[#allocation2 + $0x4f8] sm:$0xff]
        %v4821 = vld [vmem:[#allocation2 + $0x500] sm:$0xff]
        %v4822 = vld [vmem:[#allocation2 + $0x508] sm:$0xff]
        %v4823 = vld [vmem:[#allocation2 + $0x510] sm:$0xff]
        %v4824 = vld [vmem:[#allocation2 + $0x518] sm:$0xff]
        %v4825 = vld [vmem:[#allocation2 + $0x520] sm:$0xff]
        %v4826 = vld [vmem:[#allocation2 + $0x528] sm:$0xff]
        %v4827 = vld [vmem:[#allocation2 + $0x530] sm:$0xff]
        %v4828 = vld [vmem:[#allocation2 + $0x538] sm:$0xff]
        %v4829 = vld [vmem:[#allocation2 + $0x540] sm:$0xff]
        %v4830 = vld [vmem:[#allocation2 + $0x548] sm:$0xff]
        %v4831 = vld [vmem:[#allocation2 + $0x550] sm:$0xff]
        %v4832 = vld [vmem:[#allocation2 + $0x558] sm:$0xff]
        %v4833 = vld [vmem:[#allocation2 + $0x560] sm:$0xff]
        %v4834 = vld [vmem:[#allocation2 + $0x568] sm:$0xff]
        %v4835 = vld [vmem:[#allocation2 + $0x570] sm:$0xff]
        %v4836 = vld [vmem:[#allocation2 + $0x578] sm:$0xff]
        %v4837 = vld [vmem:[#allocation2 + $0x580] sm:$0xff]
        %v4838 = vld [vmem:[#allocation2 + $0x588] sm:$0xff]
        %v4839 = vld [vmem:[#allocation2 + $0x590] sm:$0xff]
        %v4840 = vld [vmem:[#allocation2 + $0x598] sm:$0xff]
        %v4841 = vld [vmem:[#allocation2 + $0x5a0] sm:$0xff]
        %v4842 = vld [vmem:[#allocation2 + $0x5a8] sm:$0xff]
        %v4843 = vld [vmem:[#allocation2 + $0x5b0] sm:$0xff]
        %v4844 = vld [vmem:[#allocation2 + $0x5b8] sm:$0xff]
        %v4845 = vld [vmem:[#allocation2 + $0x5c0] sm:$0xff]
        %v4846 = vld [vmem:[#allocation2 + $0x5c8] sm:$0xff]
        %v4847 = vld [vmem:[#allocation2 + $0x5d0] sm:$0xff]
        %v4848 = vld [vmem:[#allocation2 + $0x5d8] sm:$0xff]
        %v4849 = vld [vmem:[#allocation2 + $0x5e0] sm:$0xff]
        %v4850 = vld [vmem:[#allocation2 + $0x5e8] sm:$0xff]
        %v4851 = vld [vmem:[#allocation2 + $0x5f0] sm:$0xff]
        %v4852 = vld [vmem:[#allocation2 + $0x5f8] sm:$0xff]
        %v4853 = vpack.c.bf16 %v4575, %v4573
        %v4854 = vpack.c.bf16 %v4576, %v4574
        %v4855 = vpack.c.bf16 %v4600, %v4595
        %v4856 = vpack.c.bf16 %v4602, %v4598
        %v4857 = vpack.c.bf16 %v4634, %v4629
        %v4858 = vpack.c.bf16 %v4636, %v4632
        %v4859 = vpack.c.bf16 %v4579, %v4577
        %v4860 = vpack.c.bf16 %v4580, %v4578
        %v4861 = vpack.c.bf16 %v4608, %v4604
        %v4862 = vpack.c.bf16 %v4610, %v4606
        %v4863 = vpack.c.bf16 %v4642, %v4638
        %v4864 = vpack.c.bf16 %v4644, %v4640
        %v4865 = vpack.c.bf16 %v4581, %v4581
        %v4866 = vpack.c.bf16 %v4582, %v4582
        %v4867 = vpack.c.bf16 %v4625, %v4625
        %v4868 = vpack.c.bf16 %v4626, %v4626
        %v4869 = vpack.c.bf16 %v4659, %v4659
        %v4870 = vpack.c.bf16 %v4660, %v4660
        %v4871 = vld [vmem:[%s53] sm:$0xf]
        %v4873 = vlaneseq
        %v4874 = vshrl.u32 %v4873, 7
        %v4875 = vsub.s32 0, %v4874
        %v4876 = vrot.slane %v4871, %v4875
        %v4877 = vlaneseq
        %v4878 = vshrl.u32 %v4877, 7
        %v4879 = vsub.s32 1, %v4878
        %v4880 = vrot.slane %v4871, %v4879
        %v4881 = vlaneseq
        %v4882 = vshrl.u32 %v4881, 7
        %v4883 = vsub.s32 2, %v4882
        %v4884 = vrot.slane %v4871, %v4883
        %v4885 = vlaneseq
        %v4886 = vshrl.u32 %v4885, 7
        %v4887 = vsub.s32 3, %v4886
        %v4888 = vrot.slane %v4871, %v4887
        %v5085 = vunpack.c.l.b16 %v4661
        %v5086 = vunpack.c.h.b16 %v4661
        %v5087 = vunpack.c.l.b16 %v4662
        %v5088 = vunpack.c.h.b16 %v4662
        %v5089 = vunpack.c.l.b16 %v4663
        %v5090 = vunpack.c.h.b16 %v4663
        %v5091 = vunpack.c.l.b16 %v4664
        %v5092 = vunpack.c.h.b16 %v4664
        %v5093 = vunpack.c.l.b16 %v4665
        %v5094 = vunpack.c.h.b16 %v4665
        %v5095 = vunpack.c.l.b16 %v4666
        %v5096 = vunpack.c.h.b16 %v4666
        %v5097 = vunpack.c.l.b16 %v4667
        %v5098 = vunpack.c.h.b16 %v4667
        %v5099 = vunpack.c.l.b16 %v4668
        %v5100 = vunpack.c.h.b16 %v4668
        %v5101 = vunpack.c.l.b16 %v4669
        %v5102 = vunpack.c.h.b16 %v4669
        %v5103 = vunpack.c.l.b16 %v4670
        %v5104 = vunpack.c.h.b16 %v4670
        %v5105 = vunpack.c.l.b16 %v4671
        %v5106 = vunpack.c.h.b16 %v4671
        %v5107 = vunpack.c.l.b16 %v4672
        %v5108 = vunpack.c.h.b16 %v4672
        %v5109 = vunpack.c.l.b16 %v4673
        %v5110 = vunpack.c.h.b16 %v4673
        %v5111 = vunpack.c.l.b16 %v4674
        %v5112 = vunpack.c.h.b16 %v4674
        %v5113 = vunpack.c.l.b16 %v4675
        %v5114 = vunpack.c.h.b16 %v4675
        %v5115 = vunpack.c.l.b16 %v4676
        %v5116 = vunpack.c.h.b16 %v4676
        %v5117 = vunpack.c.l.b16 %v4677
        %v5118 = vunpack.c.h.b16 %v4677
        %v5119 = vunpack.c.l.b16 %v4678
        %v5120 = vunpack.c.h.b16 %v4678
        %v5121 = vunpack.c.l.b16 %v4679
        %v5122 = vunpack.c.h.b16 %v4679
        %v5123 = vunpack.c.l.b16 %v4680
        %v5124 = vunpack.c.h.b16 %v4680
        %v5125 = vunpack.c.l.b16 %v4681
        %v5126 = vunpack.c.h.b16 %v4681
        %v5127 = vunpack.c.l.b16 %v4682
        %v5128 = vunpack.c.h.b16 %v4682
        %v5129 = vunpack.c.l.b16 %v4683
        %v5130 = vunpack.c.h.b16 %v4683
        %v5131 = vunpack.c.l.b16 %v4684
        %v5132 = vunpack.c.h.b16 %v4684
        %v5133 = vunpack.c.l.b16 %v4685
        %v5134 = vunpack.c.h.b16 %v4685
        %v5135 = vunpack.c.l.b16 %v4686
        %v5136 = vunpack.c.h.b16 %v4686
        %v5137 = vunpack.c.l.b16 %v4687
        %v5138 = vunpack.c.h.b16 %v4687
        %v5139 = vunpack.c.l.b16 %v4688
        %v5140 = vunpack.c.h.b16 %v4688
        %v5141 = vunpack.c.l.b16 %v4689
        %v5142 = vunpack.c.h.b16 %v4689
        %v5143 = vunpack.c.l.b16 %v4690
        %v5144 = vunpack.c.h.b16 %v4690
        %v5145 = vunpack.c.l.b16 %v4691
        %v5146 = vunpack.c.h.b16 %v4691
        %v5147 = vunpack.c.l.b16 %v4692
        %v5148 = vunpack.c.h.b16 %v4692
        %v5149 = vunpack.c.l.b16 %v4693
        %v5150 = vunpack.c.h.b16 %v4693
        %v5151 = vunpack.c.l.b16 %v4694
        %v5152 = vunpack.c.h.b16 %v4694
        %v5153 = vunpack.c.l.b16 %v4695
        %v5154 = vunpack.c.h.b16 %v4695
        %v5155 = vunpack.c.l.b16 %v4696
        %v5156 = vunpack.c.h.b16 %v4696
        %v5157 = vunpack.c.l.b16 %v4697
        %v5158 = vunpack.c.h.b16 %v4697
        %v5159 = vunpack.c.l.b16 %v4698
        %v5160 = vunpack.c.h.b16 %v4698
        %v5161 = vunpack.c.l.b16 %v4699
        %v5162 = vunpack.c.h.b16 %v4699
        %v5163 = vunpack.c.l.b16 %v4700
        %v5164 = vunpack.c.h.b16 %v4700
        %v5165 = vunpack.c.l.b16 %v4701
        %v5166 = vunpack.c.h.b16 %v4701
        %v5167 = vunpack.c.l.b16 %v4702
        %v5168 = vunpack.c.h.b16 %v4702
        %v5169 = vunpack.c.l.b16 %v4703
        %v5170 = vunpack.c.h.b16 %v4703
        %v5171 = vunpack.c.l.b16 %v4704
        %v5172 = vunpack.c.h.b16 %v4704
        %v5173 = vunpack.c.l.b16 %v4705
        %v5174 = vunpack.c.h.b16 %v4705
        %v5175 = vunpack.c.l.b16 %v4706
        %v5176 = vunpack.c.h.b16 %v4706
        %v5177 = vunpack.c.l.b16 %v4707
        %v5178 = vunpack.c.h.b16 %v4707
        %v5179 = vunpack.c.l.b16 %v4708
        %v5180 = vunpack.c.h.b16 %v4708
        %v5181 = vunpack.c.l.b16 %v4709
        %v5182 = vunpack.c.h.b16 %v4709
        %v5183 = vunpack.c.l.b16 %v4710
        %v5184 = vunpack.c.h.b16 %v4710
        %v5185 = vunpack.c.l.b16 %v4711
        %v5186 = vunpack.c.h.b16 %v4711
        %v5187 = vunpack.c.l.b16 %v4712
        %v5188 = vunpack.c.h.b16 %v4712
        %v5189 = vunpack.c.l.b16 %v4713
        %v5190 = vunpack.c.h.b16 %v4713
        %v5191 = vunpack.c.l.b16 %v4714
        %v5192 = vunpack.c.h.b16 %v4714
        %v5193 = vunpack.c.l.b16 %v4715
        %v5194 = vunpack.c.h.b16 %v4715
        %v5195 = vunpack.c.l.b16 %v4716
        %v5196 = vunpack.c.h.b16 %v4716
        %v5197 = vunpack.c.l.b16 %v4717
        %v5198 = vunpack.c.h.b16 %v4717
        %v5199 = vunpack.c.l.b16 %v4718
        %v5200 = vunpack.c.h.b16 %v4718
        %v5201 = vunpack.c.l.b16 %v4719
        %v5202 = vunpack.c.h.b16 %v4719
        %v5203 = vunpack.c.l.b16 %v4720
        %v5204 = vunpack.c.h.b16 %v4720
        %v5205 = vunpack.c.l.b16 %v4721
        %v5206 = vunpack.c.h.b16 %v4721
        %v5207 = vunpack.c.l.b16 %v4722
        %v5208 = vunpack.c.h.b16 %v4722
        %v5209 = vunpack.c.l.b16 %v4723
        %v5210 = vunpack.c.h.b16 %v4723
        %v5211 = vunpack.c.l.b16 %v4724
        %v5212 = vunpack.c.h.b16 %v4724
        %v5213 = vunpack.c.l.b16 %v4725
        %v5214 = vunpack.c.h.b16 %v4725
        %v5215 = vunpack.c.l.b16 %v4726
        %v5216 = vunpack.c.h.b16 %v4726
        %v5217 = vunpack.c.l.b16 %v4727
        %v5218 = vunpack.c.h.b16 %v4727
        %v5219 = vunpack.c.l.b16 %v4728
        %v5220 = vunpack.c.h.b16 %v4728
        %v5221 = vunpack.c.l.b16 %v4729
        %v5222 = vunpack.c.h.b16 %v4729
        %v5223 = vunpack.c.l.b16 %v4730
        %v5224 = vunpack.c.h.b16 %v4730
        %v5225 = vunpack.c.l.b16 %v4731
        %v5226 = vunpack.c.h.b16 %v4731
        %v5227 = vunpack.c.l.b16 %v4732
        %v5228 = vunpack.c.h.b16 %v4732
        %v5229 = vunpack.c.l.b16 %v4733
        %v5230 = vunpack.c.h.b16 %v4733
        %v5231 = vunpack.c.l.b16 %v4734
        %v5232 = vunpack.c.h.b16 %v4734
        %v5233 = vunpack.c.l.b16 %v4735
        %v5234 = vunpack.c.h.b16 %v4735
        %v5235 = vunpack.c.l.b16 %v4736
        %v5236 = vunpack.c.h.b16 %v4736
        %v5237 = vunpack.c.l.b16 %v4737
        %v5238 = vunpack.c.h.b16 %v4737
        %v5239 = vunpack.c.l.b16 %v4738
        %v5240 = vunpack.c.h.b16 %v4738
        %v5241 = vunpack.c.l.b16 %v4739
        %v5242 = vunpack.c.h.b16 %v4739
        %v5243 = vunpack.c.l.b16 %v4740
        %v5244 = vunpack.c.h.b16 %v4740
        %v5245 = vunpack.c.l.b16 %v4741
        %v5246 = vunpack.c.h.b16 %v4741
        %v5247 = vunpack.c.l.b16 %v4742
        %v5248 = vunpack.c.h.b16 %v4742
        %v5249 = vunpack.c.l.b16 %v4743
        %v5250 = vunpack.c.h.b16 %v4743
        %v5251 = vunpack.c.l.b16 %v4744
        %v5252 = vunpack.c.h.b16 %v4744
        %v5253 = vunpack.c.l.b16 %v4745
        %v5254 = vunpack.c.h.b16 %v4745
        %v5255 = vunpack.c.l.b16 %v4746
        %v5256 = vunpack.c.h.b16 %v4746
        %v5257 = vunpack.c.l.b16 %v4747
        %v5258 = vunpack.c.h.b16 %v4747
        %v5259 = vunpack.c.l.b16 %v4748
        %v5260 = vunpack.c.h.b16 %v4748
        %v5261 = vunpack.c.l.b16 %v4749
        %v5262 = vunpack.c.h.b16 %v4749
        %v5263 = vunpack.c.l.b16 %v4750
        %v5264 = vunpack.c.h.b16 %v4750
        %v5265 = vunpack.c.l.b16 %v4751
        %v5266 = vunpack.c.h.b16 %v4751
        %v5267 = vunpack.c.l.b16 %v4752
        %v5268 = vunpack.c.h.b16 %v4752
        %v5269 = vunpack.c.l.b16 %v4753
        %v5270 = vunpack.c.h.b16 %v4753
        %v5271 = vunpack.c.l.b16 %v4754
        %v5272 = vunpack.c.h.b16 %v4754
        %v5273 = vunpack.c.l.b16 %v4755
        %v5274 = vunpack.c.h.b16 %v4755
        %v5275 = vunpack.c.l.b16 %v4756
        %v5276 = vunpack.c.h.b16 %v4756
        %v5277 = vunpack.c.l.b16 %v4757
        %v5278 = vunpack.c.h.b16 %v4757
        %v5279 = vunpack.c.l.b16 %v4758
        %v5280 = vunpack.c.h.b16 %v4758
        %v5281 = vunpack.c.l.b16 %v4759
        %v5282 = vunpack.c.h.b16 %v4759
        %v5283 = vunpack.c.l.b16 %v4760
        %v5284 = vunpack.c.h.b16 %v4760
        %v5285 = vunpack.c.l.b16 %v4761
        %v5286 = vunpack.c.h.b16 %v4761
        %v5287 = vunpack.c.l.b16 %v4762
        %v5288 = vunpack.c.h.b16 %v4762
        %v5289 = vunpack.c.l.b16 %v4763
        %v5290 = vunpack.c.h.b16 %v4763
        %v5291 = vunpack.c.l.b16 %v4764
        %v5292 = vunpack.c.h.b16 %v4764
        %v5293 = vunpack.c.l.b16 %v4765
        %v5294 = vunpack.c.h.b16 %v4765
        %v5295 = vunpack.c.l.b16 %v4766
        %v5296 = vunpack.c.h.b16 %v4766
        %v5297 = vunpack.c.l.b16 %v4767
        %v5298 = vunpack.c.h.b16 %v4767
        %v5299 = vunpack.c.l.b16 %v4768
        %v5300 = vunpack.c.h.b16 %v4768
        %v5301 = vunpack.c.l.b16 %v4769
        %v5302 = vunpack.c.h.b16 %v4769
        %v5303 = vunpack.c.l.b16 %v4770
        %v5304 = vunpack.c.h.b16 %v4770
        %v5305 = vunpack.c.l.b16 %v4771
        %v5306 = vunpack.c.h.b16 %v4771
        %v5307 = vunpack.c.l.b16 %v4772
        %v5308 = vunpack.c.h.b16 %v4772
        %v5309 = vunpack.c.l.b16 %v4773
        %v5310 = vunpack.c.h.b16 %v4773
        %v5311 = vunpack.c.l.b16 %v4774
        %v5312 = vunpack.c.h.b16 %v4774
        %v5313 = vunpack.c.l.b16 %v4775
        %v5314 = vunpack.c.h.b16 %v4775
        %v5315 = vunpack.c.l.b16 %v4776
        %v5316 = vunpack.c.h.b16 %v4776
        %v5317 = vunpack.c.l.b16 %v4777
        %v5318 = vunpack.c.h.b16 %v4777
        %v5319 = vunpack.c.l.b16 %v4778
        %v5320 = vunpack.c.h.b16 %v4778
        %v5321 = vunpack.c.l.b16 %v4779
        %v5322 = vunpack.c.h.b16 %v4779
        %v5323 = vunpack.c.l.b16 %v4780
        %v5324 = vunpack.c.h.b16 %v4780
        %v5325 = vunpack.c.l.b16 %v4781
        %v5326 = vunpack.c.h.b16 %v4781
        %v5327 = vunpack.c.l.b16 %v4782
        %v5328 = vunpack.c.h.b16 %v4782
        %v5329 = vunpack.c.l.b16 %v4783
        %v5330 = vunpack.c.h.b16 %v4783
        %v5331 = vunpack.c.l.b16 %v4784
        %v5332 = vunpack.c.h.b16 %v4784
        %v5333 = vunpack.c.l.b16 %v4785
        %v5334 = vunpack.c.h.b16 %v4785
        %v5335 = vunpack.c.l.b16 %v4786
        %v5336 = vunpack.c.h.b16 %v4786
        %v5337 = vunpack.c.l.b16 %v4787
        %v5338 = vunpack.c.h.b16 %v4787
        %v5339 = vunpack.c.l.b16 %v4788
        %v5340 = vunpack.c.h.b16 %v4788
        %v5341 = vunpack.c.l.b16 %v4789
        %v5342 = vunpack.c.h.b16 %v4789
        %v5343 = vunpack.c.l.b16 %v4790
        %v5344 = vunpack.c.h.b16 %v4790
        %v5345 = vunpack.c.l.b16 %v4791
        %v5346 = vunpack.c.h.b16 %v4791
        %v5347 = vunpack.c.l.b16 %v4792
        %v5348 = vunpack.c.h.b16 %v4792
        %v5349 = vunpack.c.l.b16 %v4793
        %v5350 = vunpack.c.h.b16 %v4793
        %v5351 = vunpack.c.l.b16 %v4794
        %v5352 = vunpack.c.h.b16 %v4794
        %v5353 = vunpack.c.l.b16 %v4795
        %v5354 = vunpack.c.h.b16 %v4795
        %v5355 = vunpack.c.l.b16 %v4796
        %v5356 = vunpack.c.h.b16 %v4796
        %v5357 = vunpack.c.l.b16 %v4797
        %v5358 = vunpack.c.h.b16 %v4797
        %v5359 = vunpack.c.l.b16 %v4798
        %v5360 = vunpack.c.h.b16 %v4798
        %v5361 = vunpack.c.l.b16 %v4799
        %v5362 = vunpack.c.h.b16 %v4799
        %v5363 = vunpack.c.l.b16 %v4800
        %v5364 = vunpack.c.h.b16 %v4800
        %v5365 = vunpack.c.l.b16 %v4801
        %v5366 = vunpack.c.h.b16 %v4801
        %v5367 = vunpack.c.l.b16 %v4802
        %v5368 = vunpack.c.h.b16 %v4802
        %v5369 = vunpack.c.l.b16 %v4803
        %v5370 = vunpack.c.h.b16 %v4803
        %v5371 = vunpack.c.l.b16 %v4804
        %v5372 = vunpack.c.h.b16 %v4804
        %v5373 = vunpack.c.l.b16 %v4805
        %v5374 = vunpack.c.h.b16 %v4805
        %v5375 = vunpack.c.l.b16 %v4806
        %v5376 = vunpack.c.h.b16 %v4806
        %v5377 = vunpack.c.l.b16 %v4807
        %v5378 = vunpack.c.h.b16 %v4807
        %v5379 = vunpack.c.l.b16 %v4808
        %v5380 = vunpack.c.h.b16 %v4808
        %v5381 = vunpack.c.l.b16 %v4809
        %v5382 = vunpack.c.h.b16 %v4809
        %v5383 = vunpack.c.l.b16 %v4810
        %v5384 = vunpack.c.h.b16 %v4810
        %v5385 = vunpack.c.l.b16 %v4811
        %v5386 = vunpack.c.h.b16 %v4811
        %v5387 = vunpack.c.l.b16 %v4812
        %v5388 = vunpack.c.h.b16 %v4812
        %v5389 = vunpack.c.l.b16 %v4813
        %v5390 = vunpack.c.h.b16 %v4813
        %v5391 = vunpack.c.l.b16 %v4814
        %v5392 = vunpack.c.h.b16 %v4814
        %v5393 = vunpack.c.l.b16 %v4815
        %v5394 = vunpack.c.h.b16 %v4815
        %v5395 = vunpack.c.l.b16 %v4816
        %v5396 = vunpack.c.h.b16 %v4816
        %v5397 = vunpack.c.l.b16 %v4817
        %v5398 = vunpack.c.h.b16 %v4817
        %v5399 = vunpack.c.l.b16 %v4818
        %v5400 = vunpack.c.h.b16 %v4818
        %v5401 = vunpack.c.l.b16 %v4819
        %v5402 = vunpack.c.h.b16 %v4819
        %v5403 = vunpack.c.l.b16 %v4820
        %v5404 = vunpack.c.h.b16 %v4820
        %v5405 = vunpack.c.l.b16 %v4821
        %v5406 = vunpack.c.h.b16 %v4821
        %v5407 = vunpack.c.l.b16 %v4822
        %v5408 = vunpack.c.h.b16 %v4822
        %v5409 = vunpack.c.l.b16 %v4823
        %v5410 = vunpack.c.h.b16 %v4823
        %v5411 = vunpack.c.l.b16 %v4824
        %v5412 = vunpack.c.h.b16 %v4824
        %v5413 = vunpack.c.l.b16 %v4825
        %v5414 = vunpack.c.h.b16 %v4825
        %v5415 = vunpack.c.l.b16 %v4826
        %v5416 = vunpack.c.h.b16 %v4826
        %v5417 = vunpack.c.l.b16 %v4827
        %v5418 = vunpack.c.h.b16 %v4827
        %v5419 = vunpack.c.l.b16 %v4828
        %v5420 = vunpack.c.h.b16 %v4828
        %v5421 = vunpack.c.l.b16 %v4829
        %v5422 = vunpack.c.h.b16 %v4829
        %v5423 = vunpack.c.l.b16 %v4830
        %v5424 = vunpack.c.h.b16 %v4830
        %v5425 = vunpack.c.l.b16 %v4831
        %v5426 = vunpack.c.h.b16 %v4831
        %v5427 = vunpack.c.l.b16 %v4832
        %v5428 = vunpack.c.h.b16 %v4832
        %v5429 = vunpack.c.l.b16 %v4833
        %v5430 = vunpack.c.h.b16 %v4833
        %v5431 = vunpack.c.l.b16 %v4834
        %v5432 = vunpack.c.h.b16 %v4834
        %v5433 = vunpack.c.l.b16 %v4835
        %v5434 = vunpack.c.h.b16 %v4835
        %v5435 = vunpack.c.l.b16 %v4836
        %v5436 = vunpack.c.h.b16 %v4836
        %v5437 = vunpack.c.l.b16 %v4837
        %v5438 = vunpack.c.h.b16 %v4837
        %v5439 = vunpack.c.l.b16 %v4838
        %v5440 = vunpack.c.h.b16 %v4838
        %v5441 = vunpack.c.l.b16 %v4839
        %v5442 = vunpack.c.h.b16 %v4839
        %v5443 = vunpack.c.l.b16 %v4840
        %v5444 = vunpack.c.h.b16 %v4840
        %v5445 = vunpack.c.l.b16 %v4841
        %v5446 = vunpack.c.h.b16 %v4841
        %v5447 = vunpack.c.l.b16 %v4842
        %v5448 = vunpack.c.h.b16 %v4842
        %v5449 = vunpack.c.l.b16 %v4843
        %v5450 = vunpack.c.h.b16 %v4843
        %v5451 = vunpack.c.l.b16 %v4844
        %v5452 = vunpack.c.h.b16 %v4844
        %v5453 = vunpack.c.l.b16 %v4845
        %v5454 = vunpack.c.h.b16 %v4845
        %v5455 = vunpack.c.l.b16 %v4846
        %v5456 = vunpack.c.h.b16 %v4846
        %v5457 = vunpack.c.l.b16 %v4847
        %v5458 = vunpack.c.h.b16 %v4847
        %v5459 = vunpack.c.l.b16 %v4848
        %v5460 = vunpack.c.h.b16 %v4848
        %v5461 = vunpack.c.l.b16 %v4849
        %v5462 = vunpack.c.h.b16 %v4849
        %v5463 = vunpack.c.l.b16 %v4850
        %v5464 = vunpack.c.h.b16 %v4850
        %v5465 = vunpack.c.l.b16 %v4851
        %v5466 = vunpack.c.h.b16 %v4851
        %v5467 = vunpack.c.l.b16 %v4852
        %v5468 = vunpack.c.h.b16 %v4852
        %v5469 = vpack.c.b16 %v5089, %v5085
        %v5470 = vpack.c.b16 %v5090, %v5086
        %v5471 = vpack.c.b16 %v5091, %v5087
        %v5472 = vpack.c.b16 %v5092, %v5088
        %v5473 = vpack.c.b16 %v5097, %v5093
        %v5474 = vpack.c.b16 %v5098, %v5094
        %v5475 = vpack.c.b16 %v5099, %v5095
        %v5476 = vpack.c.b16 %v5100, %v5096
        %v5477 = vpack.c.b16 %v5105, %v5101
        %v5478 = vpack.c.b16 %v5106, %v5102
        %v5479 = vpack.c.b16 %v5107, %v5103
        %v5480 = vpack.c.b16 %v5108, %v5104
        %v5481 = vpack.c.b16 %v5113, %v5109
        %v5482 = vpack.c.b16 %v5114, %v5110
        %v5483 = vpack.c.b16 %v5115, %v5111
        %v5484 = vpack.c.b16 %v5116, %v5112
        %v5485 = vpack.c.b16 %v5121, %v5117
        %v5486 = vpack.c.b16 %v5122, %v5118
        %v5487 = vpack.c.b16 %v5123, %v5119
        %v5488 = vpack.c.b16 %v5124, %v5120
        %v5489 = vpack.c.b16 %v5129, %v5125
        %v5490 = vpack.c.b16 %v5130, %v5126
        %v5491 = vpack.c.b16 %v5131, %v5127
        %v5492 = vpack.c.b16 %v5132, %v5128
        %v5493 = vpack.c.b16 %v5137, %v5133
        %v5494 = vpack.c.b16 %v5138, %v5134
        %v5495 = vpack.c.b16 %v5139, %v5135
        %v5496 = vpack.c.b16 %v5140, %v5136
        %v5497 = vpack.c.b16 %v5145, %v5141
        %v5498 = vpack.c.b16 %v5146, %v5142
        %v5499 = vpack.c.b16 %v5147, %v5143
        %v5500 = vpack.c.b16 %v5148, %v5144
        %v5501 = vpack.c.b16 %v5153, %v5149
        %v5502 = vpack.c.b16 %v5154, %v5150
        %v5503 = vpack.c.b16 %v5155, %v5151
        %v5504 = vpack.c.b16 %v5156, %v5152
        %v5505 = vpack.c.b16 %v5161, %v5157
        %v5506 = vpack.c.b16 %v5162, %v5158
        %v5507 = vpack.c.b16 %v5163, %v5159
        %v5508 = vpack.c.b16 %v5164, %v5160
        %v5509 = vpack.c.b16 %v5169, %v5165
        %v5510 = vpack.c.b16 %v5170, %v5166
        %v5511 = vpack.c.b16 %v5171, %v5167
        %v5512 = vpack.c.b16 %v5172, %v5168
        %v5513 = vpack.c.b16 %v5177, %v5173
        %v5514 = vpack.c.b16 %v5178, %v5174
        %v5515 = vpack.c.b16 %v5179, %v5175
        %v5516 = vpack.c.b16 %v5180, %v5176
        %v5517 = vpack.c.b16 %v5185, %v5181
        %v5518 = vpack.c.b16 %v5186, %v5182
        %v5519 = vpack.c.b16 %v5187, %v5183
        %v5520 = vpack.c.b16 %v5188, %v5184
        %v5521 = vpack.c.b16 %v5193, %v5189
        %v5522 = vpack.c.b16 %v5194, %v5190
        %v5523 = vpack.c.b16 %v5195, %v5191
        %v5524 = vpack.c.b16 %v5196, %v5192
        %v5525 = vpack.c.b16 %v5201, %v5197
        %v5526 = vpack.c.b16 %v5202, %v5198
        %v5527 = vpack.c.b16 %v5203, %v5199
        %v5528 = vpack.c.b16 %v5204, %v5200
        %v5529 = vpack.c.b16 %v5209, %v5205
        %v5530 = vpack.c.b16 %v5210, %v5206
        %v5531 = vpack.c.b16 %v5211, %v5207
        %v5532 = vpack.c.b16 %v5212, %v5208
        %v5533 = vpack.c.b16 %v5217, %v5213
        %v5534 = vpack.c.b16 %v5218, %v5214
        %v5535 = vpack.c.b16 %v5219, %v5215
        %v5536 = vpack.c.b16 %v5220, %v5216
        %v5537 = vpack.c.b16 %v5225, %v5221
        %v5538 = vpack.c.b16 %v5226, %v5222
        %v5539 = vpack.c.b16 %v5227, %v5223
        %v5540 = vpack.c.b16 %v5228, %v5224
        %v5541 = vpack.c.b16 %v5233, %v5229
        %v5542 = vpack.c.b16 %v5234, %v5230
        %v5543 = vpack.c.b16 %v5235, %v5231
        %v5544 = vpack.c.b16 %v5236, %v5232
        %v5545 = vpack.c.b16 %v5241, %v5237
        %v5546 = vpack.c.b16 %v5242, %v5238
        %v5547 = vpack.c.b16 %v5243, %v5239
        %v5548 = vpack.c.b16 %v5244, %v5240
        %v5549 = vpack.c.b16 %v5249, %v5245
        %v5550 = vpack.c.b16 %v5250, %v5246
        %v5551 = vpack.c.b16 %v5251, %v5247
        %v5552 = vpack.c.b16 %v5252, %v5248
        %v5553 = vpack.c.b16 %v5257, %v5253
        %v5554 = vpack.c.b16 %v5258, %v5254
        %v5555 = vpack.c.b16 %v5259, %v5255
        %v5556 = vpack.c.b16 %v5260, %v5256
        %v5557 = vpack.c.b16 %v5265, %v5261
        %v5558 = vpack.c.b16 %v5266, %v5262
        %v5559 = vpack.c.b16 %v5267, %v5263
        %v5560 = vpack.c.b16 %v5268, %v5264
        %v5561 = vpack.c.b16 %v5273, %v5269
        %v5562 = vpack.c.b16 %v5274, %v5270
        %v5563 = vpack.c.b16 %v5275, %v5271
        %v5564 = vpack.c.b16 %v5276, %v5272
        %v5565 = vpack.c.b16 %v5281, %v5277
        %v5566 = vpack.c.b16 %v5282, %v5278
        %v5567 = vpack.c.b16 %v5283, %v5279
        %v5568 = vpack.c.b16 %v5284, %v5280
        %v5569 = vpack.c.b16 %v5289, %v5285
        %v5570 = vpack.c.b16 %v5290, %v5286
        %v5571 = vpack.c.b16 %v5291, %v5287
        %v5572 = vpack.c.b16 %v5292, %v5288
        %v5573 = vpack.c.b16 %v5297, %v5293
        %v5574 = vpack.c.b16 %v5298, %v5294
        %v5575 = vpack.c.b16 %v5299, %v5295
        %v5576 = vpack.c.b16 %v5300, %v5296
        %v5577 = vpack.c.b16 %v5305, %v5301
        %v5578 = vpack.c.b16 %v5306, %v5302
        %v5579 = vpack.c.b16 %v5307, %v5303
        %v5580 = vpack.c.b16 %v5308, %v5304
        %v5581 = vpack.c.b16 %v5313, %v5309
        %v5582 = vpack.c.b16 %v5314, %v5310
        %v5583 = vpack.c.b16 %v5315, %v5311
        %v5584 = vpack.c.b16 %v5316, %v5312
        %v5585 = vpack.c.b16 %v5321, %v5317
        %v5586 = vpack.c.b16 %v5322, %v5318
        %v5587 = vpack.c.b16 %v5323, %v5319
        %v5588 = vpack.c.b16 %v5324, %v5320
        %v5589 = vpack.c.b16 %v5329, %v5325
        %v5590 = vpack.c.b16 %v5330, %v5326
        %v5591 = vpack.c.b16 %v5331, %v5327
        %v5592 = vpack.c.b16 %v5332, %v5328
        %v5593 = vpack.c.b16 %v5337, %v5333
        %v5594 = vpack.c.b16 %v5338, %v5334
        %v5595 = vpack.c.b16 %v5339, %v5335
        %v5596 = vpack.c.b16 %v5340, %v5336
        %v5597 = vpack.c.b16 %v5345, %v5341
        %v5598 = vpack.c.b16 %v5346, %v5342
        %v5599 = vpack.c.b16 %v5347, %v5343
        %v5600 = vpack.c.b16 %v5348, %v5344
        %v5601 = vpack.c.b16 %v5353, %v5349
        %v5602 = vpack.c.b16 %v5354, %v5350
        %v5603 = vpack.c.b16 %v5355, %v5351
        %v5604 = vpack.c.b16 %v5356, %v5352
        %v5605 = vpack.c.b16 %v5361, %v5357
        %v5606 = vpack.c.b16 %v5362, %v5358
        %v5607 = vpack.c.b16 %v5363, %v5359
        %v5608 = vpack.c.b16 %v5364, %v5360
        %v5609 = vpack.c.b16 %v5369, %v5365
        %v5610 = vpack.c.b16 %v5370, %v5366
        %v5611 = vpack.c.b16 %v5371, %v5367
        %v5612 = vpack.c.b16 %v5372, %v5368
        %v5613 = vpack.c.b16 %v5377, %v5373
        %v5614 = vpack.c.b16 %v5378, %v5374
        %v5615 = vpack.c.b16 %v5379, %v5375
        %v5616 = vpack.c.b16 %v5380, %v5376
        %v5617 = vpack.c.b16 %v5385, %v5381
        %v5618 = vpack.c.b16 %v5386, %v5382
        %v5619 = vpack.c.b16 %v5387, %v5383
        %v5620 = vpack.c.b16 %v5388, %v5384
        %v5621 = vpack.c.b16 %v5393, %v5389
        %v5622 = vpack.c.b16 %v5394, %v5390
        %v5623 = vpack.c.b16 %v5395, %v5391
        %v5624 = vpack.c.b16 %v5396, %v5392
        %v5625 = vpack.c.b16 %v5401, %v5397
        %v5626 = vpack.c.b16 %v5402, %v5398
        %v5627 = vpack.c.b16 %v5403, %v5399
        %v5628 = vpack.c.b16 %v5404, %v5400
        %v5629 = vpack.c.b16 %v5409, %v5405
        %v5630 = vpack.c.b16 %v5410, %v5406
        %v5631 = vpack.c.b16 %v5411, %v5407
        %v5632 = vpack.c.b16 %v5412, %v5408
        %v5633 = vpack.c.b16 %v5417, %v5413
        %v5634 = vpack.c.b16 %v5418, %v5414
        %v5635 = vpack.c.b16 %v5419, %v5415
        %v5636 = vpack.c.b16 %v5420, %v5416
        %v5637 = vpack.c.b16 %v5425, %v5421
        %v5638 = vpack.c.b16 %v5426, %v5422
        %v5639 = vpack.c.b16 %v5427, %v5423
        %v5640 = vpack.c.b16 %v5428, %v5424
        %v5641 = vpack.c.b16 %v5433, %v5429
        %v5642 = vpack.c.b16 %v5434, %v5430
        %v5643 = vpack.c.b16 %v5435, %v5431
        %v5644 = vpack.c.b16 %v5436, %v5432
        %v5645 = vpack.c.b16 %v5441, %v5437
        %v5646 = vpack.c.b16 %v5442, %v5438
        %v5647 = vpack.c.b16 %v5443, %v5439
        %v5648 = vpack.c.b16 %v5444, %v5440
        %v5649 = vpack.c.b16 %v5449, %v5445
        %v5650 = vpack.c.b16 %v5450, %v5446
        %v5651 = vpack.c.b16 %v5451, %v5447
        %v5652 = vpack.c.b16 %v5452, %v5448
        %v5653 = vpack.c.b16 %v5457, %v5453
        %v5654 = vpack.c.b16 %v5458, %v5454
        %v5655 = vpack.c.b16 %v5459, %v5455
        %v5656 = vpack.c.b16 %v5460, %v5456
        %v5657 = vpack.c.b16 %v5465, %v5461
        %v5658 = vpack.c.b16 %v5466, %v5462
        %v5659 = vpack.c.b16 %v5467, %v5463
        %v5660 = vpack.c.b16 %v5468, %v5464
        %5853 = vmatprep.subr.bf16.mxu0 %v5470
        %5854 = vmatpush1.bf16.msra.mxu0 %v5469
        %5855 = vmatprep.subr.bf16.mxu0 %v5474
        %5856 = vmatpush1.bf16.msra.mxu0 %v5473
        %5857 = vmatprep.subr.bf16.mxu0 %v5478
        %5858 = vmatpush1.bf16.msra.mxu0 %v5477
        %5859 = vmatprep.subr.bf16.mxu0 %v5482
        %5860 = vmatpush1.bf16.msra.mxu0 %v5481
        %5861 = vmatprep.subr.bf16.mxu0 %v5486
        %5862 = vmatpush1.bf16.msra.mxu0 %v5485
        %5863 = vmatprep.subr.bf16.mxu0 %v5490
        %5864 = vmatpush1.bf16.msra.mxu0 %v5489
        %5865 = vmatprep.subr.bf16.mxu0 %v5494
        %5866 = vmatpush1.bf16.msra.mxu0 %v5493
        %5867 = vmatprep.subr.bf16.mxu0 %v5498
        %5868 = vmatpush1.bf16.msra.mxu0 %v5497
        %5869 = vmatprep.subr.bf16.mxu0 %v5502
        %5870 = vmatpush1.bf16.msra.mxu0 %v5501
        %5871 = vmatprep.subr.bf16.mxu0 %v5506
        %5872 = vmatpush1.bf16.msra.mxu0 %v5505
        %5873 = vmatprep.subr.bf16.mxu0 %v5510
        %5874 = vmatpush1.bf16.msra.mxu0 %v5509
        %5875 = vmatprep.subr.bf16.mxu0 %v5514
        %5876 = vmatpush1.bf16.msra.mxu0 %v5513
        %5877 = vmatprep.subr.bf16.mxu0 %v5518
        %5878 = vmatpush1.bf16.msra.mxu0 %v5517
        %5879 = vmatprep.subr.bf16.mxu0 %v5522
        %5880 = vmatpush1.bf16.msra.mxu0 %v5521
        %5881 = vmatprep.subr.bf16.mxu0 %v5526
        %5882 = vmatpush1.bf16.msra.mxu0 %v5525
        %5883 = vmatprep.subr.bf16.mxu0 %v5530
        %5884 = vmatpush1.bf16.msra.mxu0 %v5529
        %5885 = vmatprep.mubr.bf16.mxu0 %v4854
        %5886 = vmatmul.mubr.bf16.gmra.mrb[0].mxu0 %v4853
        %v5887 = vpop.f32.mrb[0].mxu0
        %v5888 = vadd.f32 %v4876, %v5887
        %v5889 = vpop.f32.mrb[0].mxu0
        %v5890 = vadd.f32 %v4880, %v5889
        %v5891 = vpop.f32.mrb[0].mxu0
        %v5892 = vadd.f32 %v4876, %v5891
        %v5893 = vpop.f32.mrb[0].mxu0
        %v5894 = vadd.f32 %v4880, %v5893
        %5895 = vmatprep.mubr.bf16.mxu0 %v4860
        %5896 = vmatmul.mubr.bf16.gmra.mrb[0].mxu0 %v4859
        %v5897 = vpop.f32.mrb[0].mxu0
        %v5898 = vadd.f32 %v4876, %v5897
        %v5899 = vpop.f32.mrb[0].mxu0
        %v5900 = vadd.f32 %v4880, %v5899
        %v5901 = vpop.f32.mrb[0].mxu0
        %v5902 = vadd.f32 %v4876, %v5901
        %v5903 = vpop.f32.mrb[0].mxu0
        %v5904 = vadd.f32 %v4880, %v5903
        %5905 = vmatprep.mubr.bf16.mxu0 %v4866
        %5906 = vmatmul.mubr.bf16.gmra.mrb[0].mxu0 %v4865
        %v5907 = vpop.f32.mrb[0].mxu0
        %v5908 = vadd.f32 %v4876, %v5907
        %v5909 = vpop.f32.mrb[0].mxu0
        %v5910 = vadd.f32 %v4880, %v5909
        %v5911 = vpop.f32.mrb[0].mxu0
        %v5912 = vpop.f32.mrb[0].mxu0
        %5913 = vdwg.mxu0
        %5914 = vmatprep.subr.bf16.mxu0 %v5534
        %5915 = vmatpush1.bf16.msra.mxu0 %v5533
        %5916 = vmatprep.subr.bf16.mxu0 %v5538
        %5917 = vmatpush1.bf16.msra.mxu0 %v5537
        %5918 = vmatprep.subr.bf16.mxu0 %v5542
        %5919 = vmatpush1.bf16.msra.mxu0 %v5541
        %5920 = vmatprep.subr.bf16.mxu0 %v5546
        %5921 = vmatpush1.bf16.msra.mxu0 %v5545
        %5922 = vmatprep.subr.bf16.mxu0 %v5550
        %5923 = vmatpush1.bf16.msra.mxu0 %v5549
        %5924 = vmatprep.subr.bf16.mxu0 %v5554
        %5925 = vmatpush1.bf16.msra.mxu0 %v5553
        %5926 = vmatprep.subr.bf16.mxu0 %v5558
        %5927 = vmatpush1.bf16.msra.mxu0 %v5557
        %5928 = vmatprep.subr.bf16.mxu0 %v5562
        %5929 = vmatpush1.bf16.msra.mxu0 %v5561
        %5930 = vmatprep.subr.bf16.mxu0 %v5566
        %5931 = vmatpush1.bf16.msra.mxu0 %v5565
        %5932 = vmatprep.subr.bf16.mxu0 %v5570
        %5933 = vmatpush1.bf16.msra.mxu0 %v5569
        %5934 = vmatprep.subr.bf16.mxu0 %v5574
        %5935 = vmatpush1.bf16.msra.mxu0 %v5573
        %5936 = vmatprep.subr.bf16.mxu0 %v5578
        %5937 = vmatpush1.bf16.msra.mxu0 %v5577
        %5938 = vmatprep.subr.bf16.mxu0 %v5582
        %5939 = vmatpush1.bf16.msra.mxu0 %v5581
        %5940 = vmatprep.subr.bf16.mxu0 %v5586
        %5941 = vmatpush1.bf16.msra.mxu0 %v5585
        %5942 = vmatprep.subr.bf16.mxu0 %v5590
        %5943 = vmatpush1.bf16.msra.mxu0 %v5589
        %5944 = vmatprep.subr.bf16.mxu0 %v5594
        %5945 = vmatpush1.bf16.msra.mxu0 %v5593
        %5946 = vmatprep.mubr.bf16.mxu0 %v4856
        %5947 = vmatmul.mubr.bf16.gmra.mrb[0].mxu0 %v4855
        %v5948 = vpop.f32.mrb[0].mxu0
        %v5949 = vadd.f32 %v5888, %v5948
        %v5950 = vpop.f32.mrb[0].mxu0
        %v5951 = vadd.f32 %v5890, %v5950
        %v5952 = vpop.f32.mrb[0].mxu0
        %v5953 = vadd.f32 %v5892, %v5952
        %v5954 = vpop.f32.mrb[0].mxu0
        %v5955 = vadd.f32 %v5894, %v5954
        %5956 = vmatprep.mubr.bf16.mxu0 %v4862
        %5957 = vmatmul.mubr.bf16.gmra.mrb[0].mxu0 %v4861
        %v5958 = vpop.f32.mrb[0].mxu0
        %v5959 = vadd.f32 %v5898, %v5958
        %v5960 = vpop.f32.mrb[0].mxu0
        %v5961 = vadd.f32 %v5900, %v5960
        %v5962 = vpop.f32.mrb[0].mxu0
        %v5963 = vadd.f32 %v5902, %v5962
        %v5964 = vpop.f32.mrb[0].mxu0
        %v5965 = vadd.f32 %v5904, %v5964
        %5966 = vmatprep.mubr.bf16.mxu0 %v4868
        %5967 = vmatmul.mubr.bf16.gmra.mrb[0].mxu0 %v4867
        %v5968 = vpop.f32.mrb[0].mxu0
        %v5969 = vadd.f32 %v5908, %v5968
        %v5970 = vpop.f32.mrb[0].mxu0
        %v5971 = vadd.f32 %v5910, %v5970
        %v5972 = vpop.f32.mrb[0].mxu0
        %v5973 = vpop.f32.mrb[0].mxu0
        %5974 = vdwg.mxu0
        %5975 = vmatprep.subr.bf16.mxu0 %v5598
        %5976 = vmatpush1.bf16.msra.mxu0 %v5597
        %5977 = vmatprep.subr.bf16.mxu0 %v5602
        %5978 = vmatpush1.bf16.msra.mxu0 %v5601
        %5979 = vmatprep.subr.bf16.mxu0 %v5606
        %5980 = vmatpush1.bf16.msra.mxu0 %v5605
        %5981 = vmatprep.subr.bf16.mxu0 %v5610
        %5982 = vmatpush1.bf16.msra.mxu0 %v5609
        %5983 = vmatprep.subr.bf16.mxu0 %v5614
        %5984 = vmatpush1.bf16.msra.mxu0 %v5613
        %5985 = vmatprep.subr.bf16.mxu0 %v5618
        %5986 = vmatpush1.bf16.msra.mxu0 %v5617
        %5987 = vmatprep.subr.bf16.mxu0 %v5622
        %5988 = vmatpush1.bf16.msra.mxu0 %v5621
        %5989 = vmatprep.subr.bf16.mxu0 %v5626
        %5990 = vmatpush1.bf16.msra.mxu0 %v5625
        %5991 = vmatprep.subr.bf16.mxu0 %v5630
        %5992 = vmatpush1.bf16.msra.mxu0 %v5629
        %5993 = vmatprep.subr.bf16.mxu0 %v5634
        %5994 = vmatpush1.bf16.msra.mxu0 %v5633
        %5995 = vmatprep.subr.bf16.mxu0 %v5638
        %5996 = vmatpush1.bf16.msra.mxu0 %v5637
        %5997 = vmatprep.subr.bf16.mxu0 %v5642
        %5998 = vmatpush1.bf16.msra.mxu0 %v5641
        %5999 = vmatprep.subr.bf16.mxu0 %v5646
        %6000 = vmatpush1.bf16.msra.mxu0 %v5645
        %6001 = vmatprep.subr.bf16.mxu0 %v5650
        %6002 = vmatpush1.bf16.msra.mxu0 %v5649
        %6003 = vmatprep.subr.bf16.mxu0 %v5654
        %6004 = vmatpush1.bf16.msra.mxu0 %v5653
        %6005 = vmatprep.subr.bf16.mxu0 %v5658
        %6006 = vmatpush1.bf16.msra.mxu0 %v5657
        %6007 = vmatprep.mubr.bf16.mxu0 %v4858
        %6008 = vmatmul.mubr.bf16.gmra.mrb[0].mxu0 %v4857
        %v6009 = vpop.f32.mrb[0].mxu0
        %v6010 = vadd.f32 %v5949, %v6009
        %v6011 = vpop.f32.mrb[0].mxu0
        %v6012 = vadd.f32 %v5951, %v6011
        %v6013 = vpop.f32.mrb[0].mxu0
        %v6014 = vadd.f32 %v5953, %v6013
        %v6015 = vpop.f32.mrb[0].mxu0
        %v6016 = vadd.f32 %v5955, %v6015
        %6017 = vmatprep.mubr.bf16.mxu0 %v4864
        %6018 = vmatmul.mubr.bf16.gmra.mrb[0].mxu0 %v4863
        %v6019 = vpop.f32.mrb[0].mxu0
        %v6020 = vadd.f32 %v5959, %v6019
        %v6021 = vpop.f32.mrb[0].mxu0
        %v6022 = vadd.f32 %v5961, %v6021
        %v6023 = vpop.f32.mrb[0].mxu0
        %v6024 = vadd.f32 %v5963, %v6023
        %v6025 = vpop.f32.mrb[0].mxu0
        %v6026 = vadd.f32 %v5965, %v6025
        %6027 = vmatprep.mubr.bf16.mxu0 %v4870
        %6028 = vmatmul.mubr.bf16.gmra.mrb[0].mxu0 %v4869
        %v6029 = vpop.f32.mrb[0].mxu0
        %v6030 = vadd.f32 %v5969, %v6029
        %v6031 = vpop.f32.mrb[0].mxu0
        %v6032 = vadd.f32 %v5971, %v6031
        %v6033 = vpop.f32.mrb[0].mxu0
        %v6034 = vpop.f32.mrb[0].mxu0
        %6035 = vdwg.mxu0
        %6036 = vmatprep.subr.bf16.mxu0 %v5472
        %6037 = vmatpush1.bf16.msra.mxu0 %v5471
        %6038 = vmatprep.subr.bf16.mxu0 %v5476
        %6039 = vmatpush1.bf16.msra.mxu0 %v5475
        %6040 = vmatprep.subr.bf16.mxu0 %v5480
        %6041 = vmatpush1.bf16.msra.mxu0 %v5479
        %6042 = vmatprep.subr.bf16.mxu0 %v5484
        %6043 = vmatpush1.bf16.msra.mxu0 %v5483
        %6044 = vmatprep.subr.bf16.mxu0 %v5488
        %6045 = vmatpush1.bf16.msra.mxu0 %v5487
        %6046 = vmatprep.subr.bf16.mxu0 %v5492
        %6047 = vmatpush1.bf16.msra.mxu0 %v5491
        %6048 = vmatprep.subr.bf16.mxu0 %v5496
        %6049 = vmatpush1.bf16.msra.mxu0 %v5495
        %6050 = vmatprep.subr.bf16.mxu0 %v5500
        %6051 = vmatpush1.bf16.msra.mxu0 %v5499
        %6052 = vmatprep.subr.bf16.mxu0 %v5504
        %6053 = vmatpush1.bf16.msra.mxu0 %v5503
        %6054 = vmatprep.subr.bf16.mxu0 %v5508
        %6055 = vmatpush1.bf16.msra.mxu0 %v5507
        %6056 = vmatprep.subr.bf16.mxu0 %v5512
        %6057 = vmatpush1.bf16.msra.mxu0 %v5511
        %6058 = vmatprep.subr.bf16.mxu0 %v5516
        %6059 = vmatpush1.bf16.msra.mxu0 %v5515
        %6060 = vmatprep.subr.bf16.mxu0 %v5520
        %6061 = vmatpush1.bf16.msra.mxu0 %v5519
        %6062 = vmatprep.subr.bf16.mxu0 %v5524
        %6063 = vmatpush1.bf16.msra.mxu0 %v5523
        %6064 = vmatprep.subr.bf16.mxu0 %v5528
        %6065 = vmatpush1.bf16.msra.mxu0 %v5527
        %6066 = vmatprep.subr.bf16.mxu0 %v5532
        %6067 = vmatpush1.bf16.msra.mxu0 %v5531
        %6068 = vmatprep.mubr.bf16.mxu0 %v4854
        %6069 = vmatmul.mubr.bf16.gmra.mrb[0].mxu0 %v4853
        %v6070 = vpop.f32.mrb[0].mxu0
        %v6071 = vadd.f32 %v4884, %v6070
        %v6072 = vpop.f32.mrb[0].mxu0
        %v6073 = vadd.f32 %v4888, %v6072
        %v6074 = vpop.f32.mrb[0].mxu0
        %v6075 = vadd.f32 %v4884, %v6074
        %v6076 = vpop.f32.mrb[0].mxu0
        %v6077 = vadd.f32 %v4888, %v6076
        %6078 = vmatprep.mubr.bf16.mxu0 %v4860
        %6079 = vmatmul.mubr.bf16.gmra.mrb[0].mxu0 %v4859
        %v6080 = vpop.f32.mrb[0].mxu0
        %v6081 = vadd.f32 %v4884, %v6080
        %v6082 = vpop.f32.mrb[0].mxu0
        %v6083 = vadd.f32 %v4888, %v6082
        %v6084 = vpop.f32.mrb[0].mxu0
        %v6085 = vadd.f32 %v4884, %v6084
        %v6086 = vpop.f32.mrb[0].mxu0
        %v6087 = vadd.f32 %v4888, %v6086
        %6088 = vmatprep.mubr.bf16.mxu0 %v4866
        %6089 = vmatmul.mubr.bf16.gmra.mrb[0].mxu0 %v4865
        %v6090 = vpop.f32.mrb[0].mxu0
        %v6091 = vadd.f32 %v4884, %v6090
        %v6092 = vpop.f32.mrb[0].mxu0
        %v6093 = vadd.f32 %v4888, %v6092
        %v6094 = vpop.f32.mrb[0].mxu0
        %v6095 = vpop.f32.mrb[0].mxu0
        %6096 = vdwg.mxu0
        %6097 = vmatprep.subr.bf16.mxu0 %v5536
        %6098 = vmatpush1.bf16.msra.mxu0 %v5535
        %6099 = vmatprep.subr.bf16.mxu0 %v5540
        %6100 = vmatpush1.bf16.msra.mxu0 %v5539
        %6101 = vmatprep.subr.bf16.mxu0 %v5544
        %6102 = vmatpush1.bf16.msra.mxu0 %v5543
        %6103 = vmatprep.subr.bf16.mxu0 %v5548
        %6104 = vmatpush1.bf16.msra.mxu0 %v5547
        %6105 = vmatprep.subr.bf16.mxu0 %v5552
        %6106 = vmatpush1.bf16.msra.mxu0 %v5551
        %6107 = vmatprep.subr.bf16.mxu0 %v5556
        %6108 = vmatpush1.bf16.msra.mxu0 %v5555
        %6109 = vmatprep.subr.bf16.mxu0 %v5560
        %6110 = vmatpush1.bf16.msra.mxu0 %v5559
        %6111 = vmatprep.subr.bf16.mxu0 %v5564
        %6112 = vmatpush1.bf16.msra.mxu0 %v5563
        %6113 = vmatprep.subr.bf16.mxu0 %v5568
        %6114 = vmatpush1.bf16.msra.mxu0 %v5567
        %6115 = vmatprep.subr.bf16.mxu0 %v5572
        %6116 = vmatpush1.bf16.msra.mxu0 %v5571
        %6117 = vmatprep.subr.bf16.mxu0 %v5576
        %6118 = vmatpush1.bf16.msra.mxu0 %v5575
        %6119 = vmatprep.subr.bf16.mxu0 %v5580
        %6120 = vmatpush1.bf16.msra.mxu0 %v5579
        %6121 = vmatprep.subr.bf16.mxu0 %v5584
        %6122 = vmatpush1.bf16.msra.mxu0 %v5583
        %6123 = vmatprep.subr.bf16.mxu0 %v5588
        %6124 = vmatpush1.bf16.msra.mxu0 %v5587
        %6125 = vmatprep.subr.bf16.mxu0 %v5592
        %6126 = vmatpush1.bf16.msra.mxu0 %v5591
        %6127 = vmatprep.subr.bf16.mxu0 %v5596
        %6128 = vmatpush1.bf16.msra.mxu0 %v5595
        %6129 = vmatprep.mubr.bf16.mxu0 %v4856
        %6130 = vmatmul.mubr.bf16.gmra.mrb[0].mxu0 %v4855
        %v6131 = vpop.f32.mrb[0].mxu0
        %v6132 = vadd.f32 %v6071, %v6131
        %v6133 = vpop.f32.mrb[0].mxu0
        %v6134 = vadd.f32 %v6073, %v6133
        %v6135 = vpop.f32.mrb[0].mxu0
        %v6136 = vadd.f32 %v6075, %v6135
        %v6137 = vpop.f32.mrb[0].mxu0
        %v6138 = vadd.f32 %v6077, %v6137
        %6139 = vmatprep.mubr.bf16.mxu0 %v4862
        %6140 = vmatmul.mubr.bf16.gmra.mrb[0].mxu0 %v4861
        %v6141 = vpop.f32.mrb[0].mxu0
        %v6142 = vadd.f32 %v6081, %v6141
        %v6143 = vpop.f32.mrb[0].mxu0
        %v6144 = vadd.f32 %v6083, %v6143
        %v6145 = vpop.f32.mrb[0].mxu0
        %v6146 = vadd.f32 %v6085, %v6145
        %v6147 = vpop.f32.mrb[0].mxu0
        %v6148 = vadd.f32 %v6087, %v6147
        %6149 = vmatprep.mubr.bf16.mxu0 %v4868
        %6150 = vmatmul.mubr.bf16.gmra.mrb[0].mxu0 %v4867
        %v6151 = vpop.f32.mrb[0].mxu0
        %v6152 = vadd.f32 %v6091, %v6151
        %v6153 = vpop.f32.mrb[0].mxu0
        %v6154 = vadd.f32 %v6093, %v6153
        %v6155 = vpop.f32.mrb[0].mxu0
        %v6156 = vpop.f32.mrb[0].mxu0
        %6157 = vdwg.mxu0
        %6158 = vmatprep.subr.bf16.mxu0 %v5600
        %6159 = vmatpush1.bf16.msra.mxu0 %v5599
        %6160 = vmatprep.subr.bf16.mxu0 %v5604
        %6161 = vmatpush1.bf16.msra.mxu0 %v5603
        %6162 = vmatprep.subr.bf16.mxu0 %v5608
        %6163 = vmatpush1.bf16.msra.mxu0 %v5607
        %6164 = vmatprep.subr.bf16.mxu0 %v5612
        %6165 = vmatpush1.bf16.msra.mxu0 %v5611
        %6166 = vmatprep.subr.bf16.mxu0 %v5616
        %6167 = vmatpush1.bf16.msra.mxu0 %v5615
        %6168 = vmatprep.subr.bf16.mxu0 %v5620
        %6169 = vmatpush1.bf16.msra.mxu0 %v5619
        %6170 = vmatprep.subr.bf16.mxu0 %v5624
        %6171 = vmatpush1.bf16.msra.mxu0 %v5623
        %6172 = vmatprep.subr.bf16.mxu0 %v5628
        %6173 = vmatpush1.bf16.msra.mxu0 %v5627
        %6174 = vmatprep.subr.bf16.mxu0 %v5632
        %6175 = vmatpush1.bf16.msra.mxu0 %v5631
        %6176 = vmatprep.subr.bf16.mxu0 %v5636
        %6177 = vmatpush1.bf16.msra.mxu0 %v5635
        %6178 = vmatprep.subr.bf16.mxu0 %v5640
        %6179 = vmatpush1.bf16.msra.mxu0 %v5639
        %6180 = vmatprep.subr.bf16.mxu0 %v5644
        %6181 = vmatpush1.bf16.msra.mxu0 %v5643
        %6182 = vmatprep.subr.bf16.mxu0 %v5648
        %6183 = vmatpush1.bf16.msra.mxu0 %v5647
        %6184 = vmatprep.subr.bf16.mxu0 %v5652
        %6185 = vmatpush1.bf16.msra.mxu0 %v5651
        %6186 = vmatprep.subr.bf16.mxu0 %v5656
        %6187 = vmatpush1.bf16.msra.mxu0 %v5655
        %6188 = vmatprep.subr.bf16.mxu0 %v5660
        %6189 = vmatpush1.bf16.msra.mxu0 %v5659
        %6190 = vmatprep.mubr.bf16.mxu0 %v4858
        %6191 = vmatmul.mubr.bf16.gmra.mrb[0].mxu0 %v4857
        %v6192 = vpop.f32.mrb[0].mxu0
        %v6193 = vadd.f32 %v6132, %v6192
        %v6194 = vpop.f32.mrb[0].mxu0
        %v6195 = vadd.f32 %v6134, %v6194
        %v6196 = vpop.f32.mrb[0].mxu0
        %v6197 = vadd.f32 %v6136, %v6196
        %v6198 = vpop.f32.mrb[0].mxu0
        %v6199 = vadd.f32 %v6138, %v6198
        %6200 = vmatprep.mubr.bf16.mxu0 %v4864
        %6201 = vmatmul.mubr.bf16.gmra.mrb[0].mxu0 %v4863
        %v6202 = vpop.f32.mrb[0].mxu0
        %v6203 = vadd.f32 %v6142, %v6202
        %v6204 = vpop.f32.mrb[0].mxu0
        %v6205 = vadd.f32 %v6144, %v6204
        %v6206 = vpop.f32.mrb[0].mxu0
        %v6207 = vadd.f32 %v6146, %v6206
        %v6208 = vpop.f32.mrb[0].mxu0
        %v6209 = vadd.f32 %v6148, %v6208
        %6210 = vmatprep.mubr.bf16.mxu0 %v4870
        %6211 = vmatmul.mubr.bf16.gmra.mrb[0].mxu0 %v4869
        %v6212 = vpop.f32.mrb[0].mxu0
        %v6213 = vadd.f32 %v6152, %v6212
        %v6214 = vpop.f32.mrb[0].mxu0
        %v6215 = vadd.f32 %v6154, %v6214
        %v6216 = vpop.f32.mrb[0].mxu0
        %v6217 = vpop.f32.mrb[0].mxu0
        %6218 = vdwg.mxu0
        %v6231 = vrot.slane %v6020, 2
        %v6232 = vrot.slane %v6024, 2
        %v6233 = vsel %vm1885, %v6231, %v6232
        %v6234 = vrot.slane %v6022, 2
        %v6235 = vrot.slane %v6026, 2
        %v6236 = vsel %vm1885, %v6234, %v6235
        %v6237 = vrot.slane %v6203, 2
        %v6238 = vrot.slane %v6207, 2
        %v6239 = vsel %vm1885, %v6237, %v6238
        %v6240 = vrot.slane %v6205, 2
        %v6241 = vrot.slane %v6209, 2
        %v6242 = vsel %vm1885, %v6240, %v6241
        %v6243 = vrot.slane %v6030, 2
        %v6244 = vsel %vm1885, %v6232, %v6243
        %v6245 = vrot.slane %v6032, 2
        %v6246 = vsel %vm1885, %v6235, %v6245
        %v6247 = vrot.slane %v6213, 2
        %v6248 = vsel %vm1885, %v6238, %v6247
        %v6249 = vrot.slane %v6215, 2
        %v6250 = vsel %vm1885, %v6241, %v6249
        %v6259 = vadd.f32 %v6010, %v6014
        %v6260 = vadd.f32 %v6259, %v6233
        %v6261 = vadd.f32 %v6260, %v6244
        %v6262 = vrot.slane %v6261, 4
        %v6263 = vadd.f32 %v6261, %v6262
        %v6264 = vrot.slane %v6263, 2
        %v6265 = vadd.f32 %v6263, %v6264
        %v6266 = vrot.slane %v6265, 1
        %v6267 = vadd.f32 %v6265, %v6266
        %v6268 = vadd.f32 %v6012, %v6016
        %v6269 = vadd.f32 %v6268, %v6236
        %v6270 = vadd.f32 %v6269, %v6246
        %v6271 = vrot.slane %v6270, 4
        %v6272 = vadd.f32 %v6270, %v6271
        %v6273 = vrot.slane %v6272, 2
        %v6274 = vadd.f32 %v6272, %v6273
        %v6275 = vrot.slane %v6274, 1
        %v6276 = vadd.f32 %v6274, %v6275
        %v6277 = vadd.f32 %v6193, %v6197
        %v6278 = vadd.f32 %v6277, %v6239
        %v6279 = vadd.f32 %v6278, %v6248
        %v6280 = vrot.slane %v6279, 4
        %v6281 = vadd.f32 %v6279, %v6280
        %v6282 = vrot.slane %v6281, 2
        %v6283 = vadd.f32 %v6281, %v6282
        %v6284 = vrot.slane %v6283, 1
        %v6285 = vadd.f32 %v6283, %v6284
        %v6286 = vadd.f32 %v6195, %v6199
        %v6287 = vadd.f32 %v6286, %v6242
        %v6288 = vadd.f32 %v6287, %v6250
        %v6289 = vrot.slane %v6288, 4
        %v6290 = vadd.f32 %v6288, %v6289
        %v6291 = vrot.slane %v6290, 2
        %v6292 = vadd.f32 %v6290, %v6291
        %v6293 = vrot.slane %v6292, 1
        %v6294 = vadd.f32 %v6292, %v6293
        %v6295 = vmul.f32 %v6267, 0.03125
        %v6296 = vmul.f32 %v6276, 0.03125
        %v6297 = vmul.f32 %v6285, 0.03125
        %v6298 = vmul.f32 %v6294, 0.03125
        %v6299 = vsub.f32 %v6010, %v6295
        %v6300 = vsub.f32 %v6012, %v6296
        %v6301 = vsub.f32 %v6193, %v6297
        %v6302 = vsub.f32 %v6195, %v6298
        %v6303 = vsub.f32 %v6014, %v6295
        %v6304 = vsub.f32 %v6016, %v6296
        %v6305 = vsub.f32 %v6197, %v6297
        %v6306 = vsub.f32 %v6199, %v6298
        %v6307 = vsub.f32 %v6233, %v6295
        %v6308 = vsub.f32 %v6236, %v6296
        %v6309 = vsub.f32 %v6239, %v6297
        %v6310 = vsub.f32 %v6242, %v6298
        %v6311 = vsub.f32 %v6244, %v6295
        %v6312 = vsub.f32 %v6246, %v6296
        %v6313 = vsub.f32 %v6248, %v6297
        %v6314 = vsub.f32 %v6250, %v6298
        %v6315 = vmul.f32 %v6299, %v6299
        %v6316 = vmul.f32 %v6300, %v6300
        %v6317 = vmul.f32 %v6301, %v6301
        %v6318 = vmul.f32 %v6302, %v6302
        %v6319 = vmul.f32 %v6303, %v6303
        %v6320 = vmul.f32 %v6304, %v6304
        %v6321 = vmul.f32 %v6305, %v6305
        %v6322 = vmul.f32 %v6306, %v6306
        %v6323 = vmul.f32 %v6307, %v6307
        %v6324 = vmul.f32 %v6308, %v6308
        %v6325 = vmul.f32 %v6309, %v6309
        %v6326 = vmul.f32 %v6310, %v6310
        %v6327 = vmul.f32 %v6311, %v6311
        %v6328 = vmul.f32 %v6312, %v6312
        %v6329 = vmul.f32 %v6313, %v6313
        %v6330 = vmul.f32 %v6314, %v6314
        %v6331 = vadd.f32 %v6315, %v6319
        %v6332 = vadd.f32 %v6331, %v6323
        %v6333 = vadd.f32 %v6332, %v6327
        %v6334 = vrot.slane %v6333, 4
        %v6335 = vadd.f32 %v6333, %v6334
        %v6336 = vrot.slane %v6335, 2
        %v6337 = vadd.f32 %v6335, %v6336
        %v6338 = vrot.slane %v6337, 1
        %v6339 = vadd.f32 %v6337, %v6338
        %v6340 = vadd.f32 %v6316, %v6320
        %v6341 = vadd.f32 %v6340, %v6324
        %v6342 = vadd.f32 %v6341, %v6328
        %v6343 = vrot.slane %v6342, 4
        %v6344 = vadd.f32 %v6342, %v6343
        %v6345 = vrot.slane %v6344, 2
        %v6346 = vadd.f32 %v6344, %v6345
        %v6347 = vrot.slane %v6346, 1
        %v6348 = vadd.f32 %v6346, %v6347
        %v6349 = vadd.f32 %v6317, %v6321
        %v6350 = vadd.f32 %v6349, %v6325
        %v6351 = vadd.f32 %v6350, %v6329
        %v6352 = vrot.slane %v6351, 4
        %v6353 = vadd.f32 %v6351, %v6352
        %v6354 = vrot.slane %v6353, 2
        %v6355 = vadd.f32 %v6353, %v6354
        %v6356 = vrot.slane %v6355, 1
        %v6357 = vadd.f32 %v6355, %v6356
        %v6358 = vadd.f32 %v6318, %v6322
        %v6359 = vadd.f32 %v6358, %v6326
        %v6360 = vadd.f32 %v6359, %v6330
        %v6361 = vrot.slane %v6360, 4
        %v6362 = vadd.f32 %v6360, %v6361
        %v6363 = vrot.slane %v6362, 2
        %v6364 = vadd.f32 %v6362, %v6363
        %v6365 = vrot.slane %v6364, 1
        %v6366 = vadd.f32 %v6364, %v6365
        %v6367 = vmul.f32 %v6339, 0.03125
        %v6368 = vmul.f32 %v6348, 0.03125
        %v6369 = vmul.f32 %v6357, 0.03125
        %v6370 = vmul.f32 %v6366, 0.03125
        %v6371 = vadd.f32 %v6367, 1e-05
        %v6372 = vadd.f32 %v6368, 1e-05
        %v6373 = vadd.f32 %v6369, 1e-05
        %v6374 = vadd.f32 %v6370, 1e-05
        %v6375 = vrsqrt.pop %v6371
        %v6376 = vrsqrt.pop %v6372
        %v6377 = vrsqrt.pop %v6373
        %v6378 = vrsqrt.pop %v6374
        %v6379 = vmul.f32 %v6299, %v6375
        %v6380 = vmul.f32 %v6300, %v6376
        %v6381 = vmul.f32 %v6301, %v6377
        %v6382 = vmul.f32 %v6302, %v6378
        %v6383 = vmul.f32 %v6303, %v6375
        %v6384 = vmul.f32 %v6304, %v6376
        %v6385 = vmul.f32 %v6305, %v6377
        %v6386 = vmul.f32 %v6306, %v6378
        %v6387 = vmul.f32 %v6307, %v6375
        %v6388 = vmul.f32 %v6308, %v6376
        %v6389 = vmul.f32 %v6309, %v6377
        %v6390 = vmul.f32 %v6310, %v6378
        %v6391 = vmul.f32 %v6311, %v6375
        %v6392 = vmul.f32 %v6312, %v6376
        %v6393 = vmul.f32 %v6313, %v6377
        %v6394 = vmul.f32 %v6314, %v6378
        %v6395 = vld [vmem:[%s55] sm:$0xf]
        %v6397 = vlaneseq
        %v6398 = vshrl.u32 %v6397, 7
        %v6399 = vsub.s32 0, %v6398
        %v6400 = vrot.slane %v6395, %v6399
        %v6401 = vlaneseq
        %v6402 = vshrl.u32 %v6401, 7
        %v6403 = vsub.s32 1, %v6402
        %v6404 = vrot.slane %v6395, %v6403
        %v6405 = vlaneseq
        %v6406 = vshrl.u32 %v6405, 7
        %v6407 = vsub.s32 2, %v6406
        %v6408 = vrot.slane %v6395, %v6407
        %v6409 = vlaneseq
        %v6410 = vshrl.u32 %v6409, 7
        %v6411 = vsub.s32 3, %v6410
        %v6412 = vrot.slane %v6395, %v6411
        %v6417 = vmul.f32 %v6379, %v6400
        %v6418 = vmul.f32 %v6380, %v6404
        %v6419 = vmul.f32 %v6381, %v6408
        %v6420 = vmul.f32 %v6382, %v6412
        %v6421 = vmul.f32 %v6383, %v6400
        %v6422 = vmul.f32 %v6384, %v6404
        %v6423 = vmul.f32 %v6385, %v6408
        %v6424 = vmul.f32 %v6386, %v6412
        %v6425 = vmul.f32 %v6387, %v6400
        %v6426 = vmul.f32 %v6388, %v6404
        %v6427 = vmul.f32 %v6389, %v6408
        %v6428 = vmul.f32 %v6390, %v6412
        %v6429 = vmul.f32 %v6391, %v6400
        %v6430 = vmul.f32 %v6392, %v6404
        %v6431 = vmul.f32 %v6393, %v6408
        %v6432 = vmul.f32 %v6394, %v6412
        %v6433 = vld [vmem:[%s57] sm:$0xf]
        %v6435 = vlaneseq
        %v6436 = vshrl.u32 %v6435, 7
        %v6437 = vsub.s32 0, %v6436
        %v6438 = vrot.slane %v6433, %v6437
        %v6439 = vlaneseq
        %v6440 = vshrl.u32 %v6439, 7
        %v6441 = vsub.s32 1, %v6440
        %v6442 = vrot.slane %v6433, %v6441
        %v6443 = vlaneseq
        %v6444 = vshrl.u32 %v6443, 7
        %v6445 = vsub.s32 2, %v6444
        %v6446 = vrot.slane %v6433, %v6445
        %v6447 = vlaneseq
        %v6448 = vshrl.u32 %v6447, 7
        %v6449 = vsub.s32 3, %v6448
        %v6450 = vrot.slane %v6433, %v6449
        %v6455 = vadd.f32 %v6417, %v6438
        %v6456 = vadd.f32 %v6418, %v6442
        %v6457 = vadd.f32 %v6419, %v6446
        %v6458 = vadd.f32 %v6420, %v6450
        %v6459 = vadd.f32 %v6421, %v6438
        %v6460 = vadd.f32 %v6422, %v6442
        %v6461 = vadd.f32 %v6423, %v6446
        %v6462 = vadd.f32 %v6424, %v6450
        %v6463 = vadd.f32 %v6425, %v6438
        %v6464 = vadd.f32 %v6426, %v6442
        %v6465 = vadd.f32 %v6427, %v6446
        %v6466 = vadd.f32 %v6428, %v6450
        %v6467 = vadd.f32 %v6429, %v6438
        %v6468 = vadd.f32 %v6430, %v6442
        %v6469 = vadd.f32 %v6431, %v6446
        %v6470 = vadd.f32 %v6432, %v6450
        %v6471 = vmax.f32 %v6455, 0.0
        %v6472 = vmax.f32 %v6456, 0.0
        %v6473 = vmax.f32 %v6457, 0.0
        %v6474 = vmax.f32 %v6458, 0.0
        %v6475 = vmax.f32 %v6459, 0.0
        %v6476 = vmax.f32 %v6460, 0.0
        %v6477 = vmax.f32 %v6461, 0.0
        %v6478 = vmax.f32 %v6462, 0.0
        %v6479 = vmax.f32 %v6463, 0.0
        %v6480 = vmax.f32 %v6464, 0.0
        %v6481 = vmax.f32 %v6465, 0.0
        %v6482 = vmax.f32 %v6466, 0.0
        %v6483 = vmax.f32 %v6467, 0.0
        %v6484 = vmax.f32 %v6468, 0.0
        %v6485 = vmax.f32 %v6469, 0.0
        %v6486 = vmax.f32 %v6470, 0.0
        %v6503 = vcombine.low %v6471, %v6472
        %v6504 = vcombine.high %v6471, %v6472
        %v6505 = vcombine.low %v6473, %v6474
        %v6506 = vcombine.high %v6473, %v6474
        %v6507 = vcombine.low %v6475, %v6476
        %v6508 = vcombine.high %v6475, %v6476
        %v6509 = vcombine.low %v6477, %v6478
        %v6510 = vcombine.high %v6477, %v6478
        %v6511 = vcombine.low %v6479, %v6480
        %v6512 = vcombine.high %v6479, %v6480
        %v6513 = vcombine.low %v6481, %v6482
        %v6514 = vcombine.high %v6481, %v6482
        %v6515 = vcombine.low %v6483, %v6484
        %v6516 = vcombine.high %v6483, %v6484
        %v6517 = vcombine.low %v6485, %v6486
        %v6518 = vcombine.high %v6485, %v6486
        %v6535 = vcombine.high %v6503, %v6503
        %v6536 = vcombine.high %v6505, %v6505
        %v6537 = vcombine.high %v6504, %v6504
        %v6538 = vcombine.high %v6506, %v6506
        %v6539 = vcombine.high %v6507, %v6507
        %v6540 = vcombine.high %v6509, %v6509
        %v6541 = vcombine.high %v6508, %v6508
        %v6542 = vcombine.high %v6510, %v6510
        %v6543 = vcombine.high %v6511, %v6511
        %v6544 = vcombine.high %v6513, %v6513
        %v6545 = vcombine.high %v6512, %v6512
        %v6546 = vcombine.high %v6514, %v6514
        %v6547 = vcombine.high %v6515, %v6515
        %v6548 = vcombine.high %v6517, %v6517
        %v6549 = vcombine.high %v6516, %v6516
        %v6550 = vcombine.high %v6518, %v6518
        %v6567 = vsel %vm3885, %v6503, -inf
        %v6568 = vrot.slane %v6567, 4
        %v6569 = vmax.f32 %v6567, %v6568
        %v6570 = vrot.slane %v6569, 2
        %v6571 = vmax.f32 %v6569, %v6570
        %v6572 = vrot.slane %v6571, 1
        %v6573 = vmax.f32 %v6571, %v6572
        %v6574 = vsel %vm3885, %v6535, -inf
        %v6575 = vrot.slane %v6574, 4
        %v6576 = vmax.f32 %v6574, %v6575
        %v6577 = vrot.slane %v6576, 2
        %v6578 = vmax.f32 %v6576, %v6577
        %v6579 = vrot.slane %v6578, 1
        %v6580 = vmax.f32 %v6578, %v6579
        %v6581 = vsel %vm3885, %v6505, -inf
        %v6582 = vrot.slane %v6581, 4
        %v6583 = vmax.f32 %v6581, %v6582
        %v6584 = vrot.slane %v6583, 2
        %v6585 = vmax.f32 %v6583, %v6584
        %v6586 = vrot.slane %v6585, 1
        %v6587 = vmax.f32 %v6585, %v6586
        %v6588 = vsel %vm3885, %v6536, -inf
        %v6589 = vrot.slane %v6588, 4
        %v6590 = vmax.f32 %v6588, %v6589
        %v6591 = vrot.slane %v6590, 2
        %v6592 = vmax.f32 %v6590, %v6591
        %v6593 = vrot.slane %v6592, 1
        %v6594 = vmax.f32 %v6592, %v6593
        %v6595 = vsel %vm3885, %v6504, -inf
        %v6596 = vrot.slane %v6595, 4
        %v6597 = vmax.f32 %v6595, %v6596
        %v6598 = vrot.slane %v6597, 2
        %v6599 = vmax.f32 %v6597, %v6598
        %v6600 = vrot.slane %v6599, 1
        %v6601 = vmax.f32 %v6599, %v6600
        %v6602 = vsel %vm3885, %v6537, -inf
        %v6603 = vrot.slane %v6602, 4
        %v6604 = vmax.f32 %v6602, %v6603
        %v6605 = vrot.slane %v6604, 2
        %v6606 = vmax.f32 %v6604, %v6605
        %v6607 = vrot.slane %v6606, 1
        %v6608 = vmax.f32 %v6606, %v6607
        %v6609 = vsel %vm3885, %v6506, -inf
        %v6610 = vrot.slane %v6609, 4
        %v6611 = vmax.f32 %v6609, %v6610
        %v6612 = vrot.slane %v6611, 2
        %v6613 = vmax.f32 %v6611, %v6612
        %v6614 = vrot.slane %v6613, 1
        %v6615 = vmax.f32 %v6613, %v6614
        %v6616 = vsel %vm3885, %v6538, -inf
        %v6617 = vrot.slane %v6616, 4
        %v6618 = vmax.f32 %v6616, %v6617
        %v6619 = vrot.slane %v6618, 2
        %v6620 = vmax.f32 %v6618, %v6619
        %v6621 = vrot.slane %v6620, 1
        %v6622 = vmax.f32 %v6620, %v6621
        %v6623 = vsel %vm3885, %v6507, -inf
        %v6624 = vrot.slane %v6623, 4
        %v6625 = vmax.f32 %v6623, %v6624
        %v6626 = vrot.slane %v6625, 2
        %v6627 = vmax.f32 %v6625, %v6626
        %v6628 = vrot.slane %v6627, 1
        %v6629 = vmax.f32 %v6627, %v6628
        %v6630 = vsel %vm3885, %v6539, -inf
        %v6631 = vrot.slane %v6630, 4
        %v6632 = vmax.f32 %v6630, %v6631
        %v6633 = vrot.slane %v6632, 2
        %v6634 = vmax.f32 %v6632, %v6633
        %v6635 = vrot.slane %v6634, 1
        %v6636 = vmax.f32 %v6634, %v6635
        %v6637 = vsel %vm3885, %v6509, -inf
        %v6638 = vrot.slane %v6637, 4
        %v6639 = vmax.f32 %v6637, %v6638
        %v6640 = vrot.slane %v6639, 2
        %v6641 = vmax.f32 %v6639, %v6640
        %v6642 = vrot.slane %v6641, 1
        %v6643 = vmax.f32 %v6641, %v6642
        %v6644 = vsel %vm3885, %v6540, -inf
        %v6645 = vrot.slane %v6644, 4
        %v6646 = vmax.f32 %v6644, %v6645
        %v6647 = vrot.slane %v6646, 2
        %v6648 = vmax.f32 %v6646, %v6647
        %v6649 = vrot.slane %v6648, 1
        %v6650 = vmax.f32 %v6648, %v6649
        %v6651 = vsel %vm3885, %v6508, -inf
        %v6652 = vrot.slane %v6651, 4
        %v6653 = vmax.f32 %v6651, %v6652
        %v6654 = vrot.slane %v6653, 2
        %v6655 = vmax.f32 %v6653, %v6654
        %v6656 = vrot.slane %v6655, 1
        %v6657 = vmax.f32 %v6655, %v6656
        %v6658 = vsel %vm3885, %v6541, -inf
        %v6659 = vrot.slane %v6658, 4
        %v6660 = vmax.f32 %v6658, %v6659
        %v6661 = vrot.slane %v6660, 2
        %v6662 = vmax.f32 %v6660, %v6661
        %v6663 = vrot.slane %v6662, 1
        %v6664 = vmax.f32 %v6662, %v6663
        %v6665 = vsel %vm3885, %v6510, -inf
        %v6666 = vrot.slane %v6665, 4
        %v6667 = vmax.f32 %v6665, %v6666
        %v6668 = vrot.slane %v6667, 2
        %v6669 = vmax.f32 %v6667, %v6668
        %v6670 = vrot.slane %v6669, 1
        %v6671 = vmax.f32 %v6669, %v6670
        %v6672 = vsel %vm3885, %v6542, -inf
        %v6673 = vrot.slane %v6672, 4
        %v6674 = vmax.f32 %v6672, %v6673
        %v6675 = vrot.slane %v6674, 2
        %v6676 = vmax.f32 %v6674, %v6675
        %v6677 = vrot.slane %v6676, 1
        %v6678 = vmax.f32 %v6676, %v6677
        %v6679 = vsel %vm3885, %v6511, -inf
        %v6680 = vrot.slane %v6679, 4
        %v6681 = vmax.f32 %v6679, %v6680
        %v6682 = vrot.slane %v6681, 2
        %v6683 = vmax.f32 %v6681, %v6682
        %v6684 = vrot.slane %v6683, 1
        %v6685 = vmax.f32 %v6683, %v6684
        %v6686 = vsel %vm3885, %v6543, -inf
        %v6687 = vrot.slane %v6686, 4
        %v6688 = vmax.f32 %v6686, %v6687
        %v6689 = vrot.slane %v6688, 2
        %v6690 = vmax.f32 %v6688, %v6689
        %v6691 = vrot.slane %v6690, 1
        %v6692 = vmax.f32 %v6690, %v6691
        %v6693 = vsel %vm3885, %v6513, -inf
        %v6694 = vrot.slane %v6693, 4
        %v6695 = vmax.f32 %v6693, %v6694
        %v6696 = vrot.slane %v6695, 2
        %v6697 = vmax.f32 %v6695, %v6696
        %v6698 = vrot.slane %v6697, 1
        %v6699 = vmax.f32 %v6697, %v6698
        %v6700 = vsel %vm3885, %v6544, -inf
        %v6701 = vrot.slane %v6700, 4
        %v6702 = vmax.f32 %v6700, %v6701
        %v6703 = vrot.slane %v6702, 2
        %v6704 = vmax.f32 %v6702, %v6703
        %v6705 = vrot.slane %v6704, 1
        %v6706 = vmax.f32 %v6704, %v6705
        %v6707 = vsel %vm3885, %v6512, -inf
        %v6708 = vrot.slane %v6707, 4
        %v6709 = vmax.f32 %v6707, %v6708
        %v6710 = vrot.slane %v6709, 2
        %v6711 = vmax.f32 %v6709, %v6710
        %v6712 = vrot.slane %v6711, 1
        %v6713 = vmax.f32 %v6711, %v6712
        %v6714 = vsel %vm3885, %v6545, -inf
        %v6715 = vrot.slane %v6714, 4
        %v6716 = vmax.f32 %v6714, %v6715
        %v6717 = vrot.slane %v6716, 2
        %v6718 = vmax.f32 %v6716, %v6717
        %v6719 = vrot.slane %v6718, 1
        %v6720 = vmax.f32 %v6718, %v6719
        %v6721 = vsel %vm3885, %v6514, -inf
        %v6722 = vrot.slane %v6721, 4
        %v6723 = vmax.f32 %v6721, %v6722
        %v6724 = vrot.slane %v6723, 2
        %v6725 = vmax.f32 %v6723, %v6724
        %v6726 = vrot.slane %v6725, 1
        %v6727 = vmax.f32 %v6725, %v6726
        %v6728 = vsel %vm3885, %v6546, -inf
        %v6729 = vrot.slane %v6728, 4
        %v6730 = vmax.f32 %v6728, %v6729
        %v6731 = vrot.slane %v6730, 2
        %v6732 = vmax.f32 %v6730, %v6731
        %v6733 = vrot.slane %v6732, 1
        %v6734 = vmax.f32 %v6732, %v6733
        %v6735 = vsel %vm3885, %v6515, -inf
        %v6736 = vrot.slane %v6735, 4
        %v6737 = vmax.f32 %v6735, %v6736
        %v6738 = vrot.slane %v6737, 2
        %v6739 = vmax.f32 %v6737, %v6738
        %v6740 = vrot.slane %v6739, 1
        %v6741 = vmax.f32 %v6739, %v6740
        %v6742 = vsel %vm3885, %v6547, -inf
        %v6743 = vrot.slane %v6742, 4
        %v6744 = vmax.f32 %v6742, %v6743
        %v6745 = vrot.slane %v6744, 2
        %v6746 = vmax.f32 %v6744, %v6745
        %v6747 = vrot.slane %v6746, 1
        %v6748 = vmax.f32 %v6746, %v6747
        %v6749 = vsel %vm3885, %v6517, -inf
        %v6750 = vrot.slane %v6749, 4
        %v6751 = vmax.f32 %v6749, %v6750
        %v6752 = vrot.slane %v6751, 2
        %v6753 = vmax.f32 %v6751, %v6752
        %v6754 = vrot.slane %v6753, 1
        %v6755 = vmax.f32 %v6753, %v6754
        %v6756 = vsel %vm3885, %v6548, -inf
        %v6757 = vrot.slane %v6756, 4
        %v6758 = vmax.f32 %v6756, %v6757
        %v6759 = vrot.slane %v6758, 2
        %v6760 = vmax.f32 %v6758, %v6759
        %v6761 = vrot.slane %v6760, 1
        %v6762 = vmax.f32 %v6760, %v6761
        %v6763 = vsel %vm3885, %v6516, -inf
        %v6764 = vrot.slane %v6763, 4
        %v6765 = vmax.f32 %v6763, %v6764
        %v6766 = vrot.slane %v6765, 2
        %v6767 = vmax.f32 %v6765, %v6766
        %v6768 = vrot.slane %v6767, 1
        %v6769 = vmax.f32 %v6767, %v6768
        %v6770 = vsel %vm3885, %v6549, -inf
        %v6771 = vrot.slane %v6770, 4
        %v6772 = vmax.f32 %v6770, %v6771
        %v6773 = vrot.slane %v6772, 2
        %v6774 = vmax.f32 %v6772, %v6773
        %v6775 = vrot.slane %v6774, 1
        %v6776 = vmax.f32 %v6774, %v6775
        %v6777 = vsel %vm3885, %v6518, -inf
        %v6778 = vrot.slane %v6777, 4
        %v6779 = vmax.f32 %v6777, %v6778
        %v6780 = vrot.slane %v6779, 2
        %v6781 = vmax.f32 %v6779, %v6780
        %v6782 = vrot.slane %v6781, 1
        %v6783 = vmax.f32 %v6781, %v6782
        %v6784 = vsel %vm3885, %v6550, -inf
        %v6785 = vrot.slane %v6784, 4
        %v6786 = vmax.f32 %v6784, %v6785
        %v6787 = vrot.slane %v6786, 2
        %v6788 = vmax.f32 %v6786, %v6787
        %v6789 = vrot.slane %v6788, 1
        %v6790 = vmax.f32 %v6788, %v6789
        %v6823 = vsel %vm3207, %v6601, %v6573
        %v6824 = vsel %vm3209, %v6629, %v6823
        %v6825 = vsel %vm3211, %v6657, %v6824
        %v6826 = vsel %vm3213, %v6685, %v6825
        %v6827 = vsel %vm3215, %v6713, %v6826
        %v6828 = vsel %vm3217, %v6741, %v6827
        %v6829 = vsel %vm3219, %v6769, %v6828
        %v6830 = vsel %vm3207, %v6608, %v6580
        %v6831 = vsel %vm3209, %v6636, %v6830
        %v6832 = vsel %vm3211, %v6664, %v6831
        %v6833 = vsel %vm3213, %v6692, %v6832
        %v6834 = vsel %vm3215, %v6720, %v6833
        %v6835 = vsel %vm3217, %v6748, %v6834
        %v6836 = vsel %vm3219, %v6776, %v6835
        %v6837 = vsel %vm3207, %v6615, %v6587
        %v6838 = vsel %vm3209, %v6643, %v6837
        %v6839 = vsel %vm3211, %v6671, %v6838
        %v6840 = vsel %vm3213, %v6699, %v6839
        %v6841 = vsel %vm3215, %v6727, %v6840
        %v6842 = vsel %vm3217, %v6755, %v6841
        %v6843 = vsel %vm3219, %v6783, %v6842
        %v6844 = vsel %vm3207, %v6622, %v6594
        %v6845 = vsel %vm3209, %v6650, %v6844
        %v6846 = vsel %vm3211, %v6678, %v6845
        %v6847 = vsel %vm3213, %v6706, %v6846
        %v6848 = vsel %vm3215, %v6734, %v6847
        %v6849 = vsel %vm3217, %v6762, %v6848
        %v6850 = vsel %vm3219, %v6790, %v6849
        %6855 = vst [vmem:[%s1014] sm:$0xff] %v6829
        %6856 = vst [vmem:[%s1014 + $0x8] sm:$0xff] %v6836
        %6857 = vst [vmem:[%s1014 + $0x10] sm:$0xff] %v6843
        %6858 = vst [vmem:[%s1014 + $0x18] sm:$0xff] %v6850
        %v6861 = vrot.slane %v2494, 7
        %v6862 = vrot.slane 0.0, 7
        %v6866 = vrot.slane %v3588, 6
        %v6867 = vrot.slane 0.0, 6
        %v6871 = vrot.slane %v3589, 5
        %v6872 = vrot.slane 0.0, 5
        %v6876 = vrot.slane %v3897, 4
        %v6877 = vrot.slane 0.0, 4
        %v6881 = vrot.slane %v3918, 3
        %v6882 = vrot.slane 0.0, 3
        %v6887 = vrot.slane %v4469, 2
        %v6888 = vrot.slane %v4470, 2
        %v6889 = vrot.slane 0.0, 2
        %v6895 = vrot.slane %v4513, 1
        %v6896 = vrot.slane %v4514, 1
        %v6897 = vrot.slane 0.0, 1
        %v6901 = vsel %vm1817, %v2493, %v6861
        %v6902 = vsel %vm1817, 0.0, %v6862
        %v6903 = vsel %vm1785, %v6901, %v6866
        %v6904 = vsel %vm1785, %v6902, %v6867
        %v6905 = vsel %vm1545, %v6903, %v6871
        %v6906 = vsel %vm1545, %v6904, %v6872
        %v6907 = vsel %vm3885, %v6905, %v6876
        %v6908 = vsel %vm3885, %v6906, %v6877
        %vm6909 = vcmask 1044480
        %v6910 = vsel %vm6909, %v6907, %v6881
        %v6911 = vsel %vm6909, %v6908, %v6882
        %v6912 = vsel %vm1885, %v6910, %v6887
        %v6913 = vsel %vm1885, %v6911, %v6888
        %v6914 = vsel %vm1885, %v6911, %v6889
        %v6915 = vsel %vm1514, %v6912, %v6895
        %v6916 = vsel %vm1514, %v6913, %v6896
        %v6917 = vsel %vm1514, %v6914, %v6897
        %v6918 = vsel %vm1817, %v6295, %v6367
        %v6919 = vsel %vm1817, %v6296, %v6368
        %v6920 = vsel %vm1817, %v6297, %v6369
        %v6921 = vsel %vm1817, %v6298, %v6370
        %6922 = vst [vmem:[%s1019] sm:$0xff] %v6915
        %6923 = vst [vmem:[%s1019 + $0x8] sm:$0xff] %v6916
        %6924 = vst [vmem:[%s1019 + $0x10] sm:$0xff] %v6917
        %6925 = vst [vmem:[%s1019 + $0x18] sm:$0xff] %v6917
        %6926 = vst [vmem:[%s1019 + $0x20] sm:$0x3] %v6918
        %6927 = vst [vmem:[%s1019 + $0x28] sm:$0x3] %v6919
        %6928 = vst [vmem:[%s1019 + $0x30] sm:$0x3] %v6920
        %6929 = vst [vmem:[%s1019 + $0x38] sm:$0x3] %v6921
        %p6930 = scmp.lt.s32.totalorder %s78, 1
        %s6931 = scalar_select %p6930, %s78, 1
        %s6932 = smul.addr %s6931, 4
        %s6933 = smul.addr %s6932, 8
        %s6934 = scalar_lea.vmem %s63, %s6933
        %p6935 = scmp.lt.s32.totalorder %s78, 1
        %s6936 = scalar_select %p6935, %s78, 1
        %s6937 = smul.addr %s6936, 8
        %s6938 = smul.addr %s6937, 8
        %s6939 = scalar_lea.vmem %s65, %s6938
        // Predicated region
        $region149: #{dan_forward.2} parent=143 // pred_check
          %p6940 = pneg %p752
        $region150: #{dan_forward.2} parent=143 // pred_check_branch
          %6942 = sbr.rel (%p6940) target = $region152
        $region151: #{dan_forward.2} parent=143 // pred_region
          _
        $region152: #{dan_forward.2} parent=143 // pred_fallthru
          _
        // Predicated region
        $region153: #{dan_forward.2} parent=143 // pred_check
          %p6943 = pneg %p778
        $region154: #{dan_forward.2} parent=143 // pred_check_branch
          %6945 = sbr.rel (%p6943) target = $region156
        $region155: #{dan_forward.2} parent=143 // pred_region
          _
        $region156: #{dan_forward.2} parent=143 // pred_fallthru
          _
      $region144: #{dan_forward.2} parent=5 // pred_fallthru
        _
      %p6946 = scmp.le.s32.totalorder 2, %s73
      // Predicated region
      $region157: #{dan_forward.2} parent=5 // pred_check
        %p6947 = pneg %p6946
      $region158: #{dan_forward.2} parent=5 // pred_check_branch
        %6949 = sbr.rel (%p6947) target = $region160
      $region159: #{dan_forward.2} parent=5 // pred_region
        %s6950 = ssub.s32 %s73, 2
        // Predicated region
        $region161: #{dan_forward.2} parent=159 // pred_check
          %p6951 = pneg %p758
        $region162: #{dan_forward.2} parent=159 // pred_check_branch
          %6953 = sbr.rel (%p6951) target = $region164
        $region163: #{dan_forward.2} parent=159 // pred_region
          %p6954 = scmp.lt.s32.totalorder %s79, 1
          %s6955 = scalar_select %p6954, %s79, 1
          %s6956 = smul.addr %s6955, 4
          %s6957 = smul.addr %s6956, 8
          %s6958 = scalar_lea.vmem %s63, %s6957
        $region164: #{dan_forward.2} parent=159 // pred_fallthru
          _
        // Predicated region
        $region165: #{dan_forward.2} parent=159 // pred_check
          %p6959 = pneg %p784
        $region166: #{dan_forward.2} parent=159 // pred_check_branch
          %6961 = sbr.rel (%p6959) target = $region168
        $region167: #{dan_forward.2} parent=159 // pred_region
          %p6962 = scmp.lt.s32.totalorder %s79, 1
          %s6963 = scalar_select %p6962, %s79, 1
          %s6964 = smul.addr %s6963, 8
          %s6965 = smul.addr %s6964, 8
          %s6966 = scalar_lea.vmem %s65, %s6965
        $region168: #{dan_forward.2} parent=159 // pred_fallthru
          _
      $region160: #{dan_forward.2} parent=5 // pred_fallthru
        _
    $region6: #{dan_forward.2} parent=1 // loop_footer
      %s77 = sadd.s32 1, %s73
    $region7: #{dan_forward.2} parent=1 // loop_footer_branch
      %72 = sbr.rel target = $region3
    $region8: #{dan_forward.2} parent=1 // loop_exit
      _
    %6967 = vsyncpa [#allocation3], 1
    %s6968 = scalar_lea.sflag [#allocation3], 1
    %6969 = vsyncpa %s6968, 1

</llo_original>
